<compile_context>
chip_gen: v6e
topology: v6e:2x2x1
jax: 0.10.0
libtpu: 0.0.40
codegen_flags: <defaults>
</compile_context>

<pallas_src>
import itertools
from functools import lru_cache, partial

import jax
import jax.numpy as jnp
from jax.experimental import pallas as pl
from jax.experimental.pallas import tpu as pltpu


# -----------------------------------------------------------------------------
# Pallas kernel: tiled matmul with fused BN affine + LeakyReLU + residual add
# -----------------------------------------------------------------------------
def _mm_epilogue_kernel(*refs, act, has_residual):
    if has_residual:
        x_ref, w_ref, s_ref, b_ref, r_ref, o_ref, acc_ref = refs
    else:
        x_ref, w_ref, s_ref, b_ref, o_ref, acc_ref = refs
        r_ref = None

    @pl.when(pl.program_id(2) == 0)
    def _():
        acc_ref[...] = jnp.zeros_like(acc_ref)

    acc_ref[...] += jnp.dot(x_ref[...], w_ref[...],
                            preferred_element_type=jnp.float32)

    @pl.when(pl.program_id(2) == pl.num_programs(2) - 1)
    def _():
        y = acc_ref[...] * s_ref[...] + b_ref[...]
        if act:                                    # LeakyReLU(0.1)
            y = jnp.where(y > 0.0, y, 0.1 * y)
        if r_ref is not None:                      # fused residual add (f32)
            y = y + r_ref[...]
        o_ref[...] = y.astype(o_ref.dtype)


def _round_up(a, b):
    return (a + b - 1) // b * b


def _pick_tile(dim, candidates):
    for c in candidates:
        if dim >= c and dim % c == 0:
            return c
    return dim


@lru_cache(maxsize=None)
def _get_matmul_fn(Mp, Kp, Np, tm, tn, tk, act, has_residual, out_dtype):
    grid = (Mp // tm, Np // tn, Kp // tk)
    in_specs = [
        pl.BlockSpec((tm, tk), lambda i, j, k: (i, k)),      # activations bf16
        pl.BlockSpec((tk, tn), lambda i, j, k: (k, j)),      # weights     bf16
        pl.BlockSpec((1, tn), lambda i, j, k: (0, j)),       # BN scale    f32
        pl.BlockSpec((1, tn), lambda i, j, k: (0, j)),       # BN bias     f32
    ]
    if has_residual:
        in_specs.append(pl.BlockSpec((tm, tn), lambda i, j, k: (i, j)))  # f32

    out_bytes = Mp * Np * jnp.dtype(out_dtype).itemsize
    bytes_accessed = (Mp * Kp * 2 + Kp * Np * 2 + 2 * Np * 4 + out_bytes
                      + (Mp * Np * 4 if has_residual else 0))
    cost = pl.CostEstimate(flops=2 * Mp * Kp * Np, transcendentals=0,
                           bytes_accessed=int(bytes_accessed))

    return pl.pallas_call(
        partial(_mm_epilogue_kernel, act=act, has_residual=has_residual),
        out_shape=jax.ShapeDtypeStruct((Mp, Np), out_dtype),
        grid_spec=pltpu.PrefetchScalarGridSpec(
            num_scalar_prefetch=0,
            grid=grid,
            in_specs=in_specs,
            out_specs=pl.BlockSpec((tm, tn), lambda i, j, k: (i, j)),
            scratch_shapes=[pltpu.VMEM((tm, tn), jnp.float32)],
        ),
        compiler_params=pltpu.CompilerParams(
            dimension_semantics=("parallel", "parallel", "arbitrary"),
            vmem_limit_bytes=32 * 1024 * 1024),
        cost_estimate=cost,
    )


def matmul_affine_act(x, w, scale, bias, act, cout, residual=None,
                      out_dtype=jnp.float32):
    """y = maybe_residual + leaky_or_id(x @ w * scale + bias)  (Pallas kernel)."""
    M, K = x.shape
    Kp, Np = w.shape                  # weights pre-padded / pre-cast at build time

    Mp = _round_up(M, 128) if M >= 128 else _round_up(M, 8)
    tm = _pick_tile(Mp, (512, 256, 128))
    tn = _pick_tile(Np, (512, 256, 128))
    tk = _pick_tile(Kp, (512, 384, 256, 128))
    # Megacore: make sure there are >= 2 parallel output blocks when possible.
    while (Mp // tm) * (Np // tn) < 2 and tm >= 256:
        tm //= 2

    if (Mp, Kp) != (M, K):
        x = jnp.pad(x, ((0, Mp - M), (0, Kp - K)))
    x = x.astype(jnp.bfloat16)

    args = [x, w, scale, bias]
    if residual is not None:
        rM, rN = residual.shape
        if (rM, rN) != (Mp, Np):
            residual = jnp.pad(residual, ((0, Mp - rM), (0, Np - rN)))
        args.append(residual.astype(jnp.float32))

    out = _get_matmul_fn(Mp, Kp, Np, tm, tn, tk, bool(act),
                         residual is not None, out_dtype)(*args)
    if (Mp, Np) != (M, cout):
        out = out[:M, :cout]
    return out


# -----------------------------------------------------------------------------
# im2col glue (plain JAX, fused inside the enclosing jit) for NHWC inputs
# -----------------------------------------------------------------------------
def im2col(x, k, stride, pad):
    N, H, W, C = x.shape
    if pad:
        x = jnp.pad(x, ((0, 0), (pad, pad), (pad, pad), (0, 0)))
    Ho = (H + 2 * pad - k) // stride + 1
    Wo = (W + 2 * pad - k) // stride + 1
    cols = []
    for i in range(k):
        for j in range(k):
            cols.append(x[:, i:i + stride * Ho:stride,
                          j:j + stride * Wo:stride, :])
    patches = jnp.stack(cols, axis=3)                  # (N, Ho, Wo, k*k, C)
    return patches.reshape(N * Ho * Wo, k * k * C), Ho, Wo


# -----------------------------------------------------------------------------
# Deterministic parameter construction (CNNBlock)
# -----------------------------------------------------------------------------
_PARAM_KEY = jax.random.PRNGKey(1234)
_counter = itertools.count()


def _next_key():
    return jax.random.fold_in(_PARAM_KEY, next(_counter))


def make_cnn(cin, cout, k, stride, pad, bn_act=True):
    fan_in = cin * k * k
    w = jax.random.normal(_next_key(), (k, k, cin, cout), jnp.float32)
    w = (w * (2.0 / fan_in) ** 0.5).reshape(k * k * cin, cout)
    if bn_act:
        gamma = 1.0 + 0.1 * jax.random.normal(_next_key(), (cout,), jnp.float32)
        beta = 0.1 * jax.random.normal(_next_key(), (cout,), jnp.float32)
        rmean = 0.1 * jax.random.normal(_next_key(), (cout,), jnp.float32)
        rvar = jax.random.uniform(_next_key(), (cout,), jnp.float32, 0.5, 1.5)
        scale = gamma / jnp.sqrt(rvar + 1e-5)          # BN eps = 1e-5
        bias = beta - rmean * scale
    else:
        scale = jnp.ones((cout,), jnp.float32)
        bias = 0.1 * jax.random.normal(_next_key(), (cout,), jnp.float32)

    # Pad / reshape / cast ONCE at build time (never per forward call).
    K = k * k * cin
    Kp, Np = _round_up(K, 128), _round_up(cout, 128)
    w_pad = jnp.pad(w, ((0, Kp - K), (0, Np - cout))).astype(jnp.bfloat16)
    scale_pad = jnp.pad(scale, (0, Np - cout)).reshape(1, Np)
    bias_pad = jnp.pad(bias, (0, Np - cout)).reshape(1, Np)
    return dict(w=w_pad, scale=scale_pad, bias=bias_pad,
                w_ref=w, scale_ref=scale, bias_ref=bias,  # f32 reference copies
                k=k, stride=stride, pad=pad, cout=cout, act=bn_act)


def cnn_apply(x, p, residual=None, out_dtype=jnp.float32):
    """x: NHWC activation (f32 or bf16)."""
    N, H, W, C = x.shape
    if p['k'] == 1 and p['stride'] == 1 and p['pad'] == 0:
        patches, Ho, Wo = x.reshape(N * H * W, C), H, W
    else:
        patches, Ho, Wo = im2col(x, p['k'], p['stride'], p['pad'])
    res2d = None
    if residual is not None:
        res2d = residual.reshape(N * Ho * Wo, p['cout'])
    y = matmul_affine_act(patches, p['w'], p['scale'], p['bias'], p['act'],
                          p['cout'], residual=res2d, out_dtype=out_dtype)
    return y.reshape(N, Ho, Wo, p['cout'])


# -----------------------------------------------------------------------------
# ResidualBlock (mirrors the PyTorch module)
# -----------------------------------------------------------------------------
def make_residual_block(channels, use_residual=True, num_repeats=1):
    pairs = [(make_cnn(channels, channels // 2, 1, 1, 0),
              make_cnn(channels // 2, channels, 3, 1, 1))
             for _ in range(num_repeats)]
    return dict(pairs=pairs, use_residual=use_residual,
                num_repeats=num_repeats, channels=channels)


def residual_block_forward(block, x_nchw):
    """ResidualBlock.forward: NCHW in -> NCHW out."""
    x = jnp.transpose(x_nchw, (0, 2, 3, 1))           # NCHW -> NHWC (f32 carry)
    for c1, c2 in block['pairs']:
        h = cnn_apply(x, c1, out_dtype=jnp.bfloat16)  # 1x1 squeeze, bf16 interm.
        if block['use_residual']:
            x = cnn_apply(h, c2, residual=x, out_dtype=jnp.float32)
        else:
            x = cnn_apply(h, c2, out_dtype=jnp.float32)
    return jnp.transpose(x, (0, 3, 1, 2))             # NHWC -> NCHW


# -----------------------------------------------------------------------------
# Pure-JAX f32 reference (same math, no Pallas, no bf16) for validation
# -----------------------------------------------------------------------------
def _leaky(v):
    return jnp.where(v > 0.0, v, 0.1 * v)


def _cnn_ref(x, p):
    N, H, W, C = x.shape
    if p['k'] == 1:
        patches, Ho, Wo = x.reshape(N * H * W, C), H, W
    else:
        patches, Ho, Wo = im2col(x, p['k'], p['stride'], p['pad'])
    y = patches @ p['w_ref'] * p['scale_ref'] + p['bias_ref']
    if p['act']:
        y = _leaky(y)
    return y.reshape(N, Ho, Wo, p['cout'])


def residual_block_ref(block, x_nchw):
    x = jnp.transpose(x_nchw, (0, 2, 3, 1)).astype(jnp.float32)
    for c1, c2 in block['pairs']:
        y = _cnn_ref(_cnn_ref(x, c1), c2)
        x = x + y if block['use_residual'] else y
    return jnp.transpose(x, (0, 3, 1, 2))


# -----------------------------------------------------------------------------
if __name__ == "__main__":
    batch, channels, hw = 2, 256, 16          # small, lane-aligned (no padding)
    num_repeats = 2

    block = make_residual_block(channels, use_residual=True,
                                num_repeats=num_repeats)
    x = jax.random.normal(jax.random.PRNGKey(0),
                          (batch, channels, hw, hw), jnp.float32)   # NCHW

    fwd = jax.jit(lambda inp: residual_block_forward(block, inp))
    out = jax.block_until_ready(fwd(x))

    assert out.shape == (batch, channels, hw, hw)
    assert bool(jnp.all(jnp.isfinite(out)))

    # Validate the bf16-operand Pallas path against the f32 reference.
    ref = jax.jit(lambda inp: residual_block_ref(block, inp))(x)
    rel_err = float(jnp.max(jnp.abs(out - ref)) /
                    (jnp.max(jnp.abs(ref)) + 1e-6))
    assert rel_err < 8e-2, f"rel_err={rel_err}"

    print("KERNEL_OK")
</pallas_src>

<mosaic_0001>
module attributes {stable_mosaic.version = 11 : i64} {
  func.func @_mm_epilogue_kernel(%arg0: i32, %arg1: i32, %arg2: i32, %arg3: memref<256x256xbf16, #tpu.memory_space<vmem>>, %arg4: memref<256x128xbf16, #tpu.memory_space<vmem>>, %arg5: memref<1x128xf32, #tpu.memory_space<vmem>>, %arg6: memref<1x128xf32, #tpu.memory_space<vmem>>, %arg7: memref<256x128xbf16, #tpu.memory_space<vmem>>, %arg8: memref<256x128xf32, #tpu.memory_space<vmem>>) attributes {dimension_semantics = [#tpu.dimension_semantics<parallel>, #tpu.dimension_semantics<parallel>, #tpu.dimension_semantics<arbitrary>], iteration_bounds = array<i64: 2, 1, 1>, scalar_prefetch = 0 : i64, scratch_operands = 1 : i64, tpu.core_type = #tpu.core_type<tc>, window_params = [{transform_indices = @transform_0, window_bounds = array<i64: 256, 256>}, {transform_indices = @transform_1, window_bounds = array<i64: 256, 128>}, {transform_indices = @transform_2, window_bounds = array<i64: 1, 128>}, {transform_indices = @transform_3, window_bounds = array<i64: 1, 128>}, {transform_indices = @transform_4, window_bounds = array<i64: 256, 128>}]} {
    %c0_i32 = arith.constant 0 : i32
    %0 = arith.cmpi eq, %arg2, %c0_i32 : i32
    %1 = arith.extui %0 : i1 to i32
    %c0_i32_0 = arith.constant 0 : i32
    %2 = arith.cmpi ne, %1, %c0_i32_0 : i32
    scf.if %2 {
      %cst_10 = arith.constant 0.000000e+00 : f32
      %12 = vector.broadcast %cst_10 : f32 to vector<256x128xf32>
      %c0_11 = arith.constant 0 : index
      %c0_12 = arith.constant 0 : index
      %13 = vector.load %arg8[%c0_11, %c0_12] : memref<256x128xf32, #tpu.memory_space<vmem>>, vector<256x128xf32>
      tpu.vector_store %arg8[%c0_11, %c0_12], %12 {strides = array<i32>} : memref<256x128xf32, #tpu.memory_space<vmem>>, vector<256x128xf32>,
    } else {
    }
    %c0 = arith.constant 0 : index
    %c0_1 = arith.constant 0 : index
    %3 = vector.load %arg8[%c0, %c0_1] : memref<256x128xf32, #tpu.memory_space<vmem>>, vector<256x128xf32>
    %c0_2 = arith.constant 0 : index
    %c0_3 = arith.constant 0 : index
    %4 = vector.load %arg3[%c0_2, %c0_3] : memref<256x256xbf16, #tpu.memory_space<vmem>>, vector<256x256xbf16>
    %c0_4 = arith.constant 0 : index
    %c0_5 = arith.constant 0 : index
    %5 = vector.load %arg4[%c0_4, %c0_5] : memref<256x128xbf16, #tpu.memory_space<vmem>>, vector<256x128xbf16>
    %cst = arith.constant dense<0.000000e+00> : vector<256x128xf32>
    %6 = tpu.matmul %4, %5, %cst {dimension_numbers = #tpu.dot_dimension_numbers<[1], [0], [0], [1], [0, 0, 1, 1], [], []>} : vector<256x256xbf16>, vector<256x128xbf16>, vector<256x128xf32> -> vector<256x128xf32>
    %7 = arith.addf %3, %6 : vector<256x128xf32>
    %c0_6 = arith.constant 0 : index
    %c0_7 = arith.constant 0 : index
    %8 = vector.load %arg8[%c0_6, %c0_7] : memref<256x128xf32, #tpu.memory_space<vmem>>, vector<256x128xf32>
    tpu.vector_store %arg8[%c0_6, %c0_7], %7 {strides = array<i32>} : memref<256x128xf32, #tpu.memory_space<vmem>>, vector<256x128xf32>,
    %c0_i32_8 = arith.constant 0 : i32
    %9 = arith.cmpi eq, %arg2, %c0_i32_8 : i32
    %10 = arith.extui %9 : i1 to i32
    %c0_i32_9 = arith.constant 0 : i32
    %11 = arith.cmpi ne, %10, %c0_i32_9 : i32
    scf.if %11 {
      %c0_10 = arith.constant 0 : index
      %c0_11 = arith.constant 0 : index
      %12 = vector.load %arg8[%c0_10, %c0_11] : memref<256x128xf32, #tpu.memory_space<vmem>>, vector<256x128xf32>
      %c0_12 = arith.constant 0 : index
      %c0_13 = arith.constant 0 : index
      %13 = vector.load %arg5[%c0_12, %c0_13] : memref<1x128xf32, #tpu.memory_space<vmem>>, vector<1x128xf32>
      %14 = vector.broadcast %13 : vector<1x128xf32> to vector<256x128xf32>
      %15 = arith.mulf %12, %14 : vector<256x128xf32>
      %c0_14 = arith.constant 0 : index
      %c0_15 = arith.constant 0 : index
      %16 = vector.load %arg6[%c0_14, %c0_15] : memref<1x128xf32, #tpu.memory_space<vmem>>, vector<1x128xf32>
      %17 = vector.broadcast %16 : vector<1x128xf32> to vector<256x128xf32>
      %18 = arith.addf %15, %17 : vector<256x128xf32>
      %cst_16 = arith.constant 0.000000e+00 : f32
      %19 = vector.broadcast %cst_16 : f32 to vector<256x128xf32>
      %20 = arith.cmpf ogt, %18, %19 : vector<256x128xf32>
      %cst_17 = arith.constant 1.000000e-01 : f32
      %21 = vector.broadcast %cst_17 : f32 to vector<256x128xf32>
      %22 = arith.mulf %21, %18 : vector<256x128xf32>
      %23 = arith.select %20, %18, %22 : vector<256x128xi1>, vector<256x128xf32>
      %24 = arith.truncf %23 : vector<256x128xf32> to vector<256x128xbf16>
      %c0_18 = arith.constant 0 : index
      %c0_19 = arith.constant 0 : index
      %25 = vector.load %arg7[%c0_18, %c0_19] : memref<256x128xbf16, #tpu.memory_space<vmem>>, vector<256x128xbf16>
      tpu.vector_store %arg7[%c0_18, %c0_19], %24 {strides = array<i32>} : memref<256x128xbf16, #tpu.memory_space<vmem>>, vector<256x128xbf16>,
    } else {
    }
    return
  }
  func.func @transform_0(%arg0: i32, %arg1: i32, %arg2: i32) -> (i32, i32) {
    %c0_i32 = arith.constant 0 : i32
    return %arg0, %arg2 : i32, i32
  }
  func.func @transform_1(%arg0: i32, %arg1: i32, %arg2: i32) -> (i32, i32) {
    %c0_i32 = arith.constant 0 : i32
    return %arg2, %arg1 : i32, i32
  }
  func.func @transform_2(%arg0: i32, %arg1: i32, %arg2: i32) -> (i32, i32) {
    %c0_i32 = arith.constant 0 : i32
    %c0_i32_0 = arith.constant 0 : i32
    return %c0_i32, %arg1 : i32, i32
  }
  func.func @transform_3(%arg0: i32, %arg1: i32, %arg2: i32) -> (i32, i32) {
    %c0_i32 = arith.constant 0 : i32
    %c0_i32_0 = arith.constant 0 : i32
    return %c0_i32, %arg1 : i32, i32
  }
  func.func @transform_4(%arg0: i32, %arg1: i32, %arg2: i32) -> (i32, i32) {
    %c0_i32 = arith.constant 0 : i32
    return %arg0, %arg1 : i32, i32
  }
}

module attributes {stable_mosaic.version = 11 : i64} {
  func.func @_mm_epilogue_kernel(%arg0: i32, %arg1: i32, %arg2: i32, %arg3: memref<256x384xbf16, #tpu.memory_space<vmem>>, %arg4: memref<384x256xbf16, #tpu.memory_space<vmem>>, %arg5: memref<1x256xf32, #tpu.memory_space<vmem>>, %arg6: memref<1x256xf32, #tpu.memory_space<vmem>>, %arg7: memref<256x256xf32, #tpu.memory_space<vmem>>, %arg8: memref<256x256xf32, #tpu.memory_space<vmem>>, %arg9: memref<256x256xf32, #tpu.memory_space<vmem>>) attributes {dimension_semantics = [#tpu.dimension_semantics<parallel>, #tpu.dimension_semantics<parallel>, #tpu.dimension_semantics<arbitrary>], iteration_bounds = array<i64: 2, 1, 3>, scalar_prefetch = 0 : i64, scratch_operands = 1 : i64, tpu.core_type = #tpu.core_type<tc>, window_params = [{transform_indices = @transform_0, window_bounds = array<i64: 256, 384>}, {transform_indices = @transform_1, window_bounds = array<i64: 384, 256>}, {transform_indices = @transform_2, window_bounds = array<i64: 1, 256>}, {transform_indices = @transform_3, window_bounds = array<i64: 1, 256>}, {transform_indices = @transform_4, window_bounds = array<i64: 256, 256>}, {transform_indices = @transform_5, window_bounds = array<i64: 256, 256>}]} {
    %c0_i32 = arith.constant 0 : i32
    %0 = arith.cmpi eq, %arg2, %c0_i32 : i32
    %1 = arith.extui %0 : i1 to i32
    %c0_i32_0 = arith.constant 0 : i32
    %2 = arith.cmpi ne, %1, %c0_i32_0 : i32
    scf.if %2 {
      %cst_9 = arith.constant 0.000000e+00 : f32
      %12 = vector.broadcast %cst_9 : f32 to vector<256x256xf32>
      %c0_10 = arith.constant 0 : index
      %c0_11 = arith.constant 0 : index
      %13 = vector.load %arg9[%c0_10, %c0_11] : memref<256x256xf32, #tpu.memory_space<vmem>>, vector<256x256xf32>
      tpu.vector_store %arg9[%c0_10, %c0_11], %12 {strides = array<i32>} : memref<256x256xf32, #tpu.memory_space<vmem>>, vector<256x256xf32>,
    } else {
    }
    %c0 = arith.constant 0 : index
    %c0_1 = arith.constant 0 : index
    %3 = vector.load %arg9[%c0, %c0_1] : memref<256x256xf32, #tpu.memory_space<vmem>>, vector<256x256xf32>
    %c0_2 = arith.constant 0 : index
    %c0_3 = arith.constant 0 : index
    %4 = vector.load %arg3[%c0_2, %c0_3] : memref<256x384xbf16, #tpu.memory_space<vmem>>, vector<256x384xbf16>
    %c0_4 = arith.constant 0 : index
    %c0_5 = arith.constant 0 : index
    %5 = vector.load %arg4[%c0_4, %c0_5] : memref<384x256xbf16, #tpu.memory_space<vmem>>, vector<384x256xbf16>
    %cst = arith.constant dense<0.000000e+00> : vector<256x256xf32>
    %6 = tpu.matmul %4, %5, %cst {dimension_numbers = #tpu.dot_dimension_numbers<[1], [0], [0], [1], [0, 0, 1, 1], [], []>} : vector<256x384xbf16>, vector<384x256xbf16>, vector<256x256xf32> -> vector<256x256xf32>
    %7 = arith.addf %3, %6 : vector<256x256xf32>
    %c0_6 = arith.constant 0 : index
    %c0_7 = arith.constant 0 : index
    %8 = vector.load %arg9[%c0_6, %c0_7] : memref<256x256xf32, #tpu.memory_space<vmem>>, vector<256x256xf32>
    tpu.vector_store %arg9[%c0_6, %c0_7], %7 {strides = array<i32>} : memref<256x256xf32, #tpu.memory_space<vmem>>, vector<256x256xf32>,
    %c2_i32 = arith.constant 2 : i32
    %9 = arith.cmpi eq, %arg2, %c2_i32 : i32
    %10 = arith.extui %9 : i1 to i32
    %c0_i32_8 = arith.constant 0 : i32
    %11 = arith.cmpi ne, %10, %c0_i32_8 : i32
    scf.if %11 {
      %c0_9 = arith.constant 0 : index
      %c0_10 = arith.constant 0 : index
      %12 = vector.load %arg9[%c0_9, %c0_10] : memref<256x256xf32, #tpu.memory_space<vmem>>, vector<256x256xf32>
      %c0_11 = arith.constant 0 : index
      %c0_12 = arith.constant 0 : index
      %13 = vector.load %arg5[%c0_11, %c0_12] : memref<1x256xf32, #tpu.memory_space<vmem>>, vector<1x256xf32>
      %14 = vector.broadcast %13 : vector<1x256xf32> to vector<256x256xf32>
      %15 = arith.mulf %12, %14 : vector<256x256xf32>
      %c0_13 = arith.constant 0 : index
      %c0_14 = arith.constant 0 : index
      %16 = vector.load %arg6[%c0_13, %c0_14] : memref<1x256xf32, #tpu.memory_space<vmem>>, vector<1x256xf32>
      %17 = vector.broadcast %16 : vector<1x256xf32> to vector<256x256xf32>
      %18 = arith.addf %15, %17 : vector<256x256xf32>
      %cst_15 = arith.constant 0.000000e+00 : f32
      %19 = vector.broadcast %cst_15 : f32 to vector<256x256xf32>
      %20 = arith.cmpf ogt, %18, %19 : vector<256x256xf32>
      %cst_16 = arith.constant 1.000000e-01 : f32
      %21 = vector.broadcast %cst_16 : f32 to vector<256x256xf32>
      %22 = arith.mulf %21, %18 : vector<256x256xf32>
      %23 = arith.select %20, %18, %22 : vector<256x256xi1>, vector<256x256xf32>
      %c0_17 = arith.constant 0 : index
      %c0_18 = arith.constant 0 : index
      %24 = vector.load %arg7[%c0_17, %c0_18] : memref<256x256xf32, #tpu.memory_space<vmem>>, vector<256x256xf32>
      %25 = arith.addf %23, %24 : vector<256x256xf32>
      %c0_19 = arith.constant 0 : index
      %c0_20 = arith.constant 0 : index
      %26 = vector.load %arg8[%c0_19, %c0_20] : memref<256x256xf32, #tpu.memory_space<vmem>>, vector<256x256xf32>
      tpu.vector_store %arg8[%c0_19, %c0_20], %25 {strides = array<i32>} : memref<256x256xf32, #tpu.memory_space<vmem>>, vector<256x256xf32>,
    } else {
    }
    return
  }
  func.func @transform_0(%arg0: i32, %arg1: i32, %arg2: i32) -> (i32, i32) {
    %c0_i32 = arith.constant 0 : i32
    return %arg0, %arg2 : i32, i32
  }
  func.func @transform_1(%arg0: i32, %arg1: i32, %arg2: i32) -> (i32, i32) {
    %c0_i32 = arith.constant 0 : i32
    return %arg2, %arg1 : i32, i32
  }
  func.func @transform_2(%arg0: i32, %arg1: i32, %arg2: i32) -> (i32, i32) {
    %c0_i32 = arith.constant 0 : i32
    %c0_i32_0 = arith.constant 0 : i32
    return %c0_i32, %arg1 : i32, i32
  }
  func.func @transform_3(%arg0: i32, %arg1: i32, %arg2: i32) -> (i32, i32) {
    %c0_i32 = arith.constant 0 : i32
    %c0_i32_0 = arith.constant 0 : i32
    return %c0_i32, %arg1 : i32, i32
  }
  func.func @transform_4(%arg0: i32, %arg1: i32, %arg2: i32) -> (i32, i32) {
    %c0_i32 = arith.constant 0 : i32
    return %arg0, %arg1 : i32, i32
  }
  func.func @transform_5(%arg0: i32, %arg1: i32, %arg2: i32) -> (i32, i32) {
    %c0_i32 = arith.constant 0 : i32
    return %arg0, %arg1 : i32, i32
  }
}

module attributes {stable_mosaic.version = 11 : i64} {
  func.func @_mm_epilogue_kernel(%arg0: i32, %arg1: i32, %arg2: i32, %arg3: memref<256x256xbf16, #tpu.memory_space<vmem>>, %arg4: memref<256x128xbf16, #tpu.memory_space<vmem>>, %arg5: memref<1x128xf32, #tpu.memory_space<vmem>>, %arg6: memref<1x128xf32, #tpu.memory_space<vmem>>, %arg7: memref<256x128xbf16, #tpu.memory_space<vmem>>, %arg8: memref<256x128xf32, #tpu.memory_space<vmem>>) attributes {dimension_semantics = [#tpu.dimension_semantics<parallel>, #tpu.dimension_semantics<parallel>, #tpu.dimension_semantics<arbitrary>], iteration_bounds = array<i64: 2, 1, 1>, scalar_prefetch = 0 : i64, scratch_operands = 1 : i64, tpu.core_type = #tpu.core_type<tc>, window_params = [{transform_indices = @transform_0, window_bounds = array<i64: 256, 256>}, {transform_indices = @transform_1, window_bounds = array<i64: 256, 128>}, {transform_indices = @transform_2, window_bounds = array<i64: 1, 128>}, {transform_indices = @transform_3, window_bounds = array<i64: 1, 128>}, {transform_indices = @transform_4, window_bounds = array<i64: 256, 128>}]} {
    %c0_i32 = arith.constant 0 : i32
    %0 = arith.cmpi eq, %arg2, %c0_i32 : i32
    %1 = arith.extui %0 : i1 to i32
    %c0_i32_0 = arith.constant 0 : i32
    %2 = arith.cmpi ne, %1, %c0_i32_0 : i32
    scf.if %2 {
      %cst_10 = arith.constant 0.000000e+00 : f32
      %12 = vector.broadcast %cst_10 : f32 to vector<256x128xf32>
      %c0_11 = arith.constant 0 : index
      %c0_12 = arith.constant 0 : index
      %13 = vector.load %arg8[%c0_11, %c0_12] : memref<256x128xf32, #tpu.memory_space<vmem>>, vector<256x128xf32>
      tpu.vector_store %arg8[%c0_11, %c0_12], %12 {strides = array<i32>} : memref<256x128xf32, #tpu.memory_space<vmem>>, vector<256x128xf32>,
    } else {
    }
    %c0 = arith.constant 0 : index
    %c0_1 = arith.constant 0 : index
    %3 = vector.load %arg8[%c0, %c0_1] : memref<256x128xf32, #tpu.memory_space<vmem>>, vector<256x128xf32>
    %c0_2 = arith.constant 0 : index
    %c0_3 = arith.constant 0 : index
    %4 = vector.load %arg3[%c0_2, %c0_3] : memref<256x256xbf16, #tpu.memory_space<vmem>>, vector<256x256xbf16>
    %c0_4 = arith.constant 0 : index
    %c0_5 = arith.constant 0 : index
    %5 = vector.load %arg4[%c0_4, %c0_5] : memref<256x128xbf16, #tpu.memory_space<vmem>>, vector<256x128xbf16>
    %cst = arith.constant dense<0.000000e+00> : vector<256x128xf32>
    %6 = tpu.matmul %4, %5, %cst {dimension_numbers = #tpu.dot_dimension_numbers<[1], [0], [0], [1], [0, 0, 1, 1], [], []>} : vector<256x256xbf16>, vector<256x128xbf16>, vector<256x128xf32> -> vector<256x128xf32>
    %7 = arith.addf %3, %6 : vector<256x128xf32>
    %c0_6 = arith.constant 0 : index
    %c0_7 = arith.constant 0 : index
    %8 = vector.load %arg8[%c0_6, %c0_7] : memref<256x128xf32, #tpu.memory_space<vmem>>, vector<256x128xf32>
    tpu.vector_store %arg8[%c0_6, %c0_7], %7 {strides = array<i32>} : memref<256x128xf32, #tpu.memory_space<vmem>>, vector<256x128xf32>,
    %c0_i32_8 = arith.constant 0 : i32
    %9 = arith.cmpi eq, %arg2, %c0_i32_8 : i32
    %10 = arith.extui %9 : i1 to i32
    %c0_i32_9 = arith.constant 0 : i32
    %11 = arith.cmpi ne, %10, %c0_i32_9 : i32
    scf.if %11 {
      %c0_10 = arith.constant 0 : index
      %c0_11 = arith.constant 0 : index
      %12 = vector.load %arg8[%c0_10, %c0_11] : memref<256x128xf32, #tpu.memory_space<vmem>>, vector<256x128xf32>
      %c0_12 = arith.constant 0 : index
      %c0_13 = arith.constant 0 : index
      %13 = vector.load %arg5[%c0_12, %c0_13] : memref<1x128xf32, #tpu.memory_space<vmem>>, vector<1x128xf32>
      %14 = vector.broadcast %13 : vector<1x128xf32> to vector<256x128xf32>
      %15 = arith.mulf %12, %14 : vector<256x128xf32>
      %c0_14 = arith.constant 0 : index
      %c0_15 = arith.constant 0 : index
      %16 = vector.load %arg6[%c0_14, %c0_15] : memref<1x128xf32, #tpu.memory_space<vmem>>, vector<1x128xf32>
      %17 = vector.broadcast %16 : vector<1x128xf32> to vector<256x128xf32>
      %18 = arith.addf %15, %17 : vector<256x128xf32>
      %cst_16 = arith.constant 0.000000e+00 : f32
      %19 = vector.broadcast %cst_16 : f32 to vector<256x128xf32>
      %20 = arith.cmpf ogt, %18, %19 : vector<256x128xf32>
      %cst_17 = arith.constant 1.000000e-01 : f32
      %21 = vector.broadcast %cst_17 : f32 to vector<256x128xf32>
      %22 = arith.mulf %21, %18 : vector<256x128xf32>
      %23 = arith.select %20, %18, %22 : vector<256x128xi1>, vector<256x128xf32>
      %24 = arith.truncf %23 : vector<256x128xf32> to vector<256x128xbf16>
      %c0_18 = arith.constant 0 : index
      %c0_19 = arith.constant 0 : index
      %25 = vector.load %arg7[%c0_18, %c0_19] : memref<256x128xbf16, #tpu.memory_space<vmem>>, vector<256x128xbf16>
      tpu.vector_store %arg7[%c0_18, %c0_19], %24 {strides = array<i32>} : memref<256x128xbf16, #tpu.memory_space<vmem>>, vector<256x128xbf16>,
    } else {
    }
    return
  }
  func.func @transform_0(%arg0: i32, %arg1: i32, %arg2: i32) -> (i32, i32) {
    %c0_i32 = arith.constant 0 : i32
    return %arg0, %arg2 : i32, i32
  }
  func.func @transform_1(%arg0: i32, %arg1: i32, %arg2: i32) -> (i32, i32) {
    %c0_i32 = arith.constant 0 : i32
    return %arg2, %arg1 : i32, i32
  }
  func.func @transform_2(%arg0: i32, %arg1: i32, %arg2: i32) -> (i32, i32) {
    %c0_i32 = arith.constant 0 : i32
    %c0_i32_0 = arith.constant 0 : i32
    return %c0_i32, %arg1 : i32, i32
  }
  func.func @transform_3(%arg0: i32, %arg1: i32, %arg2: i32) -> (i32, i32) {
    %c0_i32 = arith.constant 0 : i32
    %c0_i32_0 = arith.constant 0 : i32
    return %c0_i32, %arg1 : i32, i32
  }
  func.func @transform_4(%arg0: i32, %arg1: i32, %arg2: i32) -> (i32, i32) {
    %c0_i32 = arith.constant 0 : i32
    return %arg0, %arg1 : i32, i32
  }
}

module attributes {stable_mosaic.version = 11 : i64} {
  func.func @_mm_epilogue_kernel(%arg0: i32, %arg1: i32, %arg2: i32, %arg3: memref<256x384xbf16, #tpu.memory_space<vmem>>, %arg4: memref<384x256xbf16, #tpu.memory_space<vmem>>, %arg5: memref<1x256xf32, #tpu.memory_space<vmem>>, %arg6: memref<1x256xf32, #tpu.memory_space<vmem>>, %arg7: memref<256x256xf32, #tpu.memory_space<vmem>>, %arg8: memref<256x256xf32, #tpu.memory_space<vmem>>, %arg9: memref<256x256xf32, #tpu.memory_space<vmem>>) attributes {dimension_semantics = [#tpu.dimension_semantics<parallel>, #tpu.dimension_semantics<parallel>, #tpu.dimension_semantics<arbitrary>], iteration_bounds = array<i64: 2, 1, 3>, scalar_prefetch = 0 : i64, scratch_operands = 1 : i64, tpu.core_type = #tpu.core_type<tc>, window_params = [{transform_indices = @transform_0, window_bounds = array<i64: 256, 384>}, {transform_indices = @transform_1, window_bounds = array<i64: 384, 256>}, {transform_indices = @transform_2, window_bounds = array<i64: 1, 256>}, {transform_indices = @transform_3, window_bounds = array<i64: 1, 256>}, {transform_indices = @transform_4, window_bounds = array<i64: 256, 256>}, {transform_indices = @transform_5, window_bounds = array<i64: 256, 256>}]} {
    %c0_i32 = arith.constant 0 : i32
    %0 = arith.cmpi eq, %arg2, %c0_i32 : i32
    %1 = arith.extui %0 : i1 to i32
    %c0_i32_0 = arith.constant 0 : i32
    %2 = arith.cmpi ne, %1, %c0_i32_0 : i32
    scf.if %2 {
      %cst_9 = arith.constant 0.000000e+00 : f32
      %12 = vector.broadcast %cst_9 : f32 to vector<256x256xf32>
      %c0_10 = arith.constant 0 : index
      %c0_11 = arith.constant 0 : index
      %13 = vector.load %arg9[%c0_10, %c0_11] : memref<256x256xf32, #tpu.memory_space<vmem>>, vector<256x256xf32>
      tpu.vector_store %arg9[%c0_10, %c0_11], %12 {strides = array<i32>} : memref<256x256xf32, #tpu.memory_space<vmem>>, vector<256x256xf32>,
    } else {
    }
    %c0 = arith.constant 0 : index
    %c0_1 = arith.constant 0 : index
    %3 = vector.load %arg9[%c0, %c0_1] : memref<256x256xf32, #tpu.memory_space<vmem>>, vector<256x256xf32>
    %c0_2 = arith.constant 0 : index
    %c0_3 = arith.constant 0 : index
    %4 = vector.load %arg3[%c0_2, %c0_3] : memref<256x384xbf16, #tpu.memory_space<vmem>>, vector<256x384xbf16>
    %c0_4 = arith.constant 0 : index
    %c0_5 = arith.constant 0 : index
    %5 = vector.load %arg4[%c0_4, %c0_5] : memref<384x256xbf16, #tpu.memory_space<vmem>>, vector<384x256xbf16>
    %cst = arith.constant dense<0.000000e+00> : vector<256x256xf32>
    %6 = tpu.matmul %4, %5, %cst {dimension_numbers = #tpu.dot_dimension_numbers<[1], [0], [0], [1], [0, 0, 1, 1], [], []>} : vector<256x384xbf16>, vector<384x256xbf16>, vector<256x256xf32> -> vector<256x256xf32>
    %7 = arith.addf %3, %6 : vector<256x256xf32>
    %c0_6 = arith.constant 0 : index
    %c0_7 = arith.constant 0 : index
    %8 = vector.load %arg9[%c0_6, %c0_7] : memref<256x256xf32, #tpu.memory_space<vmem>>, vector<256x256xf32>
    tpu.vector_store %arg9[%c0_6, %c0_7], %7 {strides = array<i32>} : memref<256x256xf32, #tpu.memory_space<vmem>>, vector<256x256xf32>,
    %c2_i32 = arith.constant 2 : i32
    %9 = arith.cmpi eq, %arg2, %c2_i32 : i32
    %10 = arith.extui %9 : i1 to i32
    %c0_i32_8 = arith.constant 0 : i32
    %11 = arith.cmpi ne, %10, %c0_i32_8 : i32
    scf.if %11 {
      %c0_9 = arith.constant 0 : index
      %c0_10 = arith.constant 0 : index
      %12 = vector.load %arg9[%c0_9, %c0_10] : memref<256x256xf32, #tpu.memory_space<vmem>>, vector<256x256xf32>
      %c0_11 = arith.constant 0 : index
      %c0_12 = arith.constant 0 : index
      %13 = vector.load %arg5[%c0_11, %c0_12] : memref<1x256xf32, #tpu.memory_space<vmem>>, vector<1x256xf32>
      %14 = vector.broadcast %13 : vector<1x256xf32> to vector<256x256xf32>
      %15 = arith.mulf %12, %14 : vector<256x256xf32>
      %c0_13 = arith.constant 0 : index
      %c0_14 = arith.constant 0 : index
      %16 = vector.load %arg6[%c0_13, %c0_14] : memref<1x256xf32, #tpu.memory_space<vmem>>, vector<1x256xf32>
      %17 = vector.broadcast %16 : vector<1x256xf32> to vector<256x256xf32>
      %18 = arith.addf %15, %17 : vector<256x256xf32>
      %cst_15 = arith.constant 0.000000e+00 : f32
      %19 = vector.broadcast %cst_15 : f32 to vector<256x256xf32>
      %20 = arith.cmpf ogt, %18, %19 : vector<256x256xf32>
      %cst_16 = arith.constant 1.000000e-01 : f32
      %21 = vector.broadcast %cst_16 : f32 to vector<256x256xf32>
      %22 = arith.mulf %21, %18 : vector<256x256xf32>
      %23 = arith.select %20, %18, %22 : vector<256x256xi1>, vector<256x256xf32>
      %c0_17 = arith.constant 0 : index
      %c0_18 = arith.constant 0 : index
      %24 = vector.load %arg7[%c0_17, %c0_18] : memref<256x256xf32, #tpu.memory_space<vmem>>, vector<256x256xf32>
      %25 = arith.addf %23, %24 : vector<256x256xf32>
      %c0_19 = arith.constant 0 : index
      %c0_20 = arith.constant 0 : index
      %26 = vector.load %arg8[%c0_19, %c0_20] : memref<256x256xf32, #tpu.memory_space<vmem>>, vector<256x256xf32>
      tpu.vector_store %arg8[%c0_19, %c0_20], %25 {strides = array<i32>} : memref<256x256xf32, #tpu.memory_space<vmem>>, vector<256x256xf32>,
    } else {
    }
    return
  }
  func.func @transform_0(%arg0: i32, %arg1: i32, %arg2: i32) -> (i32, i32) {
    %c0_i32 = arith.constant 0 : i32
    return %arg0, %arg2 : i32, i32
  }
  func.func @transform_1(%arg0: i32, %arg1: i32, %arg2: i32) -> (i32, i32) {
    %c0_i32 = arith.constant 0 : i32
    return %arg2, %arg1 : i32, i32
  }
  func.func @transform_2(%arg0: i32, %arg1: i32, %arg2: i32) -> (i32, i32) {
    %c0_i32 = arith.constant 0 : i32
    %c0_i32_0 = arith.constant 0 : i32
    return %c0_i32, %arg1 : i32, i32
  }
  func.func @transform_3(%arg0: i32, %arg1: i32, %arg2: i32) -> (i32, i32) {
    %c0_i32 = arith.constant 0 : i32
    %c0_i32_0 = arith.constant 0 : i32
    return %c0_i32, %arg1 : i32, i32
  }
  func.func @transform_4(%arg0: i32, %arg1: i32, %arg2: i32) -> (i32, i32) {
    %c0_i32 = arith.constant 0 : i32
    return %arg0, %arg1 : i32, i32
  }
  func.func @transform_5(%arg0: i32, %arg1: i32, %arg2: i32) -> (i32, i32) {
    %c0_i32 = arith.constant 0 : i32
    return %arg0, %arg1 : i32, i32
  }
}

</mosaic_0001>

<llo_original>
// kernel: _lambda_.4
$region0: #{_lambda_.4}
  #allocation0 [shape = 'u32[]', space=smem, size = 0x4, offset = 0x4, fixed_abs, tag = 'smem constant byte address 0x4 - core index']
  #allocation1 [shape = 'u32[144,128]{1,0:T(1,128)}', space=vmem, size = 0x12000, scoped, tag = 'internal scratch']
  #allocation2 [shape = 'f32[256,128]{1,0:T(8,128)}', space=vmem, size = 0x20000, scoped, tag = 'scratch operand']
  %s0 = inlined_call_operand.vmem [shape: bf16[512,256], index: 0, kind: input, shape index: {}]
  %s1 = inlined_call_operand.hbm [shape: bf16[256,128], index: 1, kind: input, shape index: {}]
  %s2 = inlined_call_operand.hbm [shape: f32[1,128], index: 2, kind: input, shape index: {}]
  %s3 = inlined_call_operand.hbm [shape: f32[1,128], index: 3, kind: input, shape index: {}]
  %s4 = inlined_call_operand.vmem [shape: bf16[512,128], index: 4, kind: output, shape index: {}]
  %s5 = sld [smem:[#allocation0]]
  $region69: #{_lambda_.4} parent=0
    _
  %s7 = ssub.s32 1, %s5
  %s8 = scalar_select 0, %s7, %s5
  $region1: #{_lambda_.4} parent=0
    #allocation3 [shape = 'u8[65536]{0}', space=vmem, size = 0x10000, scoped, tag = 'input window, operand 1, single buffered']
    #allocation4 [shape = 's32[2]{0}', space=sflag, size = 0x8, scoped, tag = 'scoped memory for _lambda_.4']
    #allocation5 [shape = 'u8[512]{0}', space=vmem, size = 0x400, scoped, tag = 'input window, operand 2, single buffered']
    #allocation6 [shape = 's32[1]{0}', space=sflag, size = 0x4, scoped, tag = 'scoped memory for _lambda_.4']
    #allocation7 [shape = 'u8[512]{0}', space=vmem, size = 0x400, scoped, tag = 'input window, operand 3, single buffered']
    %9 = vsyncpa [#allocation4], 0
    %10 = vsyncpa [#allocation6], 0
    loop: start=0, step=1, limit=4
    $region2: #{_lambda_.4} parent=1 // loop_pre_header
      _
    $region3: #{_lambda_.4} parent=1 // loop_header
      %s12 = sphi 0, %s16
      %p13 = scmp.ge.s32.totalorder %s12, 4
      %s19 = sphi 0, %s38
      %s20 = sphi 0, %s34
      %s21 = sphi 0, %s30
      %s22 = sphi 0, %s19
      %s23 = sphi 0, %s20
      %s24 = sphi 0, %s21
      %s25 = sphi 0, %s22
      %s26 = sphi 0, %s23
      %s27 = sphi 0, %s24
      %s43 = sphi 0, %s45
      %s46 = sphi 0, %s43
      %s47 = sphi 0, %s46
      %s63 = sphi 0, %s47
      %s71 = sphi 0, %s73
      %s74 = sphi 0, %s71
      %s75 = sphi 0, %s74
      %s91 = sphi 0, %s75
      %s97 = sphi 0, %s99
      %s100 = sphi 0, %s97
      %s101 = sphi 0, %s100
      %s117 = sphi 0, %s101
      %s123 = sphi 0, %s125
      %s126 = sphi 0, %s123
      %s127 = sphi 0, %s126
      %s143 = sphi 0, %s127
      %s151 = sphi 0, %s153
      %s154 = sphi 0, %s151
      %s155 = sphi 0, %s154
      %s171 = sphi 0, %s155
    $region4: #{_lambda_.4} parent=1 // loop_header_branch
      %15 = sbr.rel (%p13) target = $region8
    $region5: #{_lambda_.4} parent=1 // loop_body
      %s17 = ssub.s32 %s12, 1
      %s18 = ssub.s32 %s12, 2
      %s28 = sadd.s32 1, %s21
      %p29 = scmp.ge.s32.totalorder %s28, 1
      %s30 = scalar_select %p29, 0, %s28
      %s31 = sadd.s32 1, %s20
      %s32 = scalar_select %p29, %s31, %s20
      %p33 = scmp.ge.s32.totalorder %s32, 1
      %s34 = scalar_select %p33, 0, %s32
      %s35 = sadd.s32 1, %s19
      %s36 = scalar_select %p33, %s35, %s19
      %p37 = scmp.ge.s32.totalorder %s36, 2
      %s38 = scalar_select %p37, 0, %s36
      %s39 = ssub.s32 %s19, %s38
      %s40 = ssub.s32 %s21, %s30
      %s41 = sor.u32 %s39, %s40
      %p42 = scmp.eq.s32.totalorder %s41, 0
      %s44 = sadd.s32 %s43, 1
      %s45 = scalar_select %p42, %s43, %s44
      %p48 = pneg %p42
      %p49 = scmp.eq.s32.totalorder %s12, 1
      %p50 = por %p48, %p49
      %p51 = scmp.ne.s32.totalorder %s43, %s46
      %p52 = scmp.eq.s32.totalorder %s12, 0
      %p53 = por %p51, %p52
      %p54 = scmp.ne.s32.totalorder %s43, %s46
      %p55 = scmp.eq.s32.totalorder %s17, 1
      %p56 = por %p54, %p55
      %p57 = scmp.ne.s32.totalorder %s46, %s47
      %p58 = scmp.eq.s32.totalorder %s17, 0
      %p59 = por %p57, %p58
      %p60 = scmp.ne.s32.totalorder %s46, %s47
      %p61 = scmp.eq.s32.totalorder %s18, 1
      %p62 = por %p60, %p61
      %p64 = scmp.ne.s32.totalorder %s47, %s63
      %p65 = scmp.eq.s32.totalorder %s18, 0
      %p66 = por %p64, %p65
      %s67 = ssub.s32 %s21, %s30
      %s68 = ssub.s32 %s20, %s34
      %s69 = sor.u32 %s67, %s68
      %p70 = scmp.eq.s32.totalorder %s69, 0
      %s72 = sadd.s32 %s71, 1
      %s73 = scalar_select %p70, %s71, %s72
      %p76 = pneg %p70
      %p77 = scmp.eq.s32.totalorder %s12, 1
      %p78 = por %p76, %p77
      %p79 = scmp.ne.s32.totalorder %s71, %s74
      %p80 = scmp.eq.s32.totalorder %s12, 0
      %p81 = por %p79, %p80
      %p82 = scmp.ne.s32.totalorder %s71, %s74
      %p83 = scmp.eq.s32.totalorder %s17, 1
      %p84 = por %p82, %p83
      %p85 = scmp.ne.s32.totalorder %s74, %s75
      %p86 = scmp.eq.s32.totalorder %s17, 0
      %p87 = por %p85, %p86
      %p88 = scmp.ne.s32.totalorder %s74, %s75
      %p89 = scmp.eq.s32.totalorder %s18, 1
      %p90 = por %p88, %p89
      %p92 = scmp.ne.s32.totalorder %s75, %s91
      %p93 = scmp.eq.s32.totalorder %s18, 0
      %p94 = por %p92, %p93
      %s95 = ssub.s32 %s20, %s34
      %p96 = scmp.eq.s32.totalorder %s95, 0
      %s98 = sadd.s32 %s97, 1
      %s99 = scalar_select %p96, %s97, %s98
      %p102 = pneg %p96
      %p103 = scmp.eq.s32.totalorder %s12, 1
      %p104 = por %p102, %p103
      %p105 = scmp.ne.s32.totalorder %s97, %s100
      %p106 = scmp.eq.s32.totalorder %s12, 0
      %p107 = por %p105, %p106
      %p108 = scmp.ne.s32.totalorder %s97, %s100
      %p109 = scmp.eq.s32.totalorder %s17, 1
      %p110 = por %p108, %p109
      %p111 = scmp.ne.s32.totalorder %s100, %s101
      %p112 = scmp.eq.s32.totalorder %s17, 0
      %p113 = por %p111, %p112
      %p114 = scmp.ne.s32.totalorder %s100, %s101
      %p115 = scmp.eq.s32.totalorder %s18, 1
      %p116 = por %p114, %p115
      %p118 = scmp.ne.s32.totalorder %s101, %s117
      %p119 = scmp.eq.s32.totalorder %s18, 0
      %p120 = por %p118, %p119
      %s121 = ssub.s32 %s20, %s34
      %p122 = scmp.eq.s32.totalorder %s121, 0
      %s124 = sadd.s32 %s123, 1
      %s125 = scalar_select %p122, %s123, %s124
      %p128 = pneg %p122
      %p129 = scmp.eq.s32.totalorder %s12, 1
      %p130 = por %p128, %p129
      %p131 = scmp.ne.s32.totalorder %s123, %s126
      %p132 = scmp.eq.s32.totalorder %s12, 0
      %p133 = por %p131, %p132
      %p134 = scmp.ne.s32.totalorder %s123, %s126
      %p135 = scmp.eq.s32.totalorder %s17, 1
      %p136 = por %p134, %p135
      %p137 = scmp.ne.s32.totalorder %s126, %s127
      %p138 = scmp.eq.s32.totalorder %s17, 0
      %p139 = por %p137, %p138
      %p140 = scmp.ne.s32.totalorder %s126, %s127
      %p141 = scmp.eq.s32.totalorder %s18, 1
      %p142 = por %p140, %p141
      %p144 = scmp.ne.s32.totalorder %s127, %s143
      %p145 = scmp.eq.s32.totalorder %s18, 0
      %p146 = por %p144, %p145
      %s147 = ssub.s32 %s19, %s38
      %s148 = ssub.s32 %s20, %s34
      %s149 = sor.u32 %s147, %s148
      %p150 = scmp.eq.s32.totalorder %s149, 0
      %s152 = sadd.s32 %s151, 1
      %s153 = scalar_select %p150, %s151, %s152
      %p156 = pneg %p150
      %p157 = scmp.eq.s32.totalorder %s12, 1
      %p158 = por %p156, %p157
      %p159 = scmp.ne.s32.totalorder %s151, %s154
      %p160 = scmp.eq.s32.totalorder %s12, 0
      %p161 = por %p159, %p160
      %p162 = scmp.ne.s32.totalorder %s151, %s154
      %p163 = scmp.eq.s32.totalorder %s17, 1
      %p164 = por %p162, %p163
      %p165 = scmp.ne.s32.totalorder %s154, %s155
      %p166 = scmp.eq.s32.totalorder %s17, 0
      %p167 = por %p165, %p166
      %p168 = scmp.ne.s32.totalorder %s154, %s155
      %p169 = scmp.eq.s32.totalorder %s18, 1
      %p170 = por %p168, %p169
      %p172 = scmp.ne.s32.totalorder %s155, %s171
      %p173 = scmp.eq.s32.totalorder %s18, 0
      %p174 = por %p172, %p173
      %p175 = scmp.le.s32.totalorder 1, %s12
      %p176 = scmp.lt.s32.totalorder %s12, 3
      %p177 = pnand %p175, %p176
      %p178 = pneg %p177
      // Predicated region
      $region9: #{_lambda_.4} parent=5 // pred_check
        _
      $region10: #{_lambda_.4} parent=5 // pred_check_branch
        %180 = sbr.rel (%p177) target = $region12
      $region11: #{_lambda_.4} parent=5 // pred_region
        %s181 = ssub.s32 %s12, 1
        // Predicated region
        $region13: #{_lambda_.4} parent=11 // pred_check
          %p182 = pneg %p87
        $region14: #{_lambda_.4} parent=11 // pred_check_branch
          %184 = sbr.rel (%p182) target = $region16
        $region15: #{_lambda_.4} parent=11 // pred_region
          %s185 = smul.u32 32, %s24
          %s187 = ssub.s32 2048, 2048
          %188 = vsyncadd [#allocation4], %s187
          %s189 = sadd.s32 %s23, %s185
          %s190 = smul.addr %s189, 64
          %s191 = scalar_lea.hbm %s1, %s190
          %s192 = sshll.u32 [#allocation3], 4
          %s193 = int_to_ptr.vmem [resolvable:$true] %s192
          %198 = dma.hbm_to_vmem [thread:$0]  %s191, 2048, %s193, [#allocation4], 64, 64, 4
        $region16: #{_lambda_.4} parent=11 // pred_fallthru
          _
        // Predicated region
        $region17: #{_lambda_.4} parent=11 // pred_check
          %p199 = pneg %p113
        $region18: #{_lambda_.4} parent=11 // pred_check_branch
          %201 = sbr.rel (%p199) target = $region20
        $region19: #{_lambda_.4} parent=11 // pred_region
          %s203 = ssub.s32 16, 16
          %204 = vsyncadd [#allocation6], %s203
          %s205 = smul.addr %s23, 16
          %s206 = scalar_lea.hbm %s2, %s205
          %s208 = sshll.u32 [#allocation5], 4
          %s209 = int_to_ptr.vmem [resolvable:$true] %s208
          %211 = dma.hbm_to_vmem [thread:$0]  %s206, 16, %s209, [#allocation6]
        $region20: #{_lambda_.4} parent=11 // pred_fallthru
          _
        // Predicated region
        $region21: #{_lambda_.4} parent=11 // pred_check
          %p212 = pneg %p139
        $region22: #{_lambda_.4} parent=11 // pred_check_branch
          %214 = sbr.rel (%p212) target = $region24
        $region23: #{_lambda_.4} parent=11 // pred_region
          %s216 = ssub.s32 16, 16
          %217 = vsyncadd [#allocation6], %s216
          %s218 = smul.addr %s23, 16
          %s219 = scalar_lea.hbm %s3, %s218
          %s221 = sshll.u32 [#allocation7], 4
          %s222 = int_to_ptr.vmem [resolvable:$true] %s221
          %224 = dma.hbm_to_vmem [thread:$0]  %s219, 16, %s222, [#allocation6]
        $region24: #{_lambda_.4} parent=11 // pred_fallthru
          _
      $region12: #{_lambda_.4} parent=5 // pred_fallthru
        _
      %p225 = scmp.lt.s32.totalorder %s12, 2
      // Predicated region
      $region25: #{_lambda_.4} parent=5 // pred_check
        %p226 = pneg %p225
      $region26: #{_lambda_.4} parent=5 // pred_check_branch
        %228 = sbr.rel (%p226) target = $region28
      $region27: #{_lambda_.4} parent=5 // pred_region
        // Predicated region
        $region29: #{_lambda_.4} parent=27 // pred_check
          %p229 = pneg %p53
        $region30: #{_lambda_.4} parent=27 // pred_check_branch
          %231 = sbr.rel (%p229) target = $region32
        $region31: #{_lambda_.4} parent=27 // pred_region
          %s232 = smul.u32 32, %s19
          %s233 = smul.u32 2, %s21
          %p234 = scmp.lt.s32.totalorder %s232, 63
          %s235 = scalar_select %p234, %s232, 63
          %p236 = scmp.lt.s32.totalorder %s233, 1
          %s237 = scalar_select %p236, %s233, 1
          %s238 = smul.addr %s235, 2
          %s239 = sadd.s32 %s237, %s238
          %s240 = smul.addr %s239, 4
          %s241 = scalar_lea.vmem %s0, %s240
          %s242 = smul.u32 32, %s19
          %s243 = smul.u32 2, %s21
        $region32: #{_lambda_.4} parent=27 // pred_fallthru
          _
      $region28: #{_lambda_.4} parent=5 // pred_fallthru
        _
      %p244 = scmp.le.s32.totalorder 1, %s12
      %p245 = scmp.lt.s32.totalorder %s12, 3
      %p246 = pnand %p244, %p245
      %p247 = pneg %p246
      // Predicated region
      $region33: #{_lambda_.4} parent=5 // pred_check
        _
      $region34: #{_lambda_.4} parent=5 // pred_check_branch
        %249 = sbr.rel (%p246) target = $region36
      $region35: #{_lambda_.4} parent=5 // pred_region
        %s250 = ssub.s32 %s12, 1
        // Predicated region
        $region37: #{_lambda_.4} parent=35 // pred_check
          %p251 = pneg %p87
        $region38: #{_lambda_.4} parent=35 // pred_check_branch
          %253 = sbr.rel (%p251) target = $region40
        $region39: #{_lambda_.4} parent=35 // pred_region
          %254 = dma.done [#allocation4], 2048
        $region40: #{_lambda_.4} parent=35 // pred_fallthru
          _
        // Predicated region
        $region41: #{_lambda_.4} parent=35 // pred_check
          %p255 = pneg %p113
        $region42: #{_lambda_.4} parent=35 // pred_check_branch
          %257 = sbr.rel (%p255) target = $region44
        $region43: #{_lambda_.4} parent=35 // pred_region
          %258 = dma.done [#allocation6], 16
        $region44: #{_lambda_.4} parent=35 // pred_fallthru
          _
        // Predicated region
        $region45: #{_lambda_.4} parent=35 // pred_check
          %p259 = pneg %p139
        $region46: #{_lambda_.4} parent=35 // pred_check_branch
          %261 = sbr.rel (%p259) target = $region48
        $region47: #{_lambda_.4} parent=35 // pred_region
          %262 = dma.done [#allocation6], 16
        $region48: #{_lambda_.4} parent=35 // pred_fallthru
          _
        %s263 = smul.u32 32, %s22
        %s264 = smul.u32 2, %s24
        %p265 = scmp.lt.s32.totalorder %s263, 63
        %s266 = scalar_select %p265, %s263, 63
        %p267 = scmp.lt.s32.totalorder %s264, 1
        %s268 = scalar_select %p267, %s264, 1
        %s269 = smul.addr %s266, 2
        %s270 = sadd.s32 %s268, %s269
        %s271 = smul.addr %s270, 4
        %s272 = scalar_lea.vmem %s0, %s271
        %p273 = pneg %p59
        %p274 = pneg %p56
        %p275 = pneg %p87
        %p276 = pneg %p84
        %p277 = pneg %p113
        %p278 = pneg %p110
        %p279 = pneg %p139
        %p280 = pneg %p136
        %p281 = pneg %p167
        %p282 = pneg %p164
        %s283 = smul.u32 32, %s22
        %p284 = scmp.lt.s32.totalorder %s283, 63
        %s285 = scalar_select %p284, %s283, 63
        %p286 = scmp.lt.s32.totalorder %s23, 0
        %s287 = scalar_select %p286, %s23, 0
        %s288 = sadd.s32 %s287, %s285
        %s289 = smul.addr %s288, 4
        %s290 = scalar_lea.vmem %s4, %s289
        %s291 = smul.u32 32, %s22
        %s292 = smul.u32 2, %s24
        %p293 = scmp.lt.s32.totalorder %s291, 63
        %s294 = scalar_select %p293, %s291, 63
        %p295 = scmp.lt.s32.totalorder %s292, 1
        %s296 = scalar_select %p295, %s292, 1
        %s297 = smul.addr %s294, 2
        %s298 = sadd.s32 %s296, %s297
        %s299 = smul.addr %s298, 4
        %s300 = scalar_lea.vmem %s0, %s299
        %s301 = smul.u32 32, %s22
        %s302 = smul.u32 2, %s24
        %s303 = smul.u32 32, %s24
        %s304 = smul.u32 32, %s22
        %p305 = scmp.lt.s32.totalorder %s304, 63
        %s306 = scalar_select %p305, %s304, 63
        %p307 = scmp.lt.s32.totalorder %s23, 0
        %s308 = scalar_select %p307, %s23, 0
        %s309 = sadd.s32 %s308, %s306
        %s310 = smul.addr %s309, 4
        %s311 = scalar_lea.vmem %s4, %s310
        %s312 = smul.u32 32, %s22
        %p314 = scmp.eq.s32.totalorder %s24, 0
        // Predicated region
        $region49: #{_lambda_.4} parent=35 // pred_check
          %p315 = pneg %p314
        $region50: #{_lambda_.4} parent=35 // pred_check_branch
          %317 = sbr.rel (%p315) target = $region52
        $region51: #{_lambda_.4} parent=35 // pred_region
          %318 = vst [vmem:[#allocation2] sm:$0xff] 0.0
          %319 = vst [vmem:[#allocation2 + $0x8] sm:$0xff] 0.0
          %320 = vst [vmem:[#allocation2 + $0x10] sm:$0xff] 0.0
          %321 = vst [vmem:[#allocation2 + $0x18] sm:$0xff] 0.0
          %322 = vst [vmem:[#allocation2 + $0x20] sm:$0xff] 0.0
          %323 = vst [vmem:[#allocation2 + $0x28] sm:$0xff] 0.0
          %324 = vst [vmem:[#allocation2 + $0x30] sm:$0xff] 0.0
          %325 = vst [vmem:[#allocation2 + $0x38] sm:$0xff] 0.0
          %326 = vst [vmem:[#allocation2 + $0x40] sm:$0xff] 0.0
          %327 = vst [vmem:[#allocation2 + $0x48] sm:$0xff] 0.0
          %328 = vst [vmem:[#allocation2 + $0x50] sm:$0xff] 0.0
          %329 = vst [vmem:[#allocation2 + $0x58] sm:$0xff] 0.0
          %330 = vst [vmem:[#allocation2 + $0x60] sm:$0xff] 0.0
          %331 = vst [vmem:[#allocation2 + $0x68] sm:$0xff] 0.0
          %332 = vst [vmem:[#allocation2 + $0x70] sm:$0xff] 0.0
          %333 = vst [vmem:[#allocation2 + $0x78] sm:$0xff] 0.0
          %334 = vst [vmem:[#allocation2 + $0x80] sm:$0xff] 0.0
          %335 = vst [vmem:[#allocation2 + $0x88] sm:$0xff] 0.0
          %336 = vst [vmem:[#allocation2 + $0x90] sm:$0xff] 0.0
          %337 = vst [vmem:[#allocation2 + $0x98] sm:$0xff] 0.0
          %338 = vst [vmem:[#allocation2 + $0xa0] sm:$0xff] 0.0
          %339 = vst [vmem:[#allocation2 + $0xa8] sm:$0xff] 0.0
          %340 = vst [vmem:[#allocation2 + $0xb0] sm:$0xff] 0.0
          %341 = vst [vmem:[#allocation2 + $0xb8] sm:$0xff] 0.0
          %342 = vst [vmem:[#allocation2 + $0xc0] sm:$0xff] 0.0
          %343 = vst [vmem:[#allocation2 + $0xc8] sm:$0xff] 0.0
          %344 = vst [vmem:[#allocation2 + $0xd0] sm:$0xff] 0.0
          %345 = vst [vmem:[#allocation2 + $0xd8] sm:$0xff] 0.0
          %346 = vst [vmem:[#allocation2 + $0xe0] sm:$0xff] 0.0
          %347 = vst [vmem:[#allocation2 + $0xe8] sm:$0xff] 0.0
          %348 = vst [vmem:[#allocation2 + $0xf0] sm:$0xff] 0.0
          %349 = vst [vmem:[#allocation2 + $0xf8] sm:$0xff] 0.0
        $region52: #{_lambda_.4} parent=35 // pred_fallthru
          _
        %v350 = vld [vmem:[#allocation2] sm:$0xff]
        %v351 = vld [vmem:[#allocation2 + $0x8] sm:$0xff]
        %v352 = vld [vmem:[#allocation2 + $0x10] sm:$0xff]
        %v353 = vld [vmem:[#allocation2 + $0x18] sm:$0xff]
        %v354 = vld [vmem:[#allocation2 + $0x20] sm:$0xff]
        %v355 = vld [vmem:[#allocation2 + $0x28] sm:$0xff]
        %v356 = vld [vmem:[#allocation2 + $0x30] sm:$0xff]
        %v357 = vld [vmem:[#allocation2 + $0x38] sm:$0xff]
        %v358 = vld [vmem:[#allocation2 + $0x40] sm:$0xff]
        %v359 = vld [vmem:[#allocation2 + $0x48] sm:$0xff]
        %v360 = vld [vmem:[#allocation2 + $0x50] sm:$0xff]
        %v361 = vld [vmem:[#allocation2 + $0x58] sm:$0xff]
        %v362 = vld [vmem:[#allocation2 + $0x60] sm:$0xff]
        %v363 = vld [vmem:[#allocation2 + $0x68] sm:$0xff]
        %v364 = vld [vmem:[#allocation2 + $0x70] sm:$0xff]
        %v365 = vld [vmem:[#allocation2 + $0x78] sm:$0xff]
        %v366 = vld [vmem:[#allocation2 + $0x80] sm:$0xff]
        %v367 = vld [vmem:[#allocation2 + $0x88] sm:$0xff]
        %v368 = vld [vmem:[#allocation2 + $0x90] sm:$0xff]
        %v369 = vld [vmem:[#allocation2 + $0x98] sm:$0xff]
        %v370 = vld [vmem:[#allocation2 + $0xa0] sm:$0xff]
        %v371 = vld [vmem:[#allocation2 + $0xa8] sm:$0xff]
        %v372 = vld [vmem:[#allocation2 + $0xb0] sm:$0xff]
        %v373 = vld [vmem:[#allocation2 + $0xb8] sm:$0xff]
        %v374 = vld [vmem:[#allocation2 + $0xc0] sm:$0xff]
        %v375 = vld [vmem:[#allocation2 + $0xc8] sm:$0xff]
        %v376 = vld [vmem:[#allocation2 + $0xd0] sm:$0xff]
        %v377 = vld [vmem:[#allocation2 + $0xd8] sm:$0xff]
        %v378 = vld [vmem:[#allocation2 + $0xe0] sm:$0xff]
        %v379 = vld [vmem:[#allocation2 + $0xe8] sm:$0xff]
        %v380 = vld [vmem:[#allocation2 + $0xf0] sm:$0xff]
        %v381 = vld [vmem:[#allocation2 + $0xf8] sm:$0xff]
        %v382 = vld [vmem:[%s300] sm:$0xff]
        %v383 = vld [vmem:[%s300 + $0x8] sm:$0xff]
        %v384 = vld [vmem:[%s300 + $0x10] sm:$0xff]
        %v385 = vld [vmem:[%s300 + $0x18] sm:$0xff]
        %v386 = vld [vmem:[%s300 + $0x20] sm:$0xff]
        %v387 = vld [vmem:[%s300 + $0x28] sm:$0xff]
        %v388 = vld [vmem:[%s300 + $0x30] sm:$0xff]
        %v389 = vld [vmem:[%s300 + $0x38] sm:$0xff]
        %v390 = vld [vmem:[%s300 + $0x40] sm:$0xff]
        %v391 = vld [vmem:[%s300 + $0x48] sm:$0xff]
        %v392 = vld [vmem:[%s300 + $0x50] sm:$0xff]
        %v393 = vld [vmem:[%s300 + $0x58] sm:$0xff]
        %v394 = vld [vmem:[%s300 + $0x60] sm:$0xff]
        %v395 = vld [vmem:[%s300 + $0x68] sm:$0xff]
        %v396 = vld [vmem:[%s300 + $0x70] sm:$0xff]
        %v397 = vld [vmem:[%s300 + $0x78] sm:$0xff]
        %v398 = vld [vmem:[%s300 + $0x80] sm:$0xff]
        %v399 = vld [vmem:[%s300 + $0x88] sm:$0xff]
        %v400 = vld [vmem:[%s300 + $0x90] sm:$0xff]
        %v401 = vld [vmem:[%s300 + $0x98] sm:$0xff]
        %v402 = vld [vmem:[%s300 + $0xa0] sm:$0xff]
        %v403 = vld [vmem:[%s300 + $0xa8] sm:$0xff]
        %v404 = vld [vmem:[%s300 + $0xb0] sm:$0xff]
        %v405 = vld [vmem:[%s300 + $0xb8] sm:$0xff]
        %v406 = vld [vmem:[%s300 + $0xc0] sm:$0xff]
        %v407 = vld [vmem:[%s300 + $0xc8] sm:$0xff]
        %v408 = vld [vmem:[%s300 + $0xd0] sm:$0xff]
        %v409 = vld [vmem:[%s300 + $0xd8] sm:$0xff]
        %v410 = vld [vmem:[%s300 + $0xe0] sm:$0xff]
        %v411 = vld [vmem:[%s300 + $0xe8] sm:$0xff]
        %v412 = vld [vmem:[%s300 + $0xf0] sm:$0xff]
        %v413 = vld [vmem:[%s300 + $0xf8] sm:$0xff]
        %v414 = vld [vmem:[#allocation3] sm:$0xf]
        %v415 = vld [vmem:[#allocation3 + $0x4] sm:$0xf]
        %v416 = vld [vmem:[#allocation3 + $0x8] sm:$0xf]
        %v417 = vld [vmem:[#allocation3 + $0xc] sm:$0xf]
        %v418 = vld [vmem:[#allocation3 + $0x10] sm:$0xf]
        %v419 = vld [vmem:[#allocation3 + $0x14] sm:$0xf]
        %v420 = vld [vmem:[#allocation3 + $0x18] sm:$0xf]
        %v421 = vld [vmem:[#allocation3 + $0x1c] sm:$0xf]
        %v422 = vld [vmem:[#allocation3 + $0x20] sm:$0xf]
        %v423 = vld [vmem:[#allocation3 + $0x24] sm:$0xf]
        %v424 = vld [vmem:[#allocation3 + $0x28] sm:$0xf]
        %v425 = vld [vmem:[#allocation3 + $0x2c] sm:$0xf]
        %v426 = vld [vmem:[#allocation3 + $0x30] sm:$0xf]
        %v427 = vld [vmem:[#allocation3 + $0x34] sm:$0xf]
        %v428 = vld [vmem:[#allocation3 + $0x38] sm:$0xf]
        %v429 = vld [vmem:[#allocation3 + $0x3c] sm:$0xf]
        %v430 = vld [vmem:[#allocation3 + $0x40] sm:$0xf]
        %v431 = vld [vmem:[#allocation3 + $0x44] sm:$0xf]
        %v432 = vld [vmem:[#allocation3 + $0x48] sm:$0xf]
        %v433 = vld [vmem:[#allocation3 + $0x4c] sm:$0xf]
        %v434 = vld [vmem:[#allocation3 + $0x50] sm:$0xf]
        %v435 = vld [vmem:[#allocation3 + $0x54] sm:$0xf]
        %v436 = vld [vmem:[#allocation3 + $0x58] sm:$0xf]
        %v437 = vld [vmem:[#allocation3 + $0x5c] sm:$0xf]
        %v438 = vld [vmem:[#allocation3 + $0x60] sm:$0xf]
        %v439 = vld [vmem:[#allocation3 + $0x64] sm:$0xf]
        %v440 = vld [vmem:[#allocation3 + $0x68] sm:$0xf]
        %v441 = vld [vmem:[#allocation3 + $0x6c] sm:$0xf]
        %v442 = vld [vmem:[#allocation3 + $0x70] sm:$0xf]
        %v443 = vld [vmem:[#allocation3 + $0x74] sm:$0xf]
        %v444 = vld [vmem:[#allocation3 + $0x78] sm:$0xf]
        %v445 = vld [vmem:[#allocation3 + $0x7c] sm:$0xf]
        %v478 = vunpack.c.l.b16 %v382
        %v479 = vunpack.c.h.b16 %v382
        %v480 = vunpack.c.l.b16 %v383
        %v481 = vunpack.c.h.b16 %v383
        %v482 = vunpack.c.l.b16 %v384
        %v483 = vunpack.c.h.b16 %v384
        %v484 = vunpack.c.l.b16 %v385
        %v485 = vunpack.c.h.b16 %v385
        %v486 = vunpack.c.l.b16 %v386
        %v487 = vunpack.c.h.b16 %v386
        %v488 = vunpack.c.l.b16 %v387
        %v489 = vunpack.c.h.b16 %v387
        %v490 = vunpack.c.l.b16 %v388
        %v491 = vunpack.c.h.b16 %v388
        %v492 = vunpack.c.l.b16 %v389
        %v493 = vunpack.c.h.b16 %v389
        %v494 = vunpack.c.l.b16 %v390
        %v495 = vunpack.c.h.b16 %v390
        %v496 = vunpack.c.l.b16 %v391
        %v497 = vunpack.c.h.b16 %v391
        %v498 = vunpack.c.l.b16 %v392
        %v499 = vunpack.c.h.b16 %v392
        %v500 = vunpack.c.l.b16 %v393
        %v501 = vunpack.c.h.b16 %v393
        %v502 = vunpack.c.l.b16 %v394
        %v503 = vunpack.c.h.b16 %v394
        %v504 = vunpack.c.l.b16 %v395
        %v505 = vunpack.c.h.b16 %v395
        %v506 = vunpack.c.l.b16 %v396
        %v507 = vunpack.c.h.b16 %v396
        %v508 = vunpack.c.l.b16 %v397
        %v509 = vunpack.c.h.b16 %v397
        %v510 = vunpack.c.l.b16 %v398
        %v511 = vunpack.c.h.b16 %v398
        %v512 = vunpack.c.l.b16 %v399
        %v513 = vunpack.c.h.b16 %v399
        %v514 = vunpack.c.l.b16 %v400
        %v515 = vunpack.c.h.b16 %v400
        %v516 = vunpack.c.l.b16 %v401
        %v517 = vunpack.c.h.b16 %v401
        %v518 = vunpack.c.l.b16 %v402
        %v519 = vunpack.c.h.b16 %v402
        %v520 = vunpack.c.l.b16 %v403
        %v521 = vunpack.c.h.b16 %v403
        %v522 = vunpack.c.l.b16 %v404
        %v523 = vunpack.c.h.b16 %v404
        %v524 = vunpack.c.l.b16 %v405
        %v525 = vunpack.c.h.b16 %v405
        %v526 = vunpack.c.l.b16 %v406
        %v527 = vunpack.c.h.b16 %v406
        %v528 = vunpack.c.l.b16 %v407
        %v529 = vunpack.c.h.b16 %v407
        %v530 = vunpack.c.l.b16 %v408
        %v531 = vunpack.c.h.b16 %v408
        %v532 = vunpack.c.l.b16 %v409
        %v533 = vunpack.c.h.b16 %v409
        %v534 = vunpack.c.l.b16 %v410
        %v535 = vunpack.c.h.b16 %v410
        %v536 = vunpack.c.l.b16 %v411
        %v537 = vunpack.c.h.b16 %v411
        %v538 = vunpack.c.l.b16 %v412
        %v539 = vunpack.c.h.b16 %v412
        %v540 = vunpack.c.l.b16 %v413
        %v541 = vunpack.c.h.b16 %v413
        %v542 = vpack.c.b16 %v480, %v478
        %v543 = vpack.c.b16 %v481, %v479
        %v544 = vpack.c.b16 %v484, %v482
        %v545 = vpack.c.b16 %v485, %v483
        %v546 = vpack.c.b16 %v488, %v486
        %v547 = vpack.c.b16 %v489, %v487
        %v548 = vpack.c.b16 %v492, %v490
        %v549 = vpack.c.b16 %v493, %v491
        %v550 = vpack.c.b16 %v496, %v494
        %v551 = vpack.c.b16 %v497, %v495
        %v552 = vpack.c.b16 %v500, %v498
        %v553 = vpack.c.b16 %v501, %v499
        %v554 = vpack.c.b16 %v504, %v502
        %v555 = vpack.c.b16 %v505, %v503
        %v556 = vpack.c.b16 %v508, %v506
        %v557 = vpack.c.b16 %v509, %v507
        %v558 = vpack.c.b16 %v512, %v510
        %v559 = vpack.c.b16 %v513, %v511
        %v560 = vpack.c.b16 %v516, %v514
        %v561 = vpack.c.b16 %v517, %v515
        %v562 = vpack.c.b16 %v520, %v518
        %v563 = vpack.c.b16 %v521, %v519
        %v564 = vpack.c.b16 %v524, %v522
        %v565 = vpack.c.b16 %v525, %v523
        %v566 = vpack.c.b16 %v528, %v526
        %v567 = vpack.c.b16 %v529, %v527
        %v568 = vpack.c.b16 %v532, %v530
        %v569 = vpack.c.b16 %v533, %v531
        %v570 = vpack.c.b16 %v536, %v534
        %v571 = vpack.c.b16 %v537, %v535
        %v572 = vpack.c.b16 %v540, %v538
        %v573 = vpack.c.b16 %v541, %v539
        %v638 = vunpack.c.l.b16 %v414
        %v639 = vunpack.c.l.b16 %v415
        %v640 = vunpack.c.l.b16 %v416
        %v641 = vunpack.c.l.b16 %v417
        %v642 = vunpack.c.l.b16 %v418
        %v643 = vunpack.c.l.b16 %v419
        %v644 = vunpack.c.l.b16 %v420
        %v645 = vunpack.c.l.b16 %v421
        %v646 = vunpack.c.l.b16 %v422
        %v647 = vunpack.c.l.b16 %v423
        %v648 = vunpack.c.l.b16 %v424
        %v649 = vunpack.c.l.b16 %v425
        %v650 = vunpack.c.l.b16 %v426
        %v651 = vunpack.c.l.b16 %v427
        %v652 = vunpack.c.l.b16 %v428
        %v653 = vunpack.c.l.b16 %v429
        %v654 = vunpack.c.l.b16 %v430
        %v655 = vunpack.c.l.b16 %v431
        %v656 = vunpack.c.l.b16 %v432
        %v657 = vunpack.c.l.b16 %v433
        %v658 = vunpack.c.l.b16 %v434
        %v659 = vunpack.c.l.b16 %v435
        %v660 = vunpack.c.l.b16 %v436
        %v661 = vunpack.c.l.b16 %v437
        %v662 = vunpack.c.l.b16 %v438
        %v663 = vunpack.c.l.b16 %v439
        %v664 = vunpack.c.l.b16 %v440
        %v665 = vunpack.c.l.b16 %v441
        %v666 = vunpack.c.l.b16 %v442
        %v667 = vunpack.c.l.b16 %v443
        %v668 = vunpack.c.l.b16 %v444
        %v669 = vunpack.c.l.b16 %v445
        %v670 = vpack.c.b16 %v639, %v638
        %v671 = vpack.c.b16 %v641, %v640
        %v672 = vpack.c.b16 %v643, %v642
        %v673 = vpack.c.b16 %v645, %v644
        %v674 = vpack.c.b16 %v647, %v646
        %v675 = vpack.c.b16 %v649, %v648
        %v676 = vpack.c.b16 %v651, %v650
        %v677 = vpack.c.b16 %v653, %v652
        %v678 = vpack.c.b16 %v655, %v654
        %v679 = vpack.c.b16 %v657, %v656
        %v680 = vpack.c.b16 %v659, %v658
        %v681 = vpack.c.b16 %v661, %v660
        %v682 = vpack.c.b16 %v663, %v662
        %v683 = vpack.c.b16 %v665, %v664
        %v684 = vpack.c.b16 %v667, %v666
        %v685 = vpack.c.b16 %v669, %v668
        %702 = vmatprep.subr.bf16.mxu0 0
        %703 = vmatpush1.bf16.msra.mxu0 %v677
        %704 = vmatprep.subr.bf16.mxu0 0
        %705 = vmatpush1.bf16.msra.mxu0 %v676
        %706 = vmatprep.subr.bf16.mxu0 0
        %707 = vmatpush1.bf16.msra.mxu0 %v675
        %708 = vmatprep.subr.bf16.mxu0 0
        %709 = vmatpush1.bf16.msra.mxu0 %v674
        %710 = vmatprep.subr.bf16.mxu0 0
        %711 = vmatpush1.bf16.msra.mxu0 %v673
        %712 = vmatprep.subr.bf16.mxu0 0
        %713 = vmatpush1.bf16.msra.mxu0 %v672
        %714 = vmatprep.subr.bf16.mxu0 0
        %715 = vmatpush1.bf16.msra.mxu0 %v671
        %716 = vmatprep.subr.bf16.mxu0 0
        %717 = vmatpush1.bf16.msra.mxu0 %v670
        %718 = vmatprep.subr.bf16.mxu0 0
        %719 = vmatpush2.bf16.msra.mxu0 %v685
        %720 = vmatprep.subr.bf16.mxu0 0
        %721 = vmatpush2.bf16.msra.mxu0 %v684
        %722 = vmatprep.subr.bf16.mxu0 0
        %723 = vmatpush2.bf16.msra.mxu0 %v683
        %724 = vmatprep.subr.bf16.mxu0 0
        %725 = vmatpush2.bf16.msra.mxu0 %v682
        %726 = vmatprep.subr.bf16.mxu0 0
        %727 = vmatpush2.bf16.msra.mxu0 %v681
        %728 = vmatprep.subr.bf16.mxu0 0
        %729 = vmatpush2.bf16.msra.mxu0 %v680
        %730 = vmatprep.subr.bf16.mxu0 0
        %731 = vmatpush2.bf16.msra.mxu0 %v679
        %732 = vmatprep.subr.bf16.mxu0 0
        %733 = vmatpush2.bf16.msra.mxu0 %v678
        %734 = vmatprep.mubr.bf16.mxu0 %v543
        %735 = vmatmul.mubr.bf16.gmra.mxu0 %v542
        %v736 = vpop.f32.mrf.mxu0
        %v737 = vadd.f32 0.0, %v736
        %v738 = vpop.f32.mrf.mxu0
        %v739 = vpop.f32.mrf.mxu0
        %v740 = vadd.f32 0.0, %v739
        %v741 = vpop.f32.mrf.mxu0
        %742 = vmatprep.mubr.bf16.mxu0 %v545
        %743 = vmatmul.mubr.bf16.gmra.mxu0 %v544
        %v744 = vpop.f32.mrf.mxu0
        %v745 = vadd.f32 0.0, %v744
        %v746 = vpop.f32.mrf.mxu0
        %v747 = vpop.f32.mrf.mxu0
        %v748 = vadd.f32 0.0, %v747
        %v749 = vpop.f32.mrf.mxu0
        %750 = vmatprep.mubr.bf16.mxu0 %v547
        %751 = vmatmul.mubr.bf16.gmra.mxu0 %v546
        %v752 = vpop.f32.mrf.mxu0
        %v753 = vadd.f32 0.0, %v752
        %v754 = vpop.f32.mrf.mxu0
        %v755 = vpop.f32.mrf.mxu0
        %v756 = vadd.f32 0.0, %v755
        %v757 = vpop.f32.mrf.mxu0
        %758 = vmatprep.mubr.bf16.mxu0 %v549
        %759 = vmatmul.mubr.bf16.gmra.mxu0 %v548
        %v760 = vpop.f32.mrf.mxu0
        %v761 = vadd.f32 0.0, %v760
        %v762 = vpop.f32.mrf.mxu0
        %v763 = vpop.f32.mrf.mxu0
        %v764 = vadd.f32 0.0, %v763
        %v765 = vpop.f32.mrf.mxu0
        %766 = vmatprep.mubr.bf16.mxu0 %v551
        %767 = vmatmul.mubr.bf16.gmra.mxu0 %v550
        %v768 = vpop.f32.mrf.mxu0
        %v769 = vadd.f32 0.0, %v768
        %v770 = vpop.f32.mrf.mxu0
        %v771 = vpop.f32.mrf.mxu0
        %v772 = vadd.f32 0.0, %v771
        %v773 = vpop.f32.mrf.mxu0
        %774 = vmatprep.mubr.bf16.mxu0 %v553
        %775 = vmatmul.mubr.bf16.gmra.mxu0 %v552
        %v776 = vpop.f32.mrf.mxu0
        %v777 = vadd.f32 0.0, %v776
        %v778 = vpop.f32.mrf.mxu0
        %v779 = vpop.f32.mrf.mxu0
        %v780 = vadd.f32 0.0, %v779
        %v781 = vpop.f32.mrf.mxu0
        %782 = vmatprep.mubr.bf16.mxu0 %v555
        %783 = vmatmul.mubr.bf16.gmra.mxu0 %v554
        %v784 = vpop.f32.mrf.mxu0
        %v785 = vadd.f32 0.0, %v784
        %v786 = vpop.f32.mrf.mxu0
        %v787 = vpop.f32.mrf.mxu0
        %v788 = vadd.f32 0.0, %v787
        %v789 = vpop.f32.mrf.mxu0
        %790 = vmatprep.mubr.bf16.mxu0 %v557
        %791 = vmatmul.mubr.bf16.gmra.mxu0 %v556
        %v792 = vpop.f32.mrf.mxu0
        %v793 = vadd.f32 0.0, %v792
        %v794 = vpop.f32.mrf.mxu0
        %v795 = vpop.f32.mrf.mxu0
        %v796 = vadd.f32 0.0, %v795
        %v797 = vpop.f32.mrf.mxu0
        %798 = vmatprep.mubr.bf16.mxu0 %v559
        %799 = vmatmul.mubr.bf16.gmra.mxu0 %v558
        %v800 = vpop.f32.mrf.mxu0
        %v801 = vadd.f32 0.0, %v800
        %v802 = vpop.f32.mrf.mxu0
        %v803 = vpop.f32.mrf.mxu0
        %v804 = vadd.f32 0.0, %v803
        %v805 = vpop.f32.mrf.mxu0
        %806 = vmatprep.mubr.bf16.mxu0 %v561
        %807 = vmatmul.mubr.bf16.gmra.mxu0 %v560
        %v808 = vpop.f32.mrf.mxu0
        %v809 = vadd.f32 0.0, %v808
        %v810 = vpop.f32.mrf.mxu0
        %v811 = vpop.f32.mrf.mxu0
        %v812 = vadd.f32 0.0, %v811
        %v813 = vpop.f32.mrf.mxu0
        %814 = vmatprep.mubr.bf16.mxu0 %v563
        %815 = vmatmul.mubr.bf16.gmra.mxu0 %v562
        %v816 = vpop.f32.mrf.mxu0
        %v817 = vadd.f32 0.0, %v816
        %v818 = vpop.f32.mrf.mxu0
        %v819 = vpop.f32.mrf.mxu0
        %v820 = vadd.f32 0.0, %v819
        %v821 = vpop.f32.mrf.mxu0
        %822 = vmatprep.mubr.bf16.mxu0 %v565
        %823 = vmatmul.mubr.bf16.gmra.mxu0 %v564
        %v824 = vpop.f32.mrf.mxu0
        %v825 = vadd.f32 0.0, %v824
        %v826 = vpop.f32.mrf.mxu0
        %v827 = vpop.f32.mrf.mxu0
        %v828 = vadd.f32 0.0, %v827
        %v829 = vpop.f32.mrf.mxu0
        %830 = vmatprep.mubr.bf16.mxu0 %v567
        %831 = vmatmul.mubr.bf16.gmra.mxu0 %v566
        %v832 = vpop.f32.mrf.mxu0
        %v833 = vadd.f32 0.0, %v832
        %v834 = vpop.f32.mrf.mxu0
        %v835 = vpop.f32.mrf.mxu0
        %v836 = vadd.f32 0.0, %v835
        %v837 = vpop.f32.mrf.mxu0
        %838 = vmatprep.mubr.bf16.mxu0 %v569
        %839 = vmatmul.mubr.bf16.gmra.mxu0 %v568
        %v840 = vpop.f32.mrf.mxu0
        %v841 = vadd.f32 0.0, %v840
        %v842 = vpop.f32.mrf.mxu0
        %v843 = vpop.f32.mrf.mxu0
        %v844 = vadd.f32 0.0, %v843
        %v845 = vpop.f32.mrf.mxu0
        %846 = vmatprep.mubr.bf16.mxu0 %v571
        %847 = vmatmul.mubr.bf16.gmra.mxu0 %v570
        %v848 = vpop.f32.mrf.mxu0
        %v849 = vadd.f32 0.0, %v848
        %v850 = vpop.f32.mrf.mxu0
        %v851 = vpop.f32.mrf.mxu0
        %v852 = vadd.f32 0.0, %v851
        %v853 = vpop.f32.mrf.mxu0
        %854 = vmatprep.mubr.bf16.mxu0 %v573
        %855 = vmatmul.mubr.bf16.gmra.mxu0 %v572
        %v856 = vpop.f32.mrf.mxu0
        %v857 = vadd.f32 0.0, %v856
        %v858 = vpop.f32.mrf.mxu0
        %v859 = vpop.f32.mrf.mxu0
        %v860 = vadd.f32 0.0, %v859
        %v861 = vpop.f32.mrf.mxu0
        %862 = vdwg.mxu0
        %v863 = vadd.f32 %v350, %v737
        %v864 = vadd.f32 %v351, %v740
        %v865 = vadd.f32 %v352, %v745
        %v866 = vadd.f32 %v353, %v748
        %v867 = vadd.f32 %v354, %v753
        %v868 = vadd.f32 %v355, %v756
        %v869 = vadd.f32 %v356, %v761
        %v870 = vadd.f32 %v357, %v764
        %v871 = vadd.f32 %v358, %v769
        %v872 = vadd.f32 %v359, %v772
        %v873 = vadd.f32 %v360, %v777
        %v874 = vadd.f32 %v361, %v780
        %v875 = vadd.f32 %v362, %v785
        %v876 = vadd.f32 %v363, %v788
        %v877 = vadd.f32 %v364, %v793
        %v878 = vadd.f32 %v365, %v796
        %v879 = vadd.f32 %v366, %v801
        %v880 = vadd.f32 %v367, %v804
        %v881 = vadd.f32 %v368, %v809
        %v882 = vadd.f32 %v369, %v812
        %v883 = vadd.f32 %v370, %v817
        %v884 = vadd.f32 %v371, %v820
        %v885 = vadd.f32 %v372, %v825
        %v886 = vadd.f32 %v373, %v828
        %v887 = vadd.f32 %v374, %v833
        %v888 = vadd.f32 %v375, %v836
        %v889 = vadd.f32 %v376, %v841
        %v890 = vadd.f32 %v377, %v844
        %v891 = vadd.f32 %v378, %v849
        %v892 = vadd.f32 %v379, %v852
        %v893 = vadd.f32 %v380, %v857
        %v894 = vadd.f32 %v381, %v860
        %895 = vst [vmem:[#allocation2] sm:$0xff] %v863
        %896 = vst [vmem:[#allocation2 + $0x8] sm:$0xff] %v864
        %897 = vst [vmem:[#allocation2 + $0x10] sm:$0xff] %v865
        %898 = vst [vmem:[#allocation2 + $0x18] sm:$0xff] %v866
        %899 = vst [vmem:[#allocation2 + $0x20] sm:$0xff] %v867
        %900 = vst [vmem:[#allocation2 + $0x28] sm:$0xff] %v868
        %901 = vst [vmem:[#allocation2 + $0x30] sm:$0xff] %v869
        %902 = vst [vmem:[#allocation2 + $0x38] sm:$0xff] %v870
        %903 = vst [vmem:[#allocation2 + $0x40] sm:$0xff] %v871
        %904 = vst [vmem:[#allocation2 + $0x48] sm:$0xff] %v872
        %905 = vst [vmem:[#allocation2 + $0x50] sm:$0xff] %v873
        %906 = vst [vmem:[#allocation2 + $0x58] sm:$0xff] %v874
        %907 = vst [vmem:[#allocation2 + $0x60] sm:$0xff] %v875
        %908 = vst [vmem:[#allocation2 + $0x68] sm:$0xff] %v876
        %909 = vst [vmem:[#allocation2 + $0x70] sm:$0xff] %v877
        %910 = vst [vmem:[#allocation2 + $0x78] sm:$0xff] %v878
        %911 = vst [vmem:[#allocation2 + $0x80] sm:$0xff] %v879
        %912 = vst [vmem:[#allocation2 + $0x88] sm:$0xff] %v880
        %913 = vst [vmem:[#allocation2 + $0x90] sm:$0xff] %v881
        %914 = vst [vmem:[#allocation2 + $0x98] sm:$0xff] %v882
        %915 = vst [vmem:[#allocation2 + $0xa0] sm:$0xff] %v883
        %916 = vst [vmem:[#allocation2 + $0xa8] sm:$0xff] %v884
        %917 = vst [vmem:[#allocation2 + $0xb0] sm:$0xff] %v885
        %918 = vst [vmem:[#allocation2 + $0xb8] sm:$0xff] %v886
        %919 = vst [vmem:[#allocation2 + $0xc0] sm:$0xff] %v887
        %920 = vst [vmem:[#allocation2 + $0xc8] sm:$0xff] %v888
        %921 = vst [vmem:[#allocation2 + $0xd0] sm:$0xff] %v889
        %922 = vst [vmem:[#allocation2 + $0xd8] sm:$0xff] %v890
        %923 = vst [vmem:[#allocation2 + $0xe0] sm:$0xff] %v891
        %924 = vst [vmem:[#allocation2 + $0xe8] sm:$0xff] %v892
        %925 = vst [vmem:[#allocation2 + $0xf0] sm:$0xff] %v893
        %926 = vst [vmem:[#allocation2 + $0xf8] sm:$0xff] %v894
        // Predicated region
        $region53: #{_lambda_.4} parent=35 // pred_check
          %p927 = pneg %p314
        $region54: #{_lambda_.4} parent=35 // pred_check_branch
          %929 = sbr.rel (%p927) target = $region56
        $region55: #{_lambda_.4} parent=35 // pred_region
          %v930 = vld [vmem:[#allocation2] sm:$0xff]
          %v931 = vld [vmem:[#allocation2 + $0x8] sm:$0xff]
          %v932 = vld [vmem:[#allocation2 + $0x10] sm:$0xff]
          %v933 = vld [vmem:[#allocation2 + $0x18] sm:$0xff]
          %v934 = vld [vmem:[#allocation2 + $0x20] sm:$0xff]
          %v935 = vld [vmem:[#allocation2 + $0x28] sm:$0xff]
          %v936 = vld [vmem:[#allocation2 + $0x30] sm:$0xff]
          %v937 = vld [vmem:[#allocation2 + $0x38] sm:$0xff]
          %v938 = vld [vmem:[#allocation2 + $0x40] sm:$0xff]
          %v939 = vld [vmem:[#allocation2 + $0x48] sm:$0xff]
          %v940 = vld [vmem:[#allocation2 + $0x50] sm:$0xff]
          %v941 = vld [vmem:[#allocation2 + $0x58] sm:$0xff]
          %v942 = vld [vmem:[#allocation2 + $0x60] sm:$0xff]
          %v943 = vld [vmem:[#allocation2 + $0x68] sm:$0xff]
          %v944 = vld [vmem:[#allocation2 + $0x70] sm:$0xff]
          %v945 = vld [vmem:[#allocation2 + $0x78] sm:$0xff]
          %v946 = vld [vmem:[#allocation2 + $0x80] sm:$0xff]
          %v947 = vld [vmem:[#allocation2 + $0x88] sm:$0xff]
          %v948 = vld [vmem:[#allocation2 + $0x90] sm:$0xff]
          %v949 = vld [vmem:[#allocation2 + $0x98] sm:$0xff]
          %v950 = vld [vmem:[#allocation2 + $0xa0] sm:$0xff]
          %v951 = vld [vmem:[#allocation2 + $0xa8] sm:$0xff]
          %v952 = vld [vmem:[#allocation2 + $0xb0] sm:$0xff]
          %v953 = vld [vmem:[#allocation2 + $0xb8] sm:$0xff]
          %v954 = vld [vmem:[#allocation2 + $0xc0] sm:$0xff]
          %v955 = vld [vmem:[#allocation2 + $0xc8] sm:$0xff]
          %v956 = vld [vmem:[#allocation2 + $0xd0] sm:$0xff]
          %v957 = vld [vmem:[#allocation2 + $0xd8] sm:$0xff]
          %v958 = vld [vmem:[#allocation2 + $0xe0] sm:$0xff]
          %v959 = vld [vmem:[#allocation2 + $0xe8] sm:$0xff]
          %v960 = vld [vmem:[#allocation2 + $0xf0] sm:$0xff]
          %v961 = vld [vmem:[#allocation2 + $0xf8] sm:$0xff]
          %v962 = vld [vmem:[#allocation5] sm:$0x1]
          %v964 = vlaneseq
          %v965 = vshrl.u32 %v964, 7
          %v966 = vsub.s32 0, %v965
          %v967 = vrot.slane %v962, %v966
          %v969 = vmul.f32 %v930, %v967
          %v970 = vmul.f32 %v931, %v967
          %v971 = vmul.f32 %v932, %v967
          %v972 = vmul.f32 %v933, %v967
          %v973 = vmul.f32 %v934, %v967
          %v974 = vmul.f32 %v935, %v967
          %v975 = vmul.f32 %v936, %v967
          %v976 = vmul.f32 %v937, %v967
          %v977 = vmul.f32 %v938, %v967
          %v978 = vmul.f32 %v939, %v967
          %v979 = vmul.f32 %v940, %v967
          %v980 = vmul.f32 %v941, %v967
          %v981 = vmul.f32 %v942, %v967
          %v982 = vmul.f32 %v943, %v967
          %v983 = vmul.f32 %v944, %v967
          %v984 = vmul.f32 %v945, %v967
          %v985 = vmul.f32 %v946, %v967
          %v986 = vmul.f32 %v947, %v967
          %v987 = vmul.f32 %v948, %v967
          %v988 = vmul.f32 %v949, %v967
          %v989 = vmul.f32 %v950, %v967
          %v990 = vmul.f32 %v951, %v967
          %v991 = vmul.f32 %v952, %v967
          %v992 = vmul.f32 %v953, %v967
          %v993 = vmul.f32 %v954, %v967
          %v994 = vmul.f32 %v955, %v967
          %v995 = vmul.f32 %v956, %v967
          %v996 = vmul.f32 %v957, %v967
          %v997 = vmul.f32 %v958, %v967
          %v998 = vmul.f32 %v959, %v967
          %v999 = vmul.f32 %v960, %v967
          %v1000 = vmul.f32 %v961, %v967
          %v1001 = vld [vmem:[#allocation7] sm:$0x1]
          %v1003 = vlaneseq
          %v1004 = vshrl.u32 %v1003, 7
          %v1005 = vsub.s32 0, %v1004
          %v1006 = vrot.slane %v1001, %v1005
          %v1008 = vadd.f32 %v969, %v1006
          %v1009 = vadd.f32 %v970, %v1006
          %v1010 = vadd.f32 %v971, %v1006
          %v1011 = vadd.f32 %v972, %v1006
          %v1012 = vadd.f32 %v973, %v1006
          %v1013 = vadd.f32 %v974, %v1006
          %v1014 = vadd.f32 %v975, %v1006
          %v1015 = vadd.f32 %v976, %v1006
          %v1016 = vadd.f32 %v977, %v1006
          %v1017 = vadd.f32 %v978, %v1006
          %v1018 = vadd.f32 %v979, %v1006
          %v1019 = vadd.f32 %v980, %v1006
          %v1020 = vadd.f32 %v981, %v1006
          %v1021 = vadd.f32 %v982, %v1006
          %v1022 = vadd.f32 %v983, %v1006
          %v1023 = vadd.f32 %v984, %v1006
          %v1024 = vadd.f32 %v985, %v1006
          %v1025 = vadd.f32 %v986, %v1006
          %v1026 = vadd.f32 %v987, %v1006
          %v1027 = vadd.f32 %v988, %v1006
          %v1028 = vadd.f32 %v989, %v1006
          %v1029 = vadd.f32 %v990, %v1006
          %v1030 = vadd.f32 %v991, %v1006
          %v1031 = vadd.f32 %v992, %v1006
          %v1032 = vadd.f32 %v993, %v1006
          %v1033 = vadd.f32 %v994, %v1006
          %v1034 = vadd.f32 %v995, %v1006
          %v1035 = vadd.f32 %v996, %v1006
          %v1036 = vadd.f32 %v997, %v1006
          %v1037 = vadd.f32 %v998, %v1006
          %v1038 = vadd.f32 %v999, %v1006
          %v1039 = vadd.f32 %v1000, %v1006
          %vm1040 = vcmp.gt.f32.partialorder %v1008, 0.0
          %vm1041 = vcmp.gt.f32.partialorder %v1009, 0.0
          %vm1042 = vcmp.gt.f32.partialorder %v1010, 0.0
          %vm1043 = vcmp.gt.f32.partialorder %v1011, 0.0
          %vm1044 = vcmp.gt.f32.partialorder %v1012, 0.0
          %vm1045 = vcmp.gt.f32.partialorder %v1013, 0.0
          %vm1046 = vcmp.gt.f32.partialorder %v1014, 0.0
          %vm1047 = vcmp.gt.f32.partialorder %v1015, 0.0
          %vm1048 = vcmp.gt.f32.partialorder %v1016, 0.0
          %vm1049 = vcmp.gt.f32.partialorder %v1017, 0.0
          %vm1050 = vcmp.gt.f32.partialorder %v1018, 0.0
          %vm1051 = vcmp.gt.f32.partialorder %v1019, 0.0
          %vm1052 = vcmp.gt.f32.partialorder %v1020, 0.0
          %vm1053 = vcmp.gt.f32.partialorder %v1021, 0.0
          %vm1054 = vcmp.gt.f32.partialorder %v1022, 0.0
          %vm1055 = vcmp.gt.f32.partialorder %v1023, 0.0
          %vm1056 = vcmp.gt.f32.partialorder %v1024, 0.0
          %vm1057 = vcmp.gt.f32.partialorder %v1025, 0.0
          %vm1058 = vcmp.gt.f32.partialorder %v1026, 0.0
          %vm1059 = vcmp.gt.f32.partialorder %v1027, 0.0
          %vm1060 = vcmp.gt.f32.partialorder %v1028, 0.0
          %vm1061 = vcmp.gt.f32.partialorder %v1029, 0.0
          %vm1062 = vcmp.gt.f32.partialorder %v1030, 0.0
          %vm1063 = vcmp.gt.f32.partialorder %v1031, 0.0
          %vm1064 = vcmp.gt.f32.partialorder %v1032, 0.0
          %vm1065 = vcmp.gt.f32.partialorder %v1033, 0.0
          %vm1066 = vcmp.gt.f32.partialorder %v1034, 0.0
          %vm1067 = vcmp.gt.f32.partialorder %v1035, 0.0
          %vm1068 = vcmp.gt.f32.partialorder %v1036, 0.0
          %vm1069 = vcmp.gt.f32.partialorder %v1037, 0.0
          %vm1070 = vcmp.gt.f32.partialorder %v1038, 0.0
          %vm1071 = vcmp.gt.f32.partialorder %v1039, 0.0
          %v1072 = vmul.f32 %v1008, 0.1
          %v1073 = vmul.f32 %v1009, 0.1
          %v1074 = vmul.f32 %v1010, 0.1
          %v1075 = vmul.f32 %v1011, 0.1
          %v1076 = vmul.f32 %v1012, 0.1
          %v1077 = vmul.f32 %v1013, 0.1
          %v1078 = vmul.f32 %v1014, 0.1
          %v1079 = vmul.f32 %v1015, 0.1
          %v1080 = vmul.f32 %v1016, 0.1
          %v1081 = vmul.f32 %v1017, 0.1
          %v1082 = vmul.f32 %v1018, 0.1
          %v1083 = vmul.f32 %v1019, 0.1
          %v1084 = vmul.f32 %v1020, 0.1
          %v1085 = vmul.f32 %v1021, 0.1
          %v1086 = vmul.f32 %v1022, 0.1
          %v1087 = vmul.f32 %v1023, 0.1
          %v1088 = vmul.f32 %v1024, 0.1
          %v1089 = vmul.f32 %v1025, 0.1
          %v1090 = vmul.f32 %v1026, 0.1
          %v1091 = vmul.f32 %v1027, 0.1
          %v1092 = vmul.f32 %v1028, 0.1
          %v1093 = vmul.f32 %v1029, 0.1
          %v1094 = vmul.f32 %v1030, 0.1
          %v1095 = vmul.f32 %v1031, 0.1
          %v1096 = vmul.f32 %v1032, 0.1
          %v1097 = vmul.f32 %v1033, 0.1
          %v1098 = vmul.f32 %v1034, 0.1
          %v1099 = vmul.f32 %v1035, 0.1
          %v1100 = vmul.f32 %v1036, 0.1
          %v1101 = vmul.f32 %v1037, 0.1
          %v1102 = vmul.f32 %v1038, 0.1
          %v1103 = vmul.f32 %v1039, 0.1
          %v1104 = vsel %vm1040, %v1008, %v1072
          %v1105 = vsel %vm1041, %v1009, %v1073
          %v1106 = vsel %vm1042, %v1010, %v1074
          %v1107 = vsel %vm1043, %v1011, %v1075
          %v1108 = vsel %vm1044, %v1012, %v1076
          %v1109 = vsel %vm1045, %v1013, %v1077
          %v1110 = vsel %vm1046, %v1014, %v1078
          %v1111 = vsel %vm1047, %v1015, %v1079
          %v1112 = vsel %vm1048, %v1016, %v1080
          %v1113 = vsel %vm1049, %v1017, %v1081
          %v1114 = vsel %vm1050, %v1018, %v1082
          %v1115 = vsel %vm1051, %v1019, %v1083
          %v1116 = vsel %vm1052, %v1020, %v1084
          %v1117 = vsel %vm1053, %v1021, %v1085
          %v1118 = vsel %vm1054, %v1022, %v1086
          %v1119 = vsel %vm1055, %v1023, %v1087
          %v1120 = vsel %vm1056, %v1024, %v1088
          %v1121 = vsel %vm1057, %v1025, %v1089
          %v1122 = vsel %vm1058, %v1026, %v1090
          %v1123 = vsel %vm1059, %v1027, %v1091
          %v1124 = vsel %vm1060, %v1028, %v1092
          %v1125 = vsel %vm1061, %v1029, %v1093
          %v1126 = vsel %vm1062, %v1030, %v1094
          %v1127 = vsel %vm1063, %v1031, %v1095
          %v1128 = vsel %vm1064, %v1032, %v1096
          %v1129 = vsel %vm1065, %v1033, %v1097
          %v1130 = vsel %vm1066, %v1034, %v1098
          %v1131 = vsel %vm1067, %v1035, %v1099
          %v1132 = vsel %vm1068, %v1036, %v1100
          %v1133 = vsel %vm1069, %v1037, %v1101
          %v1134 = vsel %vm1070, %v1038, %v1102
          %v1135 = vsel %vm1071, %v1039, %v1103
          %v1136 = vpack.c.bf16 %v1105, %v1104
          %v1137 = vpack.c.bf16 %v1107, %v1106
          %v1138 = vpack.c.bf16 %v1109, %v1108
          %v1139 = vpack.c.bf16 %v1111, %v1110
          %v1140 = vpack.c.bf16 %v1113, %v1112
          %v1141 = vpack.c.bf16 %v1115, %v1114
          %v1142 = vpack.c.bf16 %v1117, %v1116
          %v1143 = vpack.c.bf16 %v1119, %v1118
          %v1144 = vpack.c.bf16 %v1121, %v1120
          %v1145 = vpack.c.bf16 %v1123, %v1122
          %v1146 = vpack.c.bf16 %v1125, %v1124
          %v1147 = vpack.c.bf16 %v1127, %v1126
          %v1148 = vpack.c.bf16 %v1129, %v1128
          %v1149 = vpack.c.bf16 %v1131, %v1130
          %v1150 = vpack.c.bf16 %v1133, %v1132
          %v1151 = vpack.c.bf16 %v1135, %v1134
          %v1168 = vunpack.c.l.b16 %v1136
          %v1169 = vunpack.c.h.b16 %v1136
          %v1170 = vunpack.c.l.b16 %v1137
          %v1171 = vunpack.c.h.b16 %v1137
          %v1172 = vunpack.c.l.b16 %v1138
          %v1173 = vunpack.c.h.b16 %v1138
          %v1174 = vunpack.c.l.b16 %v1139
          %v1175 = vunpack.c.h.b16 %v1139
          %v1176 = vunpack.c.l.b16 %v1140
          %v1177 = vunpack.c.h.b16 %v1140
          %v1178 = vunpack.c.l.b16 %v1141
          %v1179 = vunpack.c.h.b16 %v1141
          %v1180 = vunpack.c.l.b16 %v1142
          %v1181 = vunpack.c.h.b16 %v1142
          %v1182 = vunpack.c.l.b16 %v1143
          %v1183 = vunpack.c.h.b16 %v1143
          %v1184 = vunpack.c.l.b16 %v1144
          %v1185 = vunpack.c.h.b16 %v1144
          %v1186 = vunpack.c.l.b16 %v1145
          %v1187 = vunpack.c.h.b16 %v1145
          %v1188 = vunpack.c.l.b16 %v1146
          %v1189 = vunpack.c.h.b16 %v1146
          %v1190 = vunpack.c.l.b16 %v1147
          %v1191 = vunpack.c.h.b16 %v1147
          %v1192 = vunpack.c.l.b16 %v1148
          %v1193 = vunpack.c.h.b16 %v1148
          %v1194 = vunpack.c.l.b16 %v1149
          %v1195 = vunpack.c.h.b16 %v1149
          %v1196 = vunpack.c.l.b16 %v1150
          %v1197 = vunpack.c.h.b16 %v1150
          %v1198 = vunpack.c.l.b16 %v1151
          %v1199 = vunpack.c.h.b16 %v1151
          %v1200 = vpack.c.b16 %v1168, %v1168
          %v1201 = vpack.c.b16 %v1169, %v1169
          %v1202 = vpack.c.b16 %v1170, %v1170
          %v1203 = vpack.c.b16 %v1171, %v1171
          %v1204 = vpack.c.b16 %v1172, %v1172
          %v1205 = vpack.c.b16 %v1173, %v1173
          %v1206 = vpack.c.b16 %v1174, %v1174
          %v1207 = vpack.c.b16 %v1175, %v1175
          %v1208 = vpack.c.b16 %v1176, %v1176
          %v1209 = vpack.c.b16 %v1177, %v1177
          %v1210 = vpack.c.b16 %v1178, %v1178
          %v1211 = vpack.c.b16 %v1179, %v1179
          %v1212 = vpack.c.b16 %v1180, %v1180
          %v1213 = vpack.c.b16 %v1181, %v1181
          %v1214 = vpack.c.b16 %v1182, %v1182
          %v1215 = vpack.c.b16 %v1183, %v1183
          %v1216 = vpack.c.b16 %v1184, %v1184
          %v1217 = vpack.c.b16 %v1185, %v1185
          %v1218 = vpack.c.b16 %v1186, %v1186
          %v1219 = vpack.c.b16 %v1187, %v1187
          %v1220 = vpack.c.b16 %v1188, %v1188
          %v1221 = vpack.c.b16 %v1189, %v1189
          %v1222 = vpack.c.b16 %v1190, %v1190
          %v1223 = vpack.c.b16 %v1191, %v1191
          %v1224 = vpack.c.b16 %v1192, %v1192
          %v1225 = vpack.c.b16 %v1193, %v1193
          %v1226 = vpack.c.b16 %v1194, %v1194
          %v1227 = vpack.c.b16 %v1195, %v1195
          %v1228 = vpack.c.b16 %v1196, %v1196
          %v1229 = vpack.c.b16 %v1197, %v1197
          %v1230 = vpack.c.b16 %v1198, %v1198
          %v1231 = vpack.c.b16 %v1199, %v1199
          %1264 = vst [vmem:[%s311] sm:$0xf] %v1200
          %1265 = vst [vmem:[%s311 + $0x4] sm:$0xf] %v1201
          %1266 = vst [vmem:[%s311 + $0x8] sm:$0xf] %v1202
          %1267 = vst [vmem:[%s311 + $0xc] sm:$0xf] %v1203
          %1268 = vst [vmem:[%s311 + $0x10] sm:$0xf] %v1204
          %1269 = vst [vmem:[%s311 + $0x14] sm:$0xf] %v1205
          %1270 = vst [vmem:[%s311 + $0x18] sm:$0xf] %v1206
          %1271 = vst [vmem:[%s311 + $0x1c] sm:$0xf] %v1207
          %1272 = vst [vmem:[%s311 + $0x20] sm:$0xf] %v1208
          %1273 = vst [vmem:[%s311 + $0x24] sm:$0xf] %v1209
          %1274 = vst [vmem:[%s311 + $0x28] sm:$0xf] %v1210
          %1275 = vst [vmem:[%s311 + $0x2c] sm:$0xf] %v1211
          %1276 = vst [vmem:[%s311 + $0x30] sm:$0xf] %v1212
          %1277 = vst [vmem:[%s311 + $0x34] sm:$0xf] %v1213
          %1278 = vst [vmem:[%s311 + $0x38] sm:$0xf] %v1214
          %1279 = vst [vmem:[%s311 + $0x3c] sm:$0xf] %v1215
          %1280 = vst [vmem:[%s311 + $0x40] sm:$0xf] %v1216
          %1281 = vst [vmem:[%s311 + $0x44] sm:$0xf] %v1217
          %1282 = vst [vmem:[%s311 + $0x48] sm:$0xf] %v1218
          %1283 = vst [vmem:[%s311 + $0x4c] sm:$0xf] %v1219
          %1284 = vst [vmem:[%s311 + $0x50] sm:$0xf] %v1220
          %1285 = vst [vmem:[%s311 + $0x54] sm:$0xf] %v1221
          %1286 = vst [vmem:[%s311 + $0x58] sm:$0xf] %v1222
          %1287 = vst [vmem:[%s311 + $0x5c] sm:$0xf] %v1223
          %1288 = vst [vmem:[%s311 + $0x60] sm:$0xf] %v1224
          %1289 = vst [vmem:[%s311 + $0x64] sm:$0xf] %v1225
          %1290 = vst [vmem:[%s311 + $0x68] sm:$0xf] %v1226
          %1291 = vst [vmem:[%s311 + $0x6c] sm:$0xf] %v1227
          %1292 = vst [vmem:[%s311 + $0x70] sm:$0xf] %v1228
          %1293 = vst [vmem:[%s311 + $0x74] sm:$0xf] %v1229
          %1294 = vst [vmem:[%s311 + $0x78] sm:$0xf] %v1230
          %1295 = vst [vmem:[%s311 + $0x7c] sm:$0xf] %v1231
        $region56: #{_lambda_.4} parent=35 // pred_fallthru
          _
        %s1296 = smul.u32 32, %s22
        %p1297 = scmp.lt.s32.totalorder %s1296, 63
        %s1298 = scalar_select %p1297, %s1296, 63
        %p1299 = scmp.lt.s32.totalorder %s23, 0
        %s1300 = scalar_select %p1299, %s23, 0
        %s1301 = sadd.s32 %s1300, %s1298
        %s1302 = smul.addr %s1301, 4
        %s1303 = scalar_lea.vmem %s4, %s1302
        // Predicated region
        $region57: #{_lambda_.4} parent=35 // pred_check
          %p1304 = pneg %p164
        $region58: #{_lambda_.4} parent=35 // pred_check_branch
          %1306 = sbr.rel (%p1304) target = $region60
        $region59: #{_lambda_.4} parent=35 // pred_region
          %s1307 = smul.u32 32, %s22
        $region60: #{_lambda_.4} parent=35 // pred_fallthru
          _
      $region36: #{_lambda_.4} parent=5 // pred_fallthru
        _
      %p1308 = scmp.le.s32.totalorder 2, %s12
      // Predicated region
      $region61: #{_lambda_.4} parent=5 // pred_check
        %p1309 = pneg %p1308
      $region62: #{_lambda_.4} parent=5 // pred_check_branch
        %1311 = sbr.rel (%p1309) target = $region64
      $region63: #{_lambda_.4} parent=5 // pred_region
        %s1312 = ssub.s32 %s12, 2
        // Predicated region
        $region65: #{_lambda_.4} parent=63 // pred_check
          %p1313 = pneg %p170
        $region66: #{_lambda_.4} parent=63 // pred_check_branch
          %1315 = sbr.rel (%p1313) target = $region68
        $region67: #{_lambda_.4} parent=63 // pred_region
          %s1316 = smul.u32 32, %s25
          %p1317 = scmp.lt.s32.totalorder %s1316, 63
          %s1318 = scalar_select %p1317, %s1316, 63
          %p1319 = scmp.lt.s32.totalorder %s26, 0
          %s1320 = scalar_select %p1319, %s26, 0
          %s1321 = sadd.s32 %s1320, %s1318
          %s1322 = smul.addr %s1321, 4
          %s1323 = scalar_lea.vmem %s4, %s1322
        $region68: #{_lambda_.4} parent=63 // pred_fallthru
          _
      $region64: #{_lambda_.4} parent=5 // pred_fallthru
        _
    $region6: #{_lambda_.4} parent=1 // loop_footer
      %s16 = sadd.s32 1, %s12
    $region7: #{_lambda_.4} parent=1 // loop_footer_branch
      %11 = sbr.rel target = $region3
    $region8: #{_lambda_.4} parent=1 // loop_exit
      _
    %1324 = vsyncpa [#allocation4], 1
    %s1325 = scalar_lea.sflag [#allocation4], 1
    %1326 = vsyncpa %s1325, 1
    %1327 = vsyncpa [#allocation6], 1

// kernel: _lambda_.5
$region0: #{_lambda_.5}
  #allocation0 [shape = 'u32[]', space=smem, size = 0x4, offset = 0x4, fixed_abs, tag = 'smem constant byte address 0x4 - core index']
  #allocation1 [shape = 'u32[144,128]{1,0:T(1,128)}', space=vmem, size = 0x12000, scoped, tag = 'internal scratch']
  #allocation2 [shape = 'f32[256,256]{1,0:T(8,128)}', space=vmem, size = 0x40000, scoped, tag = 'scratch operand']
  %s0 = inlined_call_operand.vmem [shape: bf16[512,1152], index: 0, kind: input, shape index: {}]
  %s1 = inlined_call_operand.vmem [shape: bf16[1152,256], index: 1, kind: input, shape index: {}]
  %s2 = inlined_call_operand.vmem [shape: f32[1,256], index: 2, kind: input, shape index: {}]
  %s3 = inlined_call_operand.vmem [shape: f32[1,256], index: 3, kind: input, shape index: {}]
  %s4 = inlined_call_operand.vmem [shape: f32[512,256], index: 4, kind: input, shape index: {}]
  %s5 = inlined_call_operand.vmem [shape: f32[512,256], index: 5, kind: output, shape index: {}]
  %s6 = sld [smem:[#allocation0]]
  $region87: #{_lambda_.5} parent=0
    _
  %s8 = ssub.s32 1, %s6
  %s9 = scalar_select 0, %s8, %s6
  $region1: #{_lambda_.5} parent=0
    #allocation3 [shape = 'u8[393216]{0}', space=vmem, size = 0x60000, scoped, tag = 'input window, operand 0']
    loop: start=0, step=1, limit=8
    $region2: #{_lambda_.5} parent=1 // loop_pre_header
      _
    $region3: #{_lambda_.5} parent=1 // loop_header
      %s11 = sphi 0, %s15
      %p12 = scmp.ge.s32.totalorder %s11, 8
      %s18 = sphi 0, %s37
      %s19 = sphi 0, %s33
      %s20 = sphi 0, %s29
      %s21 = sphi 0, %s18
      %s22 = sphi 0, %s19
      %s23 = sphi 0, %s20
      %s24 = sphi 0, %s21
      %s25 = sphi 0, %s22
      %s26 = sphi 0, %s23
      %s42 = sphi 0, %s44
      %s45 = sphi 0, %s42
      %s46 = sphi 0, %s45
      %s62 = sphi 0, %s46
      %s70 = sphi 0, %s72
      %s73 = sphi 0, %s70
      %s74 = sphi 0, %s73
      %s90 = sphi 0, %s74
      %s96 = sphi 0, %s98
      %s99 = sphi 0, %s96
      %s100 = sphi 0, %s99
      %s116 = sphi 0, %s100
      %s122 = sphi 0, %s124
      %s125 = sphi 0, %s122
      %s126 = sphi 0, %s125
      %s142 = sphi 0, %s126
      %s150 = sphi 0, %s152
      %s153 = sphi 0, %s150
      %s154 = sphi 0, %s153
      %s170 = sphi 0, %s154
      %s178 = sphi 0, %s180
      %s181 = sphi 0, %s178
      %s182 = sphi 0, %s181
      %s198 = sphi 0, %s182
    $region4: #{_lambda_.5} parent=1 // loop_header_branch
      %14 = sbr.rel (%p12) target = $region8
    $region5: #{_lambda_.5} parent=1 // loop_body
      %s16 = ssub.s32 %s11, 1
      %s17 = ssub.s32 %s11, 2
      %s27 = sadd.s32 1, %s20
      %p28 = scmp.ge.s32.totalorder %s27, 3
      %s29 = scalar_select %p28, 0, %s27
      %s30 = sadd.s32 1, %s19
      %s31 = scalar_select %p28, %s30, %s19
      %p32 = scmp.ge.s32.totalorder %s31, 1
      %s33 = scalar_select %p32, 0, %s31
      %s34 = sadd.s32 1, %s18
      %s35 = scalar_select %p32, %s34, %s18
      %p36 = scmp.ge.s32.totalorder %s35, 2
      %s37 = scalar_select %p36, 0, %s35
      %s38 = ssub.s32 %s18, %s37
      %s39 = ssub.s32 %s20, %s29
      %s40 = sor.u32 %s38, %s39
      %p41 = scmp.eq.s32.totalorder %s40, 0
      %s43 = sadd.s32 %s42, 1
      %s44 = scalar_select %p41, %s42, %s43
      %p47 = pneg %p41
      %p48 = scmp.eq.s32.totalorder %s11, 5
      %p49 = por %p47, %p48
      %p50 = scmp.ne.s32.totalorder %s42, %s45
      %p51 = scmp.eq.s32.totalorder %s11, 0
      %p52 = por %p50, %p51
      %p53 = scmp.ne.s32.totalorder %s42, %s45
      %p54 = scmp.eq.s32.totalorder %s16, 5
      %p55 = por %p53, %p54
      %p56 = scmp.ne.s32.totalorder %s45, %s46
      %p57 = scmp.eq.s32.totalorder %s16, 0
      %p58 = por %p56, %p57
      %p59 = scmp.ne.s32.totalorder %s45, %s46
      %p60 = scmp.eq.s32.totalorder %s17, 5
      %p61 = por %p59, %p60
      %p63 = scmp.ne.s32.totalorder %s46, %s62
      %p64 = scmp.eq.s32.totalorder %s17, 0
      %p65 = por %p63, %p64
      %s66 = ssub.s32 %s20, %s29
      %s67 = ssub.s32 %s19, %s33
      %s68 = sor.u32 %s66, %s67
      %p69 = scmp.eq.s32.totalorder %s68, 0
      %s71 = sadd.s32 %s70, 1
      %s72 = scalar_select %p69, %s70, %s71
      %p75 = pneg %p69
      %p76 = scmp.eq.s32.totalorder %s11, 5
      %p77 = por %p75, %p76
      %p78 = scmp.ne.s32.totalorder %s70, %s73
      %p79 = scmp.eq.s32.totalorder %s11, 0
      %p80 = por %p78, %p79
      %p81 = scmp.ne.s32.totalorder %s70, %s73
      %p82 = scmp.eq.s32.totalorder %s16, 5
      %p83 = por %p81, %p82
      %p84 = scmp.ne.s32.totalorder %s73, %s74
      %p85 = scmp.eq.s32.totalorder %s16, 0
      %p86 = por %p84, %p85
      %p87 = scmp.ne.s32.totalorder %s73, %s74
      %p88 = scmp.eq.s32.totalorder %s17, 5
      %p89 = por %p87, %p88
      %p91 = scmp.ne.s32.totalorder %s74, %s90
      %p92 = scmp.eq.s32.totalorder %s17, 0
      %p93 = por %p91, %p92
      %s94 = ssub.s32 %s19, %s33
      %p95 = scmp.eq.s32.totalorder %s94, 0
      %s97 = sadd.s32 %s96, 1
      %s98 = scalar_select %p95, %s96, %s97
      %p101 = pneg %p95
      %p102 = scmp.eq.s32.totalorder %s11, 5
      %p103 = por %p101, %p102
      %p104 = scmp.ne.s32.totalorder %s96, %s99
      %p105 = scmp.eq.s32.totalorder %s11, 0
      %p106 = por %p104, %p105
      %p107 = scmp.ne.s32.totalorder %s96, %s99
      %p108 = scmp.eq.s32.totalorder %s16, 5
      %p109 = por %p107, %p108
      %p110 = scmp.ne.s32.totalorder %s99, %s100
      %p111 = scmp.eq.s32.totalorder %s16, 0
      %p112 = por %p110, %p111
      %p113 = scmp.ne.s32.totalorder %s99, %s100
      %p114 = scmp.eq.s32.totalorder %s17, 5
      %p115 = por %p113, %p114
      %p117 = scmp.ne.s32.totalorder %s100, %s116
      %p118 = scmp.eq.s32.totalorder %s17, 0
      %p119 = por %p117, %p118
      %s120 = ssub.s32 %s19, %s33
      %p121 = scmp.eq.s32.totalorder %s120, 0
      %s123 = sadd.s32 %s122, 1
      %s124 = scalar_select %p121, %s122, %s123
      %p127 = pneg %p121
      %p128 = scmp.eq.s32.totalorder %s11, 5
      %p129 = por %p127, %p128
      %p130 = scmp.ne.s32.totalorder %s122, %s125
      %p131 = scmp.eq.s32.totalorder %s11, 0
      %p132 = por %p130, %p131
      %p133 = scmp.ne.s32.totalorder %s122, %s125
      %p134 = scmp.eq.s32.totalorder %s16, 5
      %p135 = por %p133, %p134
      %p136 = scmp.ne.s32.totalorder %s125, %s126
      %p137 = scmp.eq.s32.totalorder %s16, 0
      %p138 = por %p136, %p137
      %p139 = scmp.ne.s32.totalorder %s125, %s126
      %p140 = scmp.eq.s32.totalorder %s17, 5
      %p141 = por %p139, %p140
      %p143 = scmp.ne.s32.totalorder %s126, %s142
      %p144 = scmp.eq.s32.totalorder %s17, 0
      %p145 = por %p143, %p144
      %s146 = ssub.s32 %s18, %s37
      %s147 = ssub.s32 %s19, %s33
      %s148 = sor.u32 %s146, %s147
      %p149 = scmp.eq.s32.totalorder %s148, 0
      %s151 = sadd.s32 %s150, 1
      %s152 = scalar_select %p149, %s150, %s151
      %p155 = pneg %p149
      %p156 = scmp.eq.s32.totalorder %s11, 5
      %p157 = por %p155, %p156
      %p158 = scmp.ne.s32.totalorder %s150, %s153
      %p159 = scmp.eq.s32.totalorder %s11, 0
      %p160 = por %p158, %p159
      %p161 = scmp.ne.s32.totalorder %s150, %s153
      %p162 = scmp.eq.s32.totalorder %s16, 5
      %p163 = por %p161, %p162
      %p164 = scmp.ne.s32.totalorder %s153, %s154
      %p165 = scmp.eq.s32.totalorder %s16, 0
      %p166 = por %p164, %p165
      %p167 = scmp.ne.s32.totalorder %s153, %s154
      %p168 = scmp.eq.s32.totalorder %s17, 5
      %p169 = por %p167, %p168
      %p171 = scmp.ne.s32.totalorder %s154, %s170
      %p172 = scmp.eq.s32.totalorder %s17, 0
      %p173 = por %p171, %p172
      %s174 = ssub.s32 %s18, %s37
      %s175 = ssub.s32 %s19, %s33
      %s176 = sor.u32 %s174, %s175
      %p177 = scmp.eq.s32.totalorder %s176, 0
      %s179 = sadd.s32 %s178, 1
      %s180 = scalar_select %p177, %s178, %s179
      %p183 = pneg %p177
      %p184 = scmp.eq.s32.totalorder %s11, 5
      %p185 = por %p183, %p184
      %p186 = scmp.ne.s32.totalorder %s178, %s181
      %p187 = scmp.eq.s32.totalorder %s11, 0
      %p188 = por %p186, %p187
      %p189 = scmp.ne.s32.totalorder %s178, %s181
      %p190 = scmp.eq.s32.totalorder %s16, 5
      %p191 = por %p189, %p190
      %p192 = scmp.ne.s32.totalorder %s181, %s182
      %p193 = scmp.eq.s32.totalorder %s16, 0
      %p194 = por %p192, %p193
      %p195 = scmp.ne.s32.totalorder %s181, %s182
      %p196 = scmp.eq.s32.totalorder %s17, 5
      %p197 = por %p195, %p196
      %p199 = scmp.ne.s32.totalorder %s182, %s198
      %p200 = scmp.eq.s32.totalorder %s17, 0
      %p201 = por %p199, %p200
      %p202 = scmp.le.s32.totalorder 1, %s11
      %p203 = scmp.lt.s32.totalorder %s11, 7
      %p204 = pnand %p202, %p203
      %p205 = pneg %p204
      // Predicated region
      $region9: #{_lambda_.5} parent=5 // pred_check
        _
      $region10: #{_lambda_.5} parent=5 // pred_check_branch
        %207 = sbr.rel (%p204) target = $region12
      $region11: #{_lambda_.5} parent=5 // pred_region
        %s208 = ssub.s32 %s11, 1
        // Predicated region
        $region13: #{_lambda_.5} parent=11 // pred_check
          %p209 = pneg %p112
        $region14: #{_lambda_.5} parent=11 // pred_check_branch
          %211 = sbr.rel (%p209) target = $region16
        $region15: #{_lambda_.5} parent=11 // pred_region
          %s212 = smul.u32 2, %s22
          %p213 = scmp.lt.s32.totalorder %s212, 1
          %s214 = scalar_select %p213, %s212, 1
          %s215 = scalar_lea.vmem %s2, %s214
          %s216 = smul.u32 2, %s22
        $region16: #{_lambda_.5} parent=11 // pred_fallthru
          _
        // Predicated region
        $region17: #{_lambda_.5} parent=11 // pred_check
          %p217 = pneg %p138
        $region18: #{_lambda_.5} parent=11 // pred_check_branch
          %219 = sbr.rel (%p217) target = $region20
        $region19: #{_lambda_.5} parent=11 // pred_region
          %s220 = smul.u32 2, %s22
          %p221 = scmp.lt.s32.totalorder %s220, 1
          %s222 = scalar_select %p221, %s220, 1
          %s223 = scalar_lea.vmem %s3, %s222
          %s224 = smul.u32 2, %s22
        $region20: #{_lambda_.5} parent=11 // pred_fallthru
          _
      $region12: #{_lambda_.5} parent=5 // pred_fallthru
        _
      %p225 = scmp.lt.s32.totalorder %s11, 6
      // Predicated region
      $region21: #{_lambda_.5} parent=5 // pred_check
        %p226 = pneg %p225
      $region22: #{_lambda_.5} parent=5 // pred_check_branch
        %228 = sbr.rel (%p226) target = $region24
      $region23: #{_lambda_.5} parent=5 // pred_region
        // Predicated region
        $region25: #{_lambda_.5} parent=23 // pred_check
          %p229 = pneg %p52
        $region26: #{_lambda_.5} parent=23 // pred_check_branch
          %231 = sbr.rel (%p229) target = $region28
        $region27: #{_lambda_.5} parent=23 // pred_region
          %s232 = sand.u32 %s42, 1
          %s233 = sand.u32 %s42, 1
          %s234 = smul.addr %s233, 384
          %s235 = scalar_lea.vmem [#allocation3], %s234
          %s236 = smul.u32 32, %s18
          %s237 = smul.u32 3, %s20
          %s238 = smul.addr %s236, 9
          %s239 = sadd.s32 %s237, %s238
          %s240 = smul.addr %s239, 4
          %s241 = scalar_lea.vmem %s0, %s240
          // Predicated region
          $region29: #{_lambda_.5} parent=27 // pred_check
            _
          $region30: #{_lambda_.5} parent=27 // pred_check_branch
            %243 = sbr.rel (0) target = $region32
          $region31: #{_lambda_.5} parent=27 // pred_region
            // Predicated region
            $region33: #{_lambda_.5} parent=31 // pred_check
              _
            $region34: #{_lambda_.5} parent=31 // pred_check_branch
              %245 = sbr.rel (0) target = $region36
            $region35: #{_lambda_.5} parent=31 // pred_region
              %s246 = scalar_lea.vmem %s241, 8
              %s247 = scalar_lea.vmem %s235, 8 [#allocation3]
              loop: start=0, step=1, limit=1
              $region37: #{_lambda_.5} parent=35 // loop_pre_header
                _
              $region38: #{_lambda_.5} parent=35 // loop_header
                %s249 = sphi 0, %s253
                %p250 = scmp.ge.s32.totalorder %s249, 1
                %s254 = sphi %s241, %s241
                %s255 = sphi %s235, %s235
              $region39: #{_lambda_.5} parent=35 // loop_header_branch
                %252 = sbr.rel (%p250) target = $region43
              $region40: #{_lambda_.5} parent=35 // loop_body
                %v256 = vld [vmem:[%s254] sm:$0xff]
                %257 = vst [vmem:[%s255] sm:$0xff] %v256
                %v258 = vld [vmem:[%s254 + $0x24] sm:$0xff]
                %259 = vst [vmem:[%s255 + $0xc] sm:$0xff] %v258
                %v260 = vld [vmem:[%s254 + $0x48] sm:$0xff]
                %261 = vst [vmem:[%s255 + $0x18] sm:$0xff] %v260
                %v262 = vld [vmem:[%s254 + $0x6c] sm:$0xff]
                %263 = vst [vmem:[%s255 + $0x24] sm:$0xff] %v262
                %v264 = vld [vmem:[%s254 + $0x90] sm:$0xff]
                %265 = vst [vmem:[%s255 + $0x30] sm:$0xff] %v264
                %v266 = vld [vmem:[%s254 + $0xb4] sm:$0xff]
                %267 = vst [vmem:[%s255 + $0x3c] sm:$0xff] %v266
                %v268 = vld [vmem:[%s254 + $0xd8] sm:$0xff]
                %269 = vst [vmem:[%s255 + $0x48] sm:$0xff] %v268
                %v270 = vld [vmem:[%s254 + $0xfc] sm:$0xff]
                %271 = vst [vmem:[%s255 + $0x54] sm:$0xff] %v270
                %v272 = vld [vmem:[%s254 + $0x120] sm:$0xff]
                %273 = vst [vmem:[%s255 + $0x60] sm:$0xff] %v272
                %v274 = vld [vmem:[%s254 + $0x144] sm:$0xff]
                %275 = vst [vmem:[%s255 + $0x6c] sm:$0xff] %v274
                %v276 = vld [vmem:[%s254 + $0x168] sm:$0xff]
                %277 = vst [vmem:[%s255 + $0x78] sm:$0xff] %v276
                %v278 = vld [vmem:[%s254 + $0x18c] sm:$0xff]
                %279 = vst [vmem:[%s255 + $0x84] sm:$0xff] %v278
                %v280 = vld [vmem:[%s254 + $0x1b0] sm:$0xff]
                %281 = vst [vmem:[%s255 + $0x90] sm:$0xff] %v280
                %v282 = vld [vmem:[%s254 + $0x1d4] sm:$0xff]
                %283 = vst [vmem:[%s255 + $0x9c] sm:$0xff] %v282
                %v284 = vld [vmem:[%s254 + $0x1f8] sm:$0xff]
                %285 = vst [vmem:[%s255 + $0xa8] sm:$0xff] %v284
                %v286 = vld [vmem:[%s254 + $0x21c] sm:$0xff]
                %287 = vst [vmem:[%s255 + $0xb4] sm:$0xff] %v286
                %v288 = vld [vmem:[%s254 + $0x240] sm:$0xff]
                %289 = vst [vmem:[%s255 + $0xc0] sm:$0xff] %v288
                %v290 = vld [vmem:[%s254 + $0x264] sm:$0xff]
                %291 = vst [vmem:[%s255 + $0xcc] sm:$0xff] %v290
                %v292 = vld [vmem:[%s254 + $0x288] sm:$0xff]
                %293 = vst [vmem:[%s255 + $0xd8] sm:$0xff] %v292
                %v294 = vld [vmem:[%s254 + $0x2ac] sm:$0xff]
                %295 = vst [vmem:[%s255 + $0xe4] sm:$0xff] %v294
                %v296 = vld [vmem:[%s254 + $0x2d0] sm:$0xff]
                %297 = vst [vmem:[%s255 + $0xf0] sm:$0xff] %v296
                %v298 = vld [vmem:[%s254 + $0x2f4] sm:$0xff]
                %299 = vst [vmem:[%s255 + $0xfc] sm:$0xff] %v298
                %v300 = vld [vmem:[%s254 + $0x318] sm:$0xff]
                %301 = vst [vmem:[%s255 + $0x108] sm:$0xff] %v300
                %v302 = vld [vmem:[%s254 + $0x33c] sm:$0xff]
                %303 = vst [vmem:[%s255 + $0x114] sm:$0xff] %v302
                %v304 = vld [vmem:[%s254 + $0x360] sm:$0xff]
                %305 = vst [vmem:[%s255 + $0x120] sm:$0xff] %v304
                %v306 = vld [vmem:[%s254 + $0x384] sm:$0xff]
                %307 = vst [vmem:[%s255 + $0x12c] sm:$0xff] %v306
                %v308 = vld [vmem:[%s254 + $0x3a8] sm:$0xff]
                %309 = vst [vmem:[%s255 + $0x138] sm:$0xff] %v308
                %v310 = vld [vmem:[%s254 + $0x3cc] sm:$0xff]
                %311 = vst [vmem:[%s255 + $0x144] sm:$0xff] %v310
                %v312 = vld [vmem:[%s254 + $0x3f0] sm:$0xff]
                %313 = vst [vmem:[%s255 + $0x150] sm:$0xff] %v312
                %v314 = vld [vmem:[%s254 + $0x414] sm:$0xff]
                %315 = vst [vmem:[%s255 + $0x15c] sm:$0xff] %v314
                %v316 = vld [vmem:[%s254 + $0x438] sm:$0xff]
                %317 = vst [vmem:[%s255 + $0x168] sm:$0xff] %v316
                %v318 = vld [vmem:[%s254 + $0x45c] sm:$0xff]
                %319 = vst [vmem:[%s255 + $0x174] sm:$0xff] %v318
              $region41: #{_lambda_.5} parent=35 // loop_footer
                %s253 = sadd.s32 1, %s249
              $region42: #{_lambda_.5} parent=35 // loop_footer_branch
                %248 = sbr.rel target = $region38
              $region43: #{_lambda_.5} parent=35 // loop_exit
                _
              %s321 = ssub.s32 16, 1
              loop: start=0, step=1, limit=1
              $region44: #{_lambda_.5} parent=35 // loop_pre_header
                _
              $region45: #{_lambda_.5} parent=35 // loop_header
                %s323 = sphi 0, %s327
                %p324 = scmp.ge.s32.totalorder %s323, 1
                %s328 = sphi %s246, %s246
                %s329 = sphi %s247, %s247
              $region46: #{_lambda_.5} parent=35 // loop_header_branch
                %326 = sbr.rel (%p324) target = $region50
              $region47: #{_lambda_.5} parent=35 // loop_body
                %v330 = vld [vmem:[%s328] sm:%s321]
                %331 = vst [vmem:[%s329] sm:%s321] %v330
                %v332 = vld [vmem:[%s328 + $0x24] sm:%s321]
                %333 = vst [vmem:[%s329 + $0xc] sm:%s321] %v332
                %v334 = vld [vmem:[%s328 + $0x48] sm:%s321]
                %335 = vst [vmem:[%s329 + $0x18] sm:%s321] %v334
                %v336 = vld [vmem:[%s328 + $0x6c] sm:%s321]
                %337 = vst [vmem:[%s329 + $0x24] sm:%s321] %v336
                %v338 = vld [vmem:[%s328 + $0x90] sm:%s321]
                %339 = vst [vmem:[%s329 + $0x30] sm:%s321] %v338
                %v340 = vld [vmem:[%s328 + $0xb4] sm:%s321]
                %341 = vst [vmem:[%s329 + $0x3c] sm:%s321] %v340
                %v342 = vld [vmem:[%s328 + $0xd8] sm:%s321]
                %343 = vst [vmem:[%s329 + $0x48] sm:%s321] %v342
                %v344 = vld [vmem:[%s328 + $0xfc] sm:%s321]
                %345 = vst [vmem:[%s329 + $0x54] sm:%s321] %v344
                %v346 = vld [vmem:[%s328 + $0x120] sm:%s321]
                %347 = vst [vmem:[%s329 + $0x60] sm:%s321] %v346
                %v348 = vld [vmem:[%s328 + $0x144] sm:%s321]
                %349 = vst [vmem:[%s329 + $0x6c] sm:%s321] %v348
                %v350 = vld [vmem:[%s328 + $0x168] sm:%s321]
                %351 = vst [vmem:[%s329 + $0x78] sm:%s321] %v350
                %v352 = vld [vmem:[%s328 + $0x18c] sm:%s321]
                %353 = vst [vmem:[%s329 + $0x84] sm:%s321] %v352
                %v354 = vld [vmem:[%s328 + $0x1b0] sm:%s321]
                %355 = vst [vmem:[%s329 + $0x90] sm:%s321] %v354
                %v356 = vld [vmem:[%s328 + $0x1d4] sm:%s321]
                %357 = vst [vmem:[%s329 + $0x9c] sm:%s321] %v356
                %v358 = vld [vmem:[%s328 + $0x1f8] sm:%s321]
                %359 = vst [vmem:[%s329 + $0xa8] sm:%s321] %v358
                %v360 = vld [vmem:[%s328 + $0x21c] sm:%s321]
                %361 = vst [vmem:[%s329 + $0xb4] sm:%s321] %v360
                %v362 = vld [vmem:[%s328 + $0x240] sm:%s321]
                %363 = vst [vmem:[%s329 + $0xc0] sm:%s321] %v362
                %v364 = vld [vmem:[%s328 + $0x264] sm:%s321]
                %365 = vst [vmem:[%s329 + $0xcc] sm:%s321] %v364
                %v366 = vld [vmem:[%s328 + $0x288] sm:%s321]
                %367 = vst [vmem:[%s329 + $0xd8] sm:%s321] %v366
                %v368 = vld [vmem:[%s328 + $0x2ac] sm:%s321]
                %369 = vst [vmem:[%s329 + $0xe4] sm:%s321] %v368
                %v370 = vld [vmem:[%s328 + $0x2d0] sm:%s321]
                %371 = vst [vmem:[%s329 + $0xf0] sm:%s321] %v370
                %v372 = vld [vmem:[%s328 + $0x2f4] sm:%s321]
                %373 = vst [vmem:[%s329 + $0xfc] sm:%s321] %v372
                %v374 = vld [vmem:[%s328 + $0x318] sm:%s321]
                %375 = vst [vmem:[%s329 + $0x108] sm:%s321] %v374
                %v376 = vld [vmem:[%s328 + $0x33c] sm:%s321]
                %377 = vst [vmem:[%s329 + $0x114] sm:%s321] %v376
                %v378 = vld [vmem:[%s328 + $0x360] sm:%s321]
                %379 = vst [vmem:[%s329 + $0x120] sm:%s321] %v378
                %v380 = vld [vmem:[%s328 + $0x384] sm:%s321]
                %381 = vst [vmem:[%s329 + $0x12c] sm:%s321] %v380
                %v382 = vld [vmem:[%s328 + $0x3a8] sm:%s321]
                %383 = vst [vmem:[%s329 + $0x138] sm:%s321] %v382
                %v384 = vld [vmem:[%s328 + $0x3cc] sm:%s321]
                %385 = vst [vmem:[%s329 + $0x144] sm:%s321] %v384
                %v386 = vld [vmem:[%s328 + $0x3f0] sm:%s321]
                %387 = vst [vmem:[%s329 + $0x150] sm:%s321] %v386
                %v388 = vld [vmem:[%s328 + $0x414] sm:%s321]
                %389 = vst [vmem:[%s329 + $0x15c] sm:%s321] %v388
                %v390 = vld [vmem:[%s328 + $0x438] sm:%s321]
                %391 = vst [vmem:[%s329 + $0x168] sm:%s321] %v390
                %v392 = vld [vmem:[%s328 + $0x45c] sm:%s321]
                %393 = vst [vmem:[%s329 + $0x174] sm:%s321] %v392
              $region48: #{_lambda_.5} parent=35 // loop_footer
                %s327 = sadd.s32 1, %s323
              $region49: #{_lambda_.5} parent=35 // loop_footer_branch
                %322 = sbr.rel target = $region45
              $region50: #{_lambda_.5} parent=35 // loop_exit
                _
            $region36: #{_lambda_.5} parent=31 // pred_fallthru
              _
          $region32: #{_lambda_.5} parent=27 // pred_fallthru
            _
          %394 = vnop
        $region28: #{_lambda_.5} parent=23 // pred_fallthru
          _
        // Predicated region
        $region51: #{_lambda_.5} parent=23 // pred_check
          %p395 = pneg %p80
        $region52: #{_lambda_.5} parent=23 // pred_check_branch
          %397 = sbr.rel (%p395) target = $region54
        $region53: #{_lambda_.5} parent=23 // pred_region
          %s398 = smul.u32 48, %s20
          %s399 = smul.u32 2, %s19
          %p400 = scmp.lt.s32.totalorder %s398, 143
          %s401 = scalar_select %p400, %s398, 143
          %p402 = scmp.lt.s32.totalorder %s399, 1
          %s403 = scalar_select %p402, %s399, 1
          %s404 = smul.addr %s401, 2
          %s405 = sadd.s32 %s403, %s404
          %s406 = smul.addr %s405, 4
          %s407 = scalar_lea.vmem %s1, %s406
          %s408 = smul.u32 48, %s20
          %s409 = smul.u32 2, %s19
        $region54: #{_lambda_.5} parent=23 // pred_fallthru
          _
        // Predicated region
        $region55: #{_lambda_.5} parent=23 // pred_check
          %p410 = pneg %p160
        $region56: #{_lambda_.5} parent=23 // pred_check_branch
          %412 = sbr.rel (%p410) target = $region58
        $region57: #{_lambda_.5} parent=23 // pred_region
          %s413 = smul.u32 32, %s18
          %s414 = smul.u32 2, %s19
          %p415 = scmp.lt.s32.totalorder %s413, 63
          %s416 = scalar_select %p415, %s413, 63
          %p417 = scmp.lt.s32.totalorder %s414, 1
          %s418 = scalar_select %p417, %s414, 1
          %s419 = smul.addr %s416, 2
          %s420 = sadd.s32 %s418, %s419
          %s421 = smul.addr %s420, 8
          %s422 = scalar_lea.vmem %s4, %s421
          %s423 = smul.u32 32, %s18
          %s424 = smul.u32 2, %s19
        $region58: #{_lambda_.5} parent=23 // pred_fallthru
          _
      $region24: #{_lambda_.5} parent=5 // pred_fallthru
        _
      %p425 = scmp.le.s32.totalorder 1, %s11
      %p426 = scmp.lt.s32.totalorder %s11, 7
      %p427 = pnand %p425, %p426
      %p428 = pneg %p427
      // Predicated region
      $region59: #{_lambda_.5} parent=5 // pred_check
        _
      $region60: #{_lambda_.5} parent=5 // pred_check_branch
        %430 = sbr.rel (%p427) target = $region62
      $region61: #{_lambda_.5} parent=5 // pred_region
        %s431 = ssub.s32 %s11, 1
        %s432 = sand.u32 %s45, 1
        %s433 = sand.u32 %s45, 1
        %s434 = smul.addr %s433, 384
        %s435 = scalar_lea.vmem [#allocation3], %s434
        // Predicated region
        $region63: #{_lambda_.5} parent=61 // pred_check
          %p436 = pneg %p58
        $region64: #{_lambda_.5} parent=61 // pred_check_branch
          %438 = sbr.rel (%p436) target = $region66
        $region65: #{_lambda_.5} parent=61 // pred_region
          _
        $region66: #{_lambda_.5} parent=61 // pred_fallthru
          _
        %s439 = sand.u32 %s45, 1
        %s440 = sand.u32 %s45, 1
        %s441 = smul.addr %s440, 384
        %s442 = scalar_lea.vmem [#allocation3], %s441
        %p443 = pneg %p58
        %p444 = pneg %p55
        %s445 = smul.u32 48, %s23
        %s446 = smul.u32 2, %s22
        %p447 = scmp.lt.s32.totalorder %s445, 143
        %s448 = scalar_select %p447, %s445, 143
        %p449 = scmp.lt.s32.totalorder %s446, 1
        %s450 = scalar_select %p449, %s446, 1
        %s451 = smul.addr %s448, 2
        %s452 = sadd.s32 %s450, %s451
        %s453 = smul.addr %s452, 4
        %s454 = scalar_lea.vmem %s1, %s453
        %p455 = pneg %p86
        %p456 = pneg %p83
        %s457 = smul.u32 2, %s22
        %p458 = scmp.lt.s32.totalorder %s457, 1
        %s459 = scalar_select %p458, %s457, 1
        %s460 = scalar_lea.vmem %s2, %s459
        %p461 = pneg %p112
        %p462 = pneg %p109
        %s463 = smul.u32 2, %s22
        %p464 = scmp.lt.s32.totalorder %s463, 1
        %s465 = scalar_select %p464, %s463, 1
        %s466 = scalar_lea.vmem %s3, %s465
        %p467 = pneg %p138
        %p468 = pneg %p135
        %s469 = smul.u32 32, %s21
        %s470 = smul.u32 2, %s22
        %p471 = scmp.lt.s32.totalorder %s469, 63
        %s472 = scalar_select %p471, %s469, 63
        %p473 = scmp.lt.s32.totalorder %s470, 1
        %s474 = scalar_select %p473, %s470, 1
        %s475 = smul.addr %s472, 2
        %s476 = sadd.s32 %s474, %s475
        %s477 = smul.addr %s476, 8
        %s478 = scalar_lea.vmem %s4, %s477
        %p479 = pneg %p166
        %p480 = pneg %p163
        %p481 = pneg %p194
        %p482 = pneg %p191
        %s483 = smul.u32 32, %s21
        %s484 = smul.u32 2, %s22
        %p485 = scmp.lt.s32.totalorder %s483, 63
        %s486 = scalar_select %p485, %s483, 63
        %p487 = scmp.lt.s32.totalorder %s484, 1
        %s488 = scalar_select %p487, %s484, 1
        %s489 = smul.addr %s486, 2
        %s490 = sadd.s32 %s488, %s489
        %s491 = smul.addr %s490, 8
        %s492 = scalar_lea.vmem %s5, %s491
        %s493 = smul.u32 32, %s21
        %s494 = smul.u32 3, %s23
        %s495 = smul.u32 48, %s23
        %s496 = smul.u32 2, %s22
        %p497 = scmp.lt.s32.totalorder %s495, 143
        %s498 = scalar_select %p497, %s495, 143
        %p499 = scmp.lt.s32.totalorder %s496, 1
        %s500 = scalar_select %p499, %s496, 1
        %s501 = smul.addr %s498, 2
        %s502 = sadd.s32 %s500, %s501
        %s503 = smul.addr %s502, 4
        %s504 = scalar_lea.vmem %s1, %s503
        %s505 = smul.u32 48, %s23
        %s506 = smul.u32 2, %s22
        %s507 = smul.u32 2, %s22
        %p508 = scmp.lt.s32.totalorder %s507, 1
        %s509 = scalar_select %p508, %s507, 1
        %s510 = scalar_lea.vmem %s2, %s509
        %s511 = smul.u32 2, %s22
        %s512 = smul.u32 2, %s22
        %p513 = scmp.lt.s32.totalorder %s512, 1
        %s514 = scalar_select %p513, %s512, 1
        %s515 = scalar_lea.vmem %s3, %s514
        %s516 = smul.u32 2, %s22
        %s517 = smul.u32 32, %s21
        %s518 = smul.u32 2, %s22
        %p519 = scmp.lt.s32.totalorder %s517, 63
        %s520 = scalar_select %p519, %s517, 63
        %p521 = scmp.lt.s32.totalorder %s518, 1
        %s522 = scalar_select %p521, %s518, 1
        %s523 = smul.addr %s520, 2
        %s524 = sadd.s32 %s522, %s523
        %s525 = smul.addr %s524, 8
        %s526 = scalar_lea.vmem %s4, %s525
        %s527 = smul.u32 32, %s21
        %s528 = smul.u32 2, %s22
        %s529 = smul.u32 32, %s21
        %s530 = smul.u32 2, %s22
        %p531 = scmp.lt.s32.totalorder %s529, 63
        %s532 = scalar_select %p531, %s529, 63
        %p533 = scmp.lt.s32.totalorder %s530, 1
        %s534 = scalar_select %p533, %s530, 1
        %s535 = smul.addr %s532, 2
        %s536 = sadd.s32 %s534, %s535
        %s537 = smul.addr %s536, 8
        %s538 = scalar_lea.vmem %s5, %s537
        %s539 = smul.u32 32, %s21
        %s540 = smul.u32 2, %s22
        %p542 = scmp.eq.s32.totalorder %s23, 0
        // Predicated region
        $region67: #{_lambda_.5} parent=61 // pred_check
          %p543 = pneg %p542
        $region68: #{_lambda_.5} parent=61 // pred_check_branch
          %545 = sbr.rel (%p543) target = $region70
        $region69: #{_lambda_.5} parent=61 // pred_region
          %546 = vst [vmem:[#allocation2] sm:$0xff] 0.0
          %547 = vst [vmem:[#allocation2 + $0x8] sm:$0xff] 0.0
          %548 = vst [vmem:[#allocation2 + $0x10] sm:$0xff] 0.0
          %549 = vst [vmem:[#allocation2 + $0x18] sm:$0xff] 0.0
          %550 = vst [vmem:[#allocation2 + $0x20] sm:$0xff] 0.0
          %551 = vst [vmem:[#allocation2 + $0x28] sm:$0xff] 0.0
          %552 = vst [vmem:[#allocation2 + $0x30] sm:$0xff] 0.0
          %553 = vst [vmem:[#allocation2 + $0x38] sm:$0xff] 0.0
          %554 = vst [vmem:[#allocation2 + $0x40] sm:$0xff] 0.0
          %555 = vst [vmem:[#allocation2 + $0x48] sm:$0xff] 0.0
          %556 = vst [vmem:[#allocation2 + $0x50] sm:$0xff] 0.0
          %557 = vst [vmem:[#allocation2 + $0x58] sm:$0xff] 0.0
          %558 = vst [vmem:[#allocation2 + $0x60] sm:$0xff] 0.0
          %559 = vst [vmem:[#allocation2 + $0x68] sm:$0xff] 0.0
          %560 = vst [vmem:[#allocation2 + $0x70] sm:$0xff] 0.0
          %561 = vst [vmem:[#allocation2 + $0x78] sm:$0xff] 0.0
          %562 = vst [vmem:[#allocation2 + $0x80] sm:$0xff] 0.0
          %563 = vst [vmem:[#allocation2 + $0x88] sm:$0xff] 0.0
          %564 = vst [vmem:[#allocation2 + $0x90] sm:$0xff] 0.0
          %565 = vst [vmem:[#allocation2 + $0x98] sm:$0xff] 0.0
          %566 = vst [vmem:[#allocation2 + $0xa0] sm:$0xff] 0.0
          %567 = vst [vmem:[#allocation2 + $0xa8] sm:$0xff] 0.0
          %568 = vst [vmem:[#allocation2 + $0xb0] sm:$0xff] 0.0
          %569 = vst [vmem:[#allocation2 + $0xb8] sm:$0xff] 0.0
          %570 = vst [vmem:[#allocation2 + $0xc0] sm:$0xff] 0.0
          %571 = vst [vmem:[#allocation2 + $0xc8] sm:$0xff] 0.0
          %572 = vst [vmem:[#allocation2 + $0xd0] sm:$0xff] 0.0
          %573 = vst [vmem:[#allocation2 + $0xd8] sm:$0xff] 0.0
          %574 = vst [vmem:[#allocation2 + $0xe0] sm:$0xff] 0.0
          %575 = vst [vmem:[#allocation2 + $0xe8] sm:$0xff] 0.0
          %576 = vst [vmem:[#allocation2 + $0xf0] sm:$0xff] 0.0
          %577 = vst [vmem:[#allocation2 + $0xf8] sm:$0xff] 0.0
          %578 = vst [vmem:[#allocation2 + $0x100] sm:$0xff] 0.0
          %579 = vst [vmem:[#allocation2 + $0x108] sm:$0xff] 0.0
          %580 = vst [vmem:[#allocation2 + $0x110] sm:$0xff] 0.0
          %581 = vst [vmem:[#allocation2 + $0x118] sm:$0xff] 0.0
          %582 = vst [vmem:[#allocation2 + $0x120] sm:$0xff] 0.0
          %583 = vst [vmem:[#allocation2 + $0x128] sm:$0xff] 0.0
          %584 = vst [vmem:[#allocation2 + $0x130] sm:$0xff] 0.0
          %585 = vst [vmem:[#allocation2 + $0x138] sm:$0xff] 0.0
          %586 = vst [vmem:[#allocation2 + $0x140] sm:$0xff] 0.0
          %587 = vst [vmem:[#allocation2 + $0x148] sm:$0xff] 0.0
          %588 = vst [vmem:[#allocation2 + $0x150] sm:$0xff] 0.0
          %589 = vst [vmem:[#allocation2 + $0x158] sm:$0xff] 0.0
          %590 = vst [vmem:[#allocation2 + $0x160] sm:$0xff] 0.0
          %591 = vst [vmem:[#allocation2 + $0x168] sm:$0xff] 0.0
          %592 = vst [vmem:[#allocation2 + $0x170] sm:$0xff] 0.0
          %593 = vst [vmem:[#allocation2 + $0x178] sm:$0xff] 0.0
          %594 = vst [vmem:[#allocation2 + $0x180] sm:$0xff] 0.0
          %595 = vst [vmem:[#allocation2 + $0x188] sm:$0xff] 0.0
          %596 = vst [vmem:[#allocation2 + $0x190] sm:$0xff] 0.0
          %597 = vst [vmem:[#allocation2 + $0x198] sm:$0xff] 0.0
          %598 = vst [vmem:[#allocation2 + $0x1a0] sm:$0xff] 0.0
          %599 = vst [vmem:[#allocation2 + $0x1a8] sm:$0xff] 0.0
          %600 = vst [vmem:[#allocation2 + $0x1b0] sm:$0xff] 0.0
          %601 = vst [vmem:[#allocation2 + $0x1b8] sm:$0xff] 0.0
          %602 = vst [vmem:[#allocation2 + $0x1c0] sm:$0xff] 0.0
          %603 = vst [vmem:[#allocation2 + $0x1c8] sm:$0xff] 0.0
          %604 = vst [vmem:[#allocation2 + $0x1d0] sm:$0xff] 0.0
          %605 = vst [vmem:[#allocation2 + $0x1d8] sm:$0xff] 0.0
          %606 = vst [vmem:[#allocation2 + $0x1e0] sm:$0xff] 0.0
          %607 = vst [vmem:[#allocation2 + $0x1e8] sm:$0xff] 0.0
          %608 = vst [vmem:[#allocation2 + $0x1f0] sm:$0xff] 0.0
          %609 = vst [vmem:[#allocation2 + $0x1f8] sm:$0xff] 0.0
        $region70: #{_lambda_.5} parent=61 // pred_fallthru
          _
        %v610 = vld [vmem:[#allocation2] sm:$0xff]
        %v611 = vld [vmem:[#allocation2 + $0x8] sm:$0xff]
        %v612 = vld [vmem:[#allocation2 + $0x10] sm:$0xff]
        %v613 = vld [vmem:[#allocation2 + $0x18] sm:$0xff]
        %v614 = vld [vmem:[#allocation2 + $0x20] sm:$0xff]
        %v615 = vld [vmem:[#allocation2 + $0x28] sm:$0xff]
        %v616 = vld [vmem:[#allocation2 + $0x30] sm:$0xff]
        %v617 = vld [vmem:[#allocation2 + $0x38] sm:$0xff]
        %v618 = vld [vmem:[#allocation2 + $0x40] sm:$0xff]
        %v619 = vld [vmem:[#allocation2 + $0x48] sm:$0xff]
        %v620 = vld [vmem:[#allocation2 + $0x50] sm:$0xff]
        %v621 = vld [vmem:[#allocation2 + $0x58] sm:$0xff]
        %v622 = vld [vmem:[#allocation2 + $0x60] sm:$0xff]
        %v623 = vld [vmem:[#allocation2 + $0x68] sm:$0xff]
        %v624 = vld [vmem:[#allocation2 + $0x70] sm:$0xff]
        %v625 = vld [vmem:[#allocation2 + $0x78] sm:$0xff]
        %v626 = vld [vmem:[#allocation2 + $0x80] sm:$0xff]
        %v627 = vld [vmem:[#allocation2 + $0x88] sm:$0xff]
        %v628 = vld [vmem:[#allocation2 + $0x90] sm:$0xff]
        %v629 = vld [vmem:[#allocation2 + $0x98] sm:$0xff]
        %v630 = vld [vmem:[#allocation2 + $0xa0] sm:$0xff]
        %v631 = vld [vmem:[#allocation2 + $0xa8] sm:$0xff]
        %v632 = vld [vmem:[#allocation2 + $0xb0] sm:$0xff]
        %v633 = vld [vmem:[#allocation2 + $0xb8] sm:$0xff]
        %v634 = vld [vmem:[#allocation2 + $0xc0] sm:$0xff]
        %v635 = vld [vmem:[#allocation2 + $0xc8] sm:$0xff]
        %v636 = vld [vmem:[#allocation2 + $0xd0] sm:$0xff]
        %v637 = vld [vmem:[#allocation2 + $0xd8] sm:$0xff]
        %v638 = vld [vmem:[#allocation2 + $0xe0] sm:$0xff]
        %v639 = vld [vmem:[#allocation2 + $0xe8] sm:$0xff]
        %v640 = vld [vmem:[#allocation2 + $0xf0] sm:$0xff]
        %v641 = vld [vmem:[#allocation2 + $0xf8] sm:$0xff]
        %v642 = vld [vmem:[#allocation2 + $0x100] sm:$0xff]
        %v643 = vld [vmem:[#allocation2 + $0x108] sm:$0xff]
        %v644 = vld [vmem:[#allocation2 + $0x110] sm:$0xff]
        %v645 = vld [vmem:[#allocation2 + $0x118] sm:$0xff]
        %v646 = vld [vmem:[#allocation2 + $0x120] sm:$0xff]
        %v647 = vld [vmem:[#allocation2 + $0x128] sm:$0xff]
        %v648 = vld [vmem:[#allocation2 + $0x130] sm:$0xff]
        %v649 = vld [vmem:[#allocation2 + $0x138] sm:$0xff]
        %v650 = vld [vmem:[#allocation2 + $0x140] sm:$0xff]
        %v651 = vld [vmem:[#allocation2 + $0x148] sm:$0xff]
        %v652 = vld [vmem:[#allocation2 + $0x150] sm:$0xff]
        %v653 = vld [vmem:[#allocation2 + $0x158] sm:$0xff]
        %v654 = vld [vmem:[#allocation2 + $0x160] sm:$0xff]
        %v655 = vld [vmem:[#allocation2 + $0x168] sm:$0xff]
        %v656 = vld [vmem:[#allocation2 + $0x170] sm:$0xff]
        %v657 = vld [vmem:[#allocation2 + $0x178] sm:$0xff]
        %v658 = vld [vmem:[#allocation2 + $0x180] sm:$0xff]
        %v659 = vld [vmem:[#allocation2 + $0x188] sm:$0xff]
        %v660 = vld [vmem:[#allocation2 + $0x190] sm:$0xff]
        %v661 = vld [vmem:[#allocation2 + $0x198] sm:$0xff]
        %v662 = vld [vmem:[#allocation2 + $0x1a0] sm:$0xff]
        %v663 = vld [vmem:[#allocation2 + $0x1a8] sm:$0xff]
        %v664 = vld [vmem:[#allocation2 + $0x1b0] sm:$0xff]
        %v665 = vld [vmem:[#allocation2 + $0x1b8] sm:$0xff]
        %v666 = vld [vmem:[#allocation2 + $0x1c0] sm:$0xff]
        %v667 = vld [vmem:[#allocation2 + $0x1c8] sm:$0xff]
        %v668 = vld [vmem:[#allocation2 + $0x1d0] sm:$0xff]
        %v669 = vld [vmem:[#allocation2 + $0x1d8] sm:$0xff]
        %v670 = vld [vmem:[#allocation2 + $0x1e0] sm:$0xff]
        %v671 = vld [vmem:[#allocation2 + $0x1e8] sm:$0xff]
        %v672 = vld [vmem:[#allocation2 + $0x1f0] sm:$0xff]
        %v673 = vld [vmem:[#allocation2 + $0x1f8] sm:$0xff]
        %v674 = vld [vmem:[%s435] sm:$0xff]
        %v675 = vld [vmem:[%s435 + $0x8] sm:$0xf]
        %v676 = vld [vmem:[%s435 + $0xc] sm:$0xff]
        %v677 = vld [vmem:[%s435 + $0x14] sm:$0xf]
        %v678 = vld [vmem:[%s435 + $0x18] sm:$0xff]
        %v679 = vld [vmem:[%s435 + $0x20] sm:$0xf]
        %v680 = vld [vmem:[%s435 + $0x24] sm:$0xff]
        %v681 = vld [vmem:[%s435 + $0x2c] sm:$0xf]
        %v682 = vld [vmem:[%s435 + $0x30] sm:$0xff]
        %v683 = vld [vmem:[%s435 + $0x38] sm:$0xf]
        %v684 = vld [vmem:[%s435 + $0x3c] sm:$0xff]
        %v685 = vld [vmem:[%s435 + $0x44] sm:$0xf]
        %v686 = vld [vmem:[%s435 + $0x48] sm:$0xff]
        %v687 = vld [vmem:[%s435 + $0x50] sm:$0xf]
        %v688 = vld [vmem:[%s435 + $0x54] sm:$0xff]
        %v689 = vld [vmem:[%s435 + $0x5c] sm:$0xf]
        %v690 = vld [vmem:[%s435 + $0x60] sm:$0xff]
        %v691 = vld [vmem:[%s435 + $0x68] sm:$0xf]
        %v692 = vld [vmem:[%s435 + $0x6c] sm:$0xff]
        %v693 = vld [vmem:[%s435 + $0x74] sm:$0xf]
        %v694 = vld [vmem:[%s435 + $0x78] sm:$0xff]
        %v695 = vld [vmem:[%s435 + $0x80] sm:$0xf]
        %v696 = vld [vmem:[%s435 + $0x84] sm:$0xff]
        %v697 = vld [vmem:[%s435 + $0x8c] sm:$0xf]
        %v698 = vld [vmem:[%s435 + $0x90] sm:$0xff]
        %v699 = vld [vmem:[%s435 + $0x98] sm:$0xf]
        %v700 = vld [vmem:[%s435 + $0x9c] sm:$0xff]
        %v701 = vld [vmem:[%s435 + $0xa4] sm:$0xf]
        %v702 = vld [vmem:[%s435 + $0xa8] sm:$0xff]
        %v703 = vld [vmem:[%s435 + $0xb0] sm:$0xf]
        %v704 = vld [vmem:[%s435 + $0xb4] sm:$0xff]
        %v705 = vld [vmem:[%s435 + $0xbc] sm:$0xf]
        %v706 = vld [vmem:[%s435 + $0xc0] sm:$0xff]
        %v707 = vld [vmem:[%s435 + $0xc8] sm:$0xf]
        %v708 = vld [vmem:[%s435 + $0xcc] sm:$0xff]
        %v709 = vld [vmem:[%s435 + $0xd4] sm:$0xf]
        %v710 = vld [vmem:[%s435 + $0xd8] sm:$0xff]
        %v711 = vld [vmem:[%s435 + $0xe0] sm:$0xf]
        %v712 = vld [vmem:[%s435 + $0xe4] sm:$0xff]
        %v713 = vld [vmem:[%s435 + $0xec] sm:$0xf]
        %v714 = vld [vmem:[%s435 + $0xf0] sm:$0xff]
        %v715 = vld [vmem:[%s435 + $0xf8] sm:$0xf]
        %v716 = vld [vmem:[%s435 + $0xfc] sm:$0xff]
        %v717 = vld [vmem:[%s435 + $0x104] sm:$0xf]
        %v718 = vld [vmem:[%s435 + $0x108] sm:$0xff]
        %v719 = vld [vmem:[%s435 + $0x110] sm:$0xf]
        %v720 = vld [vmem:[%s435 + $0x114] sm:$0xff]
        %v721 = vld [vmem:[%s435 + $0x11c] sm:$0xf]
        %v722 = vld [vmem:[%s435 + $0x120] sm:$0xff]
        %v723 = vld [vmem:[%s435 + $0x128] sm:$0xf]
        %v724 = vld [vmem:[%s435 + $0x12c] sm:$0xff]
        %v725 = vld [vmem:[%s435 + $0x134] sm:$0xf]
        %v726 = vld [vmem:[%s435 + $0x138] sm:$0xff]
        %v727 = vld [vmem:[%s435 + $0x140] sm:$0xf]
        %v728 = vld [vmem:[%s435 + $0x144] sm:$0xff]
        %v729 = vld [vmem:[%s435 + $0x14c] sm:$0xf]
        %v730 = vld [vmem:[%s435 + $0x150] sm:$0xff]
        %v731 = vld [vmem:[%s435 + $0x158] sm:$0xf]
        %v732 = vld [vmem:[%s435 + $0x15c] sm:$0xff]
        %v733 = vld [vmem:[%s435 + $0x164] sm:$0xf]
        %v734 = vld [vmem:[%s435 + $0x168] sm:$0xff]
        %v735 = vld [vmem:[%s435 + $0x170] sm:$0xf]
        %v736 = vld [vmem:[%s435 + $0x174] sm:$0xff]
        %v737 = vld [vmem:[%s435 + $0x17c] sm:$0xf]
        %v738 = vld [vmem:[%s504] sm:$0xff]
        %v739 = vld [vmem:[%s504 + $0x8] sm:$0xff]
        %v740 = vld [vmem:[%s504 + $0x10] sm:$0xff]
        %v741 = vld [vmem:[%s504 + $0x18] sm:$0xff]
        %v742 = vld [vmem:[%s504 + $0x20] sm:$0xff]
        %v743 = vld [vmem:[%s504 + $0x28] sm:$0xff]
        %v744 = vld [vmem:[%s504 + $0x30] sm:$0xff]
        %v745 = vld [vmem:[%s504 + $0x38] sm:$0xff]
        %v746 = vld [vmem:[%s504 + $0x40] sm:$0xff]
        %v747 = vld [vmem:[%s504 + $0x48] sm:$0xff]
        %v748 = vld [vmem:[%s504 + $0x50] sm:$0xff]
        %v749 = vld [vmem:[%s504 + $0x58] sm:$0xff]
        %v750 = vld [vmem:[%s504 + $0x60] sm:$0xff]
        %v751 = vld [vmem:[%s504 + $0x68] sm:$0xff]
        %v752 = vld [vmem:[%s504 + $0x70] sm:$0xff]
        %v753 = vld [vmem:[%s504 + $0x78] sm:$0xff]
        %v754 = vld [vmem:[%s504 + $0x80] sm:$0xff]
        %v755 = vld [vmem:[%s504 + $0x88] sm:$0xff]
        %v756 = vld [vmem:[%s504 + $0x90] sm:$0xff]
        %v757 = vld [vmem:[%s504 + $0x98] sm:$0xff]
        %v758 = vld [vmem:[%s504 + $0xa0] sm:$0xff]
        %v759 = vld [vmem:[%s504 + $0xa8] sm:$0xff]
        %v760 = vld [vmem:[%s504 + $0xb0] sm:$0xff]
        %v761 = vld [vmem:[%s504 + $0xb8] sm:$0xff]
        %v762 = vld [vmem:[%s504 + $0xc0] sm:$0xff]
        %v763 = vld [vmem:[%s504 + $0xc8] sm:$0xff]
        %v764 = vld [vmem:[%s504 + $0xd0] sm:$0xff]
        %v765 = vld [vmem:[%s504 + $0xd8] sm:$0xff]
        %v766 = vld [vmem:[%s504 + $0xe0] sm:$0xff]
        %v767 = vld [vmem:[%s504 + $0xe8] sm:$0xff]
        %v768 = vld [vmem:[%s504 + $0xf0] sm:$0xff]
        %v769 = vld [vmem:[%s504 + $0xf8] sm:$0xff]
        %v770 = vld [vmem:[%s504 + $0x100] sm:$0xff]
        %v771 = vld [vmem:[%s504 + $0x108] sm:$0xff]
        %v772 = vld [vmem:[%s504 + $0x110] sm:$0xff]
        %v773 = vld [vmem:[%s504 + $0x118] sm:$0xff]
        %v774 = vld [vmem:[%s504 + $0x120] sm:$0xff]
        %v775 = vld [vmem:[%s504 + $0x128] sm:$0xff]
        %v776 = vld [vmem:[%s504 + $0x130] sm:$0xff]
        %v777 = vld [vmem:[%s504 + $0x138] sm:$0xff]
        %v778 = vld [vmem:[%s504 + $0x140] sm:$0xff]
        %v779 = vld [vmem:[%s504 + $0x148] sm:$0xff]
        %v780 = vld [vmem:[%s504 + $0x150] sm:$0xff]
        %v781 = vld [vmem:[%s504 + $0x158] sm:$0xff]
        %v782 = vld [vmem:[%s504 + $0x160] sm:$0xff]
        %v783 = vld [vmem:[%s504 + $0x168] sm:$0xff]
        %v784 = vld [vmem:[%s504 + $0x170] sm:$0xff]
        %v785 = vld [vmem:[%s504 + $0x178] sm:$0xff]
        %v850 = vunpack.c.l.b16 %v674
        %v851 = vunpack.c.h.b16 %v674
        %v852 = vunpack.c.l.b16 %v675
        %v853 = vunpack.c.l.b16 %v676
        %v854 = vunpack.c.h.b16 %v676
        %v855 = vunpack.c.l.b16 %v677
        %v856 = vunpack.c.l.b16 %v678
        %v857 = vunpack.c.h.b16 %v678
        %v858 = vunpack.c.l.b16 %v679
        %v859 = vunpack.c.l.b16 %v680
        %v860 = vunpack.c.h.b16 %v680
        %v861 = vunpack.c.l.b16 %v681
        %v862 = vunpack.c.l.b16 %v682
        %v863 = vunpack.c.h.b16 %v682
        %v864 = vunpack.c.l.b16 %v683
        %v865 = vunpack.c.l.b16 %v684
        %v866 = vunpack.c.h.b16 %v684
        %v867 = vunpack.c.l.b16 %v685
        %v868 = vunpack.c.l.b16 %v686
        %v869 = vunpack.c.h.b16 %v686
        %v870 = vunpack.c.l.b16 %v687
        %v871 = vunpack.c.l.b16 %v688
        %v872 = vunpack.c.h.b16 %v688
        %v873 = vunpack.c.l.b16 %v689
        %v874 = vunpack.c.l.b16 %v690
        %v875 = vunpack.c.h.b16 %v690
        %v876 = vunpack.c.l.b16 %v691
        %v877 = vunpack.c.l.b16 %v692
        %v878 = vunpack.c.h.b16 %v692
        %v879 = vunpack.c.l.b16 %v693
        %v880 = vunpack.c.l.b16 %v694
        %v881 = vunpack.c.h.b16 %v694
        %v882 = vunpack.c.l.b16 %v695
        %v883 = vunpack.c.l.b16 %v696
        %v884 = vunpack.c.h.b16 %v696
        %v885 = vunpack.c.l.b16 %v697
        %v886 = vunpack.c.l.b16 %v698
        %v887 = vunpack.c.h.b16 %v698
        %v888 = vunpack.c.l.b16 %v699
        %v889 = vunpack.c.l.b16 %v700
        %v890 = vunpack.c.h.b16 %v700
        %v891 = vunpack.c.l.b16 %v701
        %v892 = vunpack.c.l.b16 %v702
        %v893 = vunpack.c.h.b16 %v702
        %v894 = vunpack.c.l.b16 %v703
        %v895 = vunpack.c.l.b16 %v704
        %v896 = vunpack.c.h.b16 %v704
        %v897 = vunpack.c.l.b16 %v705
        %v898 = vunpack.c.l.b16 %v706
        %v899 = vunpack.c.h.b16 %v706
        %v900 = vunpack.c.l.b16 %v707
        %v901 = vunpack.c.l.b16 %v708
        %v902 = vunpack.c.h.b16 %v708
        %v903 = vunpack.c.l.b16 %v709
        %v904 = vunpack.c.l.b16 %v710
        %v905 = vunpack.c.h.b16 %v710
        %v906 = vunpack.c.l.b16 %v711
        %v907 = vunpack.c.l.b16 %v712
        %v908 = vunpack.c.h.b16 %v712
        %v909 = vunpack.c.l.b16 %v713
        %v910 = vunpack.c.l.b16 %v714
        %v911 = vunpack.c.h.b16 %v714
        %v912 = vunpack.c.l.b16 %v715
        %v913 = vunpack.c.l.b16 %v716
        %v914 = vunpack.c.h.b16 %v716
        %v915 = vunpack.c.l.b16 %v717
        %v916 = vunpack.c.l.b16 %v718
        %v917 = vunpack.c.h.b16 %v718
        %v918 = vunpack.c.l.b16 %v719
        %v919 = vunpack.c.l.b16 %v720
        %v920 = vunpack.c.h.b16 %v720
        %v921 = vunpack.c.l.b16 %v721
        %v922 = vunpack.c.l.b16 %v722
        %v923 = vunpack.c.h.b16 %v722
        %v924 = vunpack.c.l.b16 %v723
        %v925 = vunpack.c.l.b16 %v724
        %v926 = vunpack.c.h.b16 %v724
        %v927 = vunpack.c.l.b16 %v725
        %v928 = vunpack.c.l.b16 %v726
        %v929 = vunpack.c.h.b16 %v726
        %v930 = vunpack.c.l.b16 %v727
        %v931 = vunpack.c.l.b16 %v728
        %v932 = vunpack.c.h.b16 %v728
        %v933 = vunpack.c.l.b16 %v729
        %v934 = vunpack.c.l.b16 %v730
        %v935 = vunpack.c.h.b16 %v730
        %v936 = vunpack.c.l.b16 %v731
        %v937 = vunpack.c.l.b16 %v732
        %v938 = vunpack.c.h.b16 %v732
        %v939 = vunpack.c.l.b16 %v733
        %v940 = vunpack.c.l.b16 %v734
        %v941 = vunpack.c.h.b16 %v734
        %v942 = vunpack.c.l.b16 %v735
        %v943 = vunpack.c.l.b16 %v736
        %v944 = vunpack.c.h.b16 %v736
        %v945 = vunpack.c.l.b16 %v737
        %v946 = vpack.c.b16 %v853, %v850
        %v947 = vpack.c.b16 %v854, %v851
        %v948 = vpack.c.b16 %v855, %v852
        %v949 = vpack.c.b16 %v859, %v856
        %v950 = vpack.c.b16 %v860, %v857
        %v951 = vpack.c.b16 %v861, %v858
        %v952 = vpack.c.b16 %v865, %v862
        %v953 = vpack.c.b16 %v866, %v863
        %v954 = vpack.c.b16 %v867, %v864
        %v955 = vpack.c.b16 %v871, %v868
        %v956 = vpack.c.b16 %v872, %v869
        %v957 = vpack.c.b16 %v873, %v870
        %v958 = vpack.c.b16 %v877, %v874
        %v959 = vpack.c.b16 %v878, %v875
        %v960 = vpack.c.b16 %v879, %v876
        %v961 = vpack.c.b16 %v883, %v880
        %v962 = vpack.c.b16 %v884, %v881
        %v963 = vpack.c.b16 %v885, %v882
        %v964 = vpack.c.b16 %v889, %v886
        %v965 = vpack.c.b16 %v890, %v887
        %v966 = vpack.c.b16 %v891, %v888
        %v967 = vpack.c.b16 %v895, %v892
        %v968 = vpack.c.b16 %v896, %v893
        %v969 = vpack.c.b16 %v897, %v894
        %v970 = vpack.c.b16 %v901, %v898
        %v971 = vpack.c.b16 %v902, %v899
        %v972 = vpack.c.b16 %v903, %v900
        %v973 = vpack.c.b16 %v907, %v904
        %v974 = vpack.c.b16 %v908, %v905
        %v975 = vpack.c.b16 %v909, %v906
        %v976 = vpack.c.b16 %v913, %v910
        %v977 = vpack.c.b16 %v914, %v911
        %v978 = vpack.c.b16 %v915, %v912
        %v979 = vpack.c.b16 %v919, %v916
        %v980 = vpack.c.b16 %v920, %v917
        %v981 = vpack.c.b16 %v921, %v918
        %v982 = vpack.c.b16 %v925, %v922
        %v983 = vpack.c.b16 %v926, %v923
        %v984 = vpack.c.b16 %v927, %v924
        %v985 = vpack.c.b16 %v931, %v928
        %v986 = vpack.c.b16 %v932, %v929
        %v987 = vpack.c.b16 %v933, %v930
        %v988 = vpack.c.b16 %v937, %v934
        %v989 = vpack.c.b16 %v938, %v935
        %v990 = vpack.c.b16 %v939, %v936
        %v991 = vpack.c.b16 %v943, %v940
        %v992 = vpack.c.b16 %v944, %v941
        %v993 = vpack.c.b16 %v945, %v942
        %v1090 = vunpack.c.l.b16 %v738
        %v1091 = vunpack.c.h.b16 %v738
        %v1092 = vunpack.c.l.b16 %v739
        %v1093 = vunpack.c.h.b16 %v739
        %v1094 = vunpack.c.l.b16 %v740
        %v1095 = vunpack.c.h.b16 %v740
        %v1096 = vunpack.c.l.b16 %v741
        %v1097 = vunpack.c.h.b16 %v741
        %v1098 = vunpack.c.l.b16 %v742
        %v1099 = vunpack.c.h.b16 %v742
        %v1100 = vunpack.c.l.b16 %v743
        %v1101 = vunpack.c.h.b16 %v743
        %v1102 = vunpack.c.l.b16 %v744
        %v1103 = vunpack.c.h.b16 %v744
        %v1104 = vunpack.c.l.b16 %v745
        %v1105 = vunpack.c.h.b16 %v745
        %v1106 = vunpack.c.l.b16 %v746
        %v1107 = vunpack.c.h.b16 %v746
        %v1108 = vunpack.c.l.b16 %v747
        %v1109 = vunpack.c.h.b16 %v747
        %v1110 = vunpack.c.l.b16 %v748
        %v1111 = vunpack.c.h.b16 %v748
        %v1112 = vunpack.c.l.b16 %v749
        %v1113 = vunpack.c.h.b16 %v749
        %v1114 = vunpack.c.l.b16 %v750
        %v1115 = vunpack.c.h.b16 %v750
        %v1116 = vunpack.c.l.b16 %v751
        %v1117 = vunpack.c.h.b16 %v751
        %v1118 = vunpack.c.l.b16 %v752
        %v1119 = vunpack.c.h.b16 %v752
        %v1120 = vunpack.c.l.b16 %v753
        %v1121 = vunpack.c.h.b16 %v753
        %v1122 = vunpack.c.l.b16 %v754
        %v1123 = vunpack.c.h.b16 %v754
        %v1124 = vunpack.c.l.b16 %v755
        %v1125 = vunpack.c.h.b16 %v755
        %v1126 = vunpack.c.l.b16 %v756
        %v1127 = vunpack.c.h.b16 %v756
        %v1128 = vunpack.c.l.b16 %v757
        %v1129 = vunpack.c.h.b16 %v757
        %v1130 = vunpack.c.l.b16 %v758
        %v1131 = vunpack.c.h.b16 %v758
        %v1132 = vunpack.c.l.b16 %v759
        %v1133 = vunpack.c.h.b16 %v759
        %v1134 = vunpack.c.l.b16 %v760
        %v1135 = vunpack.c.h.b16 %v760
        %v1136 = vunpack.c.l.b16 %v761
        %v1137 = vunpack.c.h.b16 %v761
        %v1138 = vunpack.c.l.b16 %v762
        %v1139 = vunpack.c.h.b16 %v762
        %v1140 = vunpack.c.l.b16 %v763
        %v1141 = vunpack.c.h.b16 %v763
        %v1142 = vunpack.c.l.b16 %v764
        %v1143 = vunpack.c.h.b16 %v764
        %v1144 = vunpack.c.l.b16 %v765
        %v1145 = vunpack.c.h.b16 %v765
        %v1146 = vunpack.c.l.b16 %v766
        %v1147 = vunpack.c.h.b16 %v766
        %v1148 = vunpack.c.l.b16 %v767
        %v1149 = vunpack.c.h.b16 %v767
        %v1150 = vunpack.c.l.b16 %v768
        %v1151 = vunpack.c.h.b16 %v768
        %v1152 = vunpack.c.l.b16 %v769
        %v1153 = vunpack.c.h.b16 %v769
        %v1154 = vunpack.c.l.b16 %v770
        %v1155 = vunpack.c.h.b16 %v770
        %v1156 = vunpack.c.l.b16 %v771
        %v1157 = vunpack.c.h.b16 %v771
        %v1158 = vunpack.c.l.b16 %v772
        %v1159 = vunpack.c.h.b16 %v772
        %v1160 = vunpack.c.l.b16 %v773
        %v1161 = vunpack.c.h.b16 %v773
        %v1162 = vunpack.c.l.b16 %v774
        %v1163 = vunpack.c.h.b16 %v774
        %v1164 = vunpack.c.l.b16 %v775
        %v1165 = vunpack.c.h.b16 %v775
        %v1166 = vunpack.c.l.b16 %v776
        %v1167 = vunpack.c.h.b16 %v776
        %v1168 = vunpack.c.l.b16 %v777
        %v1169 = vunpack.c.h.b16 %v777
        %v1170 = vunpack.c.l.b16 %v778
        %v1171 = vunpack.c.h.b16 %v778
        %v1172 = vunpack.c.l.b16 %v779
        %v1173 = vunpack.c.h.b16 %v779
        %v1174 = vunpack.c.l.b16 %v780
        %v1175 = vunpack.c.h.b16 %v780
        %v1176 = vunpack.c.l.b16 %v781
        %v1177 = vunpack.c.h.b16 %v781
        %v1178 = vunpack.c.l.b16 %v782
        %v1179 = vunpack.c.h.b16 %v782
        %v1180 = vunpack.c.l.b16 %v783
        %v1181 = vunpack.c.h.b16 %v783
        %v1182 = vunpack.c.l.b16 %v784
        %v1183 = vunpack.c.h.b16 %v784
        %v1184 = vunpack.c.l.b16 %v785
        %v1185 = vunpack.c.h.b16 %v785
        %v1186 = vpack.c.b16 %v1092, %v1090
        %v1187 = vpack.c.b16 %v1093, %v1091
        %v1188 = vpack.c.b16 %v1096, %v1094
        %v1189 = vpack.c.b16 %v1097, %v1095
        %v1190 = vpack.c.b16 %v1100, %v1098
        %v1191 = vpack.c.b16 %v1101, %v1099
        %v1192 = vpack.c.b16 %v1104, %v1102
        %v1193 = vpack.c.b16 %v1105, %v1103
        %v1194 = vpack.c.b16 %v1108, %v1106
        %v1195 = vpack.c.b16 %v1109, %v1107
        %v1196 = vpack.c.b16 %v1112, %v1110
        %v1197 = vpack.c.b16 %v1113, %v1111
        %v1198 = vpack.c.b16 %v1116, %v1114
        %v1199 = vpack.c.b16 %v1117, %v1115
        %v1200 = vpack.c.b16 %v1120, %v1118
        %v1201 = vpack.c.b16 %v1121, %v1119
        %v1202 = vpack.c.b16 %v1124, %v1122
        %v1203 = vpack.c.b16 %v1125, %v1123
        %v1204 = vpack.c.b16 %v1128, %v1126
        %v1205 = vpack.c.b16 %v1129, %v1127
        %v1206 = vpack.c.b16 %v1132, %v1130
        %v1207 = vpack.c.b16 %v1133, %v1131
        %v1208 = vpack.c.b16 %v1136, %v1134
        %v1209 = vpack.c.b16 %v1137, %v1135
        %v1210 = vpack.c.b16 %v1140, %v1138
        %v1211 = vpack.c.b16 %v1141, %v1139
        %v1212 = vpack.c.b16 %v1144, %v1142
        %v1213 = vpack.c.b16 %v1145, %v1143
        %v1214 = vpack.c.b16 %v1148, %v1146
        %v1215 = vpack.c.b16 %v1149, %v1147
        %v1216 = vpack.c.b16 %v1152, %v1150
        %v1217 = vpack.c.b16 %v1153, %v1151
        %v1218 = vpack.c.b16 %v1156, %v1154
        %v1219 = vpack.c.b16 %v1157, %v1155
        %v1220 = vpack.c.b16 %v1160, %v1158
        %v1221 = vpack.c.b16 %v1161, %v1159
        %v1222 = vpack.c.b16 %v1164, %v1162
        %v1223 = vpack.c.b16 %v1165, %v1163
        %v1224 = vpack.c.b16 %v1168, %v1166
        %v1225 = vpack.c.b16 %v1169, %v1167
        %v1226 = vpack.c.b16 %v1172, %v1170
        %v1227 = vpack.c.b16 %v1173, %v1171
        %v1228 = vpack.c.b16 %v1176, %v1174
        %v1229 = vpack.c.b16 %v1177, %v1175
        %v1230 = vpack.c.b16 %v1180, %v1178
        %v1231 = vpack.c.b16 %v1181, %v1179
        %v1232 = vpack.c.b16 %v1184, %v1182
        %v1233 = vpack.c.b16 %v1185, %v1183
        %1282 = vmatprep.subr.bf16.mxu0 %v1201
        %1283 = vmatpush1.bf16.msra.mxu0 %v1200
        %1284 = vmatprep.subr.bf16.mxu0 %v1199
        %1285 = vmatpush1.bf16.msra.mxu0 %v1198
        %1286 = vmatprep.subr.bf16.mxu0 %v1197
        %1287 = vmatpush1.bf16.msra.mxu0 %v1196
        %1288 = vmatprep.subr.bf16.mxu0 %v1195
        %1289 = vmatpush1.bf16.msra.mxu0 %v1194
        %1290 = vmatprep.subr.bf16.mxu0 %v1193
        %1291 = vmatpush1.bf16.msra.mxu0 %v1192
        %1292 = vmatprep.subr.bf16.mxu0 %v1191
        %1293 = vmatpush1.bf16.msra.mxu0 %v1190
        %1294 = vmatprep.subr.bf16.mxu0 %v1189
        %1295 = vmatpush1.bf16.msra.mxu0 %v1188
        %1296 = vmatprep.subr.bf16.mxu0 %v1187
        %1297 = vmatpush1.bf16.msra.mxu0 %v1186
        %1298 = vmatprep.subr.bf16.mxu0 %v1217
        %1299 = vmatpush2.bf16.msra.mxu0 %v1216
        %1300 = vmatprep.subr.bf16.mxu0 %v1215
        %1301 = vmatpush2.bf16.msra.mxu0 %v1214
        %1302 = vmatprep.subr.bf16.mxu0 %v1213
        %1303 = vmatpush2.bf16.msra.mxu0 %v1212
        %1304 = vmatprep.subr.bf16.mxu0 %v1211
        %1305 = vmatpush2.bf16.msra.mxu0 %v1210
        %1306 = vmatprep.subr.bf16.mxu0 %v1209
        %1307 = vmatpush2.bf16.msra.mxu0 %v1208
        %1308 = vmatprep.subr.bf16.mxu0 %v1207
        %1309 = vmatpush2.bf16.msra.mxu0 %v1206
        %1310 = vmatprep.subr.bf16.mxu0 %v1205
        %1311 = vmatpush2.bf16.msra.mxu0 %v1204
        %1312 = vmatprep.subr.bf16.mxu0 %v1203
        %1313 = vmatpush2.bf16.msra.mxu0 %v1202
        %1314 = vmatprep.mubr.bf16.mxu0 %v947
        %1315 = vmatmul.mubr.bf16.gmra.mxu0 %v946
        %v1316 = vpop.f32.mrf.mxu0
        %v1317 = vadd.f32 0.0, %v1316
        %v1318 = vpop.f32.mrf.mxu0
        %v1319 = vadd.f32 0.0, %v1318
        %v1320 = vpop.f32.mrf.mxu0
        %v1321 = vadd.f32 0.0, %v1320
        %v1322 = vpop.f32.mrf.mxu0
        %v1323 = vadd.f32 0.0, %v1322
        %1324 = vmatprep.mubr.bf16.mxu0 %v950
        %1325 = vmatmul.mubr.bf16.gmra.mxu0 %v949
        %v1326 = vpop.f32.mrf.mxu0
        %v1327 = vadd.f32 0.0, %v1326
        %v1328 = vpop.f32.mrf.mxu0
        %v1329 = vadd.f32 0.0, %v1328
        %v1330 = vpop.f32.mrf.mxu0
        %v1331 = vadd.f32 0.0, %v1330
        %v1332 = vpop.f32.mrf.mxu0
        %v1333 = vadd.f32 0.0, %v1332
        %1334 = vmatprep.mubr.bf16.mxu0 %v953
        %1335 = vmatmul.mubr.bf16.gmra.mxu0 %v952
        %v1336 = vpop.f32.mrf.mxu0
        %v1337 = vadd.f32 0.0, %v1336
        %v1338 = vpop.f32.mrf.mxu0
        %v1339 = vadd.f32 0.0, %v1338
        %v1340 = vpop.f32.mrf.mxu0
        %v1341 = vadd.f32 0.0, %v1340
        %v1342 = vpop.f32.mrf.mxu0
        %v1343 = vadd.f32 0.0, %v1342
        %1344 = vmatprep.mubr.bf16.mxu0 %v956
        %1345 = vmatmul.mubr.bf16.gmra.mxu0 %v955
        %v1346 = vpop.f32.mrf.mxu0
        %v1347 = vadd.f32 0.0, %v1346
        %v1348 = vpop.f32.mrf.mxu0
        %v1349 = vadd.f32 0.0, %v1348
        %v1350 = vpop.f32.mrf.mxu0
        %v1351 = vadd.f32 0.0, %v1350
        %v1352 = vpop.f32.mrf.mxu0
        %v1353 = vadd.f32 0.0, %v1352
        %1354 = vmatprep.mubr.bf16.mxu0 %v959
        %1355 = vmatmul.mubr.bf16.gmra.mxu0 %v958
        %v1356 = vpop.f32.mrf.mxu0
        %v1357 = vadd.f32 0.0, %v1356
        %v1358 = vpop.f32.mrf.mxu0
        %v1359 = vadd.f32 0.0, %v1358
        %v1360 = vpop.f32.mrf.mxu0
        %v1361 = vadd.f32 0.0, %v1360
        %v1362 = vpop.f32.mrf.mxu0
        %v1363 = vadd.f32 0.0, %v1362
        %1364 = vmatprep.mubr.bf16.mxu0 %v962
        %1365 = vmatmul.mubr.bf16.gmra.mxu0 %v961
        %v1366 = vpop.f32.mrf.mxu0
        %v1367 = vadd.f32 0.0, %v1366
        %v1368 = vpop.f32.mrf.mxu0
        %v1369 = vadd.f32 0.0, %v1368
        %v1370 = vpop.f32.mrf.mxu0
        %v1371 = vadd.f32 0.0, %v1370
        %v1372 = vpop.f32.mrf.mxu0
        %v1373 = vadd.f32 0.0, %v1372
        %1374 = vmatprep.mubr.bf16.mxu0 %v965
        %1375 = vmatmul.mubr.bf16.gmra.mxu0 %v964
        %v1376 = vpop.f32.mrf.mxu0
        %v1377 = vadd.f32 0.0, %v1376
        %v1378 = vpop.f32.mrf.mxu0
        %v1379 = vadd.f32 0.0, %v1378
        %v1380 = vpop.f32.mrf.mxu0
        %v1381 = vadd.f32 0.0, %v1380
        %v1382 = vpop.f32.mrf.mxu0
        %v1383 = vadd.f32 0.0, %v1382
        %1384 = vmatprep.mubr.bf16.mxu0 %v968
        %1385 = vmatmul.mubr.bf16.gmra.mxu0 %v967
        %v1386 = vpop.f32.mrf.mxu0
        %v1387 = vadd.f32 0.0, %v1386
        %v1388 = vpop.f32.mrf.mxu0
        %v1389 = vadd.f32 0.0, %v1388
        %v1390 = vpop.f32.mrf.mxu0
        %v1391 = vadd.f32 0.0, %v1390
        %v1392 = vpop.f32.mrf.mxu0
        %v1393 = vadd.f32 0.0, %v1392
        %1394 = vmatprep.mubr.bf16.mxu0 %v971
        %1395 = vmatmul.mubr.bf16.gmra.mxu0 %v970
        %v1396 = vpop.f32.mrf.mxu0
        %v1397 = vadd.f32 0.0, %v1396
        %v1398 = vpop.f32.mrf.mxu0
        %v1399 = vadd.f32 0.0, %v1398
        %v1400 = vpop.f32.mrf.mxu0
        %v1401 = vadd.f32 0.0, %v1400
        %v1402 = vpop.f32.mrf.mxu0
        %v1403 = vadd.f32 0.0, %v1402
        %1404 = vmatprep.mubr.bf16.mxu0 %v974
        %1405 = vmatmul.mubr.bf16.gmra.mxu0 %v973
        %v1406 = vpop.f32.mrf.mxu0
        %v1407 = vadd.f32 0.0, %v1406
        %v1408 = vpop.f32.mrf.mxu0
        %v1409 = vadd.f32 0.0, %v1408
        %v1410 = vpop.f32.mrf.mxu0
        %v1411 = vadd.f32 0.0, %v1410
        %v1412 = vpop.f32.mrf.mxu0
        %v1413 = vadd.f32 0.0, %v1412
        %1414 = vmatprep.mubr.bf16.mxu0 %v977
        %1415 = vmatmul.mubr.bf16.gmra.mxu0 %v976
        %v1416 = vpop.f32.mrf.mxu0
        %v1417 = vadd.f32 0.0, %v1416
        %v1418 = vpop.f32.mrf.mxu0
        %v1419 = vadd.f32 0.0, %v1418
        %v1420 = vpop.f32.mrf.mxu0
        %v1421 = vadd.f32 0.0, %v1420
        %v1422 = vpop.f32.mrf.mxu0
        %v1423 = vadd.f32 0.0, %v1422
        %1424 = vmatprep.mubr.bf16.mxu0 %v980
        %1425 = vmatmul.mubr.bf16.gmra.mxu0 %v979
        %v1426 = vpop.f32.mrf.mxu0
        %v1427 = vadd.f32 0.0, %v1426
        %v1428 = vpop.f32.mrf.mxu0
        %v1429 = vadd.f32 0.0, %v1428
        %v1430 = vpop.f32.mrf.mxu0
        %v1431 = vadd.f32 0.0, %v1430
        %v1432 = vpop.f32.mrf.mxu0
        %v1433 = vadd.f32 0.0, %v1432
        %1434 = vmatprep.mubr.bf16.mxu0 %v983
        %1435 = vmatmul.mubr.bf16.gmra.mxu0 %v982
        %v1436 = vpop.f32.mrf.mxu0
        %v1437 = vadd.f32 0.0, %v1436
        %v1438 = vpop.f32.mrf.mxu0
        %v1439 = vadd.f32 0.0, %v1438
        %v1440 = vpop.f32.mrf.mxu0
        %v1441 = vadd.f32 0.0, %v1440
        %v1442 = vpop.f32.mrf.mxu0
        %v1443 = vadd.f32 0.0, %v1442
        %1444 = vmatprep.mubr.bf16.mxu0 %v986
        %1445 = vmatmul.mubr.bf16.gmra.mxu0 %v985
        %v1446 = vpop.f32.mrf.mxu0
        %v1447 = vadd.f32 0.0, %v1446
        %v1448 = vpop.f32.mrf.mxu0
        %v1449 = vadd.f32 0.0, %v1448
        %v1450 = vpop.f32.mrf.mxu0
        %v1451 = vadd.f32 0.0, %v1450
        %v1452 = vpop.f32.mrf.mxu0
        %v1453 = vadd.f32 0.0, %v1452
        %1454 = vmatprep.mubr.bf16.mxu0 %v989
        %1455 = vmatmul.mubr.bf16.gmra.mxu0 %v988
        %v1456 = vpop.f32.mrf.mxu0
        %v1457 = vadd.f32 0.0, %v1456
        %v1458 = vpop.f32.mrf.mxu0
        %v1459 = vadd.f32 0.0, %v1458
        %v1460 = vpop.f32.mrf.mxu0
        %v1461 = vadd.f32 0.0, %v1460
        %v1462 = vpop.f32.mrf.mxu0
        %v1463 = vadd.f32 0.0, %v1462
        %1464 = vmatprep.mubr.bf16.mxu0 %v992
        %1465 = vmatmul.mubr.bf16.gmra.mxu0 %v991
        %v1466 = vpop.f32.mrf.mxu0
        %v1467 = vadd.f32 0.0, %v1466
        %v1468 = vpop.f32.mrf.mxu0
        %v1469 = vadd.f32 0.0, %v1468
        %v1470 = vpop.f32.mrf.mxu0
        %v1471 = vadd.f32 0.0, %v1470
        %v1472 = vpop.f32.mrf.mxu0
        %v1473 = vadd.f32 0.0, %v1472
        %1474 = vdwg.mxu0
        %1475 = vmatprep.subr.bf16.mxu0 %v1233
        %1476 = vmatpush1.bf16.msra.mxu0 %v1232
        %1477 = vmatprep.subr.bf16.mxu0 %v1231
        %1478 = vmatpush1.bf16.msra.mxu0 %v1230
        %1479 = vmatprep.subr.bf16.mxu0 %v1229
        %1480 = vmatpush1.bf16.msra.mxu0 %v1228
        %1481 = vmatprep.subr.bf16.mxu0 %v1227
        %1482 = vmatpush1.bf16.msra.mxu0 %v1226
        %1483 = vmatprep.subr.bf16.mxu0 %v1225
        %1484 = vmatpush1.bf16.msra.mxu0 %v1224
        %1485 = vmatprep.subr.bf16.mxu0 %v1223
        %1486 = vmatpush1.bf16.msra.mxu0 %v1222
        %1487 = vmatprep.subr.bf16.mxu0 %v1221
        %1488 = vmatpush1.bf16.msra.mxu0 %v1220
        %1489 = vmatprep.subr.bf16.mxu0 %v1219
        %1490 = vmatpush1.bf16.msra.mxu0 %v1218
        %1491 = vmatprep.subr.bf16.mxu0 0
        %1492 = vmatpush2.bf16.msra.mxu0 0
        %1493 = vmatprep.subr.bf16.mxu0 0
        %1494 = vmatpush2.bf16.msra.mxu0 0
        %1495 = vmatprep.subr.bf16.mxu0 0
        %1496 = vmatpush2.bf16.msra.mxu0 0
        %1497 = vmatprep.subr.bf16.mxu0 0
        %1498 = vmatpush2.bf16.msra.mxu0 0
        %1499 = vmatprep.subr.bf16.mxu0 0
        %1500 = vmatpush2.bf16.msra.mxu0 0
        %1501 = vmatprep.subr.bf16.mxu0 0
        %1502 = vmatpush2.bf16.msra.mxu0 0
        %1503 = vmatprep.subr.bf16.mxu0 0
        %1504 = vmatpush2.bf16.msra.mxu0 0
        %1505 = vmatprep.subr.bf16.mxu0 0
        %1506 = vmatpush2.bf16.msra.mxu0 0
        %1507 = vmatprep.mubr.bf16.mxu0 0
        %1508 = vmatmul.mubr.bf16.gmra.mxu0 %v948
        %v1509 = vpop.f32.mrf.mxu0
        %v1510 = vadd.f32 %v1317, %v1509
        %v1511 = vpop.f32.mrf.mxu0
        %v1512 = vadd.f32 %v1319, %v1511
        %v1513 = vpop.f32.mrf.mxu0
        %v1514 = vadd.f32 %v1321, %v1513
        %v1515 = vpop.f32.mrf.mxu0
        %v1516 = vadd.f32 %v1323, %v1515
        %1517 = vmatprep.mubr.bf16.mxu0 0
        %1518 = vmatmul.mubr.bf16.gmra.mxu0 %v951
        %v1519 = vpop.f32.mrf.mxu0
        %v1520 = vadd.f32 %v1327, %v1519
        %v1521 = vpop.f32.mrf.mxu0
        %v1522 = vadd.f32 %v1329, %v1521
        %v1523 = vpop.f32.mrf.mxu0
        %v1524 = vadd.f32 %v1331, %v1523
        %v1525 = vpop.f32.mrf.mxu0
        %v1526 = vadd.f32 %v1333, %v1525
        %1527 = vmatprep.mubr.bf16.mxu0 0
        %1528 = vmatmul.mubr.bf16.gmra.mxu0 %v954
        %v1529 = vpop.f32.mrf.mxu0
        %v1530 = vadd.f32 %v1337, %v1529
        %v1531 = vpop.f32.mrf.mxu0
        %v1532 = vadd.f32 %v1339, %v1531
        %v1533 = vpop.f32.mrf.mxu0
        %v1534 = vadd.f32 %v1341, %v1533
        %v1535 = vpop.f32.mrf.mxu0
        %v1536 = vadd.f32 %v1343, %v1535
        %1537 = vmatprep.mubr.bf16.mxu0 0
        %1538 = vmatmul.mubr.bf16.gmra.mxu0 %v957
        %v1539 = vpop.f32.mrf.mxu0
        %v1540 = vadd.f32 %v1347, %v1539
        %v1541 = vpop.f32.mrf.mxu0
        %v1542 = vadd.f32 %v1349, %v1541
        %v1543 = vpop.f32.mrf.mxu0
        %v1544 = vadd.f32 %v1351, %v1543
        %v1545 = vpop.f32.mrf.mxu0
        %v1546 = vadd.f32 %v1353, %v1545
        %1547 = vmatprep.mubr.bf16.mxu0 0
        %1548 = vmatmul.mubr.bf16.gmra.mxu0 %v960
        %v1549 = vpop.f32.mrf.mxu0
        %v1550 = vadd.f32 %v1357, %v1549
        %v1551 = vpop.f32.mrf.mxu0
        %v1552 = vadd.f32 %v1359, %v1551
        %v1553 = vpop.f32.mrf.mxu0
        %v1554 = vadd.f32 %v1361, %v1553
        %v1555 = vpop.f32.mrf.mxu0
        %v1556 = vadd.f32 %v1363, %v1555
        %1557 = vmatprep.mubr.bf16.mxu0 0
        %1558 = vmatmul.mubr.bf16.gmra.mxu0 %v963
        %v1559 = vpop.f32.mrf.mxu0
        %v1560 = vadd.f32 %v1367, %v1559
        %v1561 = vpop.f32.mrf.mxu0
        %v1562 = vadd.f32 %v1369, %v1561
        %v1563 = vpop.f32.mrf.mxu0
        %v1564 = vadd.f32 %v1371, %v1563
        %v1565 = vpop.f32.mrf.mxu0
        %v1566 = vadd.f32 %v1373, %v1565
        %1567 = vmatprep.mubr.bf16.mxu0 0
        %1568 = vmatmul.mubr.bf16.gmra.mxu0 %v966
        %v1569 = vpop.f32.mrf.mxu0
        %v1570 = vadd.f32 %v1377, %v1569
        %v1571 = vpop.f32.mrf.mxu0
        %v1572 = vadd.f32 %v1379, %v1571
        %v1573 = vpop.f32.mrf.mxu0
        %v1574 = vadd.f32 %v1381, %v1573
        %v1575 = vpop.f32.mrf.mxu0
        %v1576 = vadd.f32 %v1383, %v1575
        %1577 = vmatprep.mubr.bf16.mxu0 0
        %1578 = vmatmul.mubr.bf16.gmra.mxu0 %v969
        %v1579 = vpop.f32.mrf.mxu0
        %v1580 = vadd.f32 %v1387, %v1579
        %v1581 = vpop.f32.mrf.mxu0
        %v1582 = vadd.f32 %v1389, %v1581
        %v1583 = vpop.f32.mrf.mxu0
        %v1584 = vadd.f32 %v1391, %v1583
        %v1585 = vpop.f32.mrf.mxu0
        %v1586 = vadd.f32 %v1393, %v1585
        %1587 = vmatprep.mubr.bf16.mxu0 0
        %1588 = vmatmul.mubr.bf16.gmra.mxu0 %v972
        %v1589 = vpop.f32.mrf.mxu0
        %v1590 = vadd.f32 %v1397, %v1589
        %v1591 = vpop.f32.mrf.mxu0
        %v1592 = vadd.f32 %v1399, %v1591
        %v1593 = vpop.f32.mrf.mxu0
        %v1594 = vadd.f32 %v1401, %v1593
        %v1595 = vpop.f32.mrf.mxu0
        %v1596 = vadd.f32 %v1403, %v1595
        %1597 = vmatprep.mubr.bf16.mxu0 0
        %1598 = vmatmul.mubr.bf16.gmra.mxu0 %v975
        %v1599 = vpop.f32.mrf.mxu0
        %v1600 = vadd.f32 %v1407, %v1599
        %v1601 = vpop.f32.mrf.mxu0
        %v1602 = vadd.f32 %v1409, %v1601
        %v1603 = vpop.f32.mrf.mxu0
        %v1604 = vadd.f32 %v1411, %v1603
        %v1605 = vpop.f32.mrf.mxu0
        %v1606 = vadd.f32 %v1413, %v1605
        %1607 = vmatprep.mubr.bf16.mxu0 0
        %1608 = vmatmul.mubr.bf16.gmra.mxu0 %v978
        %v1609 = vpop.f32.mrf.mxu0
        %v1610 = vadd.f32 %v1417, %v1609
        %v1611 = vpop.f32.mrf.mxu0
        %v1612 = vadd.f32 %v1419, %v1611
        %v1613 = vpop.f32.mrf.mxu0
        %v1614 = vadd.f32 %v1421, %v1613
        %v1615 = vpop.f32.mrf.mxu0
        %v1616 = vadd.f32 %v1423, %v1615
        %1617 = vmatprep.mubr.bf16.mxu0 0
        %1618 = vmatmul.mubr.bf16.gmra.mxu0 %v981
        %v1619 = vpop.f32.mrf.mxu0
        %v1620 = vadd.f32 %v1427, %v1619
        %v1621 = vpop.f32.mrf.mxu0
        %v1622 = vadd.f32 %v1429, %v1621
        %v1623 = vpop.f32.mrf.mxu0
        %v1624 = vadd.f32 %v1431, %v1623
        %v1625 = vpop.f32.mrf.mxu0
        %v1626 = vadd.f32 %v1433, %v1625
        %1627 = vmatprep.mubr.bf16.mxu0 0
        %1628 = vmatmul.mubr.bf16.gmra.mxu0 %v984
        %v1629 = vpop.f32.mrf.mxu0
        %v1630 = vadd.f32 %v1437, %v1629
        %v1631 = vpop.f32.mrf.mxu0
        %v1632 = vadd.f32 %v1439, %v1631
        %v1633 = vpop.f32.mrf.mxu0
        %v1634 = vadd.f32 %v1441, %v1633
        %v1635 = vpop.f32.mrf.mxu0
        %v1636 = vadd.f32 %v1443, %v1635
        %1637 = vmatprep.mubr.bf16.mxu0 0
        %1638 = vmatmul.mubr.bf16.gmra.mxu0 %v987
        %v1639 = vpop.f32.mrf.mxu0
        %v1640 = vadd.f32 %v1447, %v1639
        %v1641 = vpop.f32.mrf.mxu0
        %v1642 = vadd.f32 %v1449, %v1641
        %v1643 = vpop.f32.mrf.mxu0
        %v1644 = vadd.f32 %v1451, %v1643
        %v1645 = vpop.f32.mrf.mxu0
        %v1646 = vadd.f32 %v1453, %v1645
        %1647 = vmatprep.mubr.bf16.mxu0 0
        %1648 = vmatmul.mubr.bf16.gmra.mxu0 %v990
        %v1649 = vpop.f32.mrf.mxu0
        %v1650 = vadd.f32 %v1457, %v1649
        %v1651 = vpop.f32.mrf.mxu0
        %v1652 = vadd.f32 %v1459, %v1651
        %v1653 = vpop.f32.mrf.mxu0
        %v1654 = vadd.f32 %v1461, %v1653
        %v1655 = vpop.f32.mrf.mxu0
        %v1656 = vadd.f32 %v1463, %v1655
        %1657 = vmatprep.mubr.bf16.mxu0 0
        %1658 = vmatmul.mubr.bf16.gmra.mxu0 %v993
        %v1659 = vpop.f32.mrf.mxu0
        %v1660 = vadd.f32 %v1467, %v1659
        %v1661 = vpop.f32.mrf.mxu0
        %v1662 = vadd.f32 %v1469, %v1661
        %v1663 = vpop.f32.mrf.mxu0
        %v1664 = vadd.f32 %v1471, %v1663
        %v1665 = vpop.f32.mrf.mxu0
        %v1666 = vadd.f32 %v1473, %v1665
        %1667 = vdwg.mxu0
        %v1668 = vadd.f32 %v610, %v1510
        %v1669 = vadd.f32 %v611, %v1512
        %v1670 = vadd.f32 %v612, %v1514
        %v1671 = vadd.f32 %v613, %v1516
        %v1672 = vadd.f32 %v614, %v1520
        %v1673 = vadd.f32 %v615, %v1522
        %v1674 = vadd.f32 %v616, %v1524
        %v1675 = vadd.f32 %v617, %v1526
        %v1676 = vadd.f32 %v618, %v1530
        %v1677 = vadd.f32 %v619, %v1532
        %v1678 = vadd.f32 %v620, %v1534
        %v1679 = vadd.f32 %v621, %v1536
        %v1680 = vadd.f32 %v622, %v1540
        %v1681 = vadd.f32 %v623, %v1542
        %v1682 = vadd.f32 %v624, %v1544
        %v1683 = vadd.f32 %v625, %v1546
        %v1684 = vadd.f32 %v626, %v1550
        %v1685 = vadd.f32 %v627, %v1552
        %v1686 = vadd.f32 %v628, %v1554
        %v1687 = vadd.f32 %v629, %v1556
        %v1688 = vadd.f32 %v630, %v1560
        %v1689 = vadd.f32 %v631, %v1562
        %v1690 = vadd.f32 %v632, %v1564
        %v1691 = vadd.f32 %v633, %v1566
        %v1692 = vadd.f32 %v634, %v1570
        %v1693 = vadd.f32 %v635, %v1572
        %v1694 = vadd.f32 %v636, %v1574
        %v1695 = vadd.f32 %v637, %v1576
        %v1696 = vadd.f32 %v638, %v1580
        %v1697 = vadd.f32 %v639, %v1582
        %v1698 = vadd.f32 %v640, %v1584
        %v1699 = vadd.f32 %v641, %v1586
        %v1700 = vadd.f32 %v642, %v1590
        %v1701 = vadd.f32 %v643, %v1592
        %v1702 = vadd.f32 %v644, %v1594
        %v1703 = vadd.f32 %v645, %v1596
        %v1704 = vadd.f32 %v646, %v1600
        %v1705 = vadd.f32 %v647, %v1602
        %v1706 = vadd.f32 %v648, %v1604
        %v1707 = vadd.f32 %v649, %v1606
        %v1708 = vadd.f32 %v650, %v1610
        %v1709 = vadd.f32 %v651, %v1612
        %v1710 = vadd.f32 %v652, %v1614
        %v1711 = vadd.f32 %v653, %v1616
        %v1712 = vadd.f32 %v654, %v1620
        %v1713 = vadd.f32 %v655, %v1622
        %v1714 = vadd.f32 %v656, %v1624
        %v1715 = vadd.f32 %v657, %v1626
        %v1716 = vadd.f32 %v658, %v1630
        %v1717 = vadd.f32 %v659, %v1632
        %v1718 = vadd.f32 %v660, %v1634
        %v1719 = vadd.f32 %v661, %v1636
        %v1720 = vadd.f32 %v662, %v1640
        %v1721 = vadd.f32 %v663, %v1642
        %v1722 = vadd.f32 %v664, %v1644
        %v1723 = vadd.f32 %v665, %v1646
        %v1724 = vadd.f32 %v666, %v1650
        %v1725 = vadd.f32 %v667, %v1652
        %v1726 = vadd.f32 %v668, %v1654
        %v1727 = vadd.f32 %v669, %v1656
        %v1728 = vadd.f32 %v670, %v1660
        %v1729 = vadd.f32 %v671, %v1662
        %v1730 = vadd.f32 %v672, %v1664
        %v1731 = vadd.f32 %v673, %v1666
        %1732 = vst [vmem:[#allocation2] sm:$0xff] %v1668
        %1733 = vst [vmem:[#allocation2 + $0x8] sm:$0xff] %v1669
        %1734 = vst [vmem:[#allocation2 + $0x10] sm:$0xff] %v1670
        %1735 = vst [vmem:[#allocation2 + $0x18] sm:$0xff] %v1671
        %1736 = vst [vmem:[#allocation2 + $0x20] sm:$0xff] %v1672
        %1737 = vst [vmem:[#allocation2 + $0x28] sm:$0xff] %v1673
        %1738 = vst [vmem:[#allocation2 + $0x30] sm:$0xff] %v1674
        %1739 = vst [vmem:[#allocation2 + $0x38] sm:$0xff] %v1675
        %1740 = vst [vmem:[#allocation2 + $0x40] sm:$0xff] %v1676
        %1741 = vst [vmem:[#allocation2 + $0x48] sm:$0xff] %v1677
        %1742 = vst [vmem:[#allocation2 + $0x50] sm:$0xff] %v1678
        %1743 = vst [vmem:[#allocation2 + $0x58] sm:$0xff] %v1679
        %1744 = vst [vmem:[#allocation2 + $0x60] sm:$0xff] %v1680
        %1745 = vst [vmem:[#allocation2 + $0x68] sm:$0xff] %v1681
        %1746 = vst [vmem:[#allocation2 + $0x70] sm:$0xff] %v1682
        %1747 = vst [vmem:[#allocation2 + $0x78] sm:$0xff] %v1683
        %1748 = vst [vmem:[#allocation2 + $0x80] sm:$0xff] %v1684
        %1749 = vst [vmem:[#allocation2 + $0x88] sm:$0xff] %v1685
        %1750 = vst [vmem:[#allocation2 + $0x90] sm:$0xff] %v1686
        %1751 = vst [vmem:[#allocation2 + $0x98] sm:$0xff] %v1687
        %1752 = vst [vmem:[#allocation2 + $0xa0] sm:$0xff] %v1688
        %1753 = vst [vmem:[#allocation2 + $0xa8] sm:$0xff] %v1689
        %1754 = vst [vmem:[#allocation2 + $0xb0] sm:$0xff] %v1690
        %1755 = vst [vmem:[#allocation2 + $0xb8] sm:$0xff] %v1691
        %1756 = vst [vmem:[#allocation2 + $0xc0] sm:$0xff] %v1692
        %1757 = vst [vmem:[#allocation2 + $0xc8] sm:$0xff] %v1693
        %1758 = vst [vmem:[#allocation2 + $0xd0] sm:$0xff] %v1694
        %1759 = vst [vmem:[#allocation2 + $0xd8] sm:$0xff] %v1695
        %1760 = vst [vmem:[#allocation2 + $0xe0] sm:$0xff] %v1696
        %1761 = vst [vmem:[#allocation2 + $0xe8] sm:$0xff] %v1697
        %1762 = vst [vmem:[#allocation2 + $0xf0] sm:$0xff] %v1698
        %1763 = vst [vmem:[#allocation2 + $0xf8] sm:$0xff] %v1699
        %1764 = vst [vmem:[#allocation2 + $0x100] sm:$0xff] %v1700
        %1765 = vst [vmem:[#allocation2 + $0x108] sm:$0xff] %v1701
        %1766 = vst [vmem:[#allocation2 + $0x110] sm:$0xff] %v1702
        %1767 = vst [vmem:[#allocation2 + $0x118] sm:$0xff] %v1703
        %1768 = vst [vmem:[#allocation2 + $0x120] sm:$0xff] %v1704
        %1769 = vst [vmem:[#allocation2 + $0x128] sm:$0xff] %v1705
        %1770 = vst [vmem:[#allocation2 + $0x130] sm:$0xff] %v1706
        %1771 = vst [vmem:[#allocation2 + $0x138] sm:$0xff] %v1707
        %1772 = vst [vmem:[#allocation2 + $0x140] sm:$0xff] %v1708
        %1773 = vst [vmem:[#allocation2 + $0x148] sm:$0xff] %v1709
        %1774 = vst [vmem:[#allocation2 + $0x150] sm:$0xff] %v1710
        %1775 = vst [vmem:[#allocation2 + $0x158] sm:$0xff] %v1711
        %1776 = vst [vmem:[#allocation2 + $0x160] sm:$0xff] %v1712
        %1777 = vst [vmem:[#allocation2 + $0x168] sm:$0xff] %v1713
        %1778 = vst [vmem:[#allocation2 + $0x170] sm:$0xff] %v1714
        %1779 = vst [vmem:[#allocation2 + $0x178] sm:$0xff] %v1715
        %1780 = vst [vmem:[#allocation2 + $0x180] sm:$0xff] %v1716
        %1781 = vst [vmem:[#allocation2 + $0x188] sm:$0xff] %v1717
        %1782 = vst [vmem:[#allocation2 + $0x190] sm:$0xff] %v1718
        %1783 = vst [vmem:[#allocation2 + $0x198] sm:$0xff] %v1719
        %1784 = vst [vmem:[#allocation2 + $0x1a0] sm:$0xff] %v1720
        %1785 = vst [vmem:[#allocation2 + $0x1a8] sm:$0xff] %v1721
        %1786 = vst [vmem:[#allocation2 + $0x1b0] sm:$0xff] %v1722
        %1787 = vst [vmem:[#allocation2 + $0x1b8] sm:$0xff] %v1723
        %1788 = vst [vmem:[#allocation2 + $0x1c0] sm:$0xff] %v1724
        %1789 = vst [vmem:[#allocation2 + $0x1c8] sm:$0xff] %v1725
        %1790 = vst [vmem:[#allocation2 + $0x1d0] sm:$0xff] %v1726
        %1791 = vst [vmem:[#allocation2 + $0x1d8] sm:$0xff] %v1727
        %1792 = vst [vmem:[#allocation2 + $0x1e0] sm:$0xff] %v1728
        %1793 = vst [vmem:[#allocation2 + $0x1e8] sm:$0xff] %v1729
        %1794 = vst [vmem:[#allocation2 + $0x1f0] sm:$0xff] %v1730
        %1795 = vst [vmem:[#allocation2 + $0x1f8] sm:$0xff] %v1731
        %p1796 = scmp.eq.s32.totalorder %s23, 2
        // Predicated region
        $region71: #{_lambda_.5} parent=61 // pred_check
          %p1797 = pneg %p1796
        $region72: #{_lambda_.5} parent=61 // pred_check_branch
          %1799 = sbr.rel (%p1797) target = $region74
        $region73: #{_lambda_.5} parent=61 // pred_region
          %v1800 = vld [vmem:[#allocation2] sm:$0xff]
          %v1801 = vld [vmem:[#allocation2 + $0x8] sm:$0xff]
          %v1802 = vld [vmem:[#allocation2 + $0x10] sm:$0xff]
          %v1803 = vld [vmem:[#allocation2 + $0x18] sm:$0xff]
          %v1804 = vld [vmem:[#allocation2 + $0x20] sm:$0xff]
          %v1805 = vld [vmem:[#allocation2 + $0x28] sm:$0xff]
          %v1806 = vld [vmem:[#allocation2 + $0x30] sm:$0xff]
          %v1807 = vld [vmem:[#allocation2 + $0x38] sm:$0xff]
          %v1808 = vld [vmem:[#allocation2 + $0x40] sm:$0xff]
          %v1809 = vld [vmem:[#allocation2 + $0x48] sm:$0xff]
          %v1810 = vld [vmem:[#allocation2 + $0x50] sm:$0xff]
          %v1811 = vld [vmem:[#allocation2 + $0x58] sm:$0xff]
          %v1812 = vld [vmem:[#allocation2 + $0x60] sm:$0xff]
          %v1813 = vld [vmem:[#allocation2 + $0x68] sm:$0xff]
          %v1814 = vld [vmem:[#allocation2 + $0x70] sm:$0xff]
          %v1815 = vld [vmem:[#allocation2 + $0x78] sm:$0xff]
          %v1816 = vld [vmem:[#allocation2 + $0x80] sm:$0xff]
          %v1817 = vld [vmem:[#allocation2 + $0x88] sm:$0xff]
          %v1818 = vld [vmem:[#allocation2 + $0x90] sm:$0xff]
          %v1819 = vld [vmem:[#allocation2 + $0x98] sm:$0xff]
          %v1820 = vld [vmem:[#allocation2 + $0xa0] sm:$0xff]
          %v1821 = vld [vmem:[#allocation2 + $0xa8] sm:$0xff]
          %v1822 = vld [vmem:[#allocation2 + $0xb0] sm:$0xff]
          %v1823 = vld [vmem:[#allocation2 + $0xb8] sm:$0xff]
          %v1824 = vld [vmem:[#allocation2 + $0xc0] sm:$0xff]
          %v1825 = vld [vmem:[#allocation2 + $0xc8] sm:$0xff]
          %v1826 = vld [vmem:[#allocation2 + $0xd0] sm:$0xff]
          %v1827 = vld [vmem:[#allocation2 + $0xd8] sm:$0xff]
          %v1828 = vld [vmem:[#allocation2 + $0xe0] sm:$0xff]
          %v1829 = vld [vmem:[#allocation2 + $0xe8] sm:$0xff]
          %v1830 = vld [vmem:[#allocation2 + $0xf0] sm:$0xff]
          %v1831 = vld [vmem:[#allocation2 + $0xf8] sm:$0xff]
          %v1832 = vld [vmem:[#allocation2 + $0x100] sm:$0xff]
          %v1833 = vld [vmem:[#allocation2 + $0x108] sm:$0xff]
          %v1834 = vld [vmem:[#allocation2 + $0x110] sm:$0xff]
          %v1835 = vld [vmem:[#allocation2 + $0x118] sm:$0xff]
          %v1836 = vld [vmem:[#allocation2 + $0x120] sm:$0xff]
          %v1837 = vld [vmem:[#allocation2 + $0x128] sm:$0xff]
          %v1838 = vld [vmem:[#allocation2 + $0x130] sm:$0xff]
          %v1839 = vld [vmem:[#allocation2 + $0x138] sm:$0xff]
          %v1840 = vld [vmem:[#allocation2 + $0x140] sm:$0xff]
          %v1841 = vld [vmem:[#allocation2 + $0x148] sm:$0xff]
          %v1842 = vld [vmem:[#allocation2 + $0x150] sm:$0xff]
          %v1843 = vld [vmem:[#allocation2 + $0x158] sm:$0xff]
          %v1844 = vld [vmem:[#allocation2 + $0x160] sm:$0xff]
          %v1845 = vld [vmem:[#allocation2 + $0x168] sm:$0xff]
          %v1846 = vld [vmem:[#allocation2 + $0x170] sm:$0xff]
          %v1847 = vld [vmem:[#allocation2 + $0x178] sm:$0xff]
          %v1848 = vld [vmem:[#allocation2 + $0x180] sm:$0xff]
          %v1849 = vld [vmem:[#allocation2 + $0x188] sm:$0xff]
          %v1850 = vld [vmem:[#allocation2 + $0x190] sm:$0xff]
          %v1851 = vld [vmem:[#allocation2 + $0x198] sm:$0xff]
          %v1852 = vld [vmem:[#allocation2 + $0x1a0] sm:$0xff]
          %v1853 = vld [vmem:[#allocation2 + $0x1a8] sm:$0xff]
          %v1854 = vld [vmem:[#allocation2 + $0x1b0] sm:$0xff]
          %v1855 = vld [vmem:[#allocation2 + $0x1b8] sm:$0xff]
          %v1856 = vld [vmem:[#allocation2 + $0x1c0] sm:$0xff]
          %v1857 = vld [vmem:[#allocation2 + $0x1c8] sm:$0xff]
          %v1858 = vld [vmem:[#allocation2 + $0x1d0] sm:$0xff]
          %v1859 = vld [vmem:[#allocation2 + $0x1d8] sm:$0xff]
          %v1860 = vld [vmem:[#allocation2 + $0x1e0] sm:$0xff]
          %v1861 = vld [vmem:[#allocation2 + $0x1e8] sm:$0xff]
          %v1862 = vld [vmem:[#allocation2 + $0x1f0] sm:$0xff]
          %v1863 = vld [vmem:[#allocation2 + $0x1f8] sm:$0xff]
          %v1864 = vld [vmem:[%s510] sm:$0x3]
          %v1866 = vlaneseq
          %v1867 = vshrl.u32 %v1866, 7
          %v1868 = vsub.s32 0, %v1867
          %v1869 = vrot.slane %v1864, %v1868
          %v1870 = vlaneseq
          %v1871 = vshrl.u32 %v1870, 7
          %v1872 = vsub.s32 1, %v1871
          %v1873 = vrot.slane %v1864, %v1872
          %v1876 = vmul.f32 %v1800, %v1869
          %v1877 = vmul.f32 %v1801, %v1873
          %v1878 = vmul.f32 %v1802, %v1869
          %v1879 = vmul.f32 %v1803, %v1873
          %v1880 = vmul.f32 %v1804, %v1869
          %v1881 = vmul.f32 %v1805, %v1873
          %v1882 = vmul.f32 %v1806, %v1869
          %v1883 = vmul.f32 %v1807, %v1873
          %v1884 = vmul.f32 %v1808, %v1869
          %v1885 = vmul.f32 %v1809, %v1873
          %v1886 = vmul.f32 %v1810, %v1869
          %v1887 = vmul.f32 %v1811, %v1873
          %v1888 = vmul.f32 %v1812, %v1869
          %v1889 = vmul.f32 %v1813, %v1873
          %v1890 = vmul.f32 %v1814, %v1869
          %v1891 = vmul.f32 %v1815, %v1873
          %v1892 = vmul.f32 %v1816, %v1869
          %v1893 = vmul.f32 %v1817, %v1873
          %v1894 = vmul.f32 %v1818, %v1869
          %v1895 = vmul.f32 %v1819, %v1873
          %v1896 = vmul.f32 %v1820, %v1869
          %v1897 = vmul.f32 %v1821, %v1873
          %v1898 = vmul.f32 %v1822, %v1869
          %v1899 = vmul.f32 %v1823, %v1873
          %v1900 = vmul.f32 %v1824, %v1869
          %v1901 = vmul.f32 %v1825, %v1873
          %v1902 = vmul.f32 %v1826, %v1869
          %v1903 = vmul.f32 %v1827, %v1873
          %v1904 = vmul.f32 %v1828, %v1869
          %v1905 = vmul.f32 %v1829, %v1873
          %v1906 = vmul.f32 %v1830, %v1869
          %v1907 = vmul.f32 %v1831, %v1873
          %v1908 = vmul.f32 %v1832, %v1869
          %v1909 = vmul.f32 %v1833, %v1873
          %v1910 = vmul.f32 %v1834, %v1869
          %v1911 = vmul.f32 %v1835, %v1873
          %v1912 = vmul.f32 %v1836, %v1869
          %v1913 = vmul.f32 %v1837, %v1873
          %v1914 = vmul.f32 %v1838, %v1869
          %v1915 = vmul.f32 %v1839, %v1873
          %v1916 = vmul.f32 %v1840, %v1869
          %v1917 = vmul.f32 %v1841, %v1873
          %v1918 = vmul.f32 %v1842, %v1869
          %v1919 = vmul.f32 %v1843, %v1873
          %v1920 = vmul.f32 %v1844, %v1869
          %v1921 = vmul.f32 %v1845, %v1873
          %v1922 = vmul.f32 %v1846, %v1869
          %v1923 = vmul.f32 %v1847, %v1873
          %v1924 = vmul.f32 %v1848, %v1869
          %v1925 = vmul.f32 %v1849, %v1873
          %v1926 = vmul.f32 %v1850, %v1869
          %v1927 = vmul.f32 %v1851, %v1873
          %v1928 = vmul.f32 %v1852, %v1869
          %v1929 = vmul.f32 %v1853, %v1873
          %v1930 = vmul.f32 %v1854, %v1869
          %v1931 = vmul.f32 %v1855, %v1873
          %v1932 = vmul.f32 %v1856, %v1869
          %v1933 = vmul.f32 %v1857, %v1873
          %v1934 = vmul.f32 %v1858, %v1869
          %v1935 = vmul.f32 %v1859, %v1873
          %v1936 = vmul.f32 %v1860, %v1869
          %v1937 = vmul.f32 %v1861, %v1873
          %v1938 = vmul.f32 %v1862, %v1869
          %v1939 = vmul.f32 %v1863, %v1873
          %v1940 = vld [vmem:[%s515] sm:$0x3]
          %v1942 = vlaneseq
          %v1943 = vshrl.u32 %v1942, 7
          %v1944 = vsub.s32 0, %v1943
          %v1945 = vrot.slane %v1940, %v1944
          %v1946 = vlaneseq
          %v1947 = vshrl.u32 %v1946, 7
          %v1948 = vsub.s32 1, %v1947
          %v1949 = vrot.slane %v1940, %v1948
          %v1952 = vadd.f32 %v1876, %v1945
          %v1953 = vadd.f32 %v1877, %v1949
          %v1954 = vadd.f32 %v1878, %v1945
          %v1955 = vadd.f32 %v1879, %v1949
          %v1956 = vadd.f32 %v1880, %v1945
          %v1957 = vadd.f32 %v1881, %v1949
          %v1958 = vadd.f32 %v1882, %v1945
          %v1959 = vadd.f32 %v1883, %v1949
          %v1960 = vadd.f32 %v1884, %v1945
          %v1961 = vadd.f32 %v1885, %v1949
          %v1962 = vadd.f32 %v1886, %v1945
          %v1963 = vadd.f32 %v1887, %v1949
          %v1964 = vadd.f32 %v1888, %v1945
          %v1965 = vadd.f32 %v1889, %v1949
          %v1966 = vadd.f32 %v1890, %v1945
          %v1967 = vadd.f32 %v1891, %v1949
          %v1968 = vadd.f32 %v1892, %v1945
          %v1969 = vadd.f32 %v1893, %v1949
          %v1970 = vadd.f32 %v1894, %v1945
          %v1971 = vadd.f32 %v1895, %v1949
          %v1972 = vadd.f32 %v1896, %v1945
          %v1973 = vadd.f32 %v1897, %v1949
          %v1974 = vadd.f32 %v1898, %v1945
          %v1975 = vadd.f32 %v1899, %v1949
          %v1976 = vadd.f32 %v1900, %v1945
          %v1977 = vadd.f32 %v1901, %v1949
          %v1978 = vadd.f32 %v1902, %v1945
          %v1979 = vadd.f32 %v1903, %v1949
          %v1980 = vadd.f32 %v1904, %v1945
          %v1981 = vadd.f32 %v1905, %v1949
          %v1982 = vadd.f32 %v1906, %v1945
          %v1983 = vadd.f32 %v1907, %v1949
          %v1984 = vadd.f32 %v1908, %v1945
          %v1985 = vadd.f32 %v1909, %v1949
          %v1986 = vadd.f32 %v1910, %v1945
          %v1987 = vadd.f32 %v1911, %v1949
          %v1988 = vadd.f32 %v1912, %v1945
          %v1989 = vadd.f32 %v1913, %v1949
          %v1990 = vadd.f32 %v1914, %v1945
          %v1991 = vadd.f32 %v1915, %v1949
          %v1992 = vadd.f32 %v1916, %v1945
          %v1993 = vadd.f32 %v1917, %v1949
          %v1994 = vadd.f32 %v1918, %v1945
          %v1995 = vadd.f32 %v1919, %v1949
          %v1996 = vadd.f32 %v1920, %v1945
          %v1997 = vadd.f32 %v1921, %v1949
          %v1998 = vadd.f32 %v1922, %v1945
          %v1999 = vadd.f32 %v1923, %v1949
          %v2000 = vadd.f32 %v1924, %v1945
          %v2001 = vadd.f32 %v1925, %v1949
          %v2002 = vadd.f32 %v1926, %v1945
          %v2003 = vadd.f32 %v1927, %v1949
          %v2004 = vadd.f32 %v1928, %v1945
          %v2005 = vadd.f32 %v1929, %v1949
          %v2006 = vadd.f32 %v1930, %v1945
          %v2007 = vadd.f32 %v1931, %v1949
          %v2008 = vadd.f32 %v1932, %v1945
          %v2009 = vadd.f32 %v1933, %v1949
          %v2010 = vadd.f32 %v1934, %v1945
          %v2011 = vadd.f32 %v1935, %v1949
          %v2012 = vadd.f32 %v1936, %v1945
          %v2013 = vadd.f32 %v1937, %v1949
          %v2014 = vadd.f32 %v1938, %v1945
          %v2015 = vadd.f32 %v1939, %v1949
          %vm2016 = vcmp.gt.f32.partialorder %v1952, 0.0
          %vm2017 = vcmp.gt.f32.partialorder %v1953, 0.0
          %vm2018 = vcmp.gt.f32.partialorder %v1954, 0.0
          %vm2019 = vcmp.gt.f32.partialorder %v1955, 0.0
          %vm2020 = vcmp.gt.f32.partialorder %v1956, 0.0
          %vm2021 = vcmp.gt.f32.partialorder %v1957, 0.0
          %vm2022 = vcmp.gt.f32.partialorder %v1958, 0.0
          %vm2023 = vcmp.gt.f32.partialorder %v1959, 0.0
          %vm2024 = vcmp.gt.f32.partialorder %v1960, 0.0
          %vm2025 = vcmp.gt.f32.partialorder %v1961, 0.0
          %vm2026 = vcmp.gt.f32.partialorder %v1962, 0.0
          %vm2027 = vcmp.gt.f32.partialorder %v1963, 0.0
          %vm2028 = vcmp.gt.f32.partialorder %v1964, 0.0
          %vm2029 = vcmp.gt.f32.partialorder %v1965, 0.0
          %vm2030 = vcmp.gt.f32.partialorder %v1966, 0.0
          %vm2031 = vcmp.gt.f32.partialorder %v1967, 0.0
          %vm2032 = vcmp.gt.f32.partialorder %v1968, 0.0
          %vm2033 = vcmp.gt.f32.partialorder %v1969, 0.0
          %vm2034 = vcmp.gt.f32.partialorder %v1970, 0.0
          %vm2035 = vcmp.gt.f32.partialorder %v1971, 0.0
          %vm2036 = vcmp.gt.f32.partialorder %v1972, 0.0
          %vm2037 = vcmp.gt.f32.partialorder %v1973, 0.0
          %vm2038 = vcmp.gt.f32.partialorder %v1974, 0.0
          %vm2039 = vcmp.gt.f32.partialorder %v1975, 0.0
          %vm2040 = vcmp.gt.f32.partialorder %v1976, 0.0
          %vm2041 = vcmp.gt.f32.partialorder %v1977, 0.0
          %vm2042 = vcmp.gt.f32.partialorder %v1978, 0.0
          %vm2043 = vcmp.gt.f32.partialorder %v1979, 0.0
          %vm2044 = vcmp.gt.f32.partialorder %v1980, 0.0
          %vm2045 = vcmp.gt.f32.partialorder %v1981, 0.0
          %vm2046 = vcmp.gt.f32.partialorder %v1982, 0.0
          %vm2047 = vcmp.gt.f32.partialorder %v1983, 0.0
          %vm2048 = vcmp.gt.f32.partialorder %v1984, 0.0
          %vm2049 = vcmp.gt.f32.partialorder %v1985, 0.0
          %vm2050 = vcmp.gt.f32.partialorder %v1986, 0.0
          %vm2051 = vcmp.gt.f32.partialorder %v1987, 0.0
          %vm2052 = vcmp.gt.f32.partialorder %v1988, 0.0
          %vm2053 = vcmp.gt.f32.partialorder %v1989, 0.0
          %vm2054 = vcmp.gt.f32.partialorder %v1990, 0.0
          %vm2055 = vcmp.gt.f32.partialorder %v1991, 0.0
          %vm2056 = vcmp.gt.f32.partialorder %v1992, 0.0
          %vm2057 = vcmp.gt.f32.partialorder %v1993, 0.0
          %vm2058 = vcmp.gt.f32.partialorder %v1994, 0.0
          %vm2059 = vcmp.gt.f32.partialorder %v1995, 0.0
          %vm2060 = vcmp.gt.f32.partialorder %v1996, 0.0
          %vm2061 = vcmp.gt.f32.partialorder %v1997, 0.0
          %vm2062 = vcmp.gt.f32.partialorder %v1998, 0.0
          %vm2063 = vcmp.gt.f32.partialorder %v1999, 0.0
          %vm2064 = vcmp.gt.f32.partialorder %v2000, 0.0
          %vm2065 = vcmp.gt.f32.partialorder %v2001, 0.0
          %vm2066 = vcmp.gt.f32.partialorder %v2002, 0.0
          %vm2067 = vcmp.gt.f32.partialorder %v2003, 0.0
          %vm2068 = vcmp.gt.f32.partialorder %v2004, 0.0
          %vm2069 = vcmp.gt.f32.partialorder %v2005, 0.0
          %vm2070 = vcmp.gt.f32.partialorder %v2006, 0.0
          %vm2071 = vcmp.gt.f32.partialorder %v2007, 0.0
          %vm2072 = vcmp.gt.f32.partialorder %v2008, 0.0
          %vm2073 = vcmp.gt.f32.partialorder %v2009, 0.0
          %vm2074 = vcmp.gt.f32.partialorder %v2010, 0.0
          %vm2075 = vcmp.gt.f32.partialorder %v2011, 0.0
          %vm2076 = vcmp.gt.f32.partialorder %v2012, 0.0
          %vm2077 = vcmp.gt.f32.partialorder %v2013, 0.0
          %vm2078 = vcmp.gt.f32.partialorder %v2014, 0.0
          %vm2079 = vcmp.gt.f32.partialorder %v2015, 0.0
          %v2080 = vmul.f32 %v1952, 0.1
          %v2081 = vmul.f32 %v1953, 0.1
          %v2082 = vmul.f32 %v1954, 0.1
          %v2083 = vmul.f32 %v1955, 0.1
          %v2084 = vmul.f32 %v1956, 0.1
          %v2085 = vmul.f32 %v1957, 0.1
          %v2086 = vmul.f32 %v1958, 0.1
          %v2087 = vmul.f32 %v1959, 0.1
          %v2088 = vmul.f32 %v1960, 0.1
          %v2089 = vmul.f32 %v1961, 0.1
          %v2090 = vmul.f32 %v1962, 0.1
          %v2091 = vmul.f32 %v1963, 0.1
          %v2092 = vmul.f32 %v1964, 0.1
          %v2093 = vmul.f32 %v1965, 0.1
          %v2094 = vmul.f32 %v1966, 0.1
          %v2095 = vmul.f32 %v1967, 0.1
          %v2096 = vmul.f32 %v1968, 0.1
          %v2097 = vmul.f32 %v1969, 0.1
          %v2098 = vmul.f32 %v1970, 0.1
          %v2099 = vmul.f32 %v1971, 0.1
          %v2100 = vmul.f32 %v1972, 0.1
          %v2101 = vmul.f32 %v1973, 0.1
          %v2102 = vmul.f32 %v1974, 0.1
          %v2103 = vmul.f32 %v1975, 0.1
          %v2104 = vmul.f32 %v1976, 0.1
          %v2105 = vmul.f32 %v1977, 0.1
          %v2106 = vmul.f32 %v1978, 0.1
          %v2107 = vmul.f32 %v1979, 0.1
          %v2108 = vmul.f32 %v1980, 0.1
          %v2109 = vmul.f32 %v1981, 0.1
          %v2110 = vmul.f32 %v1982, 0.1
          %v2111 = vmul.f32 %v1983, 0.1
          %v2112 = vmul.f32 %v1984, 0.1
          %v2113 = vmul.f32 %v1985, 0.1
          %v2114 = vmul.f32 %v1986, 0.1
          %v2115 = vmul.f32 %v1987, 0.1
          %v2116 = vmul.f32 %v1988, 0.1
          %v2117 = vmul.f32 %v1989, 0.1
          %v2118 = vmul.f32 %v1990, 0.1
          %v2119 = vmul.f32 %v1991, 0.1
          %v2120 = vmul.f32 %v1992, 0.1
          %v2121 = vmul.f32 %v1993, 0.1
          %v2122 = vmul.f32 %v1994, 0.1
          %v2123 = vmul.f32 %v1995, 0.1
          %v2124 = vmul.f32 %v1996, 0.1
          %v2125 = vmul.f32 %v1997, 0.1
          %v2126 = vmul.f32 %v1998, 0.1
          %v2127 = vmul.f32 %v1999, 0.1
          %v2128 = vmul.f32 %v2000, 0.1
          %v2129 = vmul.f32 %v2001, 0.1
          %v2130 = vmul.f32 %v2002, 0.1
          %v2131 = vmul.f32 %v2003, 0.1
          %v2132 = vmul.f32 %v2004, 0.1
          %v2133 = vmul.f32 %v2005, 0.1
          %v2134 = vmul.f32 %v2006, 0.1
          %v2135 = vmul.f32 %v2007, 0.1
          %v2136 = vmul.f32 %v2008, 0.1
          %v2137 = vmul.f32 %v2009, 0.1
          %v2138 = vmul.f32 %v2010, 0.1
          %v2139 = vmul.f32 %v2011, 0.1
          %v2140 = vmul.f32 %v2012, 0.1
          %v2141 = vmul.f32 %v2013, 0.1
          %v2142 = vmul.f32 %v2014, 0.1
          %v2143 = vmul.f32 %v2015, 0.1
          %v2144 = vsel %vm2016, %v1952, %v2080
          %v2145 = vsel %vm2017, %v1953, %v2081
          %v2146 = vsel %vm2018, %v1954, %v2082
          %v2147 = vsel %vm2019, %v1955, %v2083
          %v2148 = vsel %vm2020, %v1956, %v2084
          %v2149 = vsel %vm2021, %v1957, %v2085
          %v2150 = vsel %vm2022, %v1958, %v2086
          %v2151 = vsel %vm2023, %v1959, %v2087
          %v2152 = vsel %vm2024, %v1960, %v2088
          %v2153 = vsel %vm2025, %v1961, %v2089
          %v2154 = vsel %vm2026, %v1962, %v2090
          %v2155 = vsel %vm2027, %v1963, %v2091
          %v2156 = vsel %vm2028, %v1964, %v2092
          %v2157 = vsel %vm2029, %v1965, %v2093
          %v2158 = vsel %vm2030, %v1966, %v2094
          %v2159 = vsel %vm2031, %v1967, %v2095
          %v2160 = vsel %vm2032, %v1968, %v2096
          %v2161 = vsel %vm2033, %v1969, %v2097
          %v2162 = vsel %vm2034, %v1970, %v2098
          %v2163 = vsel %vm2035, %v1971, %v2099
          %v2164 = vsel %vm2036, %v1972, %v2100
          %v2165 = vsel %vm2037, %v1973, %v2101
          %v2166 = vsel %vm2038, %v1974, %v2102
          %v2167 = vsel %vm2039, %v1975, %v2103
          %v2168 = vsel %vm2040, %v1976, %v2104
          %v2169 = vsel %vm2041, %v1977, %v2105
          %v2170 = vsel %vm2042, %v1978, %v2106
          %v2171 = vsel %vm2043, %v1979, %v2107
          %v2172 = vsel %vm2044, %v1980, %v2108
          %v2173 = vsel %vm2045, %v1981, %v2109
          %v2174 = vsel %vm2046, %v1982, %v2110
          %v2175 = vsel %vm2047, %v1983, %v2111
          %v2176 = vsel %vm2048, %v1984, %v2112
          %v2177 = vsel %vm2049, %v1985, %v2113
          %v2178 = vsel %vm2050, %v1986, %v2114
          %v2179 = vsel %vm2051, %v1987, %v2115
          %v2180 = vsel %vm2052, %v1988, %v2116
          %v2181 = vsel %vm2053, %v1989, %v2117
          %v2182 = vsel %vm2054, %v1990, %v2118
          %v2183 = vsel %vm2055, %v1991, %v2119
          %v2184 = vsel %vm2056, %v1992, %v2120
          %v2185 = vsel %vm2057, %v1993, %v2121
          %v2186 = vsel %vm2058, %v1994, %v2122
          %v2187 = vsel %vm2059, %v1995, %v2123
          %v2188 = vsel %vm2060, %v1996, %v2124
          %v2189 = vsel %vm2061, %v1997, %v2125
          %v2190 = vsel %vm2062, %v1998, %v2126
          %v2191 = vsel %vm2063, %v1999, %v2127
          %v2192 = vsel %vm2064, %v2000, %v2128
          %v2193 = vsel %vm2065, %v2001, %v2129
          %v2194 = vsel %vm2066, %v2002, %v2130
          %v2195 = vsel %vm2067, %v2003, %v2131
          %v2196 = vsel %vm2068, %v2004, %v2132
          %v2197 = vsel %vm2069, %v2005, %v2133
          %v2198 = vsel %vm2070, %v2006, %v2134
          %v2199 = vsel %vm2071, %v2007, %v2135
          %v2200 = vsel %vm2072, %v2008, %v2136
          %v2201 = vsel %vm2073, %v2009, %v2137
          %v2202 = vsel %vm2074, %v2010, %v2138
          %v2203 = vsel %vm2075, %v2011, %v2139
          %v2204 = vsel %vm2076, %v2012, %v2140
          %v2205 = vsel %vm2077, %v2013, %v2141
          %v2206 = vsel %vm2078, %v2014, %v2142
          %v2207 = vsel %vm2079, %v2015, %v2143
          %v2208 = vld [vmem:[%s526] sm:$0xff]
          %v2209 = vld [vmem:[%s526 + $0x8] sm:$0xff]
          %v2210 = vld [vmem:[%s526 + $0x10] sm:$0xff]
          %v2211 = vld [vmem:[%s526 + $0x18] sm:$0xff]
          %v2212 = vld [vmem:[%s526 + $0x20] sm:$0xff]
          %v2213 = vld [vmem:[%s526 + $0x28] sm:$0xff]
          %v2214 = vld [vmem:[%s526 + $0x30] sm:$0xff]
          %v2215 = vld [vmem:[%s526 + $0x38] sm:$0xff]
          %v2216 = vld [vmem:[%s526 + $0x40] sm:$0xff]
          %v2217 = vld [vmem:[%s526 + $0x48] sm:$0xff]
          %v2218 = vld [vmem:[%s526 + $0x50] sm:$0xff]
          %v2219 = vld [vmem:[%s526 + $0x58] sm:$0xff]
          %v2220 = vld [vmem:[%s526 + $0x60] sm:$0xff]
          %v2221 = vld [vmem:[%s526 + $0x68] sm:$0xff]
          %v2222 = vld [vmem:[%s526 + $0x70] sm:$0xff]
          %v2223 = vld [vmem:[%s526 + $0x78] sm:$0xff]
          %v2224 = vld [vmem:[%s526 + $0x80] sm:$0xff]
          %v2225 = vld [vmem:[%s526 + $0x88] sm:$0xff]
          %v2226 = vld [vmem:[%s526 + $0x90] sm:$0xff]
          %v2227 = vld [vmem:[%s526 + $0x98] sm:$0xff]
          %v2228 = vld [vmem:[%s526 + $0xa0] sm:$0xff]
          %v2229 = vld [vmem:[%s526 + $0xa8] sm:$0xff]
          %v2230 = vld [vmem:[%s526 + $0xb0] sm:$0xff]
          %v2231 = vld [vmem:[%s526 + $0xb8] sm:$0xff]
          %v2232 = vld [vmem:[%s526 + $0xc0] sm:$0xff]
          %v2233 = vld [vmem:[%s526 + $0xc8] sm:$0xff]
          %v2234 = vld [vmem:[%s526 + $0xd0] sm:$0xff]
          %v2235 = vld [vmem:[%s526 + $0xd8] sm:$0xff]
          %v2236 = vld [vmem:[%s526 + $0xe0] sm:$0xff]
          %v2237 = vld [vmem:[%s526 + $0xe8] sm:$0xff]
          %v2238 = vld [vmem:[%s526 + $0xf0] sm:$0xff]
          %v2239 = vld [vmem:[%s526 + $0xf8] sm:$0xff]
          %v2240 = vld [vmem:[%s526 + $0x100] sm:$0xff]
          %v2241 = vld [vmem:[%s526 + $0x108] sm:$0xff]
          %v2242 = vld [vmem:[%s526 + $0x110] sm:$0xff]
          %v2243 = vld [vmem:[%s526 + $0x118] sm:$0xff]
          %v2244 = vld [vmem:[%s526 + $0x120] sm:$0xff]
          %v2245 = vld [vmem:[%s526 + $0x128] sm:$0xff]
          %v2246 = vld [vmem:[%s526 + $0x130] sm:$0xff]
          %v2247 = vld [vmem:[%s526 + $0x138] sm:$0xff]
          %v2248 = vld [vmem:[%s526 + $0x140] sm:$0xff]
          %v2249 = vld [vmem:[%s526 + $0x148] sm:$0xff]
          %v2250 = vld [vmem:[%s526 + $0x150] sm:$0xff]
          %v2251 = vld [vmem:[%s526 + $0x158] sm:$0xff]
          %v2252 = vld [vmem:[%s526 + $0x160] sm:$0xff]
          %v2253 = vld [vmem:[%s526 + $0x168] sm:$0xff]
          %v2254 = vld [vmem:[%s526 + $0x170] sm:$0xff]
          %v2255 = vld [vmem:[%s526 + $0x178] sm:$0xff]
          %v2256 = vld [vmem:[%s526 + $0x180] sm:$0xff]
          %v2257 = vld [vmem:[%s526 + $0x188] sm:$0xff]
          %v2258 = vld [vmem:[%s526 + $0x190] sm:$0xff]
          %v2259 = vld [vmem:[%s526 + $0x198] sm:$0xff]
          %v2260 = vld [vmem:[%s526 + $0x1a0] sm:$0xff]
          %v2261 = vld [vmem:[%s526 + $0x1a8] sm:$0xff]
          %v2262 = vld [vmem:[%s526 + $0x1b0] sm:$0xff]
          %v2263 = vld [vmem:[%s526 + $0x1b8] sm:$0xff]
          %v2264 = vld [vmem:[%s526 + $0x1c0] sm:$0xff]
          %v2265 = vld [vmem:[%s526 + $0x1c8] sm:$0xff]
          %v2266 = vld [vmem:[%s526 + $0x1d0] sm:$0xff]
          %v2267 = vld [vmem:[%s526 + $0x1d8] sm:$0xff]
          %v2268 = vld [vmem:[%s526 + $0x1e0] sm:$0xff]
          %v2269 = vld [vmem:[%s526 + $0x1e8] sm:$0xff]
          %v2270 = vld [vmem:[%s526 + $0x1f0] sm:$0xff]
          %v2271 = vld [vmem:[%s526 + $0x1f8] sm:$0xff]
          %v2272 = vadd.f32 %v2144, %v2208
          %v2273 = vadd.f32 %v2145, %v2209
          %v2274 = vadd.f32 %v2146, %v2210
          %v2275 = vadd.f32 %v2147, %v2211
          %v2276 = vadd.f32 %v2148, %v2212
          %v2277 = vadd.f32 %v2149, %v2213
          %v2278 = vadd.f32 %v2150, %v2214
          %v2279 = vadd.f32 %v2151, %v2215
          %v2280 = vadd.f32 %v2152, %v2216
          %v2281 = vadd.f32 %v2153, %v2217
          %v2282 = vadd.f32 %v2154, %v2218
          %v2283 = vadd.f32 %v2155, %v2219
          %v2284 = vadd.f32 %v2156, %v2220
          %v2285 = vadd.f32 %v2157, %v2221
          %v2286 = vadd.f32 %v2158, %v2222
          %v2287 = vadd.f32 %v2159, %v2223
          %v2288 = vadd.f32 %v2160, %v2224
          %v2289 = vadd.f32 %v2161, %v2225
          %v2290 = vadd.f32 %v2162, %v2226
          %v2291 = vadd.f32 %v2163, %v2227
          %v2292 = vadd.f32 %v2164, %v2228
          %v2293 = vadd.f32 %v2165, %v2229
          %v2294 = vadd.f32 %v2166, %v2230
          %v2295 = vadd.f32 %v2167, %v2231
          %v2296 = vadd.f32 %v2168, %v2232
          %v2297 = vadd.f32 %v2169, %v2233
          %v2298 = vadd.f32 %v2170, %v2234
          %v2299 = vadd.f32 %v2171, %v2235
          %v2300 = vadd.f32 %v2172, %v2236
          %v2301 = vadd.f32 %v2173, %v2237
          %v2302 = vadd.f32 %v2174, %v2238
          %v2303 = vadd.f32 %v2175, %v2239
          %v2304 = vadd.f32 %v2176, %v2240
          %v2305 = vadd.f32 %v2177, %v2241
          %v2306 = vadd.f32 %v2178, %v2242
          %v2307 = vadd.f32 %v2179, %v2243
          %v2308 = vadd.f32 %v2180, %v2244
          %v2309 = vadd.f32 %v2181, %v2245
          %v2310 = vadd.f32 %v2182, %v2246
          %v2311 = vadd.f32 %v2183, %v2247
          %v2312 = vadd.f32 %v2184, %v2248
          %v2313 = vadd.f32 %v2185, %v2249
          %v2314 = vadd.f32 %v2186, %v2250
          %v2315 = vadd.f32 %v2187, %v2251
          %v2316 = vadd.f32 %v2188, %v2252
          %v2317 = vadd.f32 %v2189, %v2253
          %v2318 = vadd.f32 %v2190, %v2254
          %v2319 = vadd.f32 %v2191, %v2255
          %v2320 = vadd.f32 %v2192, %v2256
          %v2321 = vadd.f32 %v2193, %v2257
          %v2322 = vadd.f32 %v2194, %v2258
          %v2323 = vadd.f32 %v2195, %v2259
          %v2324 = vadd.f32 %v2196, %v2260
          %v2325 = vadd.f32 %v2197, %v2261
          %v2326 = vadd.f32 %v2198, %v2262
          %v2327 = vadd.f32 %v2199, %v2263
          %v2328 = vadd.f32 %v2200, %v2264
          %v2329 = vadd.f32 %v2201, %v2265
          %v2330 = vadd.f32 %v2202, %v2266
          %v2331 = vadd.f32 %v2203, %v2267
          %v2332 = vadd.f32 %v2204, %v2268
          %v2333 = vadd.f32 %v2205, %v2269
          %v2334 = vadd.f32 %v2206, %v2270
          %v2335 = vadd.f32 %v2207, %v2271
          %2336 = vst [vmem:[%s538] sm:$0xff] %v2272
          %2337 = vst [vmem:[%s538 + $0x8] sm:$0xff] %v2273
          %2338 = vst [vmem:[%s538 + $0x10] sm:$0xff] %v2274
          %2339 = vst [vmem:[%s538 + $0x18] sm:$0xff] %v2275
          %2340 = vst [vmem:[%s538 + $0x20] sm:$0xff] %v2276
          %2341 = vst [vmem:[%s538 + $0x28] sm:$0xff] %v2277
          %2342 = vst [vmem:[%s538 + $0x30] sm:$0xff] %v2278
          %2343 = vst [vmem:[%s538 + $0x38] sm:$0xff] %v2279
          %2344 = vst [vmem:[%s538 + $0x40] sm:$0xff] %v2280
          %2345 = vst [vmem:[%s538 + $0x48] sm:$0xff] %v2281
          %2346 = vst [vmem:[%s538 + $0x50] sm:$0xff] %v2282
          %2347 = vst [vmem:[%s538 + $0x58] sm:$0xff] %v2283
          %2348 = vst [vmem:[%s538 + $0x60] sm:$0xff] %v2284
          %2349 = vst [vmem:[%s538 + $0x68] sm:$0xff] %v2285
          %2350 = vst [vmem:[%s538 + $0x70] sm:$0xff] %v2286
          %2351 = vst [vmem:[%s538 + $0x78] sm:$0xff] %v2287
          %2352 = vst [vmem:[%s538 + $0x80] sm:$0xff] %v2288
          %2353 = vst [vmem:[%s538 + $0x88] sm:$0xff] %v2289
          %2354 = vst [vmem:[%s538 + $0x90] sm:$0xff] %v2290
          %2355 = vst [vmem:[%s538 + $0x98] sm:$0xff] %v2291
          %2356 = vst [vmem:[%s538 + $0xa0] sm:$0xff] %v2292
          %2357 = vst [vmem:[%s538 + $0xa8] sm:$0xff] %v2293
          %2358 = vst [vmem:[%s538 + $0xb0] sm:$0xff] %v2294
          %2359 = vst [vmem:[%s538 + $0xb8] sm:$0xff] %v2295
          %2360 = vst [vmem:[%s538 + $0xc0] sm:$0xff] %v2296
          %2361 = vst [vmem:[%s538 + $0xc8] sm:$0xff] %v2297
          %2362 = vst [vmem:[%s538 + $0xd0] sm:$0xff] %v2298
          %2363 = vst [vmem:[%s538 + $0xd8] sm:$0xff] %v2299
          %2364 = vst [vmem:[%s538 + $0xe0] sm:$0xff] %v2300
          %2365 = vst [vmem:[%s538 + $0xe8] sm:$0xff] %v2301
          %2366 = vst [vmem:[%s538 + $0xf0] sm:$0xff] %v2302
          %2367 = vst [vmem:[%s538 + $0xf8] sm:$0xff] %v2303
          %2368 = vst [vmem:[%s538 + $0x100] sm:$0xff] %v2304
          %2369 = vst [vmem:[%s538 + $0x108] sm:$0xff] %v2305
          %2370 = vst [vmem:[%s538 + $0x110] sm:$0xff] %v2306
          %2371 = vst [vmem:[%s538 + $0x118] sm:$0xff] %v2307
          %2372 = vst [vmem:[%s538 + $0x120] sm:$0xff] %v2308
          %2373 = vst [vmem:[%s538 + $0x128] sm:$0xff] %v2309
          %2374 = vst [vmem:[%s538 + $0x130] sm:$0xff] %v2310
          %2375 = vst [vmem:[%s538 + $0x138] sm:$0xff] %v2311
          %2376 = vst [vmem:[%s538 + $0x140] sm:$0xff] %v2312
          %2377 = vst [vmem:[%s538 + $0x148] sm:$0xff] %v2313
          %2378 = vst [vmem:[%s538 + $0x150] sm:$0xff] %v2314
          %2379 = vst [vmem:[%s538 + $0x158] sm:$0xff] %v2315
          %2380 = vst [vmem:[%s538 + $0x160] sm:$0xff] %v2316
          %2381 = vst [vmem:[%s538 + $0x168] sm:$0xff] %v2317
          %2382 = vst [vmem:[%s538 + $0x170] sm:$0xff] %v2318
          %2383 = vst [vmem:[%s538 + $0x178] sm:$0xff] %v2319
          %2384 = vst [vmem:[%s538 + $0x180] sm:$0xff] %v2320
          %2385 = vst [vmem:[%s538 + $0x188] sm:$0xff] %v2321
          %2386 = vst [vmem:[%s538 + $0x190] sm:$0xff] %v2322
          %2387 = vst [vmem:[%s538 + $0x198] sm:$0xff] %v2323
          %2388 = vst [vmem:[%s538 + $0x1a0] sm:$0xff] %v2324
          %2389 = vst [vmem:[%s538 + $0x1a8] sm:$0xff] %v2325
          %2390 = vst [vmem:[%s538 + $0x1b0] sm:$0xff] %v2326
          %2391 = vst [vmem:[%s538 + $0x1b8] sm:$0xff] %v2327
          %2392 = vst [vmem:[%s538 + $0x1c0] sm:$0xff] %v2328
          %2393 = vst [vmem:[%s538 + $0x1c8] sm:$0xff] %v2329
          %2394 = vst [vmem:[%s538 + $0x1d0] sm:$0xff] %v2330
          %2395 = vst [vmem:[%s538 + $0x1d8] sm:$0xff] %v2331
          %2396 = vst [vmem:[%s538 + $0x1e0] sm:$0xff] %v2332
          %2397 = vst [vmem:[%s538 + $0x1e8] sm:$0xff] %v2333
          %2398 = vst [vmem:[%s538 + $0x1f0] sm:$0xff] %v2334
          %2399 = vst [vmem:[%s538 + $0x1f8] sm:$0xff] %v2335
        $region74: #{_lambda_.5} parent=61 // pred_fallthru
          _
        %s2400 = smul.u32 32, %s21
        %s2401 = smul.u32 2, %s22
        %p2402 = scmp.lt.s32.totalorder %s2400, 63
        %s2403 = scalar_select %p2402, %s2400, 63
        %p2404 = scmp.lt.s32.totalorder %s2401, 1
        %s2405 = scalar_select %p2404, %s2401, 1
        %s2406 = smul.addr %s2403, 2
        %s2407 = sadd.s32 %s2405, %s2406
        %s2408 = smul.addr %s2407, 8
        %s2409 = scalar_lea.vmem %s5, %s2408
        // Predicated region
        $region75: #{_lambda_.5} parent=61 // pred_check
          %p2410 = pneg %p191
        $region76: #{_lambda_.5} parent=61 // pred_check_branch
          %2412 = sbr.rel (%p2410) target = $region78
        $region77: #{_lambda_.5} parent=61 // pred_region
          %s2413 = smul.u32 32, %s21
          %s2414 = smul.u32 2, %s22
        $region78: #{_lambda_.5} parent=61 // pred_fallthru
          _
      $region62: #{_lambda_.5} parent=5 // pred_fallthru
        _
      %p2415 = scmp.le.s32.totalorder 2, %s11
      // Predicated region
      $region79: #{_lambda_.5} parent=5 // pred_check
        %p2416 = pneg %p2415
      $region80: #{_lambda_.5} parent=5 // pred_check_branch
        %2418 = sbr.rel (%p2416) target = $region82
      $region81: #{_lambda_.5} parent=5 // pred_region
        %s2419 = ssub.s32 %s11, 2
        // Predicated region
        $region83: #{_lambda_.5} parent=81 // pred_check
          %p2420 = pneg %p197
        $region84: #{_lambda_.5} parent=81 // pred_check_branch
          %2422 = sbr.rel (%p2420) target = $region86
        $region85: #{_lambda_.5} parent=81 // pred_region
          %s2423 = smul.u32 32, %s24
          %s2424 = smul.u32 2, %s25
          %p2425 = scmp.lt.s32.totalorder %s2423, 63
          %s2426 = scalar_select %p2425, %s2423, 63
          %p2427 = scmp.lt.s32.totalorder %s2424, 1
          %s2428 = scalar_select %p2427, %s2424, 1
          %s2429 = smul.addr %s2426, 2
          %s2430 = sadd.s32 %s2428, %s2429
          %s2431 = smul.addr %s2430, 8
          %s2432 = scalar_lea.vmem %s5, %s2431
        $region86: #{_lambda_.5} parent=81 // pred_fallthru
          _
      $region82: #{_lambda_.5} parent=5 // pred_fallthru
        _
    $region6: #{_lambda_.5} parent=1 // loop_footer
      %s15 = sadd.s32 1, %s11
    $region7: #{_lambda_.5} parent=1 // loop_footer_branch
      %10 = sbr.rel target = $region3
    $region8: #{_lambda_.5} parent=1 // loop_exit
      _

// kernel: _lambda_.6
$region0: #{_lambda_.6}
  #allocation0 [shape = 'u32[]', space=smem, size = 0x4, offset = 0x4, fixed_abs, tag = 'smem constant byte address 0x4 - core index']
  #allocation1 [shape = 'u32[144,128]{1,0:T(1,128)}', space=vmem, size = 0x12000, scoped, tag = 'internal scratch']
  #allocation2 [shape = 'f32[256,128]{1,0:T(8,128)}', space=vmem, size = 0x20000, scoped, tag = 'scratch operand']
  %s0 = inlined_call_operand.vmem [shape: bf16[512,256], index: 0, kind: input, shape index: {}]
  %s1 = inlined_call_operand.vmem [shape: bf16[256,128], index: 1, kind: input, shape index: {}]
  %s2 = inlined_call_operand.vmem [shape: f32[1,128], index: 2, kind: input, shape index: {}]
  %s3 = inlined_call_operand.vmem [shape: f32[1,128], index: 3, kind: input, shape index: {}]
  %s4 = inlined_call_operand.vmem [shape: bf16[512,128], index: 4, kind: output, shape index: {}]
  %s5 = sld [smem:[#allocation0]]
  $region57: #{_lambda_.6} parent=0
    _
  %s7 = ssub.s32 1, %s5
  %s8 = scalar_select 0, %s7, %s5
  loop: start=0, step=1, limit=4
  $region2: #{_lambda_.6} parent=0 // loop_pre_header
    _
  $region3: #{_lambda_.6} parent=0 // loop_header
    %s10 = sphi 0, %s14
    %p11 = scmp.ge.s32.totalorder %s10, 4
    %s17 = sphi 0, %s36
    %s18 = sphi 0, %s32
    %s19 = sphi 0, %s28
    %s20 = sphi 0, %s17
    %s21 = sphi 0, %s18
    %s22 = sphi 0, %s19
    %s23 = sphi 0, %s20
    %s24 = sphi 0, %s21
    %s25 = sphi 0, %s22
    %s41 = sphi 0, %s43
    %s44 = sphi 0, %s41
    %s45 = sphi 0, %s44
    %s61 = sphi 0, %s45
    %s69 = sphi 0, %s71
    %s72 = sphi 0, %s69
    %s73 = sphi 0, %s72
    %s89 = sphi 0, %s73
    %s95 = sphi 0, %s97
    %s98 = sphi 0, %s95
    %s99 = sphi 0, %s98
    %s115 = sphi 0, %s99
    %s121 = sphi 0, %s123
    %s124 = sphi 0, %s121
    %s125 = sphi 0, %s124
    %s141 = sphi 0, %s125
    %s149 = sphi 0, %s151
    %s152 = sphi 0, %s149
    %s153 = sphi 0, %s152
    %s169 = sphi 0, %s153
  $region4: #{_lambda_.6} parent=0 // loop_header_branch
    %13 = sbr.rel (%p11) target = $region8
  $region5: #{_lambda_.6} parent=0 // loop_body
    %s15 = ssub.s32 %s10, 1
    %s16 = ssub.s32 %s10, 2
    %s26 = sadd.s32 1, %s19
    %p27 = scmp.ge.s32.totalorder %s26, 1
    %s28 = scalar_select %p27, 0, %s26
    %s29 = sadd.s32 1, %s18
    %s30 = scalar_select %p27, %s29, %s18
    %p31 = scmp.ge.s32.totalorder %s30, 1
    %s32 = scalar_select %p31, 0, %s30
    %s33 = sadd.s32 1, %s17
    %s34 = scalar_select %p31, %s33, %s17
    %p35 = scmp.ge.s32.totalorder %s34, 2
    %s36 = scalar_select %p35, 0, %s34
    %s37 = ssub.s32 %s17, %s36
    %s38 = ssub.s32 %s19, %s28
    %s39 = sor.u32 %s37, %s38
    %p40 = scmp.eq.s32.totalorder %s39, 0
    %s42 = sadd.s32 %s41, 1
    %s43 = scalar_select %p40, %s41, %s42
    %p46 = pneg %p40
    %p47 = scmp.eq.s32.totalorder %s10, 1
    %p48 = por %p46, %p47
    %p49 = scmp.ne.s32.totalorder %s41, %s44
    %p50 = scmp.eq.s32.totalorder %s10, 0
    %p51 = por %p49, %p50
    %p52 = scmp.ne.s32.totalorder %s41, %s44
    %p53 = scmp.eq.s32.totalorder %s15, 1
    %p54 = por %p52, %p53
    %p55 = scmp.ne.s32.totalorder %s44, %s45
    %p56 = scmp.eq.s32.totalorder %s15, 0
    %p57 = por %p55, %p56
    %p58 = scmp.ne.s32.totalorder %s44, %s45
    %p59 = scmp.eq.s32.totalorder %s16, 1
    %p60 = por %p58, %p59
    %p62 = scmp.ne.s32.totalorder %s45, %s61
    %p63 = scmp.eq.s32.totalorder %s16, 0
    %p64 = por %p62, %p63
    %s65 = ssub.s32 %s19, %s28
    %s66 = ssub.s32 %s18, %s32
    %s67 = sor.u32 %s65, %s66
    %p68 = scmp.eq.s32.totalorder %s67, 0
    %s70 = sadd.s32 %s69, 1
    %s71 = scalar_select %p68, %s69, %s70
    %p74 = pneg %p68
    %p75 = scmp.eq.s32.totalorder %s10, 1
    %p76 = por %p74, %p75
    %p77 = scmp.ne.s32.totalorder %s69, %s72
    %p78 = scmp.eq.s32.totalorder %s10, 0
    %p79 = por %p77, %p78
    %p80 = scmp.ne.s32.totalorder %s69, %s72
    %p81 = scmp.eq.s32.totalorder %s15, 1
    %p82 = por %p80, %p81
    %p83 = scmp.ne.s32.totalorder %s72, %s73
    %p84 = scmp.eq.s32.totalorder %s15, 0
    %p85 = por %p83, %p84
    %p86 = scmp.ne.s32.totalorder %s72, %s73
    %p87 = scmp.eq.s32.totalorder %s16, 1
    %p88 = por %p86, %p87
    %p90 = scmp.ne.s32.totalorder %s73, %s89
    %p91 = scmp.eq.s32.totalorder %s16, 0
    %p92 = por %p90, %p91
    %s93 = ssub.s32 %s18, %s32
    %p94 = scmp.eq.s32.totalorder %s93, 0
    %s96 = sadd.s32 %s95, 1
    %s97 = scalar_select %p94, %s95, %s96
    %p100 = pneg %p94
    %p101 = scmp.eq.s32.totalorder %s10, 1
    %p102 = por %p100, %p101
    %p103 = scmp.ne.s32.totalorder %s95, %s98
    %p104 = scmp.eq.s32.totalorder %s10, 0
    %p105 = por %p103, %p104
    %p106 = scmp.ne.s32.totalorder %s95, %s98
    %p107 = scmp.eq.s32.totalorder %s15, 1
    %p108 = por %p106, %p107
    %p109 = scmp.ne.s32.totalorder %s98, %s99
    %p110 = scmp.eq.s32.totalorder %s15, 0
    %p111 = por %p109, %p110
    %p112 = scmp.ne.s32.totalorder %s98, %s99
    %p113 = scmp.eq.s32.totalorder %s16, 1
    %p114 = por %p112, %p113
    %p116 = scmp.ne.s32.totalorder %s99, %s115
    %p117 = scmp.eq.s32.totalorder %s16, 0
    %p118 = por %p116, %p117
    %s119 = ssub.s32 %s18, %s32
    %p120 = scmp.eq.s32.totalorder %s119, 0
    %s122 = sadd.s32 %s121, 1
    %s123 = scalar_select %p120, %s121, %s122
    %p126 = pneg %p120
    %p127 = scmp.eq.s32.totalorder %s10, 1
    %p128 = por %p126, %p127
    %p129 = scmp.ne.s32.totalorder %s121, %s124
    %p130 = scmp.eq.s32.totalorder %s10, 0
    %p131 = por %p129, %p130
    %p132 = scmp.ne.s32.totalorder %s121, %s124
    %p133 = scmp.eq.s32.totalorder %s15, 1
    %p134 = por %p132, %p133
    %p135 = scmp.ne.s32.totalorder %s124, %s125
    %p136 = scmp.eq.s32.totalorder %s15, 0
    %p137 = por %p135, %p136
    %p138 = scmp.ne.s32.totalorder %s124, %s125
    %p139 = scmp.eq.s32.totalorder %s16, 1
    %p140 = por %p138, %p139
    %p142 = scmp.ne.s32.totalorder %s125, %s141
    %p143 = scmp.eq.s32.totalorder %s16, 0
    %p144 = por %p142, %p143
    %s145 = ssub.s32 %s17, %s36
    %s146 = ssub.s32 %s18, %s32
    %s147 = sor.u32 %s145, %s146
    %p148 = scmp.eq.s32.totalorder %s147, 0
    %s150 = sadd.s32 %s149, 1
    %s151 = scalar_select %p148, %s149, %s150
    %p154 = pneg %p148
    %p155 = scmp.eq.s32.totalorder %s10, 1
    %p156 = por %p154, %p155
    %p157 = scmp.ne.s32.totalorder %s149, %s152
    %p158 = scmp.eq.s32.totalorder %s10, 0
    %p159 = por %p157, %p158
    %p160 = scmp.ne.s32.totalorder %s149, %s152
    %p161 = scmp.eq.s32.totalorder %s15, 1
    %p162 = por %p160, %p161
    %p163 = scmp.ne.s32.totalorder %s152, %s153
    %p164 = scmp.eq.s32.totalorder %s15, 0
    %p165 = por %p163, %p164
    %p166 = scmp.ne.s32.totalorder %s152, %s153
    %p167 = scmp.eq.s32.totalorder %s16, 1
    %p168 = por %p166, %p167
    %p170 = scmp.ne.s32.totalorder %s153, %s169
    %p171 = scmp.eq.s32.totalorder %s16, 0
    %p172 = por %p170, %p171
    %p173 = scmp.le.s32.totalorder 1, %s10
    %p174 = scmp.lt.s32.totalorder %s10, 3
    %p175 = pnand %p173, %p174
    %p176 = pneg %p175
    // Predicated region
    $region9: #{_lambda_.6} parent=5 // pred_check
      _
    $region10: #{_lambda_.6} parent=5 // pred_check_branch
      %178 = sbr.rel (%p175) target = $region12
    $region11: #{_lambda_.6} parent=5 // pred_region
      %s179 = ssub.s32 %s10, 1
      // Predicated region
      $region13: #{_lambda_.6} parent=11 // pred_check
        %p180 = pneg %p85
      $region14: #{_lambda_.6} parent=11 // pred_check_branch
        %182 = sbr.rel (%p180) target = $region16
      $region15: #{_lambda_.6} parent=11 // pred_region
        %s183 = smul.u32 32, %s22
        %p184 = scmp.lt.s32.totalorder %s183, 31
        %s185 = scalar_select %p184, %s183, 31
        %p186 = scmp.lt.s32.totalorder %s21, 0
        %s187 = scalar_select %p186, %s21, 0
        %s188 = sadd.s32 %s187, %s185
        %s189 = smul.addr %s188, 4
        %s190 = scalar_lea.vmem %s1, %s189
        %s191 = smul.u32 32, %s22
      $region16: #{_lambda_.6} parent=11 // pred_fallthru
        _
      // Predicated region
      $region17: #{_lambda_.6} parent=11 // pred_check
        %p192 = pneg %p111
      $region18: #{_lambda_.6} parent=11 // pred_check_branch
        %194 = sbr.rel (%p192) target = $region20
      $region19: #{_lambda_.6} parent=11 // pred_region
        %p195 = scmp.lt.s32.totalorder %s21, 0
        %s196 = scalar_select %p195, %s21, 0
        %s197 = scalar_lea.vmem %s2, %s196
      $region20: #{_lambda_.6} parent=11 // pred_fallthru
        _
      // Predicated region
      $region21: #{_lambda_.6} parent=11 // pred_check
        %p198 = pneg %p137
      $region22: #{_lambda_.6} parent=11 // pred_check_branch
        %200 = sbr.rel (%p198) target = $region24
      $region23: #{_lambda_.6} parent=11 // pred_region
        %p201 = scmp.lt.s32.totalorder %s21, 0
        %s202 = scalar_select %p201, %s21, 0
        %s203 = scalar_lea.vmem %s3, %s202
      $region24: #{_lambda_.6} parent=11 // pred_fallthru
        _
    $region12: #{_lambda_.6} parent=5 // pred_fallthru
      _
    %p204 = scmp.lt.s32.totalorder %s10, 2
    // Predicated region
    $region25: #{_lambda_.6} parent=5 // pred_check
      %p205 = pneg %p204
    $region26: #{_lambda_.6} parent=5 // pred_check_branch
      %207 = sbr.rel (%p205) target = $region28
    $region27: #{_lambda_.6} parent=5 // pred_region
      // Predicated region
      $region29: #{_lambda_.6} parent=27 // pred_check
        %p208 = pneg %p51
      $region30: #{_lambda_.6} parent=27 // pred_check_branch
        %210 = sbr.rel (%p208) target = $region32
      $region31: #{_lambda_.6} parent=27 // pred_region
        %s211 = smul.u32 32, %s17
        %s212 = smul.u32 2, %s19
        %p213 = scmp.lt.s32.totalorder %s211, 63
        %s214 = scalar_select %p213, %s211, 63
        %p215 = scmp.lt.s32.totalorder %s212, 1
        %s216 = scalar_select %p215, %s212, 1
        %s217 = smul.addr %s214, 2
        %s218 = sadd.s32 %s216, %s217
        %s219 = smul.addr %s218, 4
        %s220 = scalar_lea.vmem %s0, %s219
        %s221 = smul.u32 32, %s17
        %s222 = smul.u32 2, %s19
      $region32: #{_lambda_.6} parent=27 // pred_fallthru
        _
    $region28: #{_lambda_.6} parent=5 // pred_fallthru
      _
    %p223 = scmp.le.s32.totalorder 1, %s10
    %p224 = scmp.lt.s32.totalorder %s10, 3
    %p225 = pnand %p223, %p224
    %p226 = pneg %p225
    // Predicated region
    $region33: #{_lambda_.6} parent=5 // pred_check
      _
    $region34: #{_lambda_.6} parent=5 // pred_check_branch
      %228 = sbr.rel (%p225) target = $region36
    $region35: #{_lambda_.6} parent=5 // pred_region
      %s229 = ssub.s32 %s10, 1
      %s230 = smul.u32 32, %s20
      %s231 = smul.u32 2, %s22
      %p232 = scmp.lt.s32.totalorder %s230, 63
      %s233 = scalar_select %p232, %s230, 63
      %p234 = scmp.lt.s32.totalorder %s231, 1
      %s235 = scalar_select %p234, %s231, 1
      %s236 = smul.addr %s233, 2
      %s237 = sadd.s32 %s235, %s236
      %s238 = smul.addr %s237, 4
      %s239 = scalar_lea.vmem %s0, %s238
      %p240 = pneg %p57
      %p241 = pneg %p54
      %s242 = smul.u32 32, %s22
      %p243 = scmp.lt.s32.totalorder %s242, 31
      %s244 = scalar_select %p243, %s242, 31
      %p245 = scmp.lt.s32.totalorder %s21, 0
      %s246 = scalar_select %p245, %s21, 0
      %s247 = sadd.s32 %s246, %s244
      %s248 = smul.addr %s247, 4
      %s249 = scalar_lea.vmem %s1, %s248
      %p250 = pneg %p85
      %p251 = pneg %p82
      %p252 = scmp.lt.s32.totalorder %s21, 0
      %s253 = scalar_select %p252, %s21, 0
      %s254 = scalar_lea.vmem %s2, %s253
      %p255 = pneg %p111
      %p256 = pneg %p108
      %p257 = scmp.lt.s32.totalorder %s21, 0
      %s258 = scalar_select %p257, %s21, 0
      %s259 = scalar_lea.vmem %s3, %s258
      %p260 = pneg %p137
      %p261 = pneg %p134
      %p262 = pneg %p165
      %p263 = pneg %p162
      %s264 = smul.u32 32, %s20
      %p265 = scmp.lt.s32.totalorder %s264, 63
      %s266 = scalar_select %p265, %s264, 63
      %p267 = scmp.lt.s32.totalorder %s21, 0
      %s268 = scalar_select %p267, %s21, 0
      %s269 = sadd.s32 %s268, %s266
      %s270 = smul.addr %s269, 4
      %s271 = scalar_lea.vmem %s4, %s270
      %s272 = smul.u32 32, %s20
      %s273 = smul.u32 2, %s22
      %p274 = scmp.lt.s32.totalorder %s272, 63
      %s275 = scalar_select %p274, %s272, 63
      %p276 = scmp.lt.s32.totalorder %s273, 1
      %s277 = scalar_select %p276, %s273, 1
      %s278 = smul.addr %s275, 2
      %s279 = sadd.s32 %s277, %s278
      %s280 = smul.addr %s279, 4
      %s281 = scalar_lea.vmem %s0, %s280
      %s282 = smul.u32 32, %s20
      %s283 = smul.u32 2, %s22
      %s284 = smul.u32 32, %s22
      %p285 = scmp.lt.s32.totalorder %s284, 31
      %s286 = scalar_select %p285, %s284, 31
      %p287 = scmp.lt.s32.totalorder %s21, 0
      %s288 = scalar_select %p287, %s21, 0
      %s289 = sadd.s32 %s288, %s286
      %s290 = smul.addr %s289, 4
      %s291 = scalar_lea.vmem %s1, %s290
      %s292 = smul.u32 32, %s22
      %p293 = scmp.lt.s32.totalorder %s21, 0
      %s294 = scalar_select %p293, %s21, 0
      %s295 = scalar_lea.vmem %s2, %s294
      %p296 = scmp.lt.s32.totalorder %s21, 0
      %s297 = scalar_select %p296, %s21, 0
      %s298 = scalar_lea.vmem %s3, %s297
      %s299 = smul.u32 32, %s20
      %p300 = scmp.lt.s32.totalorder %s299, 63
      %s301 = scalar_select %p300, %s299, 63
      %p302 = scmp.lt.s32.totalorder %s21, 0
      %s303 = scalar_select %p302, %s21, 0
      %s304 = sadd.s32 %s303, %s301
      %s305 = smul.addr %s304, 4
      %s306 = scalar_lea.vmem %s4, %s305
      %s307 = smul.u32 32, %s20
      %p309 = scmp.eq.s32.totalorder %s22, 0
      // Predicated region
      $region37: #{_lambda_.6} parent=35 // pred_check
        %p310 = pneg %p309
      $region38: #{_lambda_.6} parent=35 // pred_check_branch
        %312 = sbr.rel (%p310) target = $region40
      $region39: #{_lambda_.6} parent=35 // pred_region
        %313 = vst [vmem:[#allocation2] sm:$0xff] 0.0
        %314 = vst [vmem:[#allocation2 + $0x8] sm:$0xff] 0.0
        %315 = vst [vmem:[#allocation2 + $0x10] sm:$0xff] 0.0
        %316 = vst [vmem:[#allocation2 + $0x18] sm:$0xff] 0.0
        %317 = vst [vmem:[#allocation2 + $0x20] sm:$0xff] 0.0
        %318 = vst [vmem:[#allocation2 + $0x28] sm:$0xff] 0.0
        %319 = vst [vmem:[#allocation2 + $0x30] sm:$0xff] 0.0
        %320 = vst [vmem:[#allocation2 + $0x38] sm:$0xff] 0.0
        %321 = vst [vmem:[#allocation2 + $0x40] sm:$0xff] 0.0
        %322 = vst [vmem:[#allocation2 + $0x48] sm:$0xff] 0.0
        %323 = vst [vmem:[#allocation2 + $0x50] sm:$0xff] 0.0
        %324 = vst [vmem:[#allocation2 + $0x58] sm:$0xff] 0.0
        %325 = vst [vmem:[#allocation2 + $0x60] sm:$0xff] 0.0
        %326 = vst [vmem:[#allocation2 + $0x68] sm:$0xff] 0.0
        %327 = vst [vmem:[#allocation2 + $0x70] sm:$0xff] 0.0
        %328 = vst [vmem:[#allocation2 + $0x78] sm:$0xff] 0.0
        %329 = vst [vmem:[#allocation2 + $0x80] sm:$0xff] 0.0
        %330 = vst [vmem:[#allocation2 + $0x88] sm:$0xff] 0.0
        %331 = vst [vmem:[#allocation2 + $0x90] sm:$0xff] 0.0
        %332 = vst [vmem:[#allocation2 + $0x98] sm:$0xff] 0.0
        %333 = vst [vmem:[#allocation2 + $0xa0] sm:$0xff] 0.0
        %334 = vst [vmem:[#allocation2 + $0xa8] sm:$0xff] 0.0
        %335 = vst [vmem:[#allocation2 + $0xb0] sm:$0xff] 0.0
        %336 = vst [vmem:[#allocation2 + $0xb8] sm:$0xff] 0.0
        %337 = vst [vmem:[#allocation2 + $0xc0] sm:$0xff] 0.0
        %338 = vst [vmem:[#allocation2 + $0xc8] sm:$0xff] 0.0
        %339 = vst [vmem:[#allocation2 + $0xd0] sm:$0xff] 0.0
        %340 = vst [vmem:[#allocation2 + $0xd8] sm:$0xff] 0.0
        %341 = vst [vmem:[#allocation2 + $0xe0] sm:$0xff] 0.0
        %342 = vst [vmem:[#allocation2 + $0xe8] sm:$0xff] 0.0
        %343 = vst [vmem:[#allocation2 + $0xf0] sm:$0xff] 0.0
        %344 = vst [vmem:[#allocation2 + $0xf8] sm:$0xff] 0.0
      $region40: #{_lambda_.6} parent=35 // pred_fallthru
        _
      %v345 = vld [vmem:[#allocation2] sm:$0xff]
      %v346 = vld [vmem:[#allocation2 + $0x8] sm:$0xff]
      %v347 = vld [vmem:[#allocation2 + $0x10] sm:$0xff]
      %v348 = vld [vmem:[#allocation2 + $0x18] sm:$0xff]
      %v349 = vld [vmem:[#allocation2 + $0x20] sm:$0xff]
      %v350 = vld [vmem:[#allocation2 + $0x28] sm:$0xff]
      %v351 = vld [vmem:[#allocation2 + $0x30] sm:$0xff]
      %v352 = vld [vmem:[#allocation2 + $0x38] sm:$0xff]
      %v353 = vld [vmem:[#allocation2 + $0x40] sm:$0xff]
      %v354 = vld [vmem:[#allocation2 + $0x48] sm:$0xff]
      %v355 = vld [vmem:[#allocation2 + $0x50] sm:$0xff]
      %v356 = vld [vmem:[#allocation2 + $0x58] sm:$0xff]
      %v357 = vld [vmem:[#allocation2 + $0x60] sm:$0xff]
      %v358 = vld [vmem:[#allocation2 + $0x68] sm:$0xff]
      %v359 = vld [vmem:[#allocation2 + $0x70] sm:$0xff]
      %v360 = vld [vmem:[#allocation2 + $0x78] sm:$0xff]
      %v361 = vld [vmem:[#allocation2 + $0x80] sm:$0xff]
      %v362 = vld [vmem:[#allocation2 + $0x88] sm:$0xff]
      %v363 = vld [vmem:[#allocation2 + $0x90] sm:$0xff]
      %v364 = vld [vmem:[#allocation2 + $0x98] sm:$0xff]
      %v365 = vld [vmem:[#allocation2 + $0xa0] sm:$0xff]
      %v366 = vld [vmem:[#allocation2 + $0xa8] sm:$0xff]
      %v367 = vld [vmem:[#allocation2 + $0xb0] sm:$0xff]
      %v368 = vld [vmem:[#allocation2 + $0xb8] sm:$0xff]
      %v369 = vld [vmem:[#allocation2 + $0xc0] sm:$0xff]
      %v370 = vld [vmem:[#allocation2 + $0xc8] sm:$0xff]
      %v371 = vld [vmem:[#allocation2 + $0xd0] sm:$0xff]
      %v372 = vld [vmem:[#allocation2 + $0xd8] sm:$0xff]
      %v373 = vld [vmem:[#allocation2 + $0xe0] sm:$0xff]
      %v374 = vld [vmem:[#allocation2 + $0xe8] sm:$0xff]
      %v375 = vld [vmem:[#allocation2 + $0xf0] sm:$0xff]
      %v376 = vld [vmem:[#allocation2 + $0xf8] sm:$0xff]
      %v377 = vld [vmem:[%s281] sm:$0xff]
      %v378 = vld [vmem:[%s281 + $0x8] sm:$0xff]
      %v379 = vld [vmem:[%s281 + $0x10] sm:$0xff]
      %v380 = vld [vmem:[%s281 + $0x18] sm:$0xff]
      %v381 = vld [vmem:[%s281 + $0x20] sm:$0xff]
      %v382 = vld [vmem:[%s281 + $0x28] sm:$0xff]
      %v383 = vld [vmem:[%s281 + $0x30] sm:$0xff]
      %v384 = vld [vmem:[%s281 + $0x38] sm:$0xff]
      %v385 = vld [vmem:[%s281 + $0x40] sm:$0xff]
      %v386 = vld [vmem:[%s281 + $0x48] sm:$0xff]
      %v387 = vld [vmem:[%s281 + $0x50] sm:$0xff]
      %v388 = vld [vmem:[%s281 + $0x58] sm:$0xff]
      %v389 = vld [vmem:[%s281 + $0x60] sm:$0xff]
      %v390 = vld [vmem:[%s281 + $0x68] sm:$0xff]
      %v391 = vld [vmem:[%s281 + $0x70] sm:$0xff]
      %v392 = vld [vmem:[%s281 + $0x78] sm:$0xff]
      %v393 = vld [vmem:[%s281 + $0x80] sm:$0xff]
      %v394 = vld [vmem:[%s281 + $0x88] sm:$0xff]
      %v395 = vld [vmem:[%s281 + $0x90] sm:$0xff]
      %v396 = vld [vmem:[%s281 + $0x98] sm:$0xff]
      %v397 = vld [vmem:[%s281 + $0xa0] sm:$0xff]
      %v398 = vld [vmem:[%s281 + $0xa8] sm:$0xff]
      %v399 = vld [vmem:[%s281 + $0xb0] sm:$0xff]
      %v400 = vld [vmem:[%s281 + $0xb8] sm:$0xff]
      %v401 = vld [vmem:[%s281 + $0xc0] sm:$0xff]
      %v402 = vld [vmem:[%s281 + $0xc8] sm:$0xff]
      %v403 = vld [vmem:[%s281 + $0xd0] sm:$0xff]
      %v404 = vld [vmem:[%s281 + $0xd8] sm:$0xff]
      %v405 = vld [vmem:[%s281 + $0xe0] sm:$0xff]
      %v406 = vld [vmem:[%s281 + $0xe8] sm:$0xff]
      %v407 = vld [vmem:[%s281 + $0xf0] sm:$0xff]
      %v408 = vld [vmem:[%s281 + $0xf8] sm:$0xff]
      %v409 = vld [vmem:[%s291] sm:$0xf]
      %v410 = vld [vmem:[%s291 + $0x4] sm:$0xf]
      %v411 = vld [vmem:[%s291 + $0x8] sm:$0xf]
      %v412 = vld [vmem:[%s291 + $0xc] sm:$0xf]
      %v413 = vld [vmem:[%s291 + $0x10] sm:$0xf]
      %v414 = vld [vmem:[%s291 + $0x14] sm:$0xf]
      %v415 = vld [vmem:[%s291 + $0x18] sm:$0xf]
      %v416 = vld [vmem:[%s291 + $0x1c] sm:$0xf]
      %v417 = vld [vmem:[%s291 + $0x20] sm:$0xf]
      %v418 = vld [vmem:[%s291 + $0x24] sm:$0xf]
      %v419 = vld [vmem:[%s291 + $0x28] sm:$0xf]
      %v420 = vld [vmem:[%s291 + $0x2c] sm:$0xf]
      %v421 = vld [vmem:[%s291 + $0x30] sm:$0xf]
      %v422 = vld [vmem:[%s291 + $0x34] sm:$0xf]
      %v423 = vld [vmem:[%s291 + $0x38] sm:$0xf]
      %v424 = vld [vmem:[%s291 + $0x3c] sm:$0xf]
      %v425 = vld [vmem:[%s291 + $0x40] sm:$0xf]
      %v426 = vld [vmem:[%s291 + $0x44] sm:$0xf]
      %v427 = vld [vmem:[%s291 + $0x48] sm:$0xf]
      %v428 = vld [vmem:[%s291 + $0x4c] sm:$0xf]
      %v429 = vld [vmem:[%s291 + $0x50] sm:$0xf]
      %v430 = vld [vmem:[%s291 + $0x54] sm:$0xf]
      %v431 = vld [vmem:[%s291 + $0x58] sm:$0xf]
      %v432 = vld [vmem:[%s291 + $0x5c] sm:$0xf]
      %v433 = vld [vmem:[%s291 + $0x60] sm:$0xf]
      %v434 = vld [vmem:[%s291 + $0x64] sm:$0xf]
      %v435 = vld [vmem:[%s291 + $0x68] sm:$0xf]
      %v436 = vld [vmem:[%s291 + $0x6c] sm:$0xf]
      %v437 = vld [vmem:[%s291 + $0x70] sm:$0xf]
      %v438 = vld [vmem:[%s291 + $0x74] sm:$0xf]
      %v439 = vld [vmem:[%s291 + $0x78] sm:$0xf]
      %v440 = vld [vmem:[%s291 + $0x7c] sm:$0xf]
      %v473 = vunpack.c.l.b16 %v377
      %v474 = vunpack.c.h.b16 %v377
      %v475 = vunpack.c.l.b16 %v378
      %v476 = vunpack.c.h.b16 %v378
      %v477 = vunpack.c.l.b16 %v379
      %v478 = vunpack.c.h.b16 %v379
      %v479 = vunpack.c.l.b16 %v380
      %v480 = vunpack.c.h.b16 %v380
      %v481 = vunpack.c.l.b16 %v381
      %v482 = vunpack.c.h.b16 %v381
      %v483 = vunpack.c.l.b16 %v382
      %v484 = vunpack.c.h.b16 %v382
      %v485 = vunpack.c.l.b16 %v383
      %v486 = vunpack.c.h.b16 %v383
      %v487 = vunpack.c.l.b16 %v384
      %v488 = vunpack.c.h.b16 %v384
      %v489 = vunpack.c.l.b16 %v385
      %v490 = vunpack.c.h.b16 %v385
      %v491 = vunpack.c.l.b16 %v386
      %v492 = vunpack.c.h.b16 %v386
      %v493 = vunpack.c.l.b16 %v387
      %v494 = vunpack.c.h.b16 %v387
      %v495 = vunpack.c.l.b16 %v388
      %v496 = vunpack.c.h.b16 %v388
      %v497 = vunpack.c.l.b16 %v389
      %v498 = vunpack.c.h.b16 %v389
      %v499 = vunpack.c.l.b16 %v390
      %v500 = vunpack.c.h.b16 %v390
      %v501 = vunpack.c.l.b16 %v391
      %v502 = vunpack.c.h.b16 %v391
      %v503 = vunpack.c.l.b16 %v392
      %v504 = vunpack.c.h.b16 %v392
      %v505 = vunpack.c.l.b16 %v393
      %v506 = vunpack.c.h.b16 %v393
      %v507 = vunpack.c.l.b16 %v394
      %v508 = vunpack.c.h.b16 %v394
      %v509 = vunpack.c.l.b16 %v395
      %v510 = vunpack.c.h.b16 %v395
      %v511 = vunpack.c.l.b16 %v396
      %v512 = vunpack.c.h.b16 %v396
      %v513 = vunpack.c.l.b16 %v397
      %v514 = vunpack.c.h.b16 %v397
      %v515 = vunpack.c.l.b16 %v398
      %v516 = vunpack.c.h.b16 %v398
      %v517 = vunpack.c.l.b16 %v399
      %v518 = vunpack.c.h.b16 %v399
      %v519 = vunpack.c.l.b16 %v400
      %v520 = vunpack.c.h.b16 %v400
      %v521 = vunpack.c.l.b16 %v401
      %v522 = vunpack.c.h.b16 %v401
      %v523 = vunpack.c.l.b16 %v402
      %v524 = vunpack.c.h.b16 %v402
      %v525 = vunpack.c.l.b16 %v403
      %v526 = vunpack.c.h.b16 %v403
      %v527 = vunpack.c.l.b16 %v404
      %v528 = vunpack.c.h.b16 %v404
      %v529 = vunpack.c.l.b16 %v405
      %v530 = vunpack.c.h.b16 %v405
      %v531 = vunpack.c.l.b16 %v406
      %v532 = vunpack.c.h.b16 %v406
      %v533 = vunpack.c.l.b16 %v407
      %v534 = vunpack.c.h.b16 %v407
      %v535 = vunpack.c.l.b16 %v408
      %v536 = vunpack.c.h.b16 %v408
      %v537 = vpack.c.b16 %v475, %v473
      %v538 = vpack.c.b16 %v476, %v474
      %v539 = vpack.c.b16 %v479, %v477
      %v540 = vpack.c.b16 %v480, %v478
      %v541 = vpack.c.b16 %v483, %v481
      %v542 = vpack.c.b16 %v484, %v482
      %v543 = vpack.c.b16 %v487, %v485
      %v544 = vpack.c.b16 %v488, %v486
      %v545 = vpack.c.b16 %v491, %v489
      %v546 = vpack.c.b16 %v492, %v490
      %v547 = vpack.c.b16 %v495, %v493
      %v548 = vpack.c.b16 %v496, %v494
      %v549 = vpack.c.b16 %v499, %v497
      %v550 = vpack.c.b16 %v500, %v498
      %v551 = vpack.c.b16 %v503, %v501
      %v552 = vpack.c.b16 %v504, %v502
      %v553 = vpack.c.b16 %v507, %v505
      %v554 = vpack.c.b16 %v508, %v506
      %v555 = vpack.c.b16 %v511, %v509
      %v556 = vpack.c.b16 %v512, %v510
      %v557 = vpack.c.b16 %v515, %v513
      %v558 = vpack.c.b16 %v516, %v514
      %v559 = vpack.c.b16 %v519, %v517
      %v560 = vpack.c.b16 %v520, %v518
      %v561 = vpack.c.b16 %v523, %v521
      %v562 = vpack.c.b16 %v524, %v522
      %v563 = vpack.c.b16 %v527, %v525
      %v564 = vpack.c.b16 %v528, %v526
      %v565 = vpack.c.b16 %v531, %v529
      %v566 = vpack.c.b16 %v532, %v530
      %v567 = vpack.c.b16 %v535, %v533
      %v568 = vpack.c.b16 %v536, %v534
      %v633 = vunpack.c.l.b16 %v409
      %v634 = vunpack.c.l.b16 %v410
      %v635 = vunpack.c.l.b16 %v411
      %v636 = vunpack.c.l.b16 %v412
      %v637 = vunpack.c.l.b16 %v413
      %v638 = vunpack.c.l.b16 %v414
      %v639 = vunpack.c.l.b16 %v415
      %v640 = vunpack.c.l.b16 %v416
      %v641 = vunpack.c.l.b16 %v417
      %v642 = vunpack.c.l.b16 %v418
      %v643 = vunpack.c.l.b16 %v419
      %v644 = vunpack.c.l.b16 %v420
      %v645 = vunpack.c.l.b16 %v421
      %v646 = vunpack.c.l.b16 %v422
      %v647 = vunpack.c.l.b16 %v423
      %v648 = vunpack.c.l.b16 %v424
      %v649 = vunpack.c.l.b16 %v425
      %v650 = vunpack.c.l.b16 %v426
      %v651 = vunpack.c.l.b16 %v427
      %v652 = vunpack.c.l.b16 %v428
      %v653 = vunpack.c.l.b16 %v429
      %v654 = vunpack.c.l.b16 %v430
      %v655 = vunpack.c.l.b16 %v431
      %v656 = vunpack.c.l.b16 %v432
      %v657 = vunpack.c.l.b16 %v433
      %v658 = vunpack.c.l.b16 %v434
      %v659 = vunpack.c.l.b16 %v435
      %v660 = vunpack.c.l.b16 %v436
      %v661 = vunpack.c.l.b16 %v437
      %v662 = vunpack.c.l.b16 %v438
      %v663 = vunpack.c.l.b16 %v439
      %v664 = vunpack.c.l.b16 %v440
      %v665 = vpack.c.b16 %v634, %v633
      %v666 = vpack.c.b16 %v636, %v635
      %v667 = vpack.c.b16 %v638, %v637
      %v668 = vpack.c.b16 %v640, %v639
      %v669 = vpack.c.b16 %v642, %v641
      %v670 = vpack.c.b16 %v644, %v643
      %v671 = vpack.c.b16 %v646, %v645
      %v672 = vpack.c.b16 %v648, %v647
      %v673 = vpack.c.b16 %v650, %v649
      %v674 = vpack.c.b16 %v652, %v651
      %v675 = vpack.c.b16 %v654, %v653
      %v676 = vpack.c.b16 %v656, %v655
      %v677 = vpack.c.b16 %v658, %v657
      %v678 = vpack.c.b16 %v660, %v659
      %v679 = vpack.c.b16 %v662, %v661
      %v680 = vpack.c.b16 %v664, %v663
      %697 = vmatprep.subr.bf16.mxu0 0
      %698 = vmatpush1.bf16.msra.mxu0 %v672
      %699 = vmatprep.subr.bf16.mxu0 0
      %700 = vmatpush1.bf16.msra.mxu0 %v671
      %701 = vmatprep.subr.bf16.mxu0 0
      %702 = vmatpush1.bf16.msra.mxu0 %v670
      %703 = vmatprep.subr.bf16.mxu0 0
      %704 = vmatpush1.bf16.msra.mxu0 %v669
      %705 = vmatprep.subr.bf16.mxu0 0
      %706 = vmatpush1.bf16.msra.mxu0 %v668
      %707 = vmatprep.subr.bf16.mxu0 0
      %708 = vmatpush1.bf16.msra.mxu0 %v667
      %709 = vmatprep.subr.bf16.mxu0 0
      %710 = vmatpush1.bf16.msra.mxu0 %v666
      %711 = vmatprep.subr.bf16.mxu0 0
      %712 = vmatpush1.bf16.msra.mxu0 %v665
      %713 = vmatprep.subr.bf16.mxu0 0
      %714 = vmatpush2.bf16.msra.mxu0 %v680
      %715 = vmatprep.subr.bf16.mxu0 0
      %716 = vmatpush2.bf16.msra.mxu0 %v679
      %717 = vmatprep.subr.bf16.mxu0 0
      %718 = vmatpush2.bf16.msra.mxu0 %v678
      %719 = vmatprep.subr.bf16.mxu0 0
      %720 = vmatpush2.bf16.msra.mxu0 %v677
      %721 = vmatprep.subr.bf16.mxu0 0
      %722 = vmatpush2.bf16.msra.mxu0 %v676
      %723 = vmatprep.subr.bf16.mxu0 0
      %724 = vmatpush2.bf16.msra.mxu0 %v675
      %725 = vmatprep.subr.bf16.mxu0 0
      %726 = vmatpush2.bf16.msra.mxu0 %v674
      %727 = vmatprep.subr.bf16.mxu0 0
      %728 = vmatpush2.bf16.msra.mxu0 %v673
      %729 = vmatprep.mubr.bf16.mxu0 %v538
      %730 = vmatmul.mubr.bf16.gmra.mxu0 %v537
      %v731 = vpop.f32.mrf.mxu0
      %v732 = vadd.f32 0.0, %v731
      %v733 = vpop.f32.mrf.mxu0
      %v734 = vpop.f32.mrf.mxu0
      %v735 = vadd.f32 0.0, %v734
      %v736 = vpop.f32.mrf.mxu0
      %737 = vmatprep.mubr.bf16.mxu0 %v540
      %738 = vmatmul.mubr.bf16.gmra.mxu0 %v539
      %v739 = vpop.f32.mrf.mxu0
      %v740 = vadd.f32 0.0, %v739
      %v741 = vpop.f32.mrf.mxu0
      %v742 = vpop.f32.mrf.mxu0
      %v743 = vadd.f32 0.0, %v742
      %v744 = vpop.f32.mrf.mxu0
      %745 = vmatprep.mubr.bf16.mxu0 %v542
      %746 = vmatmul.mubr.bf16.gmra.mxu0 %v541
      %v747 = vpop.f32.mrf.mxu0
      %v748 = vadd.f32 0.0, %v747
      %v749 = vpop.f32.mrf.mxu0
      %v750 = vpop.f32.mrf.mxu0
      %v751 = vadd.f32 0.0, %v750
      %v752 = vpop.f32.mrf.mxu0
      %753 = vmatprep.mubr.bf16.mxu0 %v544
      %754 = vmatmul.mubr.bf16.gmra.mxu0 %v543
      %v755 = vpop.f32.mrf.mxu0
      %v756 = vadd.f32 0.0, %v755
      %v757 = vpop.f32.mrf.mxu0
      %v758 = vpop.f32.mrf.mxu0
      %v759 = vadd.f32 0.0, %v758
      %v760 = vpop.f32.mrf.mxu0
      %761 = vmatprep.mubr.bf16.mxu0 %v546
      %762 = vmatmul.mubr.bf16.gmra.mxu0 %v545
      %v763 = vpop.f32.mrf.mxu0
      %v764 = vadd.f32 0.0, %v763
      %v765 = vpop.f32.mrf.mxu0
      %v766 = vpop.f32.mrf.mxu0
      %v767 = vadd.f32 0.0, %v766
      %v768 = vpop.f32.mrf.mxu0
      %769 = vmatprep.mubr.bf16.mxu0 %v548
      %770 = vmatmul.mubr.bf16.gmra.mxu0 %v547
      %v771 = vpop.f32.mrf.mxu0
      %v772 = vadd.f32 0.0, %v771
      %v773 = vpop.f32.mrf.mxu0
      %v774 = vpop.f32.mrf.mxu0
      %v775 = vadd.f32 0.0, %v774
      %v776 = vpop.f32.mrf.mxu0
      %777 = vmatprep.mubr.bf16.mxu0 %v550
      %778 = vmatmul.mubr.bf16.gmra.mxu0 %v549
      %v779 = vpop.f32.mrf.mxu0
      %v780 = vadd.f32 0.0, %v779
      %v781 = vpop.f32.mrf.mxu0
      %v782 = vpop.f32.mrf.mxu0
      %v783 = vadd.f32 0.0, %v782
      %v784 = vpop.f32.mrf.mxu0
      %785 = vmatprep.mubr.bf16.mxu0 %v552
      %786 = vmatmul.mubr.bf16.gmra.mxu0 %v551
      %v787 = vpop.f32.mrf.mxu0
      %v788 = vadd.f32 0.0, %v787
      %v789 = vpop.f32.mrf.mxu0
      %v790 = vpop.f32.mrf.mxu0
      %v791 = vadd.f32 0.0, %v790
      %v792 = vpop.f32.mrf.mxu0
      %793 = vmatprep.mubr.bf16.mxu0 %v554
      %794 = vmatmul.mubr.bf16.gmra.mxu0 %v553
      %v795 = vpop.f32.mrf.mxu0
      %v796 = vadd.f32 0.0, %v795
      %v797 = vpop.f32.mrf.mxu0
      %v798 = vpop.f32.mrf.mxu0
      %v799 = vadd.f32 0.0, %v798
      %v800 = vpop.f32.mrf.mxu0
      %801 = vmatprep.mubr.bf16.mxu0 %v556
      %802 = vmatmul.mubr.bf16.gmra.mxu0 %v555
      %v803 = vpop.f32.mrf.mxu0
      %v804 = vadd.f32 0.0, %v803
      %v805 = vpop.f32.mrf.mxu0
      %v806 = vpop.f32.mrf.mxu0
      %v807 = vadd.f32 0.0, %v806
      %v808 = vpop.f32.mrf.mxu0
      %809 = vmatprep.mubr.bf16.mxu0 %v558
      %810 = vmatmul.mubr.bf16.gmra.mxu0 %v557
      %v811 = vpop.f32.mrf.mxu0
      %v812 = vadd.f32 0.0, %v811
      %v813 = vpop.f32.mrf.mxu0
      %v814 = vpop.f32.mrf.mxu0
      %v815 = vadd.f32 0.0, %v814
      %v816 = vpop.f32.mrf.mxu0
      %817 = vmatprep.mubr.bf16.mxu0 %v560
      %818 = vmatmul.mubr.bf16.gmra.mxu0 %v559
      %v819 = vpop.f32.mrf.mxu0
      %v820 = vadd.f32 0.0, %v819
      %v821 = vpop.f32.mrf.mxu0
      %v822 = vpop.f32.mrf.mxu0
      %v823 = vadd.f32 0.0, %v822
      %v824 = vpop.f32.mrf.mxu0
      %825 = vmatprep.mubr.bf16.mxu0 %v562
      %826 = vmatmul.mubr.bf16.gmra.mxu0 %v561
      %v827 = vpop.f32.mrf.mxu0
      %v828 = vadd.f32 0.0, %v827
      %v829 = vpop.f32.mrf.mxu0
      %v830 = vpop.f32.mrf.mxu0
      %v831 = vadd.f32 0.0, %v830
      %v832 = vpop.f32.mrf.mxu0
      %833 = vmatprep.mubr.bf16.mxu0 %v564
      %834 = vmatmul.mubr.bf16.gmra.mxu0 %v563
      %v835 = vpop.f32.mrf.mxu0
      %v836 = vadd.f32 0.0, %v835
      %v837 = vpop.f32.mrf.mxu0
      %v838 = vpop.f32.mrf.mxu0
      %v839 = vadd.f32 0.0, %v838
      %v840 = vpop.f32.mrf.mxu0
      %841 = vmatprep.mubr.bf16.mxu0 %v566
      %842 = vmatmul.mubr.bf16.gmra.mxu0 %v565
      %v843 = vpop.f32.mrf.mxu0
      %v844 = vadd.f32 0.0, %v843
      %v845 = vpop.f32.mrf.mxu0
      %v846 = vpop.f32.mrf.mxu0
      %v847 = vadd.f32 0.0, %v846
      %v848 = vpop.f32.mrf.mxu0
      %849 = vmatprep.mubr.bf16.mxu0 %v568
      %850 = vmatmul.mubr.bf16.gmra.mxu0 %v567
      %v851 = vpop.f32.mrf.mxu0
      %v852 = vadd.f32 0.0, %v851
      %v853 = vpop.f32.mrf.mxu0
      %v854 = vpop.f32.mrf.mxu0
      %v855 = vadd.f32 0.0, %v854
      %v856 = vpop.f32.mrf.mxu0
      %857 = vdwg.mxu0
      %v858 = vadd.f32 %v345, %v732
      %v859 = vadd.f32 %v346, %v735
      %v860 = vadd.f32 %v347, %v740
      %v861 = vadd.f32 %v348, %v743
      %v862 = vadd.f32 %v349, %v748
      %v863 = vadd.f32 %v350, %v751
      %v864 = vadd.f32 %v351, %v756
      %v865 = vadd.f32 %v352, %v759
      %v866 = vadd.f32 %v353, %v764
      %v867 = vadd.f32 %v354, %v767
      %v868 = vadd.f32 %v355, %v772
      %v869 = vadd.f32 %v356, %v775
      %v870 = vadd.f32 %v357, %v780
      %v871 = vadd.f32 %v358, %v783
      %v872 = vadd.f32 %v359, %v788
      %v873 = vadd.f32 %v360, %v791
      %v874 = vadd.f32 %v361, %v796
      %v875 = vadd.f32 %v362, %v799
      %v876 = vadd.f32 %v363, %v804
      %v877 = vadd.f32 %v364, %v807
      %v878 = vadd.f32 %v365, %v812
      %v879 = vadd.f32 %v366, %v815
      %v880 = vadd.f32 %v367, %v820
      %v881 = vadd.f32 %v368, %v823
      %v882 = vadd.f32 %v369, %v828
      %v883 = vadd.f32 %v370, %v831
      %v884 = vadd.f32 %v371, %v836
      %v885 = vadd.f32 %v372, %v839
      %v886 = vadd.f32 %v373, %v844
      %v887 = vadd.f32 %v374, %v847
      %v888 = vadd.f32 %v375, %v852
      %v889 = vadd.f32 %v376, %v855
      %890 = vst [vmem:[#allocation2] sm:$0xff] %v858
      %891 = vst [vmem:[#allocation2 + $0x8] sm:$0xff] %v859
      %892 = vst [vmem:[#allocation2 + $0x10] sm:$0xff] %v860
      %893 = vst [vmem:[#allocation2 + $0x18] sm:$0xff] %v861
      %894 = vst [vmem:[#allocation2 + $0x20] sm:$0xff] %v862
      %895 = vst [vmem:[#allocation2 + $0x28] sm:$0xff] %v863
      %896 = vst [vmem:[#allocation2 + $0x30] sm:$0xff] %v864
      %897 = vst [vmem:[#allocation2 + $0x38] sm:$0xff] %v865
      %898 = vst [vmem:[#allocation2 + $0x40] sm:$0xff] %v866
      %899 = vst [vmem:[#allocation2 + $0x48] sm:$0xff] %v867
      %900 = vst [vmem:[#allocation2 + $0x50] sm:$0xff] %v868
      %901 = vst [vmem:[#allocation2 + $0x58] sm:$0xff] %v869
      %902 = vst [vmem:[#allocation2 + $0x60] sm:$0xff] %v870
      %903 = vst [vmem:[#allocation2 + $0x68] sm:$0xff] %v871
      %904 = vst [vmem:[#allocation2 + $0x70] sm:$0xff] %v872
      %905 = vst [vmem:[#allocation2 + $0x78] sm:$0xff] %v873
      %906 = vst [vmem:[#allocation2 + $0x80] sm:$0xff] %v874
      %907 = vst [vmem:[#allocation2 + $0x88] sm:$0xff] %v875
      %908 = vst [vmem:[#allocation2 + $0x90] sm:$0xff] %v876
      %909 = vst [vmem:[#allocation2 + $0x98] sm:$0xff] %v877
      %910 = vst [vmem:[#allocation2 + $0xa0] sm:$0xff] %v878
      %911 = vst [vmem:[#allocation2 + $0xa8] sm:$0xff] %v879
      %912 = vst [vmem:[#allocation2 + $0xb0] sm:$0xff] %v880
      %913 = vst [vmem:[#allocation2 + $0xb8] sm:$0xff] %v881
      %914 = vst [vmem:[#allocation2 + $0xc0] sm:$0xff] %v882
      %915 = vst [vmem:[#allocation2 + $0xc8] sm:$0xff] %v883
      %916 = vst [vmem:[#allocation2 + $0xd0] sm:$0xff] %v884
      %917 = vst [vmem:[#allocation2 + $0xd8] sm:$0xff] %v885
      %918 = vst [vmem:[#allocation2 + $0xe0] sm:$0xff] %v886
      %919 = vst [vmem:[#allocation2 + $0xe8] sm:$0xff] %v887
      %920 = vst [vmem:[#allocation2 + $0xf0] sm:$0xff] %v888
      %921 = vst [vmem:[#allocation2 + $0xf8] sm:$0xff] %v889
      // Predicated region
      $region41: #{_lambda_.6} parent=35 // pred_check
        %p922 = pneg %p309
      $region42: #{_lambda_.6} parent=35 // pred_check_branch
        %924 = sbr.rel (%p922) target = $region44
      $region43: #{_lambda_.6} parent=35 // pred_region
        %v925 = vld [vmem:[#allocation2] sm:$0xff]
        %v926 = vld [vmem:[#allocation2 + $0x8] sm:$0xff]
        %v927 = vld [vmem:[#allocation2 + $0x10] sm:$0xff]
        %v928 = vld [vmem:[#allocation2 + $0x18] sm:$0xff]
        %v929 = vld [vmem:[#allocation2 + $0x20] sm:$0xff]
        %v930 = vld [vmem:[#allocation2 + $0x28] sm:$0xff]
        %v931 = vld [vmem:[#allocation2 + $0x30] sm:$0xff]
        %v932 = vld [vmem:[#allocation2 + $0x38] sm:$0xff]
        %v933 = vld [vmem:[#allocation2 + $0x40] sm:$0xff]
        %v934 = vld [vmem:[#allocation2 + $0x48] sm:$0xff]
        %v935 = vld [vmem:[#allocation2 + $0x50] sm:$0xff]
        %v936 = vld [vmem:[#allocation2 + $0x58] sm:$0xff]
        %v937 = vld [vmem:[#allocation2 + $0x60] sm:$0xff]
        %v938 = vld [vmem:[#allocation2 + $0x68] sm:$0xff]
        %v939 = vld [vmem:[#allocation2 + $0x70] sm:$0xff]
        %v940 = vld [vmem:[#allocation2 + $0x78] sm:$0xff]
        %v941 = vld [vmem:[#allocation2 + $0x80] sm:$0xff]
        %v942 = vld [vmem:[#allocation2 + $0x88] sm:$0xff]
        %v943 = vld [vmem:[#allocation2 + $0x90] sm:$0xff]
        %v944 = vld [vmem:[#allocation2 + $0x98] sm:$0xff]
        %v945 = vld [vmem:[#allocation2 + $0xa0] sm:$0xff]
        %v946 = vld [vmem:[#allocation2 + $0xa8] sm:$0xff]
        %v947 = vld [vmem:[#allocation2 + $0xb0] sm:$0xff]
        %v948 = vld [vmem:[#allocation2 + $0xb8] sm:$0xff]
        %v949 = vld [vmem:[#allocation2 + $0xc0] sm:$0xff]
        %v950 = vld [vmem:[#allocation2 + $0xc8] sm:$0xff]
        %v951 = vld [vmem:[#allocation2 + $0xd0] sm:$0xff]
        %v952 = vld [vmem:[#allocation2 + $0xd8] sm:$0xff]
        %v953 = vld [vmem:[#allocation2 + $0xe0] sm:$0xff]
        %v954 = vld [vmem:[#allocation2 + $0xe8] sm:$0xff]
        %v955 = vld [vmem:[#allocation2 + $0xf0] sm:$0xff]
        %v956 = vld [vmem:[#allocation2 + $0xf8] sm:$0xff]
        %v957 = vld [vmem:[%s295] sm:$0x1]
        %v959 = vlaneseq
        %v960 = vshrl.u32 %v959, 7
        %v961 = vsub.s32 0, %v960
        %v962 = vrot.slane %v957, %v961
        %v964 = vmul.f32 %v925, %v962
        %v965 = vmul.f32 %v926, %v962
        %v966 = vmul.f32 %v927, %v962
        %v967 = vmul.f32 %v928, %v962
        %v968 = vmul.f32 %v929, %v962
        %v969 = vmul.f32 %v930, %v962
        %v970 = vmul.f32 %v931, %v962
        %v971 = vmul.f32 %v932, %v962
        %v972 = vmul.f32 %v933, %v962
        %v973 = vmul.f32 %v934, %v962
        %v974 = vmul.f32 %v935, %v962
        %v975 = vmul.f32 %v936, %v962
        %v976 = vmul.f32 %v937, %v962
        %v977 = vmul.f32 %v938, %v962
        %v978 = vmul.f32 %v939, %v962
        %v979 = vmul.f32 %v940, %v962
        %v980 = vmul.f32 %v941, %v962
        %v981 = vmul.f32 %v942, %v962
        %v982 = vmul.f32 %v943, %v962
        %v983 = vmul.f32 %v944, %v962
        %v984 = vmul.f32 %v945, %v962
        %v985 = vmul.f32 %v946, %v962
        %v986 = vmul.f32 %v947, %v962
        %v987 = vmul.f32 %v948, %v962
        %v988 = vmul.f32 %v949, %v962
        %v989 = vmul.f32 %v950, %v962
        %v990 = vmul.f32 %v951, %v962
        %v991 = vmul.f32 %v952, %v962
        %v992 = vmul.f32 %v953, %v962
        %v993 = vmul.f32 %v954, %v962
        %v994 = vmul.f32 %v955, %v962
        %v995 = vmul.f32 %v956, %v962
        %v996 = vld [vmem:[%s298] sm:$0x1]
        %v998 = vlaneseq
        %v999 = vshrl.u32 %v998, 7
        %v1000 = vsub.s32 0, %v999
        %v1001 = vrot.slane %v996, %v1000
        %v1003 = vadd.f32 %v964, %v1001
        %v1004 = vadd.f32 %v965, %v1001
        %v1005 = vadd.f32 %v966, %v1001
        %v1006 = vadd.f32 %v967, %v1001
        %v1007 = vadd.f32 %v968, %v1001
        %v1008 = vadd.f32 %v969, %v1001
        %v1009 = vadd.f32 %v970, %v1001
        %v1010 = vadd.f32 %v971, %v1001
        %v1011 = vadd.f32 %v972, %v1001
        %v1012 = vadd.f32 %v973, %v1001
        %v1013 = vadd.f32 %v974, %v1001
        %v1014 = vadd.f32 %v975, %v1001
        %v1015 = vadd.f32 %v976, %v1001
        %v1016 = vadd.f32 %v977, %v1001
        %v1017 = vadd.f32 %v978, %v1001
        %v1018 = vadd.f32 %v979, %v1001
        %v1019 = vadd.f32 %v980, %v1001
        %v1020 = vadd.f32 %v981, %v1001
        %v1021 = vadd.f32 %v982, %v1001
        %v1022 = vadd.f32 %v983, %v1001
        %v1023 = vadd.f32 %v984, %v1001
        %v1024 = vadd.f32 %v985, %v1001
        %v1025 = vadd.f32 %v986, %v1001
        %v1026 = vadd.f32 %v987, %v1001
        %v1027 = vadd.f32 %v988, %v1001
        %v1028 = vadd.f32 %v989, %v1001
        %v1029 = vadd.f32 %v990, %v1001
        %v1030 = vadd.f32 %v991, %v1001
        %v1031 = vadd.f32 %v992, %v1001
        %v1032 = vadd.f32 %v993, %v1001
        %v1033 = vadd.f32 %v994, %v1001
        %v1034 = vadd.f32 %v995, %v1001
        %vm1035 = vcmp.gt.f32.partialorder %v1003, 0.0
        %vm1036 = vcmp.gt.f32.partialorder %v1004, 0.0
        %vm1037 = vcmp.gt.f32.partialorder %v1005, 0.0
        %vm1038 = vcmp.gt.f32.partialorder %v1006, 0.0
        %vm1039 = vcmp.gt.f32.partialorder %v1007, 0.0
        %vm1040 = vcmp.gt.f32.partialorder %v1008, 0.0
        %vm1041 = vcmp.gt.f32.partialorder %v1009, 0.0
        %vm1042 = vcmp.gt.f32.partialorder %v1010, 0.0
        %vm1043 = vcmp.gt.f32.partialorder %v1011, 0.0
        %vm1044 = vcmp.gt.f32.partialorder %v1012, 0.0
        %vm1045 = vcmp.gt.f32.partialorder %v1013, 0.0
        %vm1046 = vcmp.gt.f32.partialorder %v1014, 0.0
        %vm1047 = vcmp.gt.f32.partialorder %v1015, 0.0
        %vm1048 = vcmp.gt.f32.partialorder %v1016, 0.0
        %vm1049 = vcmp.gt.f32.partialorder %v1017, 0.0
        %vm1050 = vcmp.gt.f32.partialorder %v1018, 0.0
        %vm1051 = vcmp.gt.f32.partialorder %v1019, 0.0
        %vm1052 = vcmp.gt.f32.partialorder %v1020, 0.0
        %vm1053 = vcmp.gt.f32.partialorder %v1021, 0.0
        %vm1054 = vcmp.gt.f32.partialorder %v1022, 0.0
        %vm1055 = vcmp.gt.f32.partialorder %v1023, 0.0
        %vm1056 = vcmp.gt.f32.partialorder %v1024, 0.0
        %vm1057 = vcmp.gt.f32.partialorder %v1025, 0.0
        %vm1058 = vcmp.gt.f32.partialorder %v1026, 0.0
        %vm1059 = vcmp.gt.f32.partialorder %v1027, 0.0
        %vm1060 = vcmp.gt.f32.partialorder %v1028, 0.0
        %vm1061 = vcmp.gt.f32.partialorder %v1029, 0.0
        %vm1062 = vcmp.gt.f32.partialorder %v1030, 0.0
        %vm1063 = vcmp.gt.f32.partialorder %v1031, 0.0
        %vm1064 = vcmp.gt.f32.partialorder %v1032, 0.0
        %vm1065 = vcmp.gt.f32.partialorder %v1033, 0.0
        %vm1066 = vcmp.gt.f32.partialorder %v1034, 0.0
        %v1067 = vmul.f32 %v1003, 0.1
        %v1068 = vmul.f32 %v1004, 0.1
        %v1069 = vmul.f32 %v1005, 0.1
        %v1070 = vmul.f32 %v1006, 0.1
        %v1071 = vmul.f32 %v1007, 0.1
        %v1072 = vmul.f32 %v1008, 0.1
        %v1073 = vmul.f32 %v1009, 0.1
        %v1074 = vmul.f32 %v1010, 0.1
        %v1075 = vmul.f32 %v1011, 0.1
        %v1076 = vmul.f32 %v1012, 0.1
        %v1077 = vmul.f32 %v1013, 0.1
        %v1078 = vmul.f32 %v1014, 0.1
        %v1079 = vmul.f32 %v1015, 0.1
        %v1080 = vmul.f32 %v1016, 0.1
        %v1081 = vmul.f32 %v1017, 0.1
        %v1082 = vmul.f32 %v1018, 0.1
        %v1083 = vmul.f32 %v1019, 0.1
        %v1084 = vmul.f32 %v1020, 0.1
        %v1085 = vmul.f32 %v1021, 0.1
        %v1086 = vmul.f32 %v1022, 0.1
        %v1087 = vmul.f32 %v1023, 0.1
        %v1088 = vmul.f32 %v1024, 0.1
        %v1089 = vmul.f32 %v1025, 0.1
        %v1090 = vmul.f32 %v1026, 0.1
        %v1091 = vmul.f32 %v1027, 0.1
        %v1092 = vmul.f32 %v1028, 0.1
        %v1093 = vmul.f32 %v1029, 0.1
        %v1094 = vmul.f32 %v1030, 0.1
        %v1095 = vmul.f32 %v1031, 0.1
        %v1096 = vmul.f32 %v1032, 0.1
        %v1097 = vmul.f32 %v1033, 0.1
        %v1098 = vmul.f32 %v1034, 0.1
        %v1099 = vsel %vm1035, %v1003, %v1067
        %v1100 = vsel %vm1036, %v1004, %v1068
        %v1101 = vsel %vm1037, %v1005, %v1069
        %v1102 = vsel %vm1038, %v1006, %v1070
        %v1103 = vsel %vm1039, %v1007, %v1071
        %v1104 = vsel %vm1040, %v1008, %v1072
        %v1105 = vsel %vm1041, %v1009, %v1073
        %v1106 = vsel %vm1042, %v1010, %v1074
        %v1107 = vsel %vm1043, %v1011, %v1075
        %v1108 = vsel %vm1044, %v1012, %v1076
        %v1109 = vsel %vm1045, %v1013, %v1077
        %v1110 = vsel %vm1046, %v1014, %v1078
        %v1111 = vsel %vm1047, %v1015, %v1079
        %v1112 = vsel %vm1048, %v1016, %v1080
        %v1113 = vsel %vm1049, %v1017, %v1081
        %v1114 = vsel %vm1050, %v1018, %v1082
        %v1115 = vsel %vm1051, %v1019, %v1083
        %v1116 = vsel %vm1052, %v1020, %v1084
        %v1117 = vsel %vm1053, %v1021, %v1085
        %v1118 = vsel %vm1054, %v1022, %v1086
        %v1119 = vsel %vm1055, %v1023, %v1087
        %v1120 = vsel %vm1056, %v1024, %v1088
        %v1121 = vsel %vm1057, %v1025, %v1089
        %v1122 = vsel %vm1058, %v1026, %v1090
        %v1123 = vsel %vm1059, %v1027, %v1091
        %v1124 = vsel %vm1060, %v1028, %v1092
        %v1125 = vsel %vm1061, %v1029, %v1093
        %v1126 = vsel %vm1062, %v1030, %v1094
        %v1127 = vsel %vm1063, %v1031, %v1095
        %v1128 = vsel %vm1064, %v1032, %v1096
        %v1129 = vsel %vm1065, %v1033, %v1097
        %v1130 = vsel %vm1066, %v1034, %v1098
        %v1131 = vpack.c.bf16 %v1100, %v1099
        %v1132 = vpack.c.bf16 %v1102, %v1101
        %v1133 = vpack.c.bf16 %v1104, %v1103
        %v1134 = vpack.c.bf16 %v1106, %v1105
        %v1135 = vpack.c.bf16 %v1108, %v1107
        %v1136 = vpack.c.bf16 %v1110, %v1109
        %v1137 = vpack.c.bf16 %v1112, %v1111
        %v1138 = vpack.c.bf16 %v1114, %v1113
        %v1139 = vpack.c.bf16 %v1116, %v1115
        %v1140 = vpack.c.bf16 %v1118, %v1117
        %v1141 = vpack.c.bf16 %v1120, %v1119
        %v1142 = vpack.c.bf16 %v1122, %v1121
        %v1143 = vpack.c.bf16 %v1124, %v1123
        %v1144 = vpack.c.bf16 %v1126, %v1125
        %v1145 = vpack.c.bf16 %v1128, %v1127
        %v1146 = vpack.c.bf16 %v1130, %v1129
        %v1163 = vunpack.c.l.b16 %v1131
        %v1164 = vunpack.c.h.b16 %v1131
        %v1165 = vunpack.c.l.b16 %v1132
        %v1166 = vunpack.c.h.b16 %v1132
        %v1167 = vunpack.c.l.b16 %v1133
        %v1168 = vunpack.c.h.b16 %v1133
        %v1169 = vunpack.c.l.b16 %v1134
        %v1170 = vunpack.c.h.b16 %v1134
        %v1171 = vunpack.c.l.b16 %v1135
        %v1172 = vunpack.c.h.b16 %v1135
        %v1173 = vunpack.c.l.b16 %v1136
        %v1174 = vunpack.c.h.b16 %v1136
        %v1175 = vunpack.c.l.b16 %v1137
        %v1176 = vunpack.c.h.b16 %v1137
        %v1177 = vunpack.c.l.b16 %v1138
        %v1178 = vunpack.c.h.b16 %v1138
        %v1179 = vunpack.c.l.b16 %v1139
        %v1180 = vunpack.c.h.b16 %v1139
        %v1181 = vunpack.c.l.b16 %v1140
        %v1182 = vunpack.c.h.b16 %v1140
        %v1183 = vunpack.c.l.b16 %v1141
        %v1184 = vunpack.c.h.b16 %v1141
        %v1185 = vunpack.c.l.b16 %v1142
        %v1186 = vunpack.c.h.b16 %v1142
        %v1187 = vunpack.c.l.b16 %v1143
        %v1188 = vunpack.c.h.b16 %v1143
        %v1189 = vunpack.c.l.b16 %v1144
        %v1190 = vunpack.c.h.b16 %v1144
        %v1191 = vunpack.c.l.b16 %v1145
        %v1192 = vunpack.c.h.b16 %v1145
        %v1193 = vunpack.c.l.b16 %v1146
        %v1194 = vunpack.c.h.b16 %v1146
        %v1195 = vpack.c.b16 %v1163, %v1163
        %v1196 = vpack.c.b16 %v1164, %v1164
        %v1197 = vpack.c.b16 %v1165, %v1165
        %v1198 = vpack.c.b16 %v1166, %v1166
        %v1199 = vpack.c.b16 %v1167, %v1167
        %v1200 = vpack.c.b16 %v1168, %v1168
        %v1201 = vpack.c.b16 %v1169, %v1169
        %v1202 = vpack.c.b16 %v1170, %v1170
        %v1203 = vpack.c.b16 %v1171, %v1171
        %v1204 = vpack.c.b16 %v1172, %v1172
        %v1205 = vpack.c.b16 %v1173, %v1173
        %v1206 = vpack.c.b16 %v1174, %v1174
        %v1207 = vpack.c.b16 %v1175, %v1175
        %v1208 = vpack.c.b16 %v1176, %v1176
        %v1209 = vpack.c.b16 %v1177, %v1177
        %v1210 = vpack.c.b16 %v1178, %v1178
        %v1211 = vpack.c.b16 %v1179, %v1179
        %v1212 = vpack.c.b16 %v1180, %v1180
        %v1213 = vpack.c.b16 %v1181, %v1181
        %v1214 = vpack.c.b16 %v1182, %v1182
        %v1215 = vpack.c.b16 %v1183, %v1183
        %v1216 = vpack.c.b16 %v1184, %v1184
        %v1217 = vpack.c.b16 %v1185, %v1185
        %v1218 = vpack.c.b16 %v1186, %v1186
        %v1219 = vpack.c.b16 %v1187, %v1187
        %v1220 = vpack.c.b16 %v1188, %v1188
        %v1221 = vpack.c.b16 %v1189, %v1189
        %v1222 = vpack.c.b16 %v1190, %v1190
        %v1223 = vpack.c.b16 %v1191, %v1191
        %v1224 = vpack.c.b16 %v1192, %v1192
        %v1225 = vpack.c.b16 %v1193, %v1193
        %v1226 = vpack.c.b16 %v1194, %v1194
        %1259 = vst [vmem:[%s306] sm:$0xf] %v1195
        %1260 = vst [vmem:[%s306 + $0x4] sm:$0xf] %v1196
        %1261 = vst [vmem:[%s306 + $0x8] sm:$0xf] %v1197
        %1262 = vst [vmem:[%s306 + $0xc] sm:$0xf] %v1198
        %1263 = vst [vmem:[%s306 + $0x10] sm:$0xf] %v1199
        %1264 = vst [vmem:[%s306 + $0x14] sm:$0xf] %v1200
        %1265 = vst [vmem:[%s306 + $0x18] sm:$0xf] %v1201
        %1266 = vst [vmem:[%s306 + $0x1c] sm:$0xf] %v1202
        %1267 = vst [vmem:[%s306 + $0x20] sm:$0xf] %v1203
        %1268 = vst [vmem:[%s306 + $0x24] sm:$0xf] %v1204
        %1269 = vst [vmem:[%s306 + $0x28] sm:$0xf] %v1205
        %1270 = vst [vmem:[%s306 + $0x2c] sm:$0xf] %v1206
        %1271 = vst [vmem:[%s306 + $0x30] sm:$0xf] %v1207
        %1272 = vst [vmem:[%s306 + $0x34] sm:$0xf] %v1208
        %1273 = vst [vmem:[%s306 + $0x38] sm:$0xf] %v1209
        %1274 = vst [vmem:[%s306 + $0x3c] sm:$0xf] %v1210
        %1275 = vst [vmem:[%s306 + $0x40] sm:$0xf] %v1211
        %1276 = vst [vmem:[%s306 + $0x44] sm:$0xf] %v1212
        %1277 = vst [vmem:[%s306 + $0x48] sm:$0xf] %v1213
        %1278 = vst [vmem:[%s306 + $0x4c] sm:$0xf] %v1214
        %1279 = vst [vmem:[%s306 + $0x50] sm:$0xf] %v1215
        %1280 = vst [vmem:[%s306 + $0x54] sm:$0xf] %v1216
        %1281 = vst [vmem:[%s306 + $0x58] sm:$0xf] %v1217
        %1282 = vst [vmem:[%s306 + $0x5c] sm:$0xf] %v1218
        %1283 = vst [vmem:[%s306 + $0x60] sm:$0xf] %v1219
        %1284 = vst [vmem:[%s306 + $0x64] sm:$0xf] %v1220
        %1285 = vst [vmem:[%s306 + $0x68] sm:$0xf] %v1221
        %1286 = vst [vmem:[%s306 + $0x6c] sm:$0xf] %v1222
        %1287 = vst [vmem:[%s306 + $0x70] sm:$0xf] %v1223
        %1288 = vst [vmem:[%s306 + $0x74] sm:$0xf] %v1224
        %1289 = vst [vmem:[%s306 + $0x78] sm:$0xf] %v1225
        %1290 = vst [vmem:[%s306 + $0x7c] sm:$0xf] %v1226
      $region44: #{_lambda_.6} parent=35 // pred_fallthru
        _
      %s1291 = smul.u32 32, %s20
      %p1292 = scmp.lt.s32.totalorder %s1291, 63
      %s1293 = scalar_select %p1292, %s1291, 63
      %p1294 = scmp.lt.s32.totalorder %s21, 0
      %s1295 = scalar_select %p1294, %s21, 0
      %s1296 = sadd.s32 %s1295, %s1293
      %s1297 = smul.addr %s1296, 4
      %s1298 = scalar_lea.vmem %s4, %s1297
      // Predicated region
      $region45: #{_lambda_.6} parent=35 // pred_check
        %p1299 = pneg %p162
      $region46: #{_lambda_.6} parent=35 // pred_check_branch
        %1301 = sbr.rel (%p1299) target = $region48
      $region47: #{_lambda_.6} parent=35 // pred_region
        %s1302 = smul.u32 32, %s20
      $region48: #{_lambda_.6} parent=35 // pred_fallthru
        _
    $region36: #{_lambda_.6} parent=5 // pred_fallthru
      _
    %p1303 = scmp.le.s32.totalorder 2, %s10
    // Predicated region
    $region49: #{_lambda_.6} parent=5 // pred_check
      %p1304 = pneg %p1303
    $region50: #{_lambda_.6} parent=5 // pred_check_branch
      %1306 = sbr.rel (%p1304) target = $region52
    $region51: #{_lambda_.6} parent=5 // pred_region
      %s1307 = ssub.s32 %s10, 2
      // Predicated region
      $region53: #{_lambda_.6} parent=51 // pred_check
        %p1308 = pneg %p168
      $region54: #{_lambda_.6} parent=51 // pred_check_branch
        %1310 = sbr.rel (%p1308) target = $region56
      $region55: #{_lambda_.6} parent=51 // pred_region
        %s1311 = smul.u32 32, %s23
        %p1312 = scmp.lt.s32.totalorder %s1311, 63
        %s1313 = scalar_select %p1312, %s1311, 63
        %p1314 = scmp.lt.s32.totalorder %s24, 0
        %s1315 = scalar_select %p1314, %s24, 0
        %s1316 = sadd.s32 %s1315, %s1313
        %s1317 = smul.addr %s1316, 4
        %s1318 = scalar_lea.vmem %s4, %s1317
      $region56: #{_lambda_.6} parent=51 // pred_fallthru
        _
    $region52: #{_lambda_.6} parent=5 // pred_fallthru
      _
  $region6: #{_lambda_.6} parent=0 // loop_footer
    %s14 = sadd.s32 1, %s10
  $region7: #{_lambda_.6} parent=0 // loop_footer_branch
    %9 = sbr.rel target = $region3
  $region8: #{_lambda_.6} parent=0 // loop_exit
    _

// kernel: _lambda_.7
$region0: #{_lambda_.7}
  #allocation0 [shape = 'u32[]', space=smem, size = 0x4, offset = 0x4, fixed_abs, tag = 'smem constant byte address 0x4 - core index']
  #allocation1 [shape = 'u32[144,128]{1,0:T(1,128)}', space=vmem, size = 0x12000, scoped, tag = 'internal scratch']
  #allocation2 [shape = 'f32[256,256]{1,0:T(8,128)}', space=vmem, size = 0x40000, scoped, tag = 'scratch operand']
  %s0 = inlined_call_operand.vmem [shape: bf16[512,1152], index: 0, kind: input, shape index: {}]
  %s1 = inlined_call_operand.vmem [shape: bf16[1152,256], index: 1, kind: input, shape index: {}]
  %s2 = inlined_call_operand.vmem [shape: f32[1,256], index: 2, kind: input, shape index: {}]
  %s3 = inlined_call_operand.vmem [shape: f32[1,256], index: 3, kind: input, shape index: {}]
  %s4 = inlined_call_operand.vmem [shape: f32[512,256], index: 4, kind: input, shape index: {}]
  %s5 = inlined_call_operand.hbm [shape: f32[512,256], index: 5, kind: output, shape index: {}]
  %s6 = sld [smem:[#allocation0]]
  $region87: #{_lambda_.7} parent=0
    _
  %s8 = ssub.s32 1, %s6
  %s9 = scalar_select 0, %s8, %s6
  $region1: #{_lambda_.7} parent=0
    #allocation3 [shape = 'u8[393216]{0}', space=vmem, size = 0x60000, scoped, tag = 'input window, operand 0']
    #allocation4 [shape = 'u8[524288]{0}', space=vmem, size = 0x80000, scoped, tag = 'output window, operand 0']
    #allocation5 [shape = 's32[2]{0}', space=sflag, size = 0x8, scoped, tag = 'scoped memory for _lambda_.7']
    %10 = vsyncpa [#allocation5], 0
    %s11 = scalar_lea.sflag [#allocation5], 1
    %12 = vsyncpa %s11, 0
    loop: start=0, step=1, limit=8
    $region2: #{_lambda_.7} parent=1 // loop_pre_header
      _
    $region3: #{_lambda_.7} parent=1 // loop_header
      %s14 = sphi 0, %s18
      %p15 = scmp.ge.s32.totalorder %s14, 8
      %s21 = sphi 0, %s40
      %s22 = sphi 0, %s36
      %s23 = sphi 0, %s32
      %s24 = sphi 0, %s21
      %s25 = sphi 0, %s22
      %s26 = sphi 0, %s23
      %s27 = sphi 0, %s24
      %s28 = sphi 0, %s25
      %s29 = sphi 0, %s26
      %s45 = sphi 0, %s47
      %s48 = sphi 0, %s45
      %s49 = sphi 0, %s48
      %s65 = sphi 0, %s49
      %s73 = sphi 0, %s75
      %s76 = sphi 0, %s73
      %s77 = sphi 0, %s76
      %s93 = sphi 0, %s77
      %s99 = sphi 0, %s101
      %s102 = sphi 0, %s99
      %s103 = sphi 0, %s102
      %s119 = sphi 0, %s103
      %s125 = sphi 0, %s127
      %s128 = sphi 0, %s125
      %s129 = sphi 0, %s128
      %s145 = sphi 0, %s129
      %s153 = sphi 0, %s155
      %s156 = sphi 0, %s153
      %s157 = sphi 0, %s156
      %s173 = sphi 0, %s157
      %s181 = sphi 0, %s183
      %s184 = sphi 0, %s181
      %s185 = sphi 0, %s184
      %s201 = sphi 0, %s185
    $region4: #{_lambda_.7} parent=1 // loop_header_branch
      %17 = sbr.rel (%p15) target = $region8
    $region5: #{_lambda_.7} parent=1 // loop_body
      %s19 = ssub.s32 %s14, 1
      %s20 = ssub.s32 %s14, 2
      %s30 = sadd.s32 1, %s23
      %p31 = scmp.ge.s32.totalorder %s30, 3
      %s32 = scalar_select %p31, 0, %s30
      %s33 = sadd.s32 1, %s22
      %s34 = scalar_select %p31, %s33, %s22
      %p35 = scmp.ge.s32.totalorder %s34, 1
      %s36 = scalar_select %p35, 0, %s34
      %s37 = sadd.s32 1, %s21
      %s38 = scalar_select %p35, %s37, %s21
      %p39 = scmp.ge.s32.totalorder %s38, 2
      %s40 = scalar_select %p39, 0, %s38
      %s41 = ssub.s32 %s21, %s40
      %s42 = ssub.s32 %s23, %s32
      %s43 = sor.u32 %s41, %s42
      %p44 = scmp.eq.s32.totalorder %s43, 0
      %s46 = sadd.s32 %s45, 1
      %s47 = scalar_select %p44, %s45, %s46
      %p50 = pneg %p44
      %p51 = scmp.eq.s32.totalorder %s14, 5
      %p52 = por %p50, %p51
      %p53 = scmp.ne.s32.totalorder %s45, %s48
      %p54 = scmp.eq.s32.totalorder %s14, 0
      %p55 = por %p53, %p54
      %p56 = scmp.ne.s32.totalorder %s45, %s48
      %p57 = scmp.eq.s32.totalorder %s19, 5
      %p58 = por %p56, %p57
      %p59 = scmp.ne.s32.totalorder %s48, %s49
      %p60 = scmp.eq.s32.totalorder %s19, 0
      %p61 = por %p59, %p60
      %p62 = scmp.ne.s32.totalorder %s48, %s49
      %p63 = scmp.eq.s32.totalorder %s20, 5
      %p64 = por %p62, %p63
      %p66 = scmp.ne.s32.totalorder %s49, %s65
      %p67 = scmp.eq.s32.totalorder %s20, 0
      %p68 = por %p66, %p67
      %s69 = ssub.s32 %s23, %s32
      %s70 = ssub.s32 %s22, %s36
      %s71 = sor.u32 %s69, %s70
      %p72 = scmp.eq.s32.totalorder %s71, 0
      %s74 = sadd.s32 %s73, 1
      %s75 = scalar_select %p72, %s73, %s74
      %p78 = pneg %p72
      %p79 = scmp.eq.s32.totalorder %s14, 5
      %p80 = por %p78, %p79
      %p81 = scmp.ne.s32.totalorder %s73, %s76
      %p82 = scmp.eq.s32.totalorder %s14, 0
      %p83 = por %p81, %p82
      %p84 = scmp.ne.s32.totalorder %s73, %s76
      %p85 = scmp.eq.s32.totalorder %s19, 5
      %p86 = por %p84, %p85
      %p87 = scmp.ne.s32.totalorder %s76, %s77
      %p88 = scmp.eq.s32.totalorder %s19, 0
      %p89 = por %p87, %p88
      %p90 = scmp.ne.s32.totalorder %s76, %s77
      %p91 = scmp.eq.s32.totalorder %s20, 5
      %p92 = por %p90, %p91
      %p94 = scmp.ne.s32.totalorder %s77, %s93
      %p95 = scmp.eq.s32.totalorder %s20, 0
      %p96 = por %p94, %p95
      %s97 = ssub.s32 %s22, %s36
      %p98 = scmp.eq.s32.totalorder %s97, 0
      %s100 = sadd.s32 %s99, 1
      %s101 = scalar_select %p98, %s99, %s100
      %p104 = pneg %p98
      %p105 = scmp.eq.s32.totalorder %s14, 5
      %p106 = por %p104, %p105
      %p107 = scmp.ne.s32.totalorder %s99, %s102
      %p108 = scmp.eq.s32.totalorder %s14, 0
      %p109 = por %p107, %p108
      %p110 = scmp.ne.s32.totalorder %s99, %s102
      %p111 = scmp.eq.s32.totalorder %s19, 5
      %p112 = por %p110, %p111
      %p113 = scmp.ne.s32.totalorder %s102, %s103
      %p114 = scmp.eq.s32.totalorder %s19, 0
      %p115 = por %p113, %p114
      %p116 = scmp.ne.s32.totalorder %s102, %s103
      %p117 = scmp.eq.s32.totalorder %s20, 5
      %p118 = por %p116, %p117
      %p120 = scmp.ne.s32.totalorder %s103, %s119
      %p121 = scmp.eq.s32.totalorder %s20, 0
      %p122 = por %p120, %p121
      %s123 = ssub.s32 %s22, %s36
      %p124 = scmp.eq.s32.totalorder %s123, 0
      %s126 = sadd.s32 %s125, 1
      %s127 = scalar_select %p124, %s125, %s126
      %p130 = pneg %p124
      %p131 = scmp.eq.s32.totalorder %s14, 5
      %p132 = por %p130, %p131
      %p133 = scmp.ne.s32.totalorder %s125, %s128
      %p134 = scmp.eq.s32.totalorder %s14, 0
      %p135 = por %p133, %p134
      %p136 = scmp.ne.s32.totalorder %s125, %s128
      %p137 = scmp.eq.s32.totalorder %s19, 5
      %p138 = por %p136, %p137
      %p139 = scmp.ne.s32.totalorder %s128, %s129
      %p140 = scmp.eq.s32.totalorder %s19, 0
      %p141 = por %p139, %p140
      %p142 = scmp.ne.s32.totalorder %s128, %s129
      %p143 = scmp.eq.s32.totalorder %s20, 5
      %p144 = por %p142, %p143
      %p146 = scmp.ne.s32.totalorder %s129, %s145
      %p147 = scmp.eq.s32.totalorder %s20, 0
      %p148 = por %p146, %p147
      %s149 = ssub.s32 %s21, %s40
      %s150 = ssub.s32 %s22, %s36
      %s151 = sor.u32 %s149, %s150
      %p152 = scmp.eq.s32.totalorder %s151, 0
      %s154 = sadd.s32 %s153, 1
      %s155 = scalar_select %p152, %s153, %s154
      %p158 = pneg %p152
      %p159 = scmp.eq.s32.totalorder %s14, 5
      %p160 = por %p158, %p159
      %p161 = scmp.ne.s32.totalorder %s153, %s156
      %p162 = scmp.eq.s32.totalorder %s14, 0
      %p163 = por %p161, %p162
      %p164 = scmp.ne.s32.totalorder %s153, %s156
      %p165 = scmp.eq.s32.totalorder %s19, 5
      %p166 = por %p164, %p165
      %p167 = scmp.ne.s32.totalorder %s156, %s157
      %p168 = scmp.eq.s32.totalorder %s19, 0
      %p169 = por %p167, %p168
      %p170 = scmp.ne.s32.totalorder %s156, %s157
      %p171 = scmp.eq.s32.totalorder %s20, 5
      %p172 = por %p170, %p171
      %p174 = scmp.ne.s32.totalorder %s157, %s173
      %p175 = scmp.eq.s32.totalorder %s20, 0
      %p176 = por %p174, %p175
      %s177 = ssub.s32 %s21, %s40
      %s178 = ssub.s32 %s22, %s36
      %s179 = sor.u32 %s177, %s178
      %p180 = scmp.eq.s32.totalorder %s179, 0
      %s182 = sadd.s32 %s181, 1
      %s183 = scalar_select %p180, %s181, %s182
      %p186 = pneg %p180
      %p187 = scmp.eq.s32.totalorder %s14, 5
      %p188 = por %p186, %p187
      %p189 = scmp.ne.s32.totalorder %s181, %s184
      %p190 = scmp.eq.s32.totalorder %s14, 0
      %p191 = por %p189, %p190
      %p192 = scmp.ne.s32.totalorder %s181, %s184
      %p193 = scmp.eq.s32.totalorder %s19, 5
      %p194 = por %p192, %p193
      %p195 = scmp.ne.s32.totalorder %s184, %s185
      %p196 = scmp.eq.s32.totalorder %s19, 0
      %p197 = por %p195, %p196
      %p198 = scmp.ne.s32.totalorder %s184, %s185
      %p199 = scmp.eq.s32.totalorder %s20, 5
      %p200 = por %p198, %p199
      %p202 = scmp.ne.s32.totalorder %s185, %s201
      %p203 = scmp.eq.s32.totalorder %s20, 0
      %p204 = por %p202, %p203
      %p205 = scmp.le.s32.totalorder 1, %s14
      %p206 = scmp.lt.s32.totalorder %s14, 7
      %p207 = pnand %p205, %p206
      %p208 = pneg %p207
      // Predicated region
      $region9: #{_lambda_.7} parent=5 // pred_check
        _
      $region10: #{_lambda_.7} parent=5 // pred_check_branch
        %210 = sbr.rel (%p207) target = $region12
      $region11: #{_lambda_.7} parent=5 // pred_region
        %s211 = ssub.s32 %s14, 1
        // Predicated region
        $region13: #{_lambda_.7} parent=11 // pred_check
          %p212 = pneg %p115
        $region14: #{_lambda_.7} parent=11 // pred_check_branch
          %214 = sbr.rel (%p212) target = $region16
        $region15: #{_lambda_.7} parent=11 // pred_region
          %s215 = smul.u32 2, %s25
          %p216 = scmp.lt.s32.totalorder %s215, 1
          %s217 = scalar_select %p216, %s215, 1
          %s218 = scalar_lea.vmem %s2, %s217
          %s219 = smul.u32 2, %s25
        $region16: #{_lambda_.7} parent=11 // pred_fallthru
          _
        // Predicated region
        $region17: #{_lambda_.7} parent=11 // pred_check
          %p220 = pneg %p141
        $region18: #{_lambda_.7} parent=11 // pred_check_branch
          %222 = sbr.rel (%p220) target = $region20
        $region19: #{_lambda_.7} parent=11 // pred_region
          %s223 = smul.u32 2, %s25
          %p224 = scmp.lt.s32.totalorder %s223, 1
          %s225 = scalar_select %p224, %s223, 1
          %s226 = scalar_lea.vmem %s3, %s225
          %s227 = smul.u32 2, %s25
        $region20: #{_lambda_.7} parent=11 // pred_fallthru
          _
      $region12: #{_lambda_.7} parent=5 // pred_fallthru
        _
      %p228 = scmp.lt.s32.totalorder %s14, 6
      // Predicated region
      $region21: #{_lambda_.7} parent=5 // pred_check
        %p229 = pneg %p228
      $region22: #{_lambda_.7} parent=5 // pred_check_branch
        %231 = sbr.rel (%p229) target = $region24
      $region23: #{_lambda_.7} parent=5 // pred_region
        // Predicated region
        $region25: #{_lambda_.7} parent=23 // pred_check
          %p232 = pneg %p55
        $region26: #{_lambda_.7} parent=23 // pred_check_branch
          %234 = sbr.rel (%p232) target = $region28
        $region27: #{_lambda_.7} parent=23 // pred_region
          %s235 = sand.u32 %s45, 1
          %s236 = sand.u32 %s45, 1
          %s237 = smul.addr %s236, 384
          %s238 = scalar_lea.vmem [#allocation3], %s237
          %s239 = smul.u32 32, %s21
          %s240 = smul.u32 3, %s23
          %s241 = smul.addr %s239, 9
          %s242 = sadd.s32 %s240, %s241
          %s243 = smul.addr %s242, 4
          %s244 = scalar_lea.vmem %s0, %s243
          // Predicated region
          $region29: #{_lambda_.7} parent=27 // pred_check
            _
          $region30: #{_lambda_.7} parent=27 // pred_check_branch
            %246 = sbr.rel (0) target = $region32
          $region31: #{_lambda_.7} parent=27 // pred_region
            // Predicated region
            $region33: #{_lambda_.7} parent=31 // pred_check
              _
            $region34: #{_lambda_.7} parent=31 // pred_check_branch
              %248 = sbr.rel (0) target = $region36
            $region35: #{_lambda_.7} parent=31 // pred_region
              %s249 = scalar_lea.vmem %s244, 8
              %s250 = scalar_lea.vmem %s238, 8 [#allocation3]
              loop: start=0, step=1, limit=1
              $region37: #{_lambda_.7} parent=35 // loop_pre_header
                _
              $region38: #{_lambda_.7} parent=35 // loop_header
                %s252 = sphi 0, %s256
                %p253 = scmp.ge.s32.totalorder %s252, 1
                %s257 = sphi %s244, %s244
                %s258 = sphi %s238, %s238
              $region39: #{_lambda_.7} parent=35 // loop_header_branch
                %255 = sbr.rel (%p253) target = $region43
              $region40: #{_lambda_.7} parent=35 // loop_body
                %v259 = vld [vmem:[%s257] sm:$0xff]
                %260 = vst [vmem:[%s258] sm:$0xff] %v259
                %v261 = vld [vmem:[%s257 + $0x24] sm:$0xff]
                %262 = vst [vmem:[%s258 + $0xc] sm:$0xff] %v261
                %v263 = vld [vmem:[%s257 + $0x48] sm:$0xff]
                %264 = vst [vmem:[%s258 + $0x18] sm:$0xff] %v263
                %v265 = vld [vmem:[%s257 + $0x6c] sm:$0xff]
                %266 = vst [vmem:[%s258 + $0x24] sm:$0xff] %v265
                %v267 = vld [vmem:[%s257 + $0x90] sm:$0xff]
                %268 = vst [vmem:[%s258 + $0x30] sm:$0xff] %v267
                %v269 = vld [vmem:[%s257 + $0xb4] sm:$0xff]
                %270 = vst [vmem:[%s258 + $0x3c] sm:$0xff] %v269
                %v271 = vld [vmem:[%s257 + $0xd8] sm:$0xff]
                %272 = vst [vmem:[%s258 + $0x48] sm:$0xff] %v271
                %v273 = vld [vmem:[%s257 + $0xfc] sm:$0xff]
                %274 = vst [vmem:[%s258 + $0x54] sm:$0xff] %v273
                %v275 = vld [vmem:[%s257 + $0x120] sm:$0xff]
                %276 = vst [vmem:[%s258 + $0x60] sm:$0xff] %v275
                %v277 = vld [vmem:[%s257 + $0x144] sm:$0xff]
                %278 = vst [vmem:[%s258 + $0x6c] sm:$0xff] %v277
                %v279 = vld [vmem:[%s257 + $0x168] sm:$0xff]
                %280 = vst [vmem:[%s258 + $0x78] sm:$0xff] %v279
                %v281 = vld [vmem:[%s257 + $0x18c] sm:$0xff]
                %282 = vst [vmem:[%s258 + $0x84] sm:$0xff] %v281
                %v283 = vld [vmem:[%s257 + $0x1b0] sm:$0xff]
                %284 = vst [vmem:[%s258 + $0x90] sm:$0xff] %v283
                %v285 = vld [vmem:[%s257 + $0x1d4] sm:$0xff]
                %286 = vst [vmem:[%s258 + $0x9c] sm:$0xff] %v285
                %v287 = vld [vmem:[%s257 + $0x1f8] sm:$0xff]
                %288 = vst [vmem:[%s258 + $0xa8] sm:$0xff] %v287
                %v289 = vld [vmem:[%s257 + $0x21c] sm:$0xff]
                %290 = vst [vmem:[%s258 + $0xb4] sm:$0xff] %v289
                %v291 = vld [vmem:[%s257 + $0x240] sm:$0xff]
                %292 = vst [vmem:[%s258 + $0xc0] sm:$0xff] %v291
                %v293 = vld [vmem:[%s257 + $0x264] sm:$0xff]
                %294 = vst [vmem:[%s258 + $0xcc] sm:$0xff] %v293
                %v295 = vld [vmem:[%s257 + $0x288] sm:$0xff]
                %296 = vst [vmem:[%s258 + $0xd8] sm:$0xff] %v295
                %v297 = vld [vmem:[%s257 + $0x2ac] sm:$0xff]
                %298 = vst [vmem:[%s258 + $0xe4] sm:$0xff] %v297
                %v299 = vld [vmem:[%s257 + $0x2d0] sm:$0xff]
                %300 = vst [vmem:[%s258 + $0xf0] sm:$0xff] %v299
                %v301 = vld [vmem:[%s257 + $0x2f4] sm:$0xff]
                %302 = vst [vmem:[%s258 + $0xfc] sm:$0xff] %v301
                %v303 = vld [vmem:[%s257 + $0x318] sm:$0xff]
                %304 = vst [vmem:[%s258 + $0x108] sm:$0xff] %v303
                %v305 = vld [vmem:[%s257 + $0x33c] sm:$0xff]
                %306 = vst [vmem:[%s258 + $0x114] sm:$0xff] %v305
                %v307 = vld [vmem:[%s257 + $0x360] sm:$0xff]
                %308 = vst [vmem:[%s258 + $0x120] sm:$0xff] %v307
                %v309 = vld [vmem:[%s257 + $0x384] sm:$0xff]
                %310 = vst [vmem:[%s258 + $0x12c] sm:$0xff] %v309
                %v311 = vld [vmem:[%s257 + $0x3a8] sm:$0xff]
                %312 = vst [vmem:[%s258 + $0x138] sm:$0xff] %v311
                %v313 = vld [vmem:[%s257 + $0x3cc] sm:$0xff]
                %314 = vst [vmem:[%s258 + $0x144] sm:$0xff] %v313
                %v315 = vld [vmem:[%s257 + $0x3f0] sm:$0xff]
                %316 = vst [vmem:[%s258 + $0x150] sm:$0xff] %v315
                %v317 = vld [vmem:[%s257 + $0x414] sm:$0xff]
                %318 = vst [vmem:[%s258 + $0x15c] sm:$0xff] %v317
                %v319 = vld [vmem:[%s257 + $0x438] sm:$0xff]
                %320 = vst [vmem:[%s258 + $0x168] sm:$0xff] %v319
                %v321 = vld [vmem:[%s257 + $0x45c] sm:$0xff]
                %322 = vst [vmem:[%s258 + $0x174] sm:$0xff] %v321
              $region41: #{_lambda_.7} parent=35 // loop_footer
                %s256 = sadd.s32 1, %s252
              $region42: #{_lambda_.7} parent=35 // loop_footer_branch
                %251 = sbr.rel target = $region38
              $region43: #{_lambda_.7} parent=35 // loop_exit
                _
              %s324 = ssub.s32 16, 1
              loop: start=0, step=1, limit=1
              $region44: #{_lambda_.7} parent=35 // loop_pre_header
                _
              $region45: #{_lambda_.7} parent=35 // loop_header
                %s326 = sphi 0, %s330
                %p327 = scmp.ge.s32.totalorder %s326, 1
                %s331 = sphi %s249, %s249
                %s332 = sphi %s250, %s250
              $region46: #{_lambda_.7} parent=35 // loop_header_branch
                %329 = sbr.rel (%p327) target = $region50
              $region47: #{_lambda_.7} parent=35 // loop_body
                %v333 = vld [vmem:[%s331] sm:%s324]
                %334 = vst [vmem:[%s332] sm:%s324] %v333
                %v335 = vld [vmem:[%s331 + $0x24] sm:%s324]
                %336 = vst [vmem:[%s332 + $0xc] sm:%s324] %v335
                %v337 = vld [vmem:[%s331 + $0x48] sm:%s324]
                %338 = vst [vmem:[%s332 + $0x18] sm:%s324] %v337
                %v339 = vld [vmem:[%s331 + $0x6c] sm:%s324]
                %340 = vst [vmem:[%s332 + $0x24] sm:%s324] %v339
                %v341 = vld [vmem:[%s331 + $0x90] sm:%s324]
                %342 = vst [vmem:[%s332 + $0x30] sm:%s324] %v341
                %v343 = vld [vmem:[%s331 + $0xb4] sm:%s324]
                %344 = vst [vmem:[%s332 + $0x3c] sm:%s324] %v343
                %v345 = vld [vmem:[%s331 + $0xd8] sm:%s324]
                %346 = vst [vmem:[%s332 + $0x48] sm:%s324] %v345
                %v347 = vld [vmem:[%s331 + $0xfc] sm:%s324]
                %348 = vst [vmem:[%s332 + $0x54] sm:%s324] %v347
                %v349 = vld [vmem:[%s331 + $0x120] sm:%s324]
                %350 = vst [vmem:[%s332 + $0x60] sm:%s324] %v349
                %v351 = vld [vmem:[%s331 + $0x144] sm:%s324]
                %352 = vst [vmem:[%s332 + $0x6c] sm:%s324] %v351
                %v353 = vld [vmem:[%s331 + $0x168] sm:%s324]
                %354 = vst [vmem:[%s332 + $0x78] sm:%s324] %v353
                %v355 = vld [vmem:[%s331 + $0x18c] sm:%s324]
                %356 = vst [vmem:[%s332 + $0x84] sm:%s324] %v355
                %v357 = vld [vmem:[%s331 + $0x1b0] sm:%s324]
                %358 = vst [vmem:[%s332 + $0x90] sm:%s324] %v357
                %v359 = vld [vmem:[%s331 + $0x1d4] sm:%s324]
                %360 = vst [vmem:[%s332 + $0x9c] sm:%s324] %v359
                %v361 = vld [vmem:[%s331 + $0x1f8] sm:%s324]
                %362 = vst [vmem:[%s332 + $0xa8] sm:%s324] %v361
                %v363 = vld [vmem:[%s331 + $0x21c] sm:%s324]
                %364 = vst [vmem:[%s332 + $0xb4] sm:%s324] %v363
                %v365 = vld [vmem:[%s331 + $0x240] sm:%s324]
                %366 = vst [vmem:[%s332 + $0xc0] sm:%s324] %v365
                %v367 = vld [vmem:[%s331 + $0x264] sm:%s324]
                %368 = vst [vmem:[%s332 + $0xcc] sm:%s324] %v367
                %v369 = vld [vmem:[%s331 + $0x288] sm:%s324]
                %370 = vst [vmem:[%s332 + $0xd8] sm:%s324] %v369
                %v371 = vld [vmem:[%s331 + $0x2ac] sm:%s324]
                %372 = vst [vmem:[%s332 + $0xe4] sm:%s324] %v371
                %v373 = vld [vmem:[%s331 + $0x2d0] sm:%s324]
                %374 = vst [vmem:[%s332 + $0xf0] sm:%s324] %v373
                %v375 = vld [vmem:[%s331 + $0x2f4] sm:%s324]
                %376 = vst [vmem:[%s332 + $0xfc] sm:%s324] %v375
                %v377 = vld [vmem:[%s331 + $0x318] sm:%s324]
                %378 = vst [vmem:[%s332 + $0x108] sm:%s324] %v377
                %v379 = vld [vmem:[%s331 + $0x33c] sm:%s324]
                %380 = vst [vmem:[%s332 + $0x114] sm:%s324] %v379
                %v381 = vld [vmem:[%s331 + $0x360] sm:%s324]
                %382 = vst [vmem:[%s332 + $0x120] sm:%s324] %v381
                %v383 = vld [vmem:[%s331 + $0x384] sm:%s324]
                %384 = vst [vmem:[%s332 + $0x12c] sm:%s324] %v383
                %v385 = vld [vmem:[%s331 + $0x3a8] sm:%s324]
                %386 = vst [vmem:[%s332 + $0x138] sm:%s324] %v385
                %v387 = vld [vmem:[%s331 + $0x3cc] sm:%s324]
                %388 = vst [vmem:[%s332 + $0x144] sm:%s324] %v387
                %v389 = vld [vmem:[%s331 + $0x3f0] sm:%s324]
                %390 = vst [vmem:[%s332 + $0x150] sm:%s324] %v389
                %v391 = vld [vmem:[%s331 + $0x414] sm:%s324]
                %392 = vst [vmem:[%s332 + $0x15c] sm:%s324] %v391
                %v393 = vld [vmem:[%s331 + $0x438] sm:%s324]
                %394 = vst [vmem:[%s332 + $0x168] sm:%s324] %v393
                %v395 = vld [vmem:[%s331 + $0x45c] sm:%s324]
                %396 = vst [vmem:[%s332 + $0x174] sm:%s324] %v395
              $region48: #{_lambda_.7} parent=35 // loop_footer
                %s330 = sadd.s32 1, %s326
              $region49: #{_lambda_.7} parent=35 // loop_footer_branch
                %325 = sbr.rel target = $region45
              $region50: #{_lambda_.7} parent=35 // loop_exit
                _
            $region36: #{_lambda_.7} parent=31 // pred_fallthru
              _
          $region32: #{_lambda_.7} parent=27 // pred_fallthru
            _
          %397 = vnop
        $region28: #{_lambda_.7} parent=23 // pred_fallthru
          _
        // Predicated region
        $region51: #{_lambda_.7} parent=23 // pred_check
          %p398 = pneg %p83
        $region52: #{_lambda_.7} parent=23 // pred_check_branch
          %400 = sbr.rel (%p398) target = $region54
        $region53: #{_lambda_.7} parent=23 // pred_region
          %s401 = smul.u32 48, %s23
          %s402 = smul.u32 2, %s22
          %p403 = scmp.lt.s32.totalorder %s401, 143
          %s404 = scalar_select %p403, %s401, 143
          %p405 = scmp.lt.s32.totalorder %s402, 1
          %s406 = scalar_select %p405, %s402, 1
          %s407 = smul.addr %s404, 2
          %s408 = sadd.s32 %s406, %s407
          %s409 = smul.addr %s408, 4
          %s410 = scalar_lea.vmem %s1, %s409
          %s411 = smul.u32 48, %s23
          %s412 = smul.u32 2, %s22
        $region54: #{_lambda_.7} parent=23 // pred_fallthru
          _
        // Predicated region
        $region55: #{_lambda_.7} parent=23 // pred_check
          %p413 = pneg %p163
        $region56: #{_lambda_.7} parent=23 // pred_check_branch
          %415 = sbr.rel (%p413) target = $region58
        $region57: #{_lambda_.7} parent=23 // pred_region
          %s416 = smul.u32 32, %s21
          %s417 = smul.u32 2, %s22
          %p418 = scmp.lt.s32.totalorder %s416, 63
          %s419 = scalar_select %p418, %s416, 63
          %p420 = scmp.lt.s32.totalorder %s417, 1
          %s421 = scalar_select %p420, %s417, 1
          %s422 = smul.addr %s419, 2
          %s423 = sadd.s32 %s421, %s422
          %s424 = smul.addr %s423, 8
          %s425 = scalar_lea.vmem %s4, %s424
          %s426 = smul.u32 32, %s21
          %s427 = smul.u32 2, %s22
        $region58: #{_lambda_.7} parent=23 // pred_fallthru
          _
      $region24: #{_lambda_.7} parent=5 // pred_fallthru
        _
      %p428 = scmp.le.s32.totalorder 1, %s14
      %p429 = scmp.lt.s32.totalorder %s14, 7
      %p430 = pnand %p428, %p429
      %p431 = pneg %p430
      // Predicated region
      $region59: #{_lambda_.7} parent=5 // pred_check
        _
      $region60: #{_lambda_.7} parent=5 // pred_check_branch
        %433 = sbr.rel (%p430) target = $region62
      $region61: #{_lambda_.7} parent=5 // pred_region
        %s434 = ssub.s32 %s14, 1
        %s435 = sand.u32 %s48, 1
        %s436 = sand.u32 %s48, 1
        %s437 = smul.addr %s436, 384
        %s438 = scalar_lea.vmem [#allocation3], %s437
        // Predicated region
        $region63: #{_lambda_.7} parent=61 // pred_check
          %p439 = pneg %p61
        $region64: #{_lambda_.7} parent=61 // pred_check_branch
          %441 = sbr.rel (%p439) target = $region66
        $region65: #{_lambda_.7} parent=61 // pred_region
          _
        $region66: #{_lambda_.7} parent=61 // pred_fallthru
          _
        %s442 = sand.u32 %s48, 1
        %s443 = sand.u32 %s48, 1
        %s444 = smul.addr %s443, 384
        %s445 = scalar_lea.vmem [#allocation3], %s444
        %p446 = pneg %p61
        %p447 = pneg %p58
        %s448 = smul.u32 48, %s26
        %s449 = smul.u32 2, %s25
        %p450 = scmp.lt.s32.totalorder %s448, 143
        %s451 = scalar_select %p450, %s448, 143
        %p452 = scmp.lt.s32.totalorder %s449, 1
        %s453 = scalar_select %p452, %s449, 1
        %s454 = smul.addr %s451, 2
        %s455 = sadd.s32 %s453, %s454
        %s456 = smul.addr %s455, 4
        %s457 = scalar_lea.vmem %s1, %s456
        %p458 = pneg %p89
        %p459 = pneg %p86
        %s460 = smul.u32 2, %s25
        %p461 = scmp.lt.s32.totalorder %s460, 1
        %s462 = scalar_select %p461, %s460, 1
        %s463 = scalar_lea.vmem %s2, %s462
        %p464 = pneg %p115
        %p465 = pneg %p112
        %s466 = smul.u32 2, %s25
        %p467 = scmp.lt.s32.totalorder %s466, 1
        %s468 = scalar_select %p467, %s466, 1
        %s469 = scalar_lea.vmem %s3, %s468
        %p470 = pneg %p141
        %p471 = pneg %p138
        %s472 = smul.u32 32, %s24
        %s473 = smul.u32 2, %s25
        %p474 = scmp.lt.s32.totalorder %s472, 63
        %s475 = scalar_select %p474, %s472, 63
        %p476 = scmp.lt.s32.totalorder %s473, 1
        %s477 = scalar_select %p476, %s473, 1
        %s478 = smul.addr %s475, 2
        %s479 = sadd.s32 %s477, %s478
        %s480 = smul.addr %s479, 8
        %s481 = scalar_lea.vmem %s4, %s480
        %p482 = pneg %p169
        %p483 = pneg %p166
        %p484 = pneg %p197
        %p485 = pneg %p194
        %s486 = sand.u32 %s184, 1
        %s487 = scalar_lea.sflag [#allocation5], %s486
        %s488 = sand.u32 %s184, 1
        %s489 = smul.addr %s488, 512
        %s490 = scalar_lea.vmem [#allocation4], %s489
        %s491 = smul.u32 32, %s24
        %s492 = smul.u32 3, %s26
        %s493 = smul.u32 48, %s26
        %s494 = smul.u32 2, %s25
        %p495 = scmp.lt.s32.totalorder %s493, 143
        %s496 = scalar_select %p495, %s493, 143
        %p497 = scmp.lt.s32.totalorder %s494, 1
        %s498 = scalar_select %p497, %s494, 1
        %s499 = smul.addr %s496, 2
        %s500 = sadd.s32 %s498, %s499
        %s501 = smul.addr %s500, 4
        %s502 = scalar_lea.vmem %s1, %s501
        %s503 = smul.u32 48, %s26
        %s504 = smul.u32 2, %s25
        %s505 = smul.u32 2, %s25
        %p506 = scmp.lt.s32.totalorder %s505, 1
        %s507 = scalar_select %p506, %s505, 1
        %s508 = scalar_lea.vmem %s2, %s507
        %s509 = smul.u32 2, %s25
        %s510 = smul.u32 2, %s25
        %p511 = scmp.lt.s32.totalorder %s510, 1
        %s512 = scalar_select %p511, %s510, 1
        %s513 = scalar_lea.vmem %s3, %s512
        %s514 = smul.u32 2, %s25
        %s515 = smul.u32 32, %s24
        %s516 = smul.u32 2, %s25
        %p517 = scmp.lt.s32.totalorder %s515, 63
        %s518 = scalar_select %p517, %s515, 63
        %p519 = scmp.lt.s32.totalorder %s516, 1
        %s520 = scalar_select %p519, %s516, 1
        %s521 = smul.addr %s518, 2
        %s522 = sadd.s32 %s520, %s521
        %s523 = smul.addr %s522, 8
        %s524 = scalar_lea.vmem %s4, %s523
        %s525 = smul.u32 32, %s24
        %s526 = smul.u32 2, %s25
        %s527 = smul.u32 32, %s24
        %s528 = smul.u32 2, %s25
        %p530 = scmp.eq.s32.totalorder %s26, 0
        // Predicated region
        $region67: #{_lambda_.7} parent=61 // pred_check
          %p531 = pneg %p530
        $region68: #{_lambda_.7} parent=61 // pred_check_branch
          %533 = sbr.rel (%p531) target = $region70
        $region69: #{_lambda_.7} parent=61 // pred_region
          %534 = vst [vmem:[#allocation2] sm:$0xff] 0.0
          %535 = vst [vmem:[#allocation2 + $0x8] sm:$0xff] 0.0
          %536 = vst [vmem:[#allocation2 + $0x10] sm:$0xff] 0.0
          %537 = vst [vmem:[#allocation2 + $0x18] sm:$0xff] 0.0
          %538 = vst [vmem:[#allocation2 + $0x20] sm:$0xff] 0.0
          %539 = vst [vmem:[#allocation2 + $0x28] sm:$0xff] 0.0
          %540 = vst [vmem:[#allocation2 + $0x30] sm:$0xff] 0.0
          %541 = vst [vmem:[#allocation2 + $0x38] sm:$0xff] 0.0
          %542 = vst [vmem:[#allocation2 + $0x40] sm:$0xff] 0.0
          %543 = vst [vmem:[#allocation2 + $0x48] sm:$0xff] 0.0
          %544 = vst [vmem:[#allocation2 + $0x50] sm:$0xff] 0.0
          %545 = vst [vmem:[#allocation2 + $0x58] sm:$0xff] 0.0
          %546 = vst [vmem:[#allocation2 + $0x60] sm:$0xff] 0.0
          %547 = vst [vmem:[#allocation2 + $0x68] sm:$0xff] 0.0
          %548 = vst [vmem:[#allocation2 + $0x70] sm:$0xff] 0.0
          %549 = vst [vmem:[#allocation2 + $0x78] sm:$0xff] 0.0
          %550 = vst [vmem:[#allocation2 + $0x80] sm:$0xff] 0.0
          %551 = vst [vmem:[#allocation2 + $0x88] sm:$0xff] 0.0
          %552 = vst [vmem:[#allocation2 + $0x90] sm:$0xff] 0.0
          %553 = vst [vmem:[#allocation2 + $0x98] sm:$0xff] 0.0
          %554 = vst [vmem:[#allocation2 + $0xa0] sm:$0xff] 0.0
          %555 = vst [vmem:[#allocation2 + $0xa8] sm:$0xff] 0.0
          %556 = vst [vmem:[#allocation2 + $0xb0] sm:$0xff] 0.0
          %557 = vst [vmem:[#allocation2 + $0xb8] sm:$0xff] 0.0
          %558 = vst [vmem:[#allocation2 + $0xc0] sm:$0xff] 0.0
          %559 = vst [vmem:[#allocation2 + $0xc8] sm:$0xff] 0.0
          %560 = vst [vmem:[#allocation2 + $0xd0] sm:$0xff] 0.0
          %561 = vst [vmem:[#allocation2 + $0xd8] sm:$0xff] 0.0
          %562 = vst [vmem:[#allocation2 + $0xe0] sm:$0xff] 0.0
          %563 = vst [vmem:[#allocation2 + $0xe8] sm:$0xff] 0.0
          %564 = vst [vmem:[#allocation2 + $0xf0] sm:$0xff] 0.0
          %565 = vst [vmem:[#allocation2 + $0xf8] sm:$0xff] 0.0
          %566 = vst [vmem:[#allocation2 + $0x100] sm:$0xff] 0.0
          %567 = vst [vmem:[#allocation2 + $0x108] sm:$0xff] 0.0
          %568 = vst [vmem:[#allocation2 + $0x110] sm:$0xff] 0.0
          %569 = vst [vmem:[#allocation2 + $0x118] sm:$0xff] 0.0
          %570 = vst [vmem:[#allocation2 + $0x120] sm:$0xff] 0.0
          %571 = vst [vmem:[#allocation2 + $0x128] sm:$0xff] 0.0
          %572 = vst [vmem:[#allocation2 + $0x130] sm:$0xff] 0.0
          %573 = vst [vmem:[#allocation2 + $0x138] sm:$0xff] 0.0
          %574 = vst [vmem:[#allocation2 + $0x140] sm:$0xff] 0.0
          %575 = vst [vmem:[#allocation2 + $0x148] sm:$0xff] 0.0
          %576 = vst [vmem:[#allocation2 + $0x150] sm:$0xff] 0.0
          %577 = vst [vmem:[#allocation2 + $0x158] sm:$0xff] 0.0
          %578 = vst [vmem:[#allocation2 + $0x160] sm:$0xff] 0.0
          %579 = vst [vmem:[#allocation2 + $0x168] sm:$0xff] 0.0
          %580 = vst [vmem:[#allocation2 + $0x170] sm:$0xff] 0.0
          %581 = vst [vmem:[#allocation2 + $0x178] sm:$0xff] 0.0
          %582 = vst [vmem:[#allocation2 + $0x180] sm:$0xff] 0.0
          %583 = vst [vmem:[#allocation2 + $0x188] sm:$0xff] 0.0
          %584 = vst [vmem:[#allocation2 + $0x190] sm:$0xff] 0.0
          %585 = vst [vmem:[#allocation2 + $0x198] sm:$0xff] 0.0
          %586 = vst [vmem:[#allocation2 + $0x1a0] sm:$0xff] 0.0
          %587 = vst [vmem:[#allocation2 + $0x1a8] sm:$0xff] 0.0
          %588 = vst [vmem:[#allocation2 + $0x1b0] sm:$0xff] 0.0
          %589 = vst [vmem:[#allocation2 + $0x1b8] sm:$0xff] 0.0
          %590 = vst [vmem:[#allocation2 + $0x1c0] sm:$0xff] 0.0
          %591 = vst [vmem:[#allocation2 + $0x1c8] sm:$0xff] 0.0
          %592 = vst [vmem:[#allocation2 + $0x1d0] sm:$0xff] 0.0
          %593 = vst [vmem:[#allocation2 + $0x1d8] sm:$0xff] 0.0
          %594 = vst [vmem:[#allocation2 + $0x1e0] sm:$0xff] 0.0
          %595 = vst [vmem:[#allocation2 + $0x1e8] sm:$0xff] 0.0
          %596 = vst [vmem:[#allocation2 + $0x1f0] sm:$0xff] 0.0
          %597 = vst [vmem:[#allocation2 + $0x1f8] sm:$0xff] 0.0
        $region70: #{_lambda_.7} parent=61 // pred_fallthru
          _
        %v598 = vld [vmem:[#allocation2] sm:$0xff]
        %v599 = vld [vmem:[#allocation2 + $0x8] sm:$0xff]
        %v600 = vld [vmem:[#allocation2 + $0x10] sm:$0xff]
        %v601 = vld [vmem:[#allocation2 + $0x18] sm:$0xff]
        %v602 = vld [vmem:[#allocation2 + $0x20] sm:$0xff]
        %v603 = vld [vmem:[#allocation2 + $0x28] sm:$0xff]
        %v604 = vld [vmem:[#allocation2 + $0x30] sm:$0xff]
        %v605 = vld [vmem:[#allocation2 + $0x38] sm:$0xff]
        %v606 = vld [vmem:[#allocation2 + $0x40] sm:$0xff]
        %v607 = vld [vmem:[#allocation2 + $0x48] sm:$0xff]
        %v608 = vld [vmem:[#allocation2 + $0x50] sm:$0xff]
        %v609 = vld [vmem:[#allocation2 + $0x58] sm:$0xff]
        %v610 = vld [vmem:[#allocation2 + $0x60] sm:$0xff]
        %v611 = vld [vmem:[#allocation2 + $0x68] sm:$0xff]
        %v612 = vld [vmem:[#allocation2 + $0x70] sm:$0xff]
        %v613 = vld [vmem:[#allocation2 + $0x78] sm:$0xff]
        %v614 = vld [vmem:[#allocation2 + $0x80] sm:$0xff]
        %v615 = vld [vmem:[#allocation2 + $0x88] sm:$0xff]
        %v616 = vld [vmem:[#allocation2 + $0x90] sm:$0xff]
        %v617 = vld [vmem:[#allocation2 + $0x98] sm:$0xff]
        %v618 = vld [vmem:[#allocation2 + $0xa0] sm:$0xff]
        %v619 = vld [vmem:[#allocation2 + $0xa8] sm:$0xff]
        %v620 = vld [vmem:[#allocation2 + $0xb0] sm:$0xff]
        %v621 = vld [vmem:[#allocation2 + $0xb8] sm:$0xff]
        %v622 = vld [vmem:[#allocation2 + $0xc0] sm:$0xff]
        %v623 = vld [vmem:[#allocation2 + $0xc8] sm:$0xff]
        %v624 = vld [vmem:[#allocation2 + $0xd0] sm:$0xff]
        %v625 = vld [vmem:[#allocation2 + $0xd8] sm:$0xff]
        %v626 = vld [vmem:[#allocation2 + $0xe0] sm:$0xff]
        %v627 = vld [vmem:[#allocation2 + $0xe8] sm:$0xff]
        %v628 = vld [vmem:[#allocation2 + $0xf0] sm:$0xff]
        %v629 = vld [vmem:[#allocation2 + $0xf8] sm:$0xff]
        %v630 = vld [vmem:[#allocation2 + $0x100] sm:$0xff]
        %v631 = vld [vmem:[#allocation2 + $0x108] sm:$0xff]
        %v632 = vld [vmem:[#allocation2 + $0x110] sm:$0xff]
        %v633 = vld [vmem:[#allocation2 + $0x118] sm:$0xff]
        %v634 = vld [vmem:[#allocation2 + $0x120] sm:$0xff]
        %v635 = vld [vmem:[#allocation2 + $0x128] sm:$0xff]
        %v636 = vld [vmem:[#allocation2 + $0x130] sm:$0xff]
        %v637 = vld [vmem:[#allocation2 + $0x138] sm:$0xff]
        %v638 = vld [vmem:[#allocation2 + $0x140] sm:$0xff]
        %v639 = vld [vmem:[#allocation2 + $0x148] sm:$0xff]
        %v640 = vld [vmem:[#allocation2 + $0x150] sm:$0xff]
        %v641 = vld [vmem:[#allocation2 + $0x158] sm:$0xff]
        %v642 = vld [vmem:[#allocation2 + $0x160] sm:$0xff]
        %v643 = vld [vmem:[#allocation2 + $0x168] sm:$0xff]
        %v644 = vld [vmem:[#allocation2 + $0x170] sm:$0xff]
        %v645 = vld [vmem:[#allocation2 + $0x178] sm:$0xff]
        %v646 = vld [vmem:[#allocation2 + $0x180] sm:$0xff]
        %v647 = vld [vmem:[#allocation2 + $0x188] sm:$0xff]
        %v648 = vld [vmem:[#allocation2 + $0x190] sm:$0xff]
        %v649 = vld [vmem:[#allocation2 + $0x198] sm:$0xff]
        %v650 = vld [vmem:[#allocation2 + $0x1a0] sm:$0xff]
        %v651 = vld [vmem:[#allocation2 + $0x1a8] sm:$0xff]
        %v652 = vld [vmem:[#allocation2 + $0x1b0] sm:$0xff]
        %v653 = vld [vmem:[#allocation2 + $0x1b8] sm:$0xff]
        %v654 = vld [vmem:[#allocation2 + $0x1c0] sm:$0xff]
        %v655 = vld [vmem:[#allocation2 + $0x1c8] sm:$0xff]
        %v656 = vld [vmem:[#allocation2 + $0x1d0] sm:$0xff]
        %v657 = vld [vmem:[#allocation2 + $0x1d8] sm:$0xff]
        %v658 = vld [vmem:[#allocation2 + $0x1e0] sm:$0xff]
        %v659 = vld [vmem:[#allocation2 + $0x1e8] sm:$0xff]
        %v660 = vld [vmem:[#allocation2 + $0x1f0] sm:$0xff]
        %v661 = vld [vmem:[#allocation2 + $0x1f8] sm:$0xff]
        %v662 = vld [vmem:[%s438] sm:$0xff]
        %v663 = vld [vmem:[%s438 + $0x8] sm:$0xf]
        %v664 = vld [vmem:[%s438 + $0xc] sm:$0xff]
        %v665 = vld [vmem:[%s438 + $0x14] sm:$0xf]
        %v666 = vld [vmem:[%s438 + $0x18] sm:$0xff]
        %v667 = vld [vmem:[%s438 + $0x20] sm:$0xf]
        %v668 = vld [vmem:[%s438 + $0x24] sm:$0xff]
        %v669 = vld [vmem:[%s438 + $0x2c] sm:$0xf]
        %v670 = vld [vmem:[%s438 + $0x30] sm:$0xff]
        %v671 = vld [vmem:[%s438 + $0x38] sm:$0xf]
        %v672 = vld [vmem:[%s438 + $0x3c] sm:$0xff]
        %v673 = vld [vmem:[%s438 + $0x44] sm:$0xf]
        %v674 = vld [vmem:[%s438 + $0x48] sm:$0xff]
        %v675 = vld [vmem:[%s438 + $0x50] sm:$0xf]
        %v676 = vld [vmem:[%s438 + $0x54] sm:$0xff]
        %v677 = vld [vmem:[%s438 + $0x5c] sm:$0xf]
        %v678 = vld [vmem:[%s438 + $0x60] sm:$0xff]
        %v679 = vld [vmem:[%s438 + $0x68] sm:$0xf]
        %v680 = vld [vmem:[%s438 + $0x6c] sm:$0xff]
        %v681 = vld [vmem:[%s438 + $0x74] sm:$0xf]
        %v682 = vld [vmem:[%s438 + $0x78] sm:$0xff]
        %v683 = vld [vmem:[%s438 + $0x80] sm:$0xf]
        %v684 = vld [vmem:[%s438 + $0x84] sm:$0xff]
        %v685 = vld [vmem:[%s438 + $0x8c] sm:$0xf]
        %v686 = vld [vmem:[%s438 + $0x90] sm:$0xff]
        %v687 = vld [vmem:[%s438 + $0x98] sm:$0xf]
        %v688 = vld [vmem:[%s438 + $0x9c] sm:$0xff]
        %v689 = vld [vmem:[%s438 + $0xa4] sm:$0xf]
        %v690 = vld [vmem:[%s438 + $0xa8] sm:$0xff]
        %v691 = vld [vmem:[%s438 + $0xb0] sm:$0xf]
        %v692 = vld [vmem:[%s438 + $0xb4] sm:$0xff]
        %v693 = vld [vmem:[%s438 + $0xbc] sm:$0xf]
        %v694 = vld [vmem:[%s438 + $0xc0] sm:$0xff]
        %v695 = vld [vmem:[%s438 + $0xc8] sm:$0xf]
        %v696 = vld [vmem:[%s438 + $0xcc] sm:$0xff]
        %v697 = vld [vmem:[%s438 + $0xd4] sm:$0xf]
        %v698 = vld [vmem:[%s438 + $0xd8] sm:$0xff]
        %v699 = vld [vmem:[%s438 + $0xe0] sm:$0xf]
        %v700 = vld [vmem:[%s438 + $0xe4] sm:$0xff]
        %v701 = vld [vmem:[%s438 + $0xec] sm:$0xf]
        %v702 = vld [vmem:[%s438 + $0xf0] sm:$0xff]
        %v703 = vld [vmem:[%s438 + $0xf8] sm:$0xf]
        %v704 = vld [vmem:[%s438 + $0xfc] sm:$0xff]
        %v705 = vld [vmem:[%s438 + $0x104] sm:$0xf]
        %v706 = vld [vmem:[%s438 + $0x108] sm:$0xff]
        %v707 = vld [vmem:[%s438 + $0x110] sm:$0xf]
        %v708 = vld [vmem:[%s438 + $0x114] sm:$0xff]
        %v709 = vld [vmem:[%s438 + $0x11c] sm:$0xf]
        %v710 = vld [vmem:[%s438 + $0x120] sm:$0xff]
        %v711 = vld [vmem:[%s438 + $0x128] sm:$0xf]
        %v712 = vld [vmem:[%s438 + $0x12c] sm:$0xff]
        %v713 = vld [vmem:[%s438 + $0x134] sm:$0xf]
        %v714 = vld [vmem:[%s438 + $0x138] sm:$0xff]
        %v715 = vld [vmem:[%s438 + $0x140] sm:$0xf]
        %v716 = vld [vmem:[%s438 + $0x144] sm:$0xff]
        %v717 = vld [vmem:[%s438 + $0x14c] sm:$0xf]
        %v718 = vld [vmem:[%s438 + $0x150] sm:$0xff]
        %v719 = vld [vmem:[%s438 + $0x158] sm:$0xf]
        %v720 = vld [vmem:[%s438 + $0x15c] sm:$0xff]
        %v721 = vld [vmem:[%s438 + $0x164] sm:$0xf]
        %v722 = vld [vmem:[%s438 + $0x168] sm:$0xff]
        %v723 = vld [vmem:[%s438 + $0x170] sm:$0xf]
        %v724 = vld [vmem:[%s438 + $0x174] sm:$0xff]
        %v725 = vld [vmem:[%s438 + $0x17c] sm:$0xf]
        %v726 = vld [vmem:[%s502] sm:$0xff]
        %v727 = vld [vmem:[%s502 + $0x8] sm:$0xff]
        %v728 = vld [vmem:[%s502 + $0x10] sm:$0xff]
        %v729 = vld [vmem:[%s502 + $0x18] sm:$0xff]
        %v730 = vld [vmem:[%s502 + $0x20] sm:$0xff]
        %v731 = vld [vmem:[%s502 + $0x28] sm:$0xff]
        %v732 = vld [vmem:[%s502 + $0x30] sm:$0xff]
        %v733 = vld [vmem:[%s502 + $0x38] sm:$0xff]
        %v734 = vld [vmem:[%s502 + $0x40] sm:$0xff]
        %v735 = vld [vmem:[%s502 + $0x48] sm:$0xff]
        %v736 = vld [vmem:[%s502 + $0x50] sm:$0xff]
        %v737 = vld [vmem:[%s502 + $0x58] sm:$0xff]
        %v738 = vld [vmem:[%s502 + $0x60] sm:$0xff]
        %v739 = vld [vmem:[%s502 + $0x68] sm:$0xff]
        %v740 = vld [vmem:[%s502 + $0x70] sm:$0xff]
        %v741 = vld [vmem:[%s502 + $0x78] sm:$0xff]
        %v742 = vld [vmem:[%s502 + $0x80] sm:$0xff]
        %v743 = vld [vmem:[%s502 + $0x88] sm:$0xff]
        %v744 = vld [vmem:[%s502 + $0x90] sm:$0xff]
        %v745 = vld [vmem:[%s502 + $0x98] sm:$0xff]
        %v746 = vld [vmem:[%s502 + $0xa0] sm:$0xff]
        %v747 = vld [vmem:[%s502 + $0xa8] sm:$0xff]
        %v748 = vld [vmem:[%s502 + $0xb0] sm:$0xff]
        %v749 = vld [vmem:[%s502 + $0xb8] sm:$0xff]
        %v750 = vld [vmem:[%s502 + $0xc0] sm:$0xff]
        %v751 = vld [vmem:[%s502 + $0xc8] sm:$0xff]
        %v752 = vld [vmem:[%s502 + $0xd0] sm:$0xff]
        %v753 = vld [vmem:[%s502 + $0xd8] sm:$0xff]
        %v754 = vld [vmem:[%s502 + $0xe0] sm:$0xff]
        %v755 = vld [vmem:[%s502 + $0xe8] sm:$0xff]
        %v756 = vld [vmem:[%s502 + $0xf0] sm:$0xff]
        %v757 = vld [vmem:[%s502 + $0xf8] sm:$0xff]
        %v758 = vld [vmem:[%s502 + $0x100] sm:$0xff]
        %v759 = vld [vmem:[%s502 + $0x108] sm:$0xff]
        %v760 = vld [vmem:[%s502 + $0x110] sm:$0xff]
        %v761 = vld [vmem:[%s502 + $0x118] sm:$0xff]
        %v762 = vld [vmem:[%s502 + $0x120] sm:$0xff]
        %v763 = vld [vmem:[%s502 + $0x128] sm:$0xff]
        %v764 = vld [vmem:[%s502 + $0x130] sm:$0xff]
        %v765 = vld [vmem:[%s502 + $0x138] sm:$0xff]
        %v766 = vld [vmem:[%s502 + $0x140] sm:$0xff]
        %v767 = vld [vmem:[%s502 + $0x148] sm:$0xff]
        %v768 = vld [vmem:[%s502 + $0x150] sm:$0xff]
        %v769 = vld [vmem:[%s502 + $0x158] sm:$0xff]
        %v770 = vld [vmem:[%s502 + $0x160] sm:$0xff]
        %v771 = vld [vmem:[%s502 + $0x168] sm:$0xff]
        %v772 = vld [vmem:[%s502 + $0x170] sm:$0xff]
        %v773 = vld [vmem:[%s502 + $0x178] sm:$0xff]
        %v838 = vunpack.c.l.b16 %v662
        %v839 = vunpack.c.h.b16 %v662
        %v840 = vunpack.c.l.b16 %v663
        %v841 = vunpack.c.l.b16 %v664
        %v842 = vunpack.c.h.b16 %v664
        %v843 = vunpack.c.l.b16 %v665
        %v844 = vunpack.c.l.b16 %v666
        %v845 = vunpack.c.h.b16 %v666
        %v846 = vunpack.c.l.b16 %v667
        %v847 = vunpack.c.l.b16 %v668
        %v848 = vunpack.c.h.b16 %v668
        %v849 = vunpack.c.l.b16 %v669
        %v850 = vunpack.c.l.b16 %v670
        %v851 = vunpack.c.h.b16 %v670
        %v852 = vunpack.c.l.b16 %v671
        %v853 = vunpack.c.l.b16 %v672
        %v854 = vunpack.c.h.b16 %v672
        %v855 = vunpack.c.l.b16 %v673
        %v856 = vunpack.c.l.b16 %v674
        %v857 = vunpack.c.h.b16 %v674
        %v858 = vunpack.c.l.b16 %v675
        %v859 = vunpack.c.l.b16 %v676
        %v860 = vunpack.c.h.b16 %v676
        %v861 = vunpack.c.l.b16 %v677
        %v862 = vunpack.c.l.b16 %v678
        %v863 = vunpack.c.h.b16 %v678
        %v864 = vunpack.c.l.b16 %v679
        %v865 = vunpack.c.l.b16 %v680
        %v866 = vunpack.c.h.b16 %v680
        %v867 = vunpack.c.l.b16 %v681
        %v868 = vunpack.c.l.b16 %v682
        %v869 = vunpack.c.h.b16 %v682
        %v870 = vunpack.c.l.b16 %v683
        %v871 = vunpack.c.l.b16 %v684
        %v872 = vunpack.c.h.b16 %v684
        %v873 = vunpack.c.l.b16 %v685
        %v874 = vunpack.c.l.b16 %v686
        %v875 = vunpack.c.h.b16 %v686
        %v876 = vunpack.c.l.b16 %v687
        %v877 = vunpack.c.l.b16 %v688
        %v878 = vunpack.c.h.b16 %v688
        %v879 = vunpack.c.l.b16 %v689
        %v880 = vunpack.c.l.b16 %v690
        %v881 = vunpack.c.h.b16 %v690
        %v882 = vunpack.c.l.b16 %v691
        %v883 = vunpack.c.l.b16 %v692
        %v884 = vunpack.c.h.b16 %v692
        %v885 = vunpack.c.l.b16 %v693
        %v886 = vunpack.c.l.b16 %v694
        %v887 = vunpack.c.h.b16 %v694
        %v888 = vunpack.c.l.b16 %v695
        %v889 = vunpack.c.l.b16 %v696
        %v890 = vunpack.c.h.b16 %v696
        %v891 = vunpack.c.l.b16 %v697
        %v892 = vunpack.c.l.b16 %v698
        %v893 = vunpack.c.h.b16 %v698
        %v894 = vunpack.c.l.b16 %v699
        %v895 = vunpack.c.l.b16 %v700
        %v896 = vunpack.c.h.b16 %v700
        %v897 = vunpack.c.l.b16 %v701
        %v898 = vunpack.c.l.b16 %v702
        %v899 = vunpack.c.h.b16 %v702
        %v900 = vunpack.c.l.b16 %v703
        %v901 = vunpack.c.l.b16 %v704
        %v902 = vunpack.c.h.b16 %v704
        %v903 = vunpack.c.l.b16 %v705
        %v904 = vunpack.c.l.b16 %v706
        %v905 = vunpack.c.h.b16 %v706
        %v906 = vunpack.c.l.b16 %v707
        %v907 = vunpack.c.l.b16 %v708
        %v908 = vunpack.c.h.b16 %v708
        %v909 = vunpack.c.l.b16 %v709
        %v910 = vunpack.c.l.b16 %v710
        %v911 = vunpack.c.h.b16 %v710
        %v912 = vunpack.c.l.b16 %v711
        %v913 = vunpack.c.l.b16 %v712
        %v914 = vunpack.c.h.b16 %v712
        %v915 = vunpack.c.l.b16 %v713
        %v916 = vunpack.c.l.b16 %v714
        %v917 = vunpack.c.h.b16 %v714
        %v918 = vunpack.c.l.b16 %v715
        %v919 = vunpack.c.l.b16 %v716
        %v920 = vunpack.c.h.b16 %v716
        %v921 = vunpack.c.l.b16 %v717
        %v922 = vunpack.c.l.b16 %v718
        %v923 = vunpack.c.h.b16 %v718
        %v924 = vunpack.c.l.b16 %v719
        %v925 = vunpack.c.l.b16 %v720
        %v926 = vunpack.c.h.b16 %v720
        %v927 = vunpack.c.l.b16 %v721
        %v928 = vunpack.c.l.b16 %v722
        %v929 = vunpack.c.h.b16 %v722
        %v930 = vunpack.c.l.b16 %v723
        %v931 = vunpack.c.l.b16 %v724
        %v932 = vunpack.c.h.b16 %v724
        %v933 = vunpack.c.l.b16 %v725
        %v934 = vpack.c.b16 %v841, %v838
        %v935 = vpack.c.b16 %v842, %v839
        %v936 = vpack.c.b16 %v843, %v840
        %v937 = vpack.c.b16 %v847, %v844
        %v938 = vpack.c.b16 %v848, %v845
        %v939 = vpack.c.b16 %v849, %v846
        %v940 = vpack.c.b16 %v853, %v850
        %v941 = vpack.c.b16 %v854, %v851
        %v942 = vpack.c.b16 %v855, %v852
        %v943 = vpack.c.b16 %v859, %v856
        %v944 = vpack.c.b16 %v860, %v857
        %v945 = vpack.c.b16 %v861, %v858
        %v946 = vpack.c.b16 %v865, %v862
        %v947 = vpack.c.b16 %v866, %v863
        %v948 = vpack.c.b16 %v867, %v864
        %v949 = vpack.c.b16 %v871, %v868
        %v950 = vpack.c.b16 %v872, %v869
        %v951 = vpack.c.b16 %v873, %v870
        %v952 = vpack.c.b16 %v877, %v874
        %v953 = vpack.c.b16 %v878, %v875
        %v954 = vpack.c.b16 %v879, %v876
        %v955 = vpack.c.b16 %v883, %v880
        %v956 = vpack.c.b16 %v884, %v881
        %v957 = vpack.c.b16 %v885, %v882
        %v958 = vpack.c.b16 %v889, %v886
        %v959 = vpack.c.b16 %v890, %v887
        %v960 = vpack.c.b16 %v891, %v888
        %v961 = vpack.c.b16 %v895, %v892
        %v962 = vpack.c.b16 %v896, %v893
        %v963 = vpack.c.b16 %v897, %v894
        %v964 = vpack.c.b16 %v901, %v898
        %v965 = vpack.c.b16 %v902, %v899
        %v966 = vpack.c.b16 %v903, %v900
        %v967 = vpack.c.b16 %v907, %v904
        %v968 = vpack.c.b16 %v908, %v905
        %v969 = vpack.c.b16 %v909, %v906
        %v970 = vpack.c.b16 %v913, %v910
        %v971 = vpack.c.b16 %v914, %v911
        %v972 = vpack.c.b16 %v915, %v912
        %v973 = vpack.c.b16 %v919, %v916
        %v974 = vpack.c.b16 %v920, %v917
        %v975 = vpack.c.b16 %v921, %v918
        %v976 = vpack.c.b16 %v925, %v922
        %v977 = vpack.c.b16 %v926, %v923
        %v978 = vpack.c.b16 %v927, %v924
        %v979 = vpack.c.b16 %v931, %v928
        %v980 = vpack.c.b16 %v932, %v929
        %v981 = vpack.c.b16 %v933, %v930
        %v1078 = vunpack.c.l.b16 %v726
        %v1079 = vunpack.c.h.b16 %v726
        %v1080 = vunpack.c.l.b16 %v727
        %v1081 = vunpack.c.h.b16 %v727
        %v1082 = vunpack.c.l.b16 %v728
        %v1083 = vunpack.c.h.b16 %v728
        %v1084 = vunpack.c.l.b16 %v729
        %v1085 = vunpack.c.h.b16 %v729
        %v1086 = vunpack.c.l.b16 %v730
        %v1087 = vunpack.c.h.b16 %v730
        %v1088 = vunpack.c.l.b16 %v731
        %v1089 = vunpack.c.h.b16 %v731
        %v1090 = vunpack.c.l.b16 %v732
        %v1091 = vunpack.c.h.b16 %v732
        %v1092 = vunpack.c.l.b16 %v733
        %v1093 = vunpack.c.h.b16 %v733
        %v1094 = vunpack.c.l.b16 %v734
        %v1095 = vunpack.c.h.b16 %v734
        %v1096 = vunpack.c.l.b16 %v735
        %v1097 = vunpack.c.h.b16 %v735
        %v1098 = vunpack.c.l.b16 %v736
        %v1099 = vunpack.c.h.b16 %v736
        %v1100 = vunpack.c.l.b16 %v737
        %v1101 = vunpack.c.h.b16 %v737
        %v1102 = vunpack.c.l.b16 %v738
        %v1103 = vunpack.c.h.b16 %v738
        %v1104 = vunpack.c.l.b16 %v739
        %v1105 = vunpack.c.h.b16 %v739
        %v1106 = vunpack.c.l.b16 %v740
        %v1107 = vunpack.c.h.b16 %v740
        %v1108 = vunpack.c.l.b16 %v741
        %v1109 = vunpack.c.h.b16 %v741
        %v1110 = vunpack.c.l.b16 %v742
        %v1111 = vunpack.c.h.b16 %v742
        %v1112 = vunpack.c.l.b16 %v743
        %v1113 = vunpack.c.h.b16 %v743
        %v1114 = vunpack.c.l.b16 %v744
        %v1115 = vunpack.c.h.b16 %v744
        %v1116 = vunpack.c.l.b16 %v745
        %v1117 = vunpack.c.h.b16 %v745
        %v1118 = vunpack.c.l.b16 %v746
        %v1119 = vunpack.c.h.b16 %v746
        %v1120 = vunpack.c.l.b16 %v747
        %v1121 = vunpack.c.h.b16 %v747
        %v1122 = vunpack.c.l.b16 %v748
        %v1123 = vunpack.c.h.b16 %v748
        %v1124 = vunpack.c.l.b16 %v749
        %v1125 = vunpack.c.h.b16 %v749
        %v1126 = vunpack.c.l.b16 %v750
        %v1127 = vunpack.c.h.b16 %v750
        %v1128 = vunpack.c.l.b16 %v751
        %v1129 = vunpack.c.h.b16 %v751
        %v1130 = vunpack.c.l.b16 %v752
        %v1131 = vunpack.c.h.b16 %v752
        %v1132 = vunpack.c.l.b16 %v753
        %v1133 = vunpack.c.h.b16 %v753
        %v1134 = vunpack.c.l.b16 %v754
        %v1135 = vunpack.c.h.b16 %v754
        %v1136 = vunpack.c.l.b16 %v755
        %v1137 = vunpack.c.h.b16 %v755
        %v1138 = vunpack.c.l.b16 %v756
        %v1139 = vunpack.c.h.b16 %v756
        %v1140 = vunpack.c.l.b16 %v757
        %v1141 = vunpack.c.h.b16 %v757
        %v1142 = vunpack.c.l.b16 %v758
        %v1143 = vunpack.c.h.b16 %v758
        %v1144 = vunpack.c.l.b16 %v759
        %v1145 = vunpack.c.h.b16 %v759
        %v1146 = vunpack.c.l.b16 %v760
        %v1147 = vunpack.c.h.b16 %v760
        %v1148 = vunpack.c.l.b16 %v761
        %v1149 = vunpack.c.h.b16 %v761
        %v1150 = vunpack.c.l.b16 %v762
        %v1151 = vunpack.c.h.b16 %v762
        %v1152 = vunpack.c.l.b16 %v763
        %v1153 = vunpack.c.h.b16 %v763
        %v1154 = vunpack.c.l.b16 %v764
        %v1155 = vunpack.c.h.b16 %v764
        %v1156 = vunpack.c.l.b16 %v765
        %v1157 = vunpack.c.h.b16 %v765
        %v1158 = vunpack.c.l.b16 %v766
        %v1159 = vunpack.c.h.b16 %v766
        %v1160 = vunpack.c.l.b16 %v767
        %v1161 = vunpack.c.h.b16 %v767
        %v1162 = vunpack.c.l.b16 %v768
        %v1163 = vunpack.c.h.b16 %v768
        %v1164 = vunpack.c.l.b16 %v769
        %v1165 = vunpack.c.h.b16 %v769
        %v1166 = vunpack.c.l.b16 %v770
        %v1167 = vunpack.c.h.b16 %v770
        %v1168 = vunpack.c.l.b16 %v771
        %v1169 = vunpack.c.h.b16 %v771
        %v1170 = vunpack.c.l.b16 %v772
        %v1171 = vunpack.c.h.b16 %v772
        %v1172 = vunpack.c.l.b16 %v773
        %v1173 = vunpack.c.h.b16 %v773
        %v1174 = vpack.c.b16 %v1080, %v1078
        %v1175 = vpack.c.b16 %v1081, %v1079
        %v1176 = vpack.c.b16 %v1084, %v1082
        %v1177 = vpack.c.b16 %v1085, %v1083
        %v1178 = vpack.c.b16 %v1088, %v1086
        %v1179 = vpack.c.b16 %v1089, %v1087
        %v1180 = vpack.c.b16 %v1092, %v1090
        %v1181 = vpack.c.b16 %v1093, %v1091
        %v1182 = vpack.c.b16 %v1096, %v1094
        %v1183 = vpack.c.b16 %v1097, %v1095
        %v1184 = vpack.c.b16 %v1100, %v1098
        %v1185 = vpack.c.b16 %v1101, %v1099
        %v1186 = vpack.c.b16 %v1104, %v1102
        %v1187 = vpack.c.b16 %v1105, %v1103
        %v1188 = vpack.c.b16 %v1108, %v1106
        %v1189 = vpack.c.b16 %v1109, %v1107
        %v1190 = vpack.c.b16 %v1112, %v1110
        %v1191 = vpack.c.b16 %v1113, %v1111
        %v1192 = vpack.c.b16 %v1116, %v1114
        %v1193 = vpack.c.b16 %v1117, %v1115
        %v1194 = vpack.c.b16 %v1120, %v1118
        %v1195 = vpack.c.b16 %v1121, %v1119
        %v1196 = vpack.c.b16 %v1124, %v1122
        %v1197 = vpack.c.b16 %v1125, %v1123
        %v1198 = vpack.c.b16 %v1128, %v1126
        %v1199 = vpack.c.b16 %v1129, %v1127
        %v1200 = vpack.c.b16 %v1132, %v1130
        %v1201 = vpack.c.b16 %v1133, %v1131
        %v1202 = vpack.c.b16 %v1136, %v1134
        %v1203 = vpack.c.b16 %v1137, %v1135
        %v1204 = vpack.c.b16 %v1140, %v1138
        %v1205 = vpack.c.b16 %v1141, %v1139
        %v1206 = vpack.c.b16 %v1144, %v1142
        %v1207 = vpack.c.b16 %v1145, %v1143
        %v1208 = vpack.c.b16 %v1148, %v1146
        %v1209 = vpack.c.b16 %v1149, %v1147
        %v1210 = vpack.c.b16 %v1152, %v1150
        %v1211 = vpack.c.b16 %v1153, %v1151
        %v1212 = vpack.c.b16 %v1156, %v1154
        %v1213 = vpack.c.b16 %v1157, %v1155
        %v1214 = vpack.c.b16 %v1160, %v1158
        %v1215 = vpack.c.b16 %v1161, %v1159
        %v1216 = vpack.c.b16 %v1164, %v1162
        %v1217 = vpack.c.b16 %v1165, %v1163
        %v1218 = vpack.c.b16 %v1168, %v1166
        %v1219 = vpack.c.b16 %v1169, %v1167
        %v1220 = vpack.c.b16 %v1172, %v1170
        %v1221 = vpack.c.b16 %v1173, %v1171
        %1270 = vmatprep.subr.bf16.mxu0 %v1189
        %1271 = vmatpush1.bf16.msra.mxu0 %v1188
        %1272 = vmatprep.subr.bf16.mxu0 %v1187
        %1273 = vmatpush1.bf16.msra.mxu0 %v1186
        %1274 = vmatprep.subr.bf16.mxu0 %v1185
        %1275 = vmatpush1.bf16.msra.mxu0 %v1184
        %1276 = vmatprep.subr.bf16.mxu0 %v1183
        %1277 = vmatpush1.bf16.msra.mxu0 %v1182
        %1278 = vmatprep.subr.bf16.mxu0 %v1181
        %1279 = vmatpush1.bf16.msra.mxu0 %v1180
        %1280 = vmatprep.subr.bf16.mxu0 %v1179
        %1281 = vmatpush1.bf16.msra.mxu0 %v1178
        %1282 = vmatprep.subr.bf16.mxu0 %v1177
        %1283 = vmatpush1.bf16.msra.mxu0 %v1176
        %1284 = vmatprep.subr.bf16.mxu0 %v1175
        %1285 = vmatpush1.bf16.msra.mxu0 %v1174
        %1286 = vmatprep.subr.bf16.mxu0 %v1205
        %1287 = vmatpush2.bf16.msra.mxu0 %v1204
        %1288 = vmatprep.subr.bf16.mxu0 %v1203
        %1289 = vmatpush2.bf16.msra.mxu0 %v1202
        %1290 = vmatprep.subr.bf16.mxu0 %v1201
        %1291 = vmatpush2.bf16.msra.mxu0 %v1200
        %1292 = vmatprep.subr.bf16.mxu0 %v1199
        %1293 = vmatpush2.bf16.msra.mxu0 %v1198
        %1294 = vmatprep.subr.bf16.mxu0 %v1197
        %1295 = vmatpush2.bf16.msra.mxu0 %v1196
        %1296 = vmatprep.subr.bf16.mxu0 %v1195
        %1297 = vmatpush2.bf16.msra.mxu0 %v1194
        %1298 = vmatprep.subr.bf16.mxu0 %v1193
        %1299 = vmatpush2.bf16.msra.mxu0 %v1192
        %1300 = vmatprep.subr.bf16.mxu0 %v1191
        %1301 = vmatpush2.bf16.msra.mxu0 %v1190
        %1302 = vmatprep.mubr.bf16.mxu0 %v935
        %1303 = vmatmul.mubr.bf16.gmra.mxu0 %v934
        %v1304 = vpop.f32.mrf.mxu0
        %v1305 = vadd.f32 0.0, %v1304
        %v1306 = vpop.f32.mrf.mxu0
        %v1307 = vadd.f32 0.0, %v1306
        %v1308 = vpop.f32.mrf.mxu0
        %v1309 = vadd.f32 0.0, %v1308
        %v1310 = vpop.f32.mrf.mxu0
        %v1311 = vadd.f32 0.0, %v1310
        %1312 = vmatprep.mubr.bf16.mxu0 %v938
        %1313 = vmatmul.mubr.bf16.gmra.mxu0 %v937
        %v1314 = vpop.f32.mrf.mxu0
        %v1315 = vadd.f32 0.0, %v1314
        %v1316 = vpop.f32.mrf.mxu0
        %v1317 = vadd.f32 0.0, %v1316
        %v1318 = vpop.f32.mrf.mxu0
        %v1319 = vadd.f32 0.0, %v1318
        %v1320 = vpop.f32.mrf.mxu0
        %v1321 = vadd.f32 0.0, %v1320
        %1322 = vmatprep.mubr.bf16.mxu0 %v941
        %1323 = vmatmul.mubr.bf16.gmra.mxu0 %v940
        %v1324 = vpop.f32.mrf.mxu0
        %v1325 = vadd.f32 0.0, %v1324
        %v1326 = vpop.f32.mrf.mxu0
        %v1327 = vadd.f32 0.0, %v1326
        %v1328 = vpop.f32.mrf.mxu0
        %v1329 = vadd.f32 0.0, %v1328
        %v1330 = vpop.f32.mrf.mxu0
        %v1331 = vadd.f32 0.0, %v1330
        %1332 = vmatprep.mubr.bf16.mxu0 %v944
        %1333 = vmatmul.mubr.bf16.gmra.mxu0 %v943
        %v1334 = vpop.f32.mrf.mxu0
        %v1335 = vadd.f32 0.0, %v1334
        %v1336 = vpop.f32.mrf.mxu0
        %v1337 = vadd.f32 0.0, %v1336
        %v1338 = vpop.f32.mrf.mxu0
        %v1339 = vadd.f32 0.0, %v1338
        %v1340 = vpop.f32.mrf.mxu0
        %v1341 = vadd.f32 0.0, %v1340
        %1342 = vmatprep.mubr.bf16.mxu0 %v947
        %1343 = vmatmul.mubr.bf16.gmra.mxu0 %v946
        %v1344 = vpop.f32.mrf.mxu0
        %v1345 = vadd.f32 0.0, %v1344
        %v1346 = vpop.f32.mrf.mxu0
        %v1347 = vadd.f32 0.0, %v1346
        %v1348 = vpop.f32.mrf.mxu0
        %v1349 = vadd.f32 0.0, %v1348
        %v1350 = vpop.f32.mrf.mxu0
        %v1351 = vadd.f32 0.0, %v1350
        %1352 = vmatprep.mubr.bf16.mxu0 %v950
        %1353 = vmatmul.mubr.bf16.gmra.mxu0 %v949
        %v1354 = vpop.f32.mrf.mxu0
        %v1355 = vadd.f32 0.0, %v1354
        %v1356 = vpop.f32.mrf.mxu0
        %v1357 = vadd.f32 0.0, %v1356
        %v1358 = vpop.f32.mrf.mxu0
        %v1359 = vadd.f32 0.0, %v1358
        %v1360 = vpop.f32.mrf.mxu0
        %v1361 = vadd.f32 0.0, %v1360
        %1362 = vmatprep.mubr.bf16.mxu0 %v953
        %1363 = vmatmul.mubr.bf16.gmra.mxu0 %v952
        %v1364 = vpop.f32.mrf.mxu0
        %v1365 = vadd.f32 0.0, %v1364
        %v1366 = vpop.f32.mrf.mxu0
        %v1367 = vadd.f32 0.0, %v1366
        %v1368 = vpop.f32.mrf.mxu0
        %v1369 = vadd.f32 0.0, %v1368
        %v1370 = vpop.f32.mrf.mxu0
        %v1371 = vadd.f32 0.0, %v1370
        %1372 = vmatprep.mubr.bf16.mxu0 %v956
        %1373 = vmatmul.mubr.bf16.gmra.mxu0 %v955
        %v1374 = vpop.f32.mrf.mxu0
        %v1375 = vadd.f32 0.0, %v1374
        %v1376 = vpop.f32.mrf.mxu0
        %v1377 = vadd.f32 0.0, %v1376
        %v1378 = vpop.f32.mrf.mxu0
        %v1379 = vadd.f32 0.0, %v1378
        %v1380 = vpop.f32.mrf.mxu0
        %v1381 = vadd.f32 0.0, %v1380
        %1382 = vmatprep.mubr.bf16.mxu0 %v959
        %1383 = vmatmul.mubr.bf16.gmra.mxu0 %v958
        %v1384 = vpop.f32.mrf.mxu0
        %v1385 = vadd.f32 0.0, %v1384
        %v1386 = vpop.f32.mrf.mxu0
        %v1387 = vadd.f32 0.0, %v1386
        %v1388 = vpop.f32.mrf.mxu0
        %v1389 = vadd.f32 0.0, %v1388
        %v1390 = vpop.f32.mrf.mxu0
        %v1391 = vadd.f32 0.0, %v1390
        %1392 = vmatprep.mubr.bf16.mxu0 %v962
        %1393 = vmatmul.mubr.bf16.gmra.mxu0 %v961
        %v1394 = vpop.f32.mrf.mxu0
        %v1395 = vadd.f32 0.0, %v1394
        %v1396 = vpop.f32.mrf.mxu0
        %v1397 = vadd.f32 0.0, %v1396
        %v1398 = vpop.f32.mrf.mxu0
        %v1399 = vadd.f32 0.0, %v1398
        %v1400 = vpop.f32.mrf.mxu0
        %v1401 = vadd.f32 0.0, %v1400
        %1402 = vmatprep.mubr.bf16.mxu0 %v965
        %1403 = vmatmul.mubr.bf16.gmra.mxu0 %v964
        %v1404 = vpop.f32.mrf.mxu0
        %v1405 = vadd.f32 0.0, %v1404
        %v1406 = vpop.f32.mrf.mxu0
        %v1407 = vadd.f32 0.0, %v1406
        %v1408 = vpop.f32.mrf.mxu0
        %v1409 = vadd.f32 0.0, %v1408
        %v1410 = vpop.f32.mrf.mxu0
        %v1411 = vadd.f32 0.0, %v1410
        %1412 = vmatprep.mubr.bf16.mxu0 %v968
        %1413 = vmatmul.mubr.bf16.gmra.mxu0 %v967
        %v1414 = vpop.f32.mrf.mxu0
        %v1415 = vadd.f32 0.0, %v1414
        %v1416 = vpop.f32.mrf.mxu0
        %v1417 = vadd.f32 0.0, %v1416
        %v1418 = vpop.f32.mrf.mxu0
        %v1419 = vadd.f32 0.0, %v1418
        %v1420 = vpop.f32.mrf.mxu0
        %v1421 = vadd.f32 0.0, %v1420
        %1422 = vmatprep.mubr.bf16.mxu0 %v971
        %1423 = vmatmul.mubr.bf16.gmra.mxu0 %v970
        %v1424 = vpop.f32.mrf.mxu0
        %v1425 = vadd.f32 0.0, %v1424
        %v1426 = vpop.f32.mrf.mxu0
        %v1427 = vadd.f32 0.0, %v1426
        %v1428 = vpop.f32.mrf.mxu0
        %v1429 = vadd.f32 0.0, %v1428
        %v1430 = vpop.f32.mrf.mxu0
        %v1431 = vadd.f32 0.0, %v1430
        %1432 = vmatprep.mubr.bf16.mxu0 %v974
        %1433 = vmatmul.mubr.bf16.gmra.mxu0 %v973
        %v1434 = vpop.f32.mrf.mxu0
        %v1435 = vadd.f32 0.0, %v1434
        %v1436 = vpop.f32.mrf.mxu0
        %v1437 = vadd.f32 0.0, %v1436
        %v1438 = vpop.f32.mrf.mxu0
        %v1439 = vadd.f32 0.0, %v1438
        %v1440 = vpop.f32.mrf.mxu0
        %v1441 = vadd.f32 0.0, %v1440
        %1442 = vmatprep.mubr.bf16.mxu0 %v977
        %1443 = vmatmul.mubr.bf16.gmra.mxu0 %v976
        %v1444 = vpop.f32.mrf.mxu0
        %v1445 = vadd.f32 0.0, %v1444
        %v1446 = vpop.f32.mrf.mxu0
        %v1447 = vadd.f32 0.0, %v1446
        %v1448 = vpop.f32.mrf.mxu0
        %v1449 = vadd.f32 0.0, %v1448
        %v1450 = vpop.f32.mrf.mxu0
        %v1451 = vadd.f32 0.0, %v1450
        %1452 = vmatprep.mubr.bf16.mxu0 %v980
        %1453 = vmatmul.mubr.bf16.gmra.mxu0 %v979
        %v1454 = vpop.f32.mrf.mxu0
        %v1455 = vadd.f32 0.0, %v1454
        %v1456 = vpop.f32.mrf.mxu0
        %v1457 = vadd.f32 0.0, %v1456
        %v1458 = vpop.f32.mrf.mxu0
        %v1459 = vadd.f32 0.0, %v1458
        %v1460 = vpop.f32.mrf.mxu0
        %v1461 = vadd.f32 0.0, %v1460
        %1462 = vdwg.mxu0
        %1463 = vmatprep.subr.bf16.mxu0 %v1221
        %1464 = vmatpush1.bf16.msra.mxu0 %v1220
        %1465 = vmatprep.subr.bf16.mxu0 %v1219
        %1466 = vmatpush1.bf16.msra.mxu0 %v1218
        %1467 = vmatprep.subr.bf16.mxu0 %v1217
        %1468 = vmatpush1.bf16.msra.mxu0 %v1216
        %1469 = vmatprep.subr.bf16.mxu0 %v1215
        %1470 = vmatpush1.bf16.msra.mxu0 %v1214
        %1471 = vmatprep.subr.bf16.mxu0 %v1213
        %1472 = vmatpush1.bf16.msra.mxu0 %v1212
        %1473 = vmatprep.subr.bf16.mxu0 %v1211
        %1474 = vmatpush1.bf16.msra.mxu0 %v1210
        %1475 = vmatprep.subr.bf16.mxu0 %v1209
        %1476 = vmatpush1.bf16.msra.mxu0 %v1208
        %1477 = vmatprep.subr.bf16.mxu0 %v1207
        %1478 = vmatpush1.bf16.msra.mxu0 %v1206
        %1479 = vmatprep.subr.bf16.mxu0 0
        %1480 = vmatpush2.bf16.msra.mxu0 0
        %1481 = vmatprep.subr.bf16.mxu0 0
        %1482 = vmatpush2.bf16.msra.mxu0 0
        %1483 = vmatprep.subr.bf16.mxu0 0
        %1484 = vmatpush2.bf16.msra.mxu0 0
        %1485 = vmatprep.subr.bf16.mxu0 0
        %1486 = vmatpush2.bf16.msra.mxu0 0
        %1487 = vmatprep.subr.bf16.mxu0 0
        %1488 = vmatpush2.bf16.msra.mxu0 0
        %1489 = vmatprep.subr.bf16.mxu0 0
        %1490 = vmatpush2.bf16.msra.mxu0 0
        %1491 = vmatprep.subr.bf16.mxu0 0
        %1492 = vmatpush2.bf16.msra.mxu0 0
        %1493 = vmatprep.subr.bf16.mxu0 0
        %1494 = vmatpush2.bf16.msra.mxu0 0
        %1495 = vmatprep.mubr.bf16.mxu0 0
        %1496 = vmatmul.mubr.bf16.gmra.mxu0 %v936
        %v1497 = vpop.f32.mrf.mxu0
        %v1498 = vadd.f32 %v1305, %v1497
        %v1499 = vpop.f32.mrf.mxu0
        %v1500 = vadd.f32 %v1307, %v1499
        %v1501 = vpop.f32.mrf.mxu0
        %v1502 = vadd.f32 %v1309, %v1501
        %v1503 = vpop.f32.mrf.mxu0
        %v1504 = vadd.f32 %v1311, %v1503
        %1505 = vmatprep.mubr.bf16.mxu0 0
        %1506 = vmatmul.mubr.bf16.gmra.mxu0 %v939
        %v1507 = vpop.f32.mrf.mxu0
        %v1508 = vadd.f32 %v1315, %v1507
        %v1509 = vpop.f32.mrf.mxu0
        %v1510 = vadd.f32 %v1317, %v1509
        %v1511 = vpop.f32.mrf.mxu0
        %v1512 = vadd.f32 %v1319, %v1511
        %v1513 = vpop.f32.mrf.mxu0
        %v1514 = vadd.f32 %v1321, %v1513
        %1515 = vmatprep.mubr.bf16.mxu0 0
        %1516 = vmatmul.mubr.bf16.gmra.mxu0 %v942
        %v1517 = vpop.f32.mrf.mxu0
        %v1518 = vadd.f32 %v1325, %v1517
        %v1519 = vpop.f32.mrf.mxu0
        %v1520 = vadd.f32 %v1327, %v1519
        %v1521 = vpop.f32.mrf.mxu0
        %v1522 = vadd.f32 %v1329, %v1521
        %v1523 = vpop.f32.mrf.mxu0
        %v1524 = vadd.f32 %v1331, %v1523
        %1525 = vmatprep.mubr.bf16.mxu0 0
        %1526 = vmatmul.mubr.bf16.gmra.mxu0 %v945
        %v1527 = vpop.f32.mrf.mxu0
        %v1528 = vadd.f32 %v1335, %v1527
        %v1529 = vpop.f32.mrf.mxu0
        %v1530 = vadd.f32 %v1337, %v1529
        %v1531 = vpop.f32.mrf.mxu0
        %v1532 = vadd.f32 %v1339, %v1531
        %v1533 = vpop.f32.mrf.mxu0
        %v1534 = vadd.f32 %v1341, %v1533
        %1535 = vmatprep.mubr.bf16.mxu0 0
        %1536 = vmatmul.mubr.bf16.gmra.mxu0 %v948
        %v1537 = vpop.f32.mrf.mxu0
        %v1538 = vadd.f32 %v1345, %v1537
        %v1539 = vpop.f32.mrf.mxu0
        %v1540 = vadd.f32 %v1347, %v1539
        %v1541 = vpop.f32.mrf.mxu0
        %v1542 = vadd.f32 %v1349, %v1541
        %v1543 = vpop.f32.mrf.mxu0
        %v1544 = vadd.f32 %v1351, %v1543
        %1545 = vmatprep.mubr.bf16.mxu0 0
        %1546 = vmatmul.mubr.bf16.gmra.mxu0 %v951
        %v1547 = vpop.f32.mrf.mxu0
        %v1548 = vadd.f32 %v1355, %v1547
        %v1549 = vpop.f32.mrf.mxu0
        %v1550 = vadd.f32 %v1357, %v1549
        %v1551 = vpop.f32.mrf.mxu0
        %v1552 = vadd.f32 %v1359, %v1551
        %v1553 = vpop.f32.mrf.mxu0
        %v1554 = vadd.f32 %v1361, %v1553
        %1555 = vmatprep.mubr.bf16.mxu0 0
        %1556 = vmatmul.mubr.bf16.gmra.mxu0 %v954
        %v1557 = vpop.f32.mrf.mxu0
        %v1558 = vadd.f32 %v1365, %v1557
        %v1559 = vpop.f32.mrf.mxu0
        %v1560 = vadd.f32 %v1367, %v1559
        %v1561 = vpop.f32.mrf.mxu0
        %v1562 = vadd.f32 %v1369, %v1561
        %v1563 = vpop.f32.mrf.mxu0
        %v1564 = vadd.f32 %v1371, %v1563
        %1565 = vmatprep.mubr.bf16.mxu0 0
        %1566 = vmatmul.mubr.bf16.gmra.mxu0 %v957
        %v1567 = vpop.f32.mrf.mxu0
        %v1568 = vadd.f32 %v1375, %v1567
        %v1569 = vpop.f32.mrf.mxu0
        %v1570 = vadd.f32 %v1377, %v1569
        %v1571 = vpop.f32.mrf.mxu0
        %v1572 = vadd.f32 %v1379, %v1571
        %v1573 = vpop.f32.mrf.mxu0
        %v1574 = vadd.f32 %v1381, %v1573
        %1575 = vmatprep.mubr.bf16.mxu0 0
        %1576 = vmatmul.mubr.bf16.gmra.mxu0 %v960
        %v1577 = vpop.f32.mrf.mxu0
        %v1578 = vadd.f32 %v1385, %v1577
        %v1579 = vpop.f32.mrf.mxu0
        %v1580 = vadd.f32 %v1387, %v1579
        %v1581 = vpop.f32.mrf.mxu0
        %v1582 = vadd.f32 %v1389, %v1581
        %v1583 = vpop.f32.mrf.mxu0
        %v1584 = vadd.f32 %v1391, %v1583
        %1585 = vmatprep.mubr.bf16.mxu0 0
        %1586 = vmatmul.mubr.bf16.gmra.mxu0 %v963
        %v1587 = vpop.f32.mrf.mxu0
        %v1588 = vadd.f32 %v1395, %v1587
        %v1589 = vpop.f32.mrf.mxu0
        %v1590 = vadd.f32 %v1397, %v1589
        %v1591 = vpop.f32.mrf.mxu0
        %v1592 = vadd.f32 %v1399, %v1591
        %v1593 = vpop.f32.mrf.mxu0
        %v1594 = vadd.f32 %v1401, %v1593
        %1595 = vmatprep.mubr.bf16.mxu0 0
        %1596 = vmatmul.mubr.bf16.gmra.mxu0 %v966
        %v1597 = vpop.f32.mrf.mxu0
        %v1598 = vadd.f32 %v1405, %v1597
        %v1599 = vpop.f32.mrf.mxu0
        %v1600 = vadd.f32 %v1407, %v1599
        %v1601 = vpop.f32.mrf.mxu0
        %v1602 = vadd.f32 %v1409, %v1601
        %v1603 = vpop.f32.mrf.mxu0
        %v1604 = vadd.f32 %v1411, %v1603
        %1605 = vmatprep.mubr.bf16.mxu0 0
        %1606 = vmatmul.mubr.bf16.gmra.mxu0 %v969
        %v1607 = vpop.f32.mrf.mxu0
        %v1608 = vadd.f32 %v1415, %v1607
        %v1609 = vpop.f32.mrf.mxu0
        %v1610 = vadd.f32 %v1417, %v1609
        %v1611 = vpop.f32.mrf.mxu0
        %v1612 = vadd.f32 %v1419, %v1611
        %v1613 = vpop.f32.mrf.mxu0
        %v1614 = vadd.f32 %v1421, %v1613
        %1615 = vmatprep.mubr.bf16.mxu0 0
        %1616 = vmatmul.mubr.bf16.gmra.mxu0 %v972
        %v1617 = vpop.f32.mrf.mxu0
        %v1618 = vadd.f32 %v1425, %v1617
        %v1619 = vpop.f32.mrf.mxu0
        %v1620 = vadd.f32 %v1427, %v1619
        %v1621 = vpop.f32.mrf.mxu0
        %v1622 = vadd.f32 %v1429, %v1621
        %v1623 = vpop.f32.mrf.mxu0
        %v1624 = vadd.f32 %v1431, %v1623
        %1625 = vmatprep.mubr.bf16.mxu0 0
        %1626 = vmatmul.mubr.bf16.gmra.mxu0 %v975
        %v1627 = vpop.f32.mrf.mxu0
        %v1628 = vadd.f32 %v1435, %v1627
        %v1629 = vpop.f32.mrf.mxu0
        %v1630 = vadd.f32 %v1437, %v1629
        %v1631 = vpop.f32.mrf.mxu0
        %v1632 = vadd.f32 %v1439, %v1631
        %v1633 = vpop.f32.mrf.mxu0
        %v1634 = vadd.f32 %v1441, %v1633
        %1635 = vmatprep.mubr.bf16.mxu0 0
        %1636 = vmatmul.mubr.bf16.gmra.mxu0 %v978
        %v1637 = vpop.f32.mrf.mxu0
        %v1638 = vadd.f32 %v1445, %v1637
        %v1639 = vpop.f32.mrf.mxu0
        %v1640 = vadd.f32 %v1447, %v1639
        %v1641 = vpop.f32.mrf.mxu0
        %v1642 = vadd.f32 %v1449, %v1641
        %v1643 = vpop.f32.mrf.mxu0
        %v1644 = vadd.f32 %v1451, %v1643
        %1645 = vmatprep.mubr.bf16.mxu0 0
        %1646 = vmatmul.mubr.bf16.gmra.mxu0 %v981
        %v1647 = vpop.f32.mrf.mxu0
        %v1648 = vadd.f32 %v1455, %v1647
        %v1649 = vpop.f32.mrf.mxu0
        %v1650 = vadd.f32 %v1457, %v1649
        %v1651 = vpop.f32.mrf.mxu0
        %v1652 = vadd.f32 %v1459, %v1651
        %v1653 = vpop.f32.mrf.mxu0
        %v1654 = vadd.f32 %v1461, %v1653
        %1655 = vdwg.mxu0
        %v1656 = vadd.f32 %v598, %v1498
        %v1657 = vadd.f32 %v599, %v1500
        %v1658 = vadd.f32 %v600, %v1502
        %v1659 = vadd.f32 %v601, %v1504
        %v1660 = vadd.f32 %v602, %v1508
        %v1661 = vadd.f32 %v603, %v1510
        %v1662 = vadd.f32 %v604, %v1512
        %v1663 = vadd.f32 %v605, %v1514
        %v1664 = vadd.f32 %v606, %v1518
        %v1665 = vadd.f32 %v607, %v1520
        %v1666 = vadd.f32 %v608, %v1522
        %v1667 = vadd.f32 %v609, %v1524
        %v1668 = vadd.f32 %v610, %v1528
        %v1669 = vadd.f32 %v611, %v1530
        %v1670 = vadd.f32 %v612, %v1532
        %v1671 = vadd.f32 %v613, %v1534
        %v1672 = vadd.f32 %v614, %v1538
        %v1673 = vadd.f32 %v615, %v1540
        %v1674 = vadd.f32 %v616, %v1542
        %v1675 = vadd.f32 %v617, %v1544
        %v1676 = vadd.f32 %v618, %v1548
        %v1677 = vadd.f32 %v619, %v1550
        %v1678 = vadd.f32 %v620, %v1552
        %v1679 = vadd.f32 %v621, %v1554
        %v1680 = vadd.f32 %v622, %v1558
        %v1681 = vadd.f32 %v623, %v1560
        %v1682 = vadd.f32 %v624, %v1562
        %v1683 = vadd.f32 %v625, %v1564
        %v1684 = vadd.f32 %v626, %v1568
        %v1685 = vadd.f32 %v627, %v1570
        %v1686 = vadd.f32 %v628, %v1572
        %v1687 = vadd.f32 %v629, %v1574
        %v1688 = vadd.f32 %v630, %v1578
        %v1689 = vadd.f32 %v631, %v1580
        %v1690 = vadd.f32 %v632, %v1582
        %v1691 = vadd.f32 %v633, %v1584
        %v1692 = vadd.f32 %v634, %v1588
        %v1693 = vadd.f32 %v635, %v1590
        %v1694 = vadd.f32 %v636, %v1592
        %v1695 = vadd.f32 %v637, %v1594
        %v1696 = vadd.f32 %v638, %v1598
        %v1697 = vadd.f32 %v639, %v1600
        %v1698 = vadd.f32 %v640, %v1602
        %v1699 = vadd.f32 %v641, %v1604
        %v1700 = vadd.f32 %v642, %v1608
        %v1701 = vadd.f32 %v643, %v1610
        %v1702 = vadd.f32 %v644, %v1612
        %v1703 = vadd.f32 %v645, %v1614
        %v1704 = vadd.f32 %v646, %v1618
        %v1705 = vadd.f32 %v647, %v1620
        %v1706 = vadd.f32 %v648, %v1622
        %v1707 = vadd.f32 %v649, %v1624
        %v1708 = vadd.f32 %v650, %v1628
        %v1709 = vadd.f32 %v651, %v1630
        %v1710 = vadd.f32 %v652, %v1632
        %v1711 = vadd.f32 %v653, %v1634
        %v1712 = vadd.f32 %v654, %v1638
        %v1713 = vadd.f32 %v655, %v1640
        %v1714 = vadd.f32 %v656, %v1642
        %v1715 = vadd.f32 %v657, %v1644
        %v1716 = vadd.f32 %v658, %v1648
        %v1717 = vadd.f32 %v659, %v1650
        %v1718 = vadd.f32 %v660, %v1652
        %v1719 = vadd.f32 %v661, %v1654
        %1720 = vst [vmem:[#allocation2] sm:$0xff] %v1656
        %1721 = vst [vmem:[#allocation2 + $0x8] sm:$0xff] %v1657
        %1722 = vst [vmem:[#allocation2 + $0x10] sm:$0xff] %v1658
        %1723 = vst [vmem:[#allocation2 + $0x18] sm:$0xff] %v1659
        %1724 = vst [vmem:[#allocation2 + $0x20] sm:$0xff] %v1660
        %1725 = vst [vmem:[#allocation2 + $0x28] sm:$0xff] %v1661
        %1726 = vst [vmem:[#allocation2 + $0x30] sm:$0xff] %v1662
        %1727 = vst [vmem:[#allocation2 + $0x38] sm:$0xff] %v1663
        %1728 = vst [vmem:[#allocation2 + $0x40] sm:$0xff] %v1664
        %1729 = vst [vmem:[#allocation2 + $0x48] sm:$0xff] %v1665
        %1730 = vst [vmem:[#allocation2 + $0x50] sm:$0xff] %v1666
        %1731 = vst [vmem:[#allocation2 + $0x58] sm:$0xff] %v1667
        %1732 = vst [vmem:[#allocation2 + $0x60] sm:$0xff] %v1668
        %1733 = vst [vmem:[#allocation2 + $0x68] sm:$0xff] %v1669
        %1734 = vst [vmem:[#allocation2 + $0x70] sm:$0xff] %v1670
        %1735 = vst [vmem:[#allocation2 + $0x78] sm:$0xff] %v1671
        %1736 = vst [vmem:[#allocation2 + $0x80] sm:$0xff] %v1672
        %1737 = vst [vmem:[#allocation2 + $0x88] sm:$0xff] %v1673
        %1738 = vst [vmem:[#allocation2 + $0x90] sm:$0xff] %v1674
        %1739 = vst [vmem:[#allocation2 + $0x98] sm:$0xff] %v1675
        %1740 = vst [vmem:[#allocation2 + $0xa0] sm:$0xff] %v1676
        %1741 = vst [vmem:[#allocation2 + $0xa8] sm:$0xff] %v1677
        %1742 = vst [vmem:[#allocation2 + $0xb0] sm:$0xff] %v1678
        %1743 = vst [vmem:[#allocation2 + $0xb8] sm:$0xff] %v1679
        %1744 = vst [vmem:[#allocation2 + $0xc0] sm:$0xff] %v1680
        %1745 = vst [vmem:[#allocation2 + $0xc8] sm:$0xff] %v1681
        %1746 = vst [vmem:[#allocation2 + $0xd0] sm:$0xff] %v1682
        %1747 = vst [vmem:[#allocation2 + $0xd8] sm:$0xff] %v1683
        %1748 = vst [vmem:[#allocation2 + $0xe0] sm:$0xff] %v1684
        %1749 = vst [vmem:[#allocation2 + $0xe8] sm:$0xff] %v1685
        %1750 = vst [vmem:[#allocation2 + $0xf0] sm:$0xff] %v1686
        %1751 = vst [vmem:[#allocation2 + $0xf8] sm:$0xff] %v1687
        %1752 = vst [vmem:[#allocation2 + $0x100] sm:$0xff] %v1688
        %1753 = vst [vmem:[#allocation2 + $0x108] sm:$0xff] %v1689
        %1754 = vst [vmem:[#allocation2 + $0x110] sm:$0xff] %v1690
        %1755 = vst [vmem:[#allocation2 + $0x118] sm:$0xff] %v1691
        %1756 = vst [vmem:[#allocation2 + $0x120] sm:$0xff] %v1692
        %1757 = vst [vmem:[#allocation2 + $0x128] sm:$0xff] %v1693
        %1758 = vst [vmem:[#allocation2 + $0x130] sm:$0xff] %v1694
        %1759 = vst [vmem:[#allocation2 + $0x138] sm:$0xff] %v1695
        %1760 = vst [vmem:[#allocation2 + $0x140] sm:$0xff] %v1696
        %1761 = vst [vmem:[#allocation2 + $0x148] sm:$0xff] %v1697
        %1762 = vst [vmem:[#allocation2 + $0x150] sm:$0xff] %v1698
        %1763 = vst [vmem:[#allocation2 + $0x158] sm:$0xff] %v1699
        %1764 = vst [vmem:[#allocation2 + $0x160] sm:$0xff] %v1700
        %1765 = vst [vmem:[#allocation2 + $0x168] sm:$0xff] %v1701
        %1766 = vst [vmem:[#allocation2 + $0x170] sm:$0xff] %v1702
        %1767 = vst [vmem:[#allocation2 + $0x178] sm:$0xff] %v1703
        %1768 = vst [vmem:[#allocation2 + $0x180] sm:$0xff] %v1704
        %1769 = vst [vmem:[#allocation2 + $0x188] sm:$0xff] %v1705
        %1770 = vst [vmem:[#allocation2 + $0x190] sm:$0xff] %v1706
        %1771 = vst [vmem:[#allocation2 + $0x198] sm:$0xff] %v1707
        %1772 = vst [vmem:[#allocation2 + $0x1a0] sm:$0xff] %v1708
        %1773 = vst [vmem:[#allocation2 + $0x1a8] sm:$0xff] %v1709
        %1774 = vst [vmem:[#allocation2 + $0x1b0] sm:$0xff] %v1710
        %1775 = vst [vmem:[#allocation2 + $0x1b8] sm:$0xff] %v1711
        %1776 = vst [vmem:[#allocation2 + $0x1c0] sm:$0xff] %v1712
        %1777 = vst [vmem:[#allocation2 + $0x1c8] sm:$0xff] %v1713
        %1778 = vst [vmem:[#allocation2 + $0x1d0] sm:$0xff] %v1714
        %1779 = vst [vmem:[#allocation2 + $0x1d8] sm:$0xff] %v1715
        %1780 = vst [vmem:[#allocation2 + $0x1e0] sm:$0xff] %v1716
        %1781 = vst [vmem:[#allocation2 + $0x1e8] sm:$0xff] %v1717
        %1782 = vst [vmem:[#allocation2 + $0x1f0] sm:$0xff] %v1718
        %1783 = vst [vmem:[#allocation2 + $0x1f8] sm:$0xff] %v1719
        %p1784 = scmp.eq.s32.totalorder %s26, 2
        // Predicated region
        $region71: #{_lambda_.7} parent=61 // pred_check
          %p1785 = pneg %p1784
        $region72: #{_lambda_.7} parent=61 // pred_check_branch
          %1787 = sbr.rel (%p1785) target = $region74
        $region73: #{_lambda_.7} parent=61 // pred_region
          %v1788 = vld [vmem:[#allocation2] sm:$0xff]
          %v1789 = vld [vmem:[#allocation2 + $0x8] sm:$0xff]
          %v1790 = vld [vmem:[#allocation2 + $0x10] sm:$0xff]
          %v1791 = vld [vmem:[#allocation2 + $0x18] sm:$0xff]
          %v1792 = vld [vmem:[#allocation2 + $0x20] sm:$0xff]
          %v1793 = vld [vmem:[#allocation2 + $0x28] sm:$0xff]
          %v1794 = vld [vmem:[#allocation2 + $0x30] sm:$0xff]
          %v1795 = vld [vmem:[#allocation2 + $0x38] sm:$0xff]
          %v1796 = vld [vmem:[#allocation2 + $0x40] sm:$0xff]
          %v1797 = vld [vmem:[#allocation2 + $0x48] sm:$0xff]
          %v1798 = vld [vmem:[#allocation2 + $0x50] sm:$0xff]
          %v1799 = vld [vmem:[#allocation2 + $0x58] sm:$0xff]
          %v1800 = vld [vmem:[#allocation2 + $0x60] sm:$0xff]
          %v1801 = vld [vmem:[#allocation2 + $0x68] sm:$0xff]
          %v1802 = vld [vmem:[#allocation2 + $0x70] sm:$0xff]
          %v1803 = vld [vmem:[#allocation2 + $0x78] sm:$0xff]
          %v1804 = vld [vmem:[#allocation2 + $0x80] sm:$0xff]
          %v1805 = vld [vmem:[#allocation2 + $0x88] sm:$0xff]
          %v1806 = vld [vmem:[#allocation2 + $0x90] sm:$0xff]
          %v1807 = vld [vmem:[#allocation2 + $0x98] sm:$0xff]
          %v1808 = vld [vmem:[#allocation2 + $0xa0] sm:$0xff]
          %v1809 = vld [vmem:[#allocation2 + $0xa8] sm:$0xff]
          %v1810 = vld [vmem:[#allocation2 + $0xb0] sm:$0xff]
          %v1811 = vld [vmem:[#allocation2 + $0xb8] sm:$0xff]
          %v1812 = vld [vmem:[#allocation2 + $0xc0] sm:$0xff]
          %v1813 = vld [vmem:[#allocation2 + $0xc8] sm:$0xff]
          %v1814 = vld [vmem:[#allocation2 + $0xd0] sm:$0xff]
          %v1815 = vld [vmem:[#allocation2 + $0xd8] sm:$0xff]
          %v1816 = vld [vmem:[#allocation2 + $0xe0] sm:$0xff]
          %v1817 = vld [vmem:[#allocation2 + $0xe8] sm:$0xff]
          %v1818 = vld [vmem:[#allocation2 + $0xf0] sm:$0xff]
          %v1819 = vld [vmem:[#allocation2 + $0xf8] sm:$0xff]
          %v1820 = vld [vmem:[#allocation2 + $0x100] sm:$0xff]
          %v1821 = vld [vmem:[#allocation2 + $0x108] sm:$0xff]
          %v1822 = vld [vmem:[#allocation2 + $0x110] sm:$0xff]
          %v1823 = vld [vmem:[#allocation2 + $0x118] sm:$0xff]
          %v1824 = vld [vmem:[#allocation2 + $0x120] sm:$0xff]
          %v1825 = vld [vmem:[#allocation2 + $0x128] sm:$0xff]
          %v1826 = vld [vmem:[#allocation2 + $0x130] sm:$0xff]
          %v1827 = vld [vmem:[#allocation2 + $0x138] sm:$0xff]
          %v1828 = vld [vmem:[#allocation2 + $0x140] sm:$0xff]
          %v1829 = vld [vmem:[#allocation2 + $0x148] sm:$0xff]
          %v1830 = vld [vmem:[#allocation2 + $0x150] sm:$0xff]
          %v1831 = vld [vmem:[#allocation2 + $0x158] sm:$0xff]
          %v1832 = vld [vmem:[#allocation2 + $0x160] sm:$0xff]
          %v1833 = vld [vmem:[#allocation2 + $0x168] sm:$0xff]
          %v1834 = vld [vmem:[#allocation2 + $0x170] sm:$0xff]
          %v1835 = vld [vmem:[#allocation2 + $0x178] sm:$0xff]
          %v1836 = vld [vmem:[#allocation2 + $0x180] sm:$0xff]
          %v1837 = vld [vmem:[#allocation2 + $0x188] sm:$0xff]
          %v1838 = vld [vmem:[#allocation2 + $0x190] sm:$0xff]
          %v1839 = vld [vmem:[#allocation2 + $0x198] sm:$0xff]
          %v1840 = vld [vmem:[#allocation2 + $0x1a0] sm:$0xff]
          %v1841 = vld [vmem:[#allocation2 + $0x1a8] sm:$0xff]
          %v1842 = vld [vmem:[#allocation2 + $0x1b0] sm:$0xff]
          %v1843 = vld [vmem:[#allocation2 + $0x1b8] sm:$0xff]
          %v1844 = vld [vmem:[#allocation2 + $0x1c0] sm:$0xff]
          %v1845 = vld [vmem:[#allocation2 + $0x1c8] sm:$0xff]
          %v1846 = vld [vmem:[#allocation2 + $0x1d0] sm:$0xff]
          %v1847 = vld [vmem:[#allocation2 + $0x1d8] sm:$0xff]
          %v1848 = vld [vmem:[#allocation2 + $0x1e0] sm:$0xff]
          %v1849 = vld [vmem:[#allocation2 + $0x1e8] sm:$0xff]
          %v1850 = vld [vmem:[#allocation2 + $0x1f0] sm:$0xff]
          %v1851 = vld [vmem:[#allocation2 + $0x1f8] sm:$0xff]
          %v1852 = vld [vmem:[%s508] sm:$0x3]
          %v1854 = vlaneseq
          %v1855 = vshrl.u32 %v1854, 7
          %v1856 = vsub.s32 0, %v1855
          %v1857 = vrot.slane %v1852, %v1856
          %v1858 = vlaneseq
          %v1859 = vshrl.u32 %v1858, 7
          %v1860 = vsub.s32 1, %v1859
          %v1861 = vrot.slane %v1852, %v1860
          %v1864 = vmul.f32 %v1788, %v1857
          %v1865 = vmul.f32 %v1789, %v1861
          %v1866 = vmul.f32 %v1790, %v1857
          %v1867 = vmul.f32 %v1791, %v1861
          %v1868 = vmul.f32 %v1792, %v1857
          %v1869 = vmul.f32 %v1793, %v1861
          %v1870 = vmul.f32 %v1794, %v1857
          %v1871 = vmul.f32 %v1795, %v1861
          %v1872 = vmul.f32 %v1796, %v1857
          %v1873 = vmul.f32 %v1797, %v1861
          %v1874 = vmul.f32 %v1798, %v1857
          %v1875 = vmul.f32 %v1799, %v1861
          %v1876 = vmul.f32 %v1800, %v1857
          %v1877 = vmul.f32 %v1801, %v1861
          %v1878 = vmul.f32 %v1802, %v1857
          %v1879 = vmul.f32 %v1803, %v1861
          %v1880 = vmul.f32 %v1804, %v1857
          %v1881 = vmul.f32 %v1805, %v1861
          %v1882 = vmul.f32 %v1806, %v1857
          %v1883 = vmul.f32 %v1807, %v1861
          %v1884 = vmul.f32 %v1808, %v1857
          %v1885 = vmul.f32 %v1809, %v1861
          %v1886 = vmul.f32 %v1810, %v1857
          %v1887 = vmul.f32 %v1811, %v1861
          %v1888 = vmul.f32 %v1812, %v1857
          %v1889 = vmul.f32 %v1813, %v1861
          %v1890 = vmul.f32 %v1814, %v1857
          %v1891 = vmul.f32 %v1815, %v1861
          %v1892 = vmul.f32 %v1816, %v1857
          %v1893 = vmul.f32 %v1817, %v1861
          %v1894 = vmul.f32 %v1818, %v1857
          %v1895 = vmul.f32 %v1819, %v1861
          %v1896 = vmul.f32 %v1820, %v1857
          %v1897 = vmul.f32 %v1821, %v1861
          %v1898 = vmul.f32 %v1822, %v1857
          %v1899 = vmul.f32 %v1823, %v1861
          %v1900 = vmul.f32 %v1824, %v1857
          %v1901 = vmul.f32 %v1825, %v1861
          %v1902 = vmul.f32 %v1826, %v1857
          %v1903 = vmul.f32 %v1827, %v1861
          %v1904 = vmul.f32 %v1828, %v1857
          %v1905 = vmul.f32 %v1829, %v1861
          %v1906 = vmul.f32 %v1830, %v1857
          %v1907 = vmul.f32 %v1831, %v1861
          %v1908 = vmul.f32 %v1832, %v1857
          %v1909 = vmul.f32 %v1833, %v1861
          %v1910 = vmul.f32 %v1834, %v1857
          %v1911 = vmul.f32 %v1835, %v1861
          %v1912 = vmul.f32 %v1836, %v1857
          %v1913 = vmul.f32 %v1837, %v1861
          %v1914 = vmul.f32 %v1838, %v1857
          %v1915 = vmul.f32 %v1839, %v1861
          %v1916 = vmul.f32 %v1840, %v1857
          %v1917 = vmul.f32 %v1841, %v1861
          %v1918 = vmul.f32 %v1842, %v1857
          %v1919 = vmul.f32 %v1843, %v1861
          %v1920 = vmul.f32 %v1844, %v1857
          %v1921 = vmul.f32 %v1845, %v1861
          %v1922 = vmul.f32 %v1846, %v1857
          %v1923 = vmul.f32 %v1847, %v1861
          %v1924 = vmul.f32 %v1848, %v1857
          %v1925 = vmul.f32 %v1849, %v1861
          %v1926 = vmul.f32 %v1850, %v1857
          %v1927 = vmul.f32 %v1851, %v1861
          %v1928 = vld [vmem:[%s513] sm:$0x3]
          %v1930 = vlaneseq
          %v1931 = vshrl.u32 %v1930, 7
          %v1932 = vsub.s32 0, %v1931
          %v1933 = vrot.slane %v1928, %v1932
          %v1934 = vlaneseq
          %v1935 = vshrl.u32 %v1934, 7
          %v1936 = vsub.s32 1, %v1935
          %v1937 = vrot.slane %v1928, %v1936
          %v1940 = vadd.f32 %v1864, %v1933
          %v1941 = vadd.f32 %v1865, %v1937
          %v1942 = vadd.f32 %v1866, %v1933
          %v1943 = vadd.f32 %v1867, %v1937
          %v1944 = vadd.f32 %v1868, %v1933
          %v1945 = vadd.f32 %v1869, %v1937
          %v1946 = vadd.f32 %v1870, %v1933
          %v1947 = vadd.f32 %v1871, %v1937
          %v1948 = vadd.f32 %v1872, %v1933
          %v1949 = vadd.f32 %v1873, %v1937
          %v1950 = vadd.f32 %v1874, %v1933
          %v1951 = vadd.f32 %v1875, %v1937
          %v1952 = vadd.f32 %v1876, %v1933
          %v1953 = vadd.f32 %v1877, %v1937
          %v1954 = vadd.f32 %v1878, %v1933
          %v1955 = vadd.f32 %v1879, %v1937
          %v1956 = vadd.f32 %v1880, %v1933
          %v1957 = vadd.f32 %v1881, %v1937
          %v1958 = vadd.f32 %v1882, %v1933
          %v1959 = vadd.f32 %v1883, %v1937
          %v1960 = vadd.f32 %v1884, %v1933
          %v1961 = vadd.f32 %v1885, %v1937
          %v1962 = vadd.f32 %v1886, %v1933
          %v1963 = vadd.f32 %v1887, %v1937
          %v1964 = vadd.f32 %v1888, %v1933
          %v1965 = vadd.f32 %v1889, %v1937
          %v1966 = vadd.f32 %v1890, %v1933
          %v1967 = vadd.f32 %v1891, %v1937
          %v1968 = vadd.f32 %v1892, %v1933
          %v1969 = vadd.f32 %v1893, %v1937
          %v1970 = vadd.f32 %v1894, %v1933
          %v1971 = vadd.f32 %v1895, %v1937
          %v1972 = vadd.f32 %v1896, %v1933
          %v1973 = vadd.f32 %v1897, %v1937
          %v1974 = vadd.f32 %v1898, %v1933
          %v1975 = vadd.f32 %v1899, %v1937
          %v1976 = vadd.f32 %v1900, %v1933
          %v1977 = vadd.f32 %v1901, %v1937
          %v1978 = vadd.f32 %v1902, %v1933
          %v1979 = vadd.f32 %v1903, %v1937
          %v1980 = vadd.f32 %v1904, %v1933
          %v1981 = vadd.f32 %v1905, %v1937
          %v1982 = vadd.f32 %v1906, %v1933
          %v1983 = vadd.f32 %v1907, %v1937
          %v1984 = vadd.f32 %v1908, %v1933
          %v1985 = vadd.f32 %v1909, %v1937
          %v1986 = vadd.f32 %v1910, %v1933
          %v1987 = vadd.f32 %v1911, %v1937
          %v1988 = vadd.f32 %v1912, %v1933
          %v1989 = vadd.f32 %v1913, %v1937
          %v1990 = vadd.f32 %v1914, %v1933
          %v1991 = vadd.f32 %v1915, %v1937
          %v1992 = vadd.f32 %v1916, %v1933
          %v1993 = vadd.f32 %v1917, %v1937
          %v1994 = vadd.f32 %v1918, %v1933
          %v1995 = vadd.f32 %v1919, %v1937
          %v1996 = vadd.f32 %v1920, %v1933
          %v1997 = vadd.f32 %v1921, %v1937
          %v1998 = vadd.f32 %v1922, %v1933
          %v1999 = vadd.f32 %v1923, %v1937
          %v2000 = vadd.f32 %v1924, %v1933
          %v2001 = vadd.f32 %v1925, %v1937
          %v2002 = vadd.f32 %v1926, %v1933
          %v2003 = vadd.f32 %v1927, %v1937
          %vm2004 = vcmp.gt.f32.partialorder %v1940, 0.0
          %vm2005 = vcmp.gt.f32.partialorder %v1941, 0.0
          %vm2006 = vcmp.gt.f32.partialorder %v1942, 0.0
          %vm2007 = vcmp.gt.f32.partialorder %v1943, 0.0
          %vm2008 = vcmp.gt.f32.partialorder %v1944, 0.0
          %vm2009 = vcmp.gt.f32.partialorder %v1945, 0.0
          %vm2010 = vcmp.gt.f32.partialorder %v1946, 0.0
          %vm2011 = vcmp.gt.f32.partialorder %v1947, 0.0
          %vm2012 = vcmp.gt.f32.partialorder %v1948, 0.0
          %vm2013 = vcmp.gt.f32.partialorder %v1949, 0.0
          %vm2014 = vcmp.gt.f32.partialorder %v1950, 0.0
          %vm2015 = vcmp.gt.f32.partialorder %v1951, 0.0
          %vm2016 = vcmp.gt.f32.partialorder %v1952, 0.0
          %vm2017 = vcmp.gt.f32.partialorder %v1953, 0.0
          %vm2018 = vcmp.gt.f32.partialorder %v1954, 0.0
          %vm2019 = vcmp.gt.f32.partialorder %v1955, 0.0
          %vm2020 = vcmp.gt.f32.partialorder %v1956, 0.0
          %vm2021 = vcmp.gt.f32.partialorder %v1957, 0.0
          %vm2022 = vcmp.gt.f32.partialorder %v1958, 0.0
          %vm2023 = vcmp.gt.f32.partialorder %v1959, 0.0
          %vm2024 = vcmp.gt.f32.partialorder %v1960, 0.0
          %vm2025 = vcmp.gt.f32.partialorder %v1961, 0.0
          %vm2026 = vcmp.gt.f32.partialorder %v1962, 0.0
          %vm2027 = vcmp.gt.f32.partialorder %v1963, 0.0
          %vm2028 = vcmp.gt.f32.partialorder %v1964, 0.0
          %vm2029 = vcmp.gt.f32.partialorder %v1965, 0.0
          %vm2030 = vcmp.gt.f32.partialorder %v1966, 0.0
          %vm2031 = vcmp.gt.f32.partialorder %v1967, 0.0
          %vm2032 = vcmp.gt.f32.partialorder %v1968, 0.0
          %vm2033 = vcmp.gt.f32.partialorder %v1969, 0.0
          %vm2034 = vcmp.gt.f32.partialorder %v1970, 0.0
          %vm2035 = vcmp.gt.f32.partialorder %v1971, 0.0
          %vm2036 = vcmp.gt.f32.partialorder %v1972, 0.0
          %vm2037 = vcmp.gt.f32.partialorder %v1973, 0.0
          %vm2038 = vcmp.gt.f32.partialorder %v1974, 0.0
          %vm2039 = vcmp.gt.f32.partialorder %v1975, 0.0
          %vm2040 = vcmp.gt.f32.partialorder %v1976, 0.0
          %vm2041 = vcmp.gt.f32.partialorder %v1977, 0.0
          %vm2042 = vcmp.gt.f32.partialorder %v1978, 0.0
          %vm2043 = vcmp.gt.f32.partialorder %v1979, 0.0
          %vm2044 = vcmp.gt.f32.partialorder %v1980, 0.0
          %vm2045 = vcmp.gt.f32.partialorder %v1981, 0.0
          %vm2046 = vcmp.gt.f32.partialorder %v1982, 0.0
          %vm2047 = vcmp.gt.f32.partialorder %v1983, 0.0
          %vm2048 = vcmp.gt.f32.partialorder %v1984, 0.0
          %vm2049 = vcmp.gt.f32.partialorder %v1985, 0.0
          %vm2050 = vcmp.gt.f32.partialorder %v1986, 0.0
          %vm2051 = vcmp.gt.f32.partialorder %v1987, 0.0
          %vm2052 = vcmp.gt.f32.partialorder %v1988, 0.0
          %vm2053 = vcmp.gt.f32.partialorder %v1989, 0.0
          %vm2054 = vcmp.gt.f32.partialorder %v1990, 0.0
          %vm2055 = vcmp.gt.f32.partialorder %v1991, 0.0
          %vm2056 = vcmp.gt.f32.partialorder %v1992, 0.0
          %vm2057 = vcmp.gt.f32.partialorder %v1993, 0.0
          %vm2058 = vcmp.gt.f32.partialorder %v1994, 0.0
          %vm2059 = vcmp.gt.f32.partialorder %v1995, 0.0
          %vm2060 = vcmp.gt.f32.partialorder %v1996, 0.0
          %vm2061 = vcmp.gt.f32.partialorder %v1997, 0.0
          %vm2062 = vcmp.gt.f32.partialorder %v1998, 0.0
          %vm2063 = vcmp.gt.f32.partialorder %v1999, 0.0
          %vm2064 = vcmp.gt.f32.partialorder %v2000, 0.0
          %vm2065 = vcmp.gt.f32.partialorder %v2001, 0.0
          %vm2066 = vcmp.gt.f32.partialorder %v2002, 0.0
          %vm2067 = vcmp.gt.f32.partialorder %v2003, 0.0
          %v2068 = vmul.f32 %v1940, 0.1
          %v2069 = vmul.f32 %v1941, 0.1
          %v2070 = vmul.f32 %v1942, 0.1
          %v2071 = vmul.f32 %v1943, 0.1
          %v2072 = vmul.f32 %v1944, 0.1
          %v2073 = vmul.f32 %v1945, 0.1
          %v2074 = vmul.f32 %v1946, 0.1
          %v2075 = vmul.f32 %v1947, 0.1
          %v2076 = vmul.f32 %v1948, 0.1
          %v2077 = vmul.f32 %v1949, 0.1
          %v2078 = vmul.f32 %v1950, 0.1
          %v2079 = vmul.f32 %v1951, 0.1
          %v2080 = vmul.f32 %v1952, 0.1
          %v2081 = vmul.f32 %v1953, 0.1
          %v2082 = vmul.f32 %v1954, 0.1
          %v2083 = vmul.f32 %v1955, 0.1
          %v2084 = vmul.f32 %v1956, 0.1
          %v2085 = vmul.f32 %v1957, 0.1
          %v2086 = vmul.f32 %v1958, 0.1
          %v2087 = vmul.f32 %v1959, 0.1
          %v2088 = vmul.f32 %v1960, 0.1
          %v2089 = vmul.f32 %v1961, 0.1
          %v2090 = vmul.f32 %v1962, 0.1
          %v2091 = vmul.f32 %v1963, 0.1
          %v2092 = vmul.f32 %v1964, 0.1
          %v2093 = vmul.f32 %v1965, 0.1
          %v2094 = vmul.f32 %v1966, 0.1
          %v2095 = vmul.f32 %v1967, 0.1
          %v2096 = vmul.f32 %v1968, 0.1
          %v2097 = vmul.f32 %v1969, 0.1
          %v2098 = vmul.f32 %v1970, 0.1
          %v2099 = vmul.f32 %v1971, 0.1
          %v2100 = vmul.f32 %v1972, 0.1
          %v2101 = vmul.f32 %v1973, 0.1
          %v2102 = vmul.f32 %v1974, 0.1
          %v2103 = vmul.f32 %v1975, 0.1
          %v2104 = vmul.f32 %v1976, 0.1
          %v2105 = vmul.f32 %v1977, 0.1
          %v2106 = vmul.f32 %v1978, 0.1
          %v2107 = vmul.f32 %v1979, 0.1
          %v2108 = vmul.f32 %v1980, 0.1
          %v2109 = vmul.f32 %v1981, 0.1
          %v2110 = vmul.f32 %v1982, 0.1
          %v2111 = vmul.f32 %v1983, 0.1
          %v2112 = vmul.f32 %v1984, 0.1
          %v2113 = vmul.f32 %v1985, 0.1
          %v2114 = vmul.f32 %v1986, 0.1
          %v2115 = vmul.f32 %v1987, 0.1
          %v2116 = vmul.f32 %v1988, 0.1
          %v2117 = vmul.f32 %v1989, 0.1
          %v2118 = vmul.f32 %v1990, 0.1
          %v2119 = vmul.f32 %v1991, 0.1
          %v2120 = vmul.f32 %v1992, 0.1
          %v2121 = vmul.f32 %v1993, 0.1
          %v2122 = vmul.f32 %v1994, 0.1
          %v2123 = vmul.f32 %v1995, 0.1
          %v2124 = vmul.f32 %v1996, 0.1
          %v2125 = vmul.f32 %v1997, 0.1
          %v2126 = vmul.f32 %v1998, 0.1
          %v2127 = vmul.f32 %v1999, 0.1
          %v2128 = vmul.f32 %v2000, 0.1
          %v2129 = vmul.f32 %v2001, 0.1
          %v2130 = vmul.f32 %v2002, 0.1
          %v2131 = vmul.f32 %v2003, 0.1
          %v2132 = vsel %vm2004, %v1940, %v2068
          %v2133 = vsel %vm2005, %v1941, %v2069
          %v2134 = vsel %vm2006, %v1942, %v2070
          %v2135 = vsel %vm2007, %v1943, %v2071
          %v2136 = vsel %vm2008, %v1944, %v2072
          %v2137 = vsel %vm2009, %v1945, %v2073
          %v2138 = vsel %vm2010, %v1946, %v2074
          %v2139 = vsel %vm2011, %v1947, %v2075
          %v2140 = vsel %vm2012, %v1948, %v2076
          %v2141 = vsel %vm2013, %v1949, %v2077
          %v2142 = vsel %vm2014, %v1950, %v2078
          %v2143 = vsel %vm2015, %v1951, %v2079
          %v2144 = vsel %vm2016, %v1952, %v2080
          %v2145 = vsel %vm2017, %v1953, %v2081
          %v2146 = vsel %vm2018, %v1954, %v2082
          %v2147 = vsel %vm2019, %v1955, %v2083
          %v2148 = vsel %vm2020, %v1956, %v2084
          %v2149 = vsel %vm2021, %v1957, %v2085
          %v2150 = vsel %vm2022, %v1958, %v2086
          %v2151 = vsel %vm2023, %v1959, %v2087
          %v2152 = vsel %vm2024, %v1960, %v2088
          %v2153 = vsel %vm2025, %v1961, %v2089
          %v2154 = vsel %vm2026, %v1962, %v2090
          %v2155 = vsel %vm2027, %v1963, %v2091
          %v2156 = vsel %vm2028, %v1964, %v2092
          %v2157 = vsel %vm2029, %v1965, %v2093
          %v2158 = vsel %vm2030, %v1966, %v2094
          %v2159 = vsel %vm2031, %v1967, %v2095
          %v2160 = vsel %vm2032, %v1968, %v2096
          %v2161 = vsel %vm2033, %v1969, %v2097
          %v2162 = vsel %vm2034, %v1970, %v2098
          %v2163 = vsel %vm2035, %v1971, %v2099
          %v2164 = vsel %vm2036, %v1972, %v2100
          %v2165 = vsel %vm2037, %v1973, %v2101
          %v2166 = vsel %vm2038, %v1974, %v2102
          %v2167 = vsel %vm2039, %v1975, %v2103
          %v2168 = vsel %vm2040, %v1976, %v2104
          %v2169 = vsel %vm2041, %v1977, %v2105
          %v2170 = vsel %vm2042, %v1978, %v2106
          %v2171 = vsel %vm2043, %v1979, %v2107
          %v2172 = vsel %vm2044, %v1980, %v2108
          %v2173 = vsel %vm2045, %v1981, %v2109
          %v2174 = vsel %vm2046, %v1982, %v2110
          %v2175 = vsel %vm2047, %v1983, %v2111
          %v2176 = vsel %vm2048, %v1984, %v2112
          %v2177 = vsel %vm2049, %v1985, %v2113
          %v2178 = vsel %vm2050, %v1986, %v2114
          %v2179 = vsel %vm2051, %v1987, %v2115
          %v2180 = vsel %vm2052, %v1988, %v2116
          %v2181 = vsel %vm2053, %v1989, %v2117
          %v2182 = vsel %vm2054, %v1990, %v2118
          %v2183 = vsel %vm2055, %v1991, %v2119
          %v2184 = vsel %vm2056, %v1992, %v2120
          %v2185 = vsel %vm2057, %v1993, %v2121
          %v2186 = vsel %vm2058, %v1994, %v2122
          %v2187 = vsel %vm2059, %v1995, %v2123
          %v2188 = vsel %vm2060, %v1996, %v2124
          %v2189 = vsel %vm2061, %v1997, %v2125
          %v2190 = vsel %vm2062, %v1998, %v2126
          %v2191 = vsel %vm2063, %v1999, %v2127
          %v2192 = vsel %vm2064, %v2000, %v2128
          %v2193 = vsel %vm2065, %v2001, %v2129
          %v2194 = vsel %vm2066, %v2002, %v2130
          %v2195 = vsel %vm2067, %v2003, %v2131
          %v2196 = vld [vmem:[%s524] sm:$0xff]
          %v2197 = vld [vmem:[%s524 + $0x8] sm:$0xff]
          %v2198 = vld [vmem:[%s524 + $0x10] sm:$0xff]
          %v2199 = vld [vmem:[%s524 + $0x18] sm:$0xff]
          %v2200 = vld [vmem:[%s524 + $0x20] sm:$0xff]
          %v2201 = vld [vmem:[%s524 + $0x28] sm:$0xff]
          %v2202 = vld [vmem:[%s524 + $0x30] sm:$0xff]
          %v2203 = vld [vmem:[%s524 + $0x38] sm:$0xff]
          %v2204 = vld [vmem:[%s524 + $0x40] sm:$0xff]
          %v2205 = vld [vmem:[%s524 + $0x48] sm:$0xff]
          %v2206 = vld [vmem:[%s524 + $0x50] sm:$0xff]
          %v2207 = vld [vmem:[%s524 + $0x58] sm:$0xff]
          %v2208 = vld [vmem:[%s524 + $0x60] sm:$0xff]
          %v2209 = vld [vmem:[%s524 + $0x68] sm:$0xff]
          %v2210 = vld [vmem:[%s524 + $0x70] sm:$0xff]
          %v2211 = vld [vmem:[%s524 + $0x78] sm:$0xff]
          %v2212 = vld [vmem:[%s524 + $0x80] sm:$0xff]
          %v2213 = vld [vmem:[%s524 + $0x88] sm:$0xff]
          %v2214 = vld [vmem:[%s524 + $0x90] sm:$0xff]
          %v2215 = vld [vmem:[%s524 + $0x98] sm:$0xff]
          %v2216 = vld [vmem:[%s524 + $0xa0] sm:$0xff]
          %v2217 = vld [vmem:[%s524 + $0xa8] sm:$0xff]
          %v2218 = vld [vmem:[%s524 + $0xb0] sm:$0xff]
          %v2219 = vld [vmem:[%s524 + $0xb8] sm:$0xff]
          %v2220 = vld [vmem:[%s524 + $0xc0] sm:$0xff]
          %v2221 = vld [vmem:[%s524 + $0xc8] sm:$0xff]
          %v2222 = vld [vmem:[%s524 + $0xd0] sm:$0xff]
          %v2223 = vld [vmem:[%s524 + $0xd8] sm:$0xff]
          %v2224 = vld [vmem:[%s524 + $0xe0] sm:$0xff]
          %v2225 = vld [vmem:[%s524 + $0xe8] sm:$0xff]
          %v2226 = vld [vmem:[%s524 + $0xf0] sm:$0xff]
          %v2227 = vld [vmem:[%s524 + $0xf8] sm:$0xff]
          %v2228 = vld [vmem:[%s524 + $0x100] sm:$0xff]
          %v2229 = vld [vmem:[%s524 + $0x108] sm:$0xff]
          %v2230 = vld [vmem:[%s524 + $0x110] sm:$0xff]
          %v2231 = vld [vmem:[%s524 + $0x118] sm:$0xff]
          %v2232 = vld [vmem:[%s524 + $0x120] sm:$0xff]
          %v2233 = vld [vmem:[%s524 + $0x128] sm:$0xff]
          %v2234 = vld [vmem:[%s524 + $0x130] sm:$0xff]
          %v2235 = vld [vmem:[%s524 + $0x138] sm:$0xff]
          %v2236 = vld [vmem:[%s524 + $0x140] sm:$0xff]
          %v2237 = vld [vmem:[%s524 + $0x148] sm:$0xff]
          %v2238 = vld [vmem:[%s524 + $0x150] sm:$0xff]
          %v2239 = vld [vmem:[%s524 + $0x158] sm:$0xff]
          %v2240 = vld [vmem:[%s524 + $0x160] sm:$0xff]
          %v2241 = vld [vmem:[%s524 + $0x168] sm:$0xff]
          %v2242 = vld [vmem:[%s524 + $0x170] sm:$0xff]
          %v2243 = vld [vmem:[%s524 + $0x178] sm:$0xff]
          %v2244 = vld [vmem:[%s524 + $0x180] sm:$0xff]
          %v2245 = vld [vmem:[%s524 + $0x188] sm:$0xff]
          %v2246 = vld [vmem:[%s524 + $0x190] sm:$0xff]
          %v2247 = vld [vmem:[%s524 + $0x198] sm:$0xff]
          %v2248 = vld [vmem:[%s524 + $0x1a0] sm:$0xff]
          %v2249 = vld [vmem:[%s524 + $0x1a8] sm:$0xff]
          %v2250 = vld [vmem:[%s524 + $0x1b0] sm:$0xff]
          %v2251 = vld [vmem:[%s524 + $0x1b8] sm:$0xff]
          %v2252 = vld [vmem:[%s524 + $0x1c0] sm:$0xff]
          %v2253 = vld [vmem:[%s524 + $0x1c8] sm:$0xff]
          %v2254 = vld [vmem:[%s524 + $0x1d0] sm:$0xff]
          %v2255 = vld [vmem:[%s524 + $0x1d8] sm:$0xff]
          %v2256 = vld [vmem:[%s524 + $0x1e0] sm:$0xff]
          %v2257 = vld [vmem:[%s524 + $0x1e8] sm:$0xff]
          %v2258 = vld [vmem:[%s524 + $0x1f0] sm:$0xff]
          %v2259 = vld [vmem:[%s524 + $0x1f8] sm:$0xff]
          %v2260 = vadd.f32 %v2132, %v2196
          %v2261 = vadd.f32 %v2133, %v2197
          %v2262 = vadd.f32 %v2134, %v2198
          %v2263 = vadd.f32 %v2135, %v2199
          %v2264 = vadd.f32 %v2136, %v2200
          %v2265 = vadd.f32 %v2137, %v2201
          %v2266 = vadd.f32 %v2138, %v2202
          %v2267 = vadd.f32 %v2139, %v2203
          %v2268 = vadd.f32 %v2140, %v2204
          %v2269 = vadd.f32 %v2141, %v2205
          %v2270 = vadd.f32 %v2142, %v2206
          %v2271 = vadd.f32 %v2143, %v2207
          %v2272 = vadd.f32 %v2144, %v2208
          %v2273 = vadd.f32 %v2145, %v2209
          %v2274 = vadd.f32 %v2146, %v2210
          %v2275 = vadd.f32 %v2147, %v2211
          %v2276 = vadd.f32 %v2148, %v2212
          %v2277 = vadd.f32 %v2149, %v2213
          %v2278 = vadd.f32 %v2150, %v2214
          %v2279 = vadd.f32 %v2151, %v2215
          %v2280 = vadd.f32 %v2152, %v2216
          %v2281 = vadd.f32 %v2153, %v2217
          %v2282 = vadd.f32 %v2154, %v2218
          %v2283 = vadd.f32 %v2155, %v2219
          %v2284 = vadd.f32 %v2156, %v2220
          %v2285 = vadd.f32 %v2157, %v2221
          %v2286 = vadd.f32 %v2158, %v2222
          %v2287 = vadd.f32 %v2159, %v2223
          %v2288 = vadd.f32 %v2160, %v2224
          %v2289 = vadd.f32 %v2161, %v2225
          %v2290 = vadd.f32 %v2162, %v2226
          %v2291 = vadd.f32 %v2163, %v2227
          %v2292 = vadd.f32 %v2164, %v2228
          %v2293 = vadd.f32 %v2165, %v2229
          %v2294 = vadd.f32 %v2166, %v2230
          %v2295 = vadd.f32 %v2167, %v2231
          %v2296 = vadd.f32 %v2168, %v2232
          %v2297 = vadd.f32 %v2169, %v2233
          %v2298 = vadd.f32 %v2170, %v2234
          %v2299 = vadd.f32 %v2171, %v2235
          %v2300 = vadd.f32 %v2172, %v2236
          %v2301 = vadd.f32 %v2173, %v2237
          %v2302 = vadd.f32 %v2174, %v2238
          %v2303 = vadd.f32 %v2175, %v2239
          %v2304 = vadd.f32 %v2176, %v2240
          %v2305 = vadd.f32 %v2177, %v2241
          %v2306 = vadd.f32 %v2178, %v2242
          %v2307 = vadd.f32 %v2179, %v2243
          %v2308 = vadd.f32 %v2180, %v2244
          %v2309 = vadd.f32 %v2181, %v2245
          %v2310 = vadd.f32 %v2182, %v2246
          %v2311 = vadd.f32 %v2183, %v2247
          %v2312 = vadd.f32 %v2184, %v2248
          %v2313 = vadd.f32 %v2185, %v2249
          %v2314 = vadd.f32 %v2186, %v2250
          %v2315 = vadd.f32 %v2187, %v2251
          %v2316 = vadd.f32 %v2188, %v2252
          %v2317 = vadd.f32 %v2189, %v2253
          %v2318 = vadd.f32 %v2190, %v2254
          %v2319 = vadd.f32 %v2191, %v2255
          %v2320 = vadd.f32 %v2192, %v2256
          %v2321 = vadd.f32 %v2193, %v2257
          %v2322 = vadd.f32 %v2194, %v2258
          %v2323 = vadd.f32 %v2195, %v2259
          %2324 = vst [vmem:[%s490] sm:$0xff] %v2260
          %2325 = vst [vmem:[%s490 + $0x8] sm:$0xff] %v2261
          %2326 = vst [vmem:[%s490 + $0x10] sm:$0xff] %v2262
          %2327 = vst [vmem:[%s490 + $0x18] sm:$0xff] %v2263
          %2328 = vst [vmem:[%s490 + $0x20] sm:$0xff] %v2264
          %2329 = vst [vmem:[%s490 + $0x28] sm:$0xff] %v2265
          %2330 = vst [vmem:[%s490 + $0x30] sm:$0xff] %v2266
          %2331 = vst [vmem:[%s490 + $0x38] sm:$0xff] %v2267
          %2332 = vst [vmem:[%s490 + $0x40] sm:$0xff] %v2268
          %2333 = vst [vmem:[%s490 + $0x48] sm:$0xff] %v2269
          %2334 = vst [vmem:[%s490 + $0x50] sm:$0xff] %v2270
          %2335 = vst [vmem:[%s490 + $0x58] sm:$0xff] %v2271
          %2336 = vst [vmem:[%s490 + $0x60] sm:$0xff] %v2272
          %2337 = vst [vmem:[%s490 + $0x68] sm:$0xff] %v2273
          %2338 = vst [vmem:[%s490 + $0x70] sm:$0xff] %v2274
          %2339 = vst [vmem:[%s490 + $0x78] sm:$0xff] %v2275
          %2340 = vst [vmem:[%s490 + $0x80] sm:$0xff] %v2276
          %2341 = vst [vmem:[%s490 + $0x88] sm:$0xff] %v2277
          %2342 = vst [vmem:[%s490 + $0x90] sm:$0xff] %v2278
          %2343 = vst [vmem:[%s490 + $0x98] sm:$0xff] %v2279
          %2344 = vst [vmem:[%s490 + $0xa0] sm:$0xff] %v2280
          %2345 = vst [vmem:[%s490 + $0xa8] sm:$0xff] %v2281
          %2346 = vst [vmem:[%s490 + $0xb0] sm:$0xff] %v2282
          %2347 = vst [vmem:[%s490 + $0xb8] sm:$0xff] %v2283
          %2348 = vst [vmem:[%s490 + $0xc0] sm:$0xff] %v2284
          %2349 = vst [vmem:[%s490 + $0xc8] sm:$0xff] %v2285
          %2350 = vst [vmem:[%s490 + $0xd0] sm:$0xff] %v2286
          %2351 = vst [vmem:[%s490 + $0xd8] sm:$0xff] %v2287
          %2352 = vst [vmem:[%s490 + $0xe0] sm:$0xff] %v2288
          %2353 = vst [vmem:[%s490 + $0xe8] sm:$0xff] %v2289
          %2354 = vst [vmem:[%s490 + $0xf0] sm:$0xff] %v2290
          %2355 = vst [vmem:[%s490 + $0xf8] sm:$0xff] %v2291
          %2356 = vst [vmem:[%s490 + $0x100] sm:$0xff] %v2292
          %2357 = vst [vmem:[%s490 + $0x108] sm:$0xff] %v2293
          %2358 = vst [vmem:[%s490 + $0x110] sm:$0xff] %v2294
          %2359 = vst [vmem:[%s490 + $0x118] sm:$0xff] %v2295
          %2360 = vst [vmem:[%s490 + $0x120] sm:$0xff] %v2296
          %2361 = vst [vmem:[%s490 + $0x128] sm:$0xff] %v2297
          %2362 = vst [vmem:[%s490 + $0x130] sm:$0xff] %v2298
          %2363 = vst [vmem:[%s490 + $0x138] sm:$0xff] %v2299
          %2364 = vst [vmem:[%s490 + $0x140] sm:$0xff] %v2300
          %2365 = vst [vmem:[%s490 + $0x148] sm:$0xff] %v2301
          %2366 = vst [vmem:[%s490 + $0x150] sm:$0xff] %v2302
          %2367 = vst [vmem:[%s490 + $0x158] sm:$0xff] %v2303
          %2368 = vst [vmem:[%s490 + $0x160] sm:$0xff] %v2304
          %2369 = vst [vmem:[%s490 + $0x168] sm:$0xff] %v2305
          %2370 = vst [vmem:[%s490 + $0x170] sm:$0xff] %v2306
          %2371 = vst [vmem:[%s490 + $0x178] sm:$0xff] %v2307
          %2372 = vst [vmem:[%s490 + $0x180] sm:$0xff] %v2308
          %2373 = vst [vmem:[%s490 + $0x188] sm:$0xff] %v2309
          %2374 = vst [vmem:[%s490 + $0x190] sm:$0xff] %v2310
          %2375 = vst [vmem:[%s490 + $0x198] sm:$0xff] %v2311
          %2376 = vst [vmem:[%s490 + $0x1a0] sm:$0xff] %v2312
          %2377 = vst [vmem:[%s490 + $0x1a8] sm:$0xff] %v2313
          %2378 = vst [vmem:[%s490 + $0x1b0] sm:$0xff] %v2314
          %2379 = vst [vmem:[%s490 + $0x1b8] sm:$0xff] %v2315
          %2380 = vst [vmem:[%s490 + $0x1c0] sm:$0xff] %v2316
          %2381 = vst [vmem:[%s490 + $0x1c8] sm:$0xff] %v2317
          %2382 = vst [vmem:[%s490 + $0x1d0] sm:$0xff] %v2318
          %2383 = vst [vmem:[%s490 + $0x1d8] sm:$0xff] %v2319
          %2384 = vst [vmem:[%s490 + $0x1e0] sm:$0xff] %v2320
          %2385 = vst [vmem:[%s490 + $0x1e8] sm:$0xff] %v2321
          %2386 = vst [vmem:[%s490 + $0x1f0] sm:$0xff] %v2322
          %2387 = vst [vmem:[%s490 + $0x1f8] sm:$0xff] %v2323
        $region74: #{_lambda_.7} parent=61 // pred_fallthru
          _
        %s2388 = sand.u32 %s184, 1
        %s2389 = scalar_lea.sflag [#allocation5], %s2388
        %s2390 = sand.u32 %s184, 1
        %s2391 = smul.addr %s2390, 512
        %s2392 = scalar_lea.vmem [#allocation4], %s2391
        // Predicated region
        $region75: #{_lambda_.7} parent=61 // pred_check
          %p2393 = pneg %p194
        $region76: #{_lambda_.7} parent=61 // pred_check_branch
          %2395 = sbr.rel (%p2393) target = $region78
        $region77: #{_lambda_.7} parent=61 // pred_region
          %s2396 = smul.u32 32, %s24
          %s2397 = smul.u32 2, %s25
          %s2399 = ssub.s32 8192, 8192
          %2400 = vsyncadd %s2389, %s2399
          %s2401 = smul.addr %s2396, 2
          %s2402 = sadd.s32 %s2397, %s2401
          %s2403 = smul.addr %s2402, 128
          %s2404 = scalar_lea.hbm %s5, %s2403
          %s2405 = sshll.u32 %s2392, 4
          %s2406 = int_to_ptr.vmem [resolvable:$true] %s2405
          %2411 = dma.vmem_to_hbm [thread:$0]  %s2406, 8192, %s2404, %s2389, 256, 256, 16
        $region78: #{_lambda_.7} parent=61 // pred_fallthru
          _
      $region62: #{_lambda_.7} parent=5 // pred_fallthru
        _
      %p2412 = scmp.le.s32.totalorder 2, %s14
      // Predicated region
      $region79: #{_lambda_.7} parent=5 // pred_check
        %p2413 = pneg %p2412
      $region80: #{_lambda_.7} parent=5 // pred_check_branch
        %2415 = sbr.rel (%p2413) target = $region82
      $region81: #{_lambda_.7} parent=5 // pred_region
        %s2416 = ssub.s32 %s14, 2
        // Predicated region
        $region83: #{_lambda_.7} parent=81 // pred_check
          %p2417 = pneg %p200
        $region84: #{_lambda_.7} parent=81 // pred_check_branch
          %2419 = sbr.rel (%p2417) target = $region86
        $region85: #{_lambda_.7} parent=81 // pred_region
          %s2420 = sand.u32 %s185, 1
          %s2421 = scalar_lea.sflag [#allocation5], %s2420
          %s2422 = sand.u32 %s185, 1
          %s2423 = smul.addr %s2422, 512
          %s2424 = scalar_lea.vmem [#allocation4], %s2423
          %2425 = dma.done %s2421, 8192
        $region86: #{_lambda_.7} parent=81 // pred_fallthru
          _
      $region82: #{_lambda_.7} parent=5 // pred_fallthru
        _
    $region6: #{_lambda_.7} parent=1 // loop_footer
      %s18 = sadd.s32 1, %s14
    $region7: #{_lambda_.7} parent=1 // loop_footer_branch
      %13 = sbr.rel target = $region3
    $region8: #{_lambda_.7} parent=1 // loop_exit
      _
    %2426 = vsyncpa [#allocation5], 1
    %s2427 = scalar_lea.sflag [#allocation5], 1
    %2428 = vsyncpa %s2427, 1

</llo_original>
